<compile_context>
chip_gen: v5e
topology: v5e:2x2
jax: 0.10.0
libtpu: 0.0.40
codegen_flags: <defaults>
</compile_context>

<pallas_src>
import functools
import math

import numpy as np
import jax
import jax.numpy as jnp
from jax.experimental import pallas as pl
from jax.experimental.pallas import tpu as pltpu

BN_EPS = 1e-5
VMEM_BUDGET_BYTES = 32 * 1024 * 1024  # <= default scoped VMEM on v5e/v6e/v7x


def _round_up(v, m):
    return ((v + m - 1) // m) * m


# ---------------------------------------------------------------------------
# Pallas kernels: bf16 matmul (f32 acc) -> [residual] -> BN affine -> PReLU
# ---------------------------------------------------------------------------

def _matmul_bn_prelu_kernel(a_ref, b_ref, scale_ref, bias_ref, alpha_ref, o_ref):
    acc = jnp.dot(a_ref[...], b_ref[...], preferred_element_type=jnp.float32)
    y = acc * scale_ref[...] + bias_ref[...]
    o_ref[...] = jnp.where(y >= 0.0, y, alpha_ref[...] * y).astype(o_ref.dtype)


def _matmul_res_bn_prelu_kernel(a_ref, b_ref, r_ref, scale_ref, bias_ref,
                                alpha_ref, o_ref):
    acc = jnp.dot(a_ref[...], b_ref[...], preferred_element_type=jnp.float32)
    acc = acc + r_ref[...].astype(jnp.float32)
    y = acc * scale_ref[...] + bias_ref[...]
    o_ref[...] = jnp.where(y >= 0.0, y, alpha_ref[...] * y).astype(o_ref.dtype)


def _pick_m_tiling(m):
    """Row tiling: fixed 256/512-row tiles, never a single huge block."""
    mp = _round_up(m, 8)
    if mp <= 256:
        return mp, mp                      # tiny problem: one small block
    tm = 256 if mp <= 1024 else 512
    return _round_up(mp, tm), tm


def fused_matmul(a, b, scale, bias, alpha, residual=None,
                 out_dtype=jnp.bfloat16):
    """PReLU_alpha(((a @ b) [+ residual]) * scale + bias), per output column.

    a: (M, K), b: (K, N); scale/bias/alpha: (N,). Operands are cast to bf16 for
    the MXU; accumulation and the BN/PReLU epilogue stay in f32. N is padded to
    a multiple of 128 so output stores are lane-dense (unmasked vst).
    """
    m, k = a.shape
    n = b.shape[1]
    n_pad = _round_up(n, 128)
    mp, tm = _pick_m_tiling(m)

    a_p = a.astype(jnp.bfloat16)
    if mp != m:
        a_p = jnp.pad(a_p, ((0, mp - m), (0, 0)))
    b_p = b.astype(jnp.bfloat16)
    if n_pad != n:
        b_p = jnp.pad(b_p, ((0, 0), (0, n_pad - n)))

    def _vec(v):
        v = v.astype(jnp.float32).reshape(1, n)
        if n_pad != n:
            v = jnp.pad(v, ((0, 0), (0, n_pad - n)))
        return v

    args = [a_p, b_p]
    in_specs = [
        pl.BlockSpec((tm, k), lambda i: (i, 0)),
        pl.BlockSpec((k, n_pad), lambda i: (0, 0)),
    ]
    if residual is not None:
        r_p = residual.astype(jnp.bfloat16)
        if mp != m or n_pad != n:
            r_p = jnp.pad(r_p, ((0, mp - m), (0, n_pad - n)))
        args.append(r_p)
        in_specs.append(pl.BlockSpec((tm, n_pad), lambda i: (i, 0)))
        kernel = _matmul_res_bn_prelu_kernel
    else:
        kernel = _matmul_bn_prelu_kernel

    args += [_vec(scale), _vec(bias), _vec(alpha)]
    in_specs += [pl.BlockSpec((1, n_pad), lambda i: (0, 0))] * 3

    out_bytes = mp * n_pad * np.dtype(out_dtype).itemsize
    in_bytes = (mp * k + k * n_pad) * 2
    if residual is not None:
        in_bytes += mp * n_pad * 2
    cost = pl.CostEstimate(flops=2 * mp * k * n_pad, transcendentals=0,
                           bytes_accessed=int(in_bytes + out_bytes))

    out = pl.pallas_call(
        kernel,
        out_shape=jax.ShapeDtypeStruct((mp, n_pad), out_dtype),
        grid=(mp // tm,),
        in_specs=in_specs,
        out_specs=pl.BlockSpec((tm, n_pad), lambda i: (i, 0)),
        compiler_params=pltpu.CompilerParams(
            dimension_semantics=("parallel",),
            vmem_limit_bytes=VMEM_BUDGET_BYTES,
        ),
        cost_estimate=cost,
    )(*args)

    if mp != m or n_pad != n:
        out = out[:m, :n]
    return out


# ---------------------------------------------------------------------------
# Conv / deconv / pooling built on the fused Pallas matmul
# ---------------------------------------------------------------------------

def _im2col(x, k, stride, dilation, padding):
    n, h, w, c = x.shape
    ho = (h + 2 * padding - dilation * (k - 1) - 1) // stride + 1
    wo = (w + 2 * padding - dilation * (k - 1) - 1) // stride + 1
    xp = jnp.pad(x, ((0, 0), (padding, padding), (padding, padding), (0, 0)))
    cols = []
    for dy in range(k):
        for dx in range(k):
            ys, xs = dy * dilation, dx * dilation
            cols.append(xp[:, ys:ys + stride * (ho - 1) + 1:stride,
                           xs:xs + stride * (wo - 1) + 1:stride, :])
    return jnp.concatenate(cols, axis=-1), ho, wo


def conv2d_fused(x, w, scale, bias, alpha, stride=1, padding=0, dilation=1,
                 out_dtype=jnp.bfloat16):
    # w has PyTorch layout (cout, cin, k, k); x is NHWC.
    n = x.shape[0]
    cout, cin, k, _ = w.shape
    patches, ho, wo = _im2col(x, k, stride, dilation, padding)
    a = patches.reshape(n * ho * wo, k * k * cin)
    wm = jnp.transpose(w, (2, 3, 1, 0)).reshape(k * k * cin, cout)
    y = fused_matmul(a, wm, scale, bias, alpha, out_dtype=out_dtype)
    return y.reshape(n, ho, wo, cout)


def deconv2x2_fused(x, w, scale, bias, alpha, out_dtype=jnp.bfloat16):
    # ConvTranspose2d, kernel=2, stride=2, padding=0; w: (cin, cout, 2, 2).
    n, h, ww, cin = x.shape
    cout = w.shape[1]
    wm = jnp.transpose(w, (0, 2, 3, 1)).reshape(cin, 4 * cout)
    a = x.reshape(n * h * ww, cin)
    y = fused_matmul(a, wm, jnp.tile(scale, 4), jnp.tile(bias, 4),
                     jnp.tile(alpha, 4), out_dtype=out_dtype)
    y = y.reshape(n, h, ww, 2, 2, cout).transpose(0, 1, 3, 2, 4, 5)
    return y.reshape(n, 2 * h, 2 * ww, cout)


def avg_pool_3x3_s2_p1(x):
    # F.avg_pool2d(x, 3, stride=2, padding=1), count_include_pad=True.
    # Shift-and-add on the VPU (per perf review); an N=3 matmul would use only
    # 3/128 output lanes and force masked stores.
    n, h, w, c = x.shape
    ho = (h + 2 - 3) // 2 + 1
    wo = (w + 2 - 3) // 2 + 1
    xp = jnp.pad(x, ((0, 0), (1, 1), (1, 1), (0, 0))).astype(jnp.float32)
    acc = jnp.zeros((n, ho, wo, c), jnp.float32)
    for dy in range(3):
        for dx in range(3):
            acc = acc + xp[:, dy:dy + 2 * (ho - 1) + 1:2,
                           dx:dx + 2 * (wo - 1) + 1:2, :]
    return (acc * (1.0 / 9.0)).astype(x.dtype)


# ---------------------------------------------------------------------------
# Parameter initialization (deterministic, mirrors the PyTorch module shapes)
# ---------------------------------------------------------------------------

class _Keys:
    def __init__(self, key):
        self._key = key

    def __call__(self):
        self._key, sub = jax.random.split(self._key)
        return sub


def _init_conv_w(kg, cin, cout, k):
    return jax.random.normal(kg(), (cout, cin, k, k), jnp.float32) / math.sqrt(cin * k * k)


def _bn_fold(cout):
    # Eval-mode BatchNorm folded to an affine: (x - 0) / sqrt(1 + eps) * 1 + 0.
    scale = jnp.full((cout,), 1.0 / math.sqrt(1.0 + BN_EPS), jnp.float32)
    bias = jnp.zeros((cout,), jnp.float32)
    return scale, bias


def init_cbr(kg, cin, cout, k):
    scale, bias = _bn_fold(cout)
    return {"w": _init_conv_w(kg, cin, cout, k), "scale": scale, "bias": bias,
            "alpha": jnp.full((cout,), 0.25, jnp.float32)}


def apply_cbr(p, x, stride=1, padding=0, dilation=1):
    return conv2d_fused(x, p["w"], p["scale"], p["bias"], p["alpha"],
                        stride=stride, padding=padding, dilation=dilation)


def init_deconv_cbr(kg, cin, cout):
    w = jax.random.normal(kg(), (cin, cout, 2, 2), jnp.float32) / math.sqrt(cin * 4)
    scale, bias = _bn_fold(cout)
    return {"w": w, "scale": scale, "bias": bias,
            "alpha": jnp.full((cout,), 0.25, jnp.float32)}


def apply_deconv_cbr(p, x):
    return deconv2x2_fused(x, p["w"], p["scale"], p["bias"], p["alpha"])


def _build_merged_group_weight(group_ws, mid, first, cout):
    """Block-structured (g*9*mid, cout) weight realising all dilated group convs
    plus hierarchical fusion concat([g0, g1, g1+g2, g1+g2+g3, ...])."""
    g = len(group_ws)
    kk = 9 * mid
    wbig = jnp.zeros((g * kk, cout), jnp.float32)
    for i, w in enumerate(group_ws):
        wm = jnp.transpose(w, (2, 3, 1, 0)).reshape(kk, w.shape[0])
        rows = slice(i * kk, (i + 1) * kk)
        if i == 0:
            wbig = wbig.at[rows, 0:first].set(wm)
        else:
            for j in range(i, g):           # group i contributes to segments j >= i
                c0 = first + (j - 1) * mid
                wbig = wbig.at[rows, c0:c0 + mid].set(wm)
    return wbig


def init_esp_block(kg, cin, cout, dilations=(1, 2, 4, 8, 16), stride=1):
    g = len(dilations)
    mid = cout // g
    first = cout - mid * (g - 1)
    k = 3 if stride == 2 else 1
    conv = init_cbr(kg, cin, mid, k)
    group_ws = [_init_conv_w(kg, mid, first if i == 0 else mid, 3)
                for i in range(g)]
    scale, bias = _bn_fold(cout)
    return {"conv": conv, "mid": mid, "cout": cout,
            "w_merged": _build_merged_group_weight(group_ws, mid, first, cout),
            "dilations": tuple(dilations), "stride": stride,
            "bn_scale": scale, "bn_bias": bias,
            "alpha": jnp.full((cout,), 0.25, jnp.float32)}


def apply_esp_block(p, x, use_residual=True):
    stride = p["stride"]
    pad = 1 if stride == 2 else 0
    h = apply_cbr(p["conv"], x, stride=stride, padding=pad)
    n, ho, wo, mid = h.shape
    # One merged Pallas kernel: all dilated group convs, the HFF adds (folded
    # into w_merged), the optional residual add, BatchNorm and PReLU, with a
    # single lane-dense output store.
    cols = []
    for d in p["dilations"]:
        patches, _, _ = _im2col(h, 3, 1, d, d)
        cols.append(patches.reshape(n * ho * wo, 9 * mid))
    a = jnp.concatenate(cols, axis=1)
    residual = x.reshape(n * ho * wo, x.shape[-1]) if use_residual else None
    y = fused_matmul(a, p["w_merged"], p["bn_scale"], p["bn_bias"], p["alpha"],
                     residual=residual)
    return y.reshape(n, ho, wo, p["cout"])


# ---------------------------------------------------------------------------
# Encoder / Decoder / ESPNet
# ---------------------------------------------------------------------------

def init_encoder(kg, in_channels, alphas=(2, 3)):
    return {
        "conv1": init_cbr(kg, in_channels, 16, 3),
        "down2": init_esp_block(kg, in_channels + 16, 64, stride=2),
        "level2": [init_esp_block(kg, 64, 64) for _ in range(alphas[0])],
        "down3": init_esp_block(kg, in_channels + 128, 128, stride=2),
        "level3": [init_esp_block(kg, 128, 128) for _ in range(alphas[1])],
    }


def apply_encoder(p, x):
    half = avg_pool_3x3_s2_p1(x)
    quarter = avg_pool_3x3_s2_p1(half)
    y = apply_cbr(p["conv1"], x, stride=2, padding=1)
    level1 = jnp.concatenate([y, half], axis=-1)
    x0 = apply_esp_block(p["down2"], level1, use_residual=False)
    y = x0
    for bp in p["level2"]:
        y = apply_esp_block(bp, y, use_residual=True)
    level2 = jnp.concatenate([y, x0, quarter], axis=-1)
    x0 = apply_esp_block(p["down3"], level2, use_residual=False)
    y = x0
    for bp in p["level3"]:
        y = apply_esp_block(bp, y, use_residual=True)
    level3 = jnp.concatenate([x0, y], axis=-1)
    return level1, level2, level3


def init_decoder(kg, level_channels, out_channels):
    c1, c2, c3 = level_channels
    up1_w = jax.random.normal(kg(), (out_channels, out_channels, 2, 2),
                              jnp.float32) / math.sqrt(out_channels * 4)
    up1_b = jax.random.normal(kg(), (out_channels,), jnp.float32) * 0.01
    return {
        "level1": init_cbr(kg, c1, out_channels, 1),
        "level2": init_cbr(kg, c2, out_channels, 1),
        "level3": init_cbr(kg, c3, out_channels, 1),
        "up1_w": up1_w, "up1_b": up1_b,
        "up2": init_deconv_cbr(kg, out_channels, out_channels),
        "up3": init_deconv_cbr(kg, out_channels, out_channels),
        "conv1": init_cbr(kg, out_channels * 2, out_channels, 1),
        "conv2": init_esp_block(kg, out_channels * 2, out_channels),
    }


def apply_decoder(p, levels):
    l1, l2, l3 = levels
    l1 = apply_cbr(p["level1"], l1)
    l2 = apply_cbr(p["level2"], l2)
    l3 = apply_cbr(p["level3"], l3)
    x = jnp.concatenate([apply_deconv_cbr(p["up3"], l3), l2], axis=-1)
    x = apply_esp_block(p["conv2"], x, use_residual=False)
    x = jnp.concatenate([apply_deconv_cbr(p["up2"], x), l1], axis=-1)
    x = apply_cbr(p["conv1"], x)
    cout = p["up1_w"].shape[1]
    ones = jnp.ones((cout,), jnp.float32)
    # up1 is a plain ConvTranspose2d with bias (no BN/PReLU): alpha=1 => identity.
    return deconv2x2_fused(x, p["up1_w"], ones, p["up1_b"], ones,
                           out_dtype=jnp.float32)


def init_espnet(key, in_channels, out_channels, alphas=(2, 3)):
    kg = _Keys(key)
    level_channels = [16 + in_channels, 128 + in_channels, 256]
    return {"encoder": init_encoder(kg, in_channels, alphas),
            "decoder": init_decoder(kg, level_channels, out_channels)}


def espnet_forward(params, x_nchw):
    # Public interface matches PyTorch: NCHW in, NCHW out.
    x = jnp.transpose(x_nchw, (0, 2, 3, 1)).astype(jnp.bfloat16)
    levels = apply_encoder(params["encoder"], x)
    y = apply_decoder(params["decoder"], levels)
    return jnp.transpose(y, (0, 3, 1, 2)).astype(jnp.float32)


if __name__ == "__main__":
    key = jax.random.PRNGKey(0)
    pkey, xkey = jax.random.split(key)
    in_channels, out_channels = 3, 10
    params = init_espnet(pkey, in_channels, out_channels)
    x = jax.random.normal(xkey, (2, in_channels, 32, 32), jnp.float32)

    fwd = jax.jit(functools.partial(espnet_forward, params))
    y = fwd(x)
    jax.block_until_ready(y)
    assert y.shape == (2, out_channels, 32, 32), y.shape
    assert bool(jnp.all(jnp.isfinite(y)))
    print("KERNEL_OK")
</pallas_src>

<mosaic_0001>
module attributes {stable_mosaic.version = 11 : i64} {
  func.func @_matmul_bn_prelu_kernel(%arg0: i32, %arg1: memref<256x27xbf16, #tpu.memory_space<vmem>>, %arg2: memref<27x128xbf16, #tpu.memory_space<vmem>>, %arg3: memref<1x128xf32, #tpu.memory_space<vmem>>, %arg4: memref<1x128xf32, #tpu.memory_space<vmem>>, %arg5: memref<1x128xf32, #tpu.memory_space<vmem>>, %arg6: memref<256x128xbf16, #tpu.memory_space<vmem>>) attributes {dimension_semantics = [#tpu.dimension_semantics<parallel>], iteration_bounds = array<i64: 2>, scalar_prefetch = 0 : i64, scratch_operands = 0 : i64, tpu.core_type = #tpu.core_type<tc>, window_params = [{transform_indices = @transform_0, window_bounds = array<i64: 256, 27>}, {pipeline_mode = #tpu.pipeline_mode<synchronous>, transform_indices = @transform_1, window_bounds = array<i64: 27, 128>}, {pipeline_mode = #tpu.pipeline_mode<synchronous>, transform_indices = @transform_2, window_bounds = array<i64: 1, 128>}, {pipeline_mode = #tpu.pipeline_mode<synchronous>, transform_indices = @transform_3, window_bounds = array<i64: 1, 128>}, {pipeline_mode = #tpu.pipeline_mode<synchronous>, transform_indices = @transform_4, window_bounds = array<i64: 1, 128>}, {transform_indices = @transform_5, window_bounds = array<i64: 256, 128>}]} {
    %c0 = arith.constant 0 : index
    %c0_0 = arith.constant 0 : index
    %0 = vector.load %arg1[%c0, %c0_0] : memref<256x27xbf16, #tpu.memory_space<vmem>>, vector<256x27xbf16>
    %c0_1 = arith.constant 0 : index
    %c0_2 = arith.constant 0 : index
    %1 = vector.load %arg2[%c0_1, %c0_2] : memref<27x128xbf16, #tpu.memory_space<vmem>>, vector<27x128xbf16>
    %cst = arith.constant dense<0.000000e+00> : vector<256x128xf32>
    %2 = tpu.matmul %0, %1, %cst {dimension_numbers = #tpu.dot_dimension_numbers<[1], [0], [0], [1], [0, 0, 1, 1], [], []>} : vector<256x27xbf16>, vector<27x128xbf16>, vector<256x128xf32> -> vector<256x128xf32>
    %c0_3 = arith.constant 0 : index
    %c0_4 = arith.constant 0 : index
    %3 = vector.load %arg3[%c0_3, %c0_4] : memref<1x128xf32, #tpu.memory_space<vmem>>, vector<1x128xf32>
    %4 = vector.broadcast %3 : vector<1x128xf32> to vector<256x128xf32>
    %5 = arith.mulf %2, %4 : vector<256x128xf32>
    %c0_5 = arith.constant 0 : index
    %c0_6 = arith.constant 0 : index
    %6 = vector.load %arg4[%c0_5, %c0_6] : memref<1x128xf32, #tpu.memory_space<vmem>>, vector<1x128xf32>
    %7 = vector.broadcast %6 : vector<1x128xf32> to vector<256x128xf32>
    %8 = arith.addf %5, %7 : vector<256x128xf32>
    %cst_7 = arith.constant 0.000000e+00 : f32
    %9 = vector.broadcast %cst_7 : f32 to vector<256x128xf32>
    %10 = arith.cmpf oge, %8, %9 : vector<256x128xf32>
    %c0_8 = arith.constant 0 : index
    %c0_9 = arith.constant 0 : index
    %11 = vector.load %arg5[%c0_8, %c0_9] : memref<1x128xf32, #tpu.memory_space<vmem>>, vector<1x128xf32>
    %12 = vector.broadcast %11 : vector<1x128xf32> to vector<256x128xf32>
    %13 = arith.mulf %12, %8 : vector<256x128xf32>
    %14 = arith.select %10, %8, %13 : vector<256x128xi1>, vector<256x128xf32>
    %15 = arith.truncf %14 : vector<256x128xf32> to vector<256x128xbf16>
    %c0_10 = arith.constant 0 : index
    %c0_11 = arith.constant 0 : index
    %16 = vector.load %arg6[%c0_10, %c0_11] : memref<256x128xbf16, #tpu.memory_space<vmem>>, vector<256x128xbf16>
    tpu.vector_store %arg6[%c0_10, %c0_11], %15 {strides = array<i32>} : memref<256x128xbf16, #tpu.memory_space<vmem>>, vector<256x128xbf16>,
    return
  }
  func.func @transform_0(%arg0: i32) -> (i32, i32) {
    %c0_i32 = arith.constant 0 : i32
    %c0_i32_0 = arith.constant 0 : i32
    return %arg0, %c0_i32 : i32, i32
  }
  func.func @transform_1(%arg0: i32) -> (i32, i32) {
    %c0_i32 = arith.constant 0 : i32
    %c0_i32_0 = arith.constant 0 : i32
    %c0_i32_1 = arith.constant 0 : i32
    return %c0_i32, %c0_i32_0 : i32, i32
  }
  func.func @transform_2(%arg0: i32) -> (i32, i32) {
    %c0_i32 = arith.constant 0 : i32
    %c0_i32_0 = arith.constant 0 : i32
    %c0_i32_1 = arith.constant 0 : i32
    return %c0_i32, %c0_i32_0 : i32, i32
  }
  func.func @transform_3(%arg0: i32) -> (i32, i32) {
    %c0_i32 = arith.constant 0 : i32
    %c0_i32_0 = arith.constant 0 : i32
    %c0_i32_1 = arith.constant 0 : i32
    return %c0_i32, %c0_i32_0 : i32, i32
  }
  func.func @transform_4(%arg0: i32) -> (i32, i32) {
    %c0_i32 = arith.constant 0 : i32
    %c0_i32_0 = arith.constant 0 : i32
    %c0_i32_1 = arith.constant 0 : i32
    return %c0_i32, %c0_i32_0 : i32, i32
  }
  func.func @transform_5(%arg0: i32) -> (i32, i32) {
    %c0_i32 = arith.constant 0 : i32
    %c0_i32_0 = arith.constant 0 : i32
    return %arg0, %c0_i32 : i32, i32
  }
}

module attributes {stable_mosaic.version = 11 : i64} {
  func.func @_matmul_bn_prelu_kernel(%arg0: i32, %arg1: memref<256x19xbf16, #tpu.memory_space<vmem>>, %arg2: memref<19x128xbf16, #tpu.memory_space<vmem>>, %arg3: memref<1x128xf32, #tpu.memory_space<vmem>>, %arg4: memref<1x128xf32, #tpu.memory_space<vmem>>, %arg5: memref<1x128xf32, #tpu.memory_space<vmem>>, %arg6: memref<256x128xbf16, #tpu.memory_space<vmem>>) attributes {dimension_semantics = [#tpu.dimension_semantics<parallel>], iteration_bounds = array<i64: 2>, scalar_prefetch = 0 : i64, scratch_operands = 0 : i64, tpu.core_type = #tpu.core_type<tc>, window_params = [{transform_indices = @transform_0, window_bounds = array<i64: 256, 19>}, {pipeline_mode = #tpu.pipeline_mode<synchronous>, transform_indices = @transform_1, window_bounds = array<i64: 19, 128>}, {pipeline_mode = #tpu.pipeline_mode<synchronous>, transform_indices = @transform_2, window_bounds = array<i64: 1, 128>}, {pipeline_mode = #tpu.pipeline_mode<synchronous>, transform_indices = @transform_3, window_bounds = array<i64: 1, 128>}, {pipeline_mode = #tpu.pipeline_mode<synchronous>, transform_indices = @transform_4, window_bounds = array<i64: 1, 128>}, {transform_indices = @transform_5, window_bounds = array<i64: 256, 128>}]} {
    %c0 = arith.constant 0 : index
    %c0_0 = arith.constant 0 : index
    %0 = vector.load %arg1[%c0, %c0_0] : memref<256x19xbf16, #tpu.memory_space<vmem>>, vector<256x19xbf16>
    %c0_1 = arith.constant 0 : index
    %c0_2 = arith.constant 0 : index
    %1 = vector.load %arg2[%c0_1, %c0_2] : memref<19x128xbf16, #tpu.memory_space<vmem>>, vector<19x128xbf16>
    %cst = arith.constant dense<0.000000e+00> : vector<256x128xf32>
    %2 = tpu.matmul %0, %1, %cst {dimension_numbers = #tpu.dot_dimension_numbers<[1], [0], [0], [1], [0, 0, 1, 1], [], []>} : vector<256x19xbf16>, vector<19x128xbf16>, vector<256x128xf32> -> vector<256x128xf32>
    %c0_3 = arith.constant 0 : index
    %c0_4 = arith.constant 0 : index
    %3 = vector.load %arg3[%c0_3, %c0_4] : memref<1x128xf32, #tpu.memory_space<vmem>>, vector<1x128xf32>
    %4 = vector.broadcast %3 : vector<1x128xf32> to vector<256x128xf32>
    %5 = arith.mulf %2, %4 : vector<256x128xf32>
    %c0_5 = arith.constant 0 : index
    %c0_6 = arith.constant 0 : index
    %6 = vector.load %arg4[%c0_5, %c0_6] : memref<1x128xf32, #tpu.memory_space<vmem>>, vector<1x128xf32>
    %7 = vector.broadcast %6 : vector<1x128xf32> to vector<256x128xf32>
    %8 = arith.addf %5, %7 : vector<256x128xf32>
    %cst_7 = arith.constant 0.000000e+00 : f32
    %9 = vector.broadcast %cst_7 : f32 to vector<256x128xf32>
    %10 = arith.cmpf oge, %8, %9 : vector<256x128xf32>
    %c0_8 = arith.constant 0 : index
    %c0_9 = arith.constant 0 : index
    %11 = vector.load %arg5[%c0_8, %c0_9] : memref<1x128xf32, #tpu.memory_space<vmem>>, vector<1x128xf32>
    %12 = vector.broadcast %11 : vector<1x128xf32> to vector<256x128xf32>
    %13 = arith.mulf %12, %8 : vector<256x128xf32>
    %14 = arith.select %10, %8, %13 : vector<256x128xi1>, vector<256x128xf32>
    %15 = arith.truncf %14 : vector<256x128xf32> to vector<256x128xbf16>
    %c0_10 = arith.constant 0 : index
    %c0_11 = arith.constant 0 : index
    %16 = vector.load %arg6[%c0_10, %c0_11] : memref<256x128xbf16, #tpu.memory_space<vmem>>, vector<256x128xbf16>
    tpu.vector_store %arg6[%c0_10, %c0_11], %15 {strides = array<i32>} : memref<256x128xbf16, #tpu.memory_space<vmem>>, vector<256x128xbf16>,
    return
  }
  func.func @transform_0(%arg0: i32) -> (i32, i32) {
    %c0_i32 = arith.constant 0 : i32
    %c0_i32_0 = arith.constant 0 : i32
    return %arg0, %c0_i32 : i32, i32
  }
  func.func @transform_1(%arg0: i32) -> (i32, i32) {
    %c0_i32 = arith.constant 0 : i32
    %c0_i32_0 = arith.constant 0 : i32
    %c0_i32_1 = arith.constant 0 : i32
    return %c0_i32, %c0_i32_0 : i32, i32
  }
  func.func @transform_2(%arg0: i32) -> (i32, i32) {
    %c0_i32 = arith.constant 0 : i32
    %c0_i32_0 = arith.constant 0 : i32
    %c0_i32_1 = arith.constant 0 : i32
    return %c0_i32, %c0_i32_0 : i32, i32
  }
  func.func @transform_3(%arg0: i32) -> (i32, i32) {
    %c0_i32 = arith.constant 0 : i32
    %c0_i32_0 = arith.constant 0 : i32
    %c0_i32_1 = arith.constant 0 : i32
    return %c0_i32, %c0_i32_0 : i32, i32
  }
  func.func @transform_4(%arg0: i32) -> (i32, i32) {
    %c0_i32 = arith.constant 0 : i32
    %c0_i32_0 = arith.constant 0 : i32
    %c0_i32_1 = arith.constant 0 : i32
    return %c0_i32, %c0_i32_0 : i32, i32
  }
  func.func @transform_5(%arg0: i32) -> (i32, i32) {
    %c0_i32 = arith.constant 0 : i32
    %c0_i32_0 = arith.constant 0 : i32
    return %arg0, %c0_i32 : i32, i32
  }
}

module attributes {stable_mosaic.version = 11 : i64} {
  func.func @_matmul_bn_prelu_kernel(%arg0: i32, %arg1: memref<128x171xbf16, #tpu.memory_space<vmem>>, %arg2: memref<171x128xbf16, #tpu.memory_space<vmem>>, %arg3: memref<1x128xf32, #tpu.memory_space<vmem>>, %arg4: memref<1x128xf32, #tpu.memory_space<vmem>>, %arg5: memref<1x128xf32, #tpu.memory_space<vmem>>, %arg6: memref<128x128xbf16, #tpu.memory_space<vmem>>) attributes {dimension_semantics = [#tpu.dimension_semantics<parallel>], iteration_bounds = array<i64: 1>, scalar_prefetch = 0 : i64, scratch_operands = 0 : i64, tpu.core_type = #tpu.core_type<tc>, window_params = [{transform_indices = @transform_0, window_bounds = array<i64: 128, 171>}, {pipeline_mode = #tpu.pipeline_mode<synchronous>, transform_indices = @transform_1, window_bounds = array<i64: 171, 128>}, {pipeline_mode = #tpu.pipeline_mode<synchronous>, transform_indices = @transform_2, window_bounds = array<i64: 1, 128>}, {pipeline_mode = #tpu.pipeline_mode<synchronous>, transform_indices = @transform_3, window_bounds = array<i64: 1, 128>}, {pipeline_mode = #tpu.pipeline_mode<synchronous>, transform_indices = @transform_4, window_bounds = array<i64: 1, 128>}, {transform_indices = @transform_5, window_bounds = array<i64: 128, 128>}]} {
    %c0 = arith.constant 0 : index
    %c0_0 = arith.constant 0 : index
    %0 = vector.load %arg1[%c0, %c0_0] : memref<128x171xbf16, #tpu.memory_space<vmem>>, vector<128x171xbf16>
    %c0_1 = arith.constant 0 : index
    %c0_2 = arith.constant 0 : index
    %1 = vector.load %arg2[%c0_1, %c0_2] : memref<171x128xbf16, #tpu.memory_space<vmem>>, vector<171x128xbf16>
    %cst = arith.constant dense<0.000000e+00> : vector<128x128xf32>
    %2 = tpu.matmul %0, %1, %cst {dimension_numbers = #tpu.dot_dimension_numbers<[1], [0], [0], [1], [0, 0, 1, 1], [], []>} : vector<128x171xbf16>, vector<171x128xbf16>, vector<128x128xf32> -> vector<128x128xf32>
    %c0_3 = arith.constant 0 : index
    %c0_4 = arith.constant 0 : index
    %3 = vector.load %arg3[%c0_3, %c0_4] : memref<1x128xf32, #tpu.memory_space<vmem>>, vector<1x128xf32>
    %4 = vector.broadcast %3 : vector<1x128xf32> to vector<128x128xf32>
    %5 = arith.mulf %2, %4 : vector<128x128xf32>
    %c0_5 = arith.constant 0 : index
    %c0_6 = arith.constant 0 : index
    %6 = vector.load %arg4[%c0_5, %c0_6] : memref<1x128xf32, #tpu.memory_space<vmem>>, vector<1x128xf32>
    %7 = vector.broadcast %6 : vector<1x128xf32> to vector<128x128xf32>
    %8 = arith.addf %5, %7 : vector<128x128xf32>
    %cst_7 = arith.constant 0.000000e+00 : f32
    %9 = vector.broadcast %cst_7 : f32 to vector<128x128xf32>
    %10 = arith.cmpf oge, %8, %9 : vector<128x128xf32>
    %c0_8 = arith.constant 0 : index
    %c0_9 = arith.constant 0 : index
    %11 = vector.load %arg5[%c0_8, %c0_9] : memref<1x128xf32, #tpu.memory_space<vmem>>, vector<1x128xf32>
    %12 = vector.broadcast %11 : vector<1x128xf32> to vector<128x128xf32>
    %13 = arith.mulf %12, %8 : vector<128x128xf32>
    %14 = arith.select %10, %8, %13 : vector<128x128xi1>, vector<128x128xf32>
    %15 = arith.truncf %14 : vector<128x128xf32> to vector<128x128xbf16>
    %c0_10 = arith.constant 0 : index
    %c0_11 = arith.constant 0 : index
    %16 = vector.load %arg6[%c0_10, %c0_11] : memref<128x128xbf16, #tpu.memory_space<vmem>>, vector<128x128xbf16>
    tpu.vector_store %arg6[%c0_10, %c0_11], %15 {strides = array<i32>} : memref<128x128xbf16, #tpu.memory_space<vmem>>, vector<128x128xbf16>,
    return
  }
  func.func @transform_0(%arg0: i32) -> (i32, i32) {
    %c0_i32 = arith.constant 0 : i32
    %c0_i32_0 = arith.constant 0 : i32
    return %arg0, %c0_i32 : i32, i32
  }
  func.func @transform_1(%arg0: i32) -> (i32, i32) {
    %c0_i32 = arith.constant 0 : i32
    %c0_i32_0 = arith.constant 0 : i32
    %c0_i32_1 = arith.constant 0 : i32
    return %c0_i32, %c0_i32_0 : i32, i32
  }
  func.func @transform_2(%arg0: i32) -> (i32, i32) {
    %c0_i32 = arith.constant 0 : i32
    %c0_i32_0 = arith.constant 0 : i32
    %c0_i32_1 = arith.constant 0 : i32
    return %c0_i32, %c0_i32_0 : i32, i32
  }
  func.func @transform_3(%arg0: i32) -> (i32, i32) {
    %c0_i32 = arith.constant 0 : i32
    %c0_i32_0 = arith.constant 0 : i32
    %c0_i32_1 = arith.constant 0 : i32
    return %c0_i32, %c0_i32_0 : i32, i32
  }
  func.func @transform_4(%arg0: i32) -> (i32, i32) {
    %c0_i32 = arith.constant 0 : i32
    %c0_i32_0 = arith.constant 0 : i32
    %c0_i32_1 = arith.constant 0 : i32
    return %c0_i32, %c0_i32_0 : i32, i32
  }
  func.func @transform_5(%arg0: i32) -> (i32, i32) {
    %c0_i32 = arith.constant 0 : i32
    %c0_i32_0 = arith.constant 0 : i32
    return %arg0, %c0_i32 : i32, i32
  }
}

module attributes {stable_mosaic.version = 11 : i64} {
  func.func @_matmul_bn_prelu_kernel(%arg0: i32, %arg1: memref<128x540xbf16, #tpu.memory_space<vmem>>, %arg2: memref<540x128xbf16, #tpu.memory_space<vmem>>, %arg3: memref<1x128xf32, #tpu.memory_space<vmem>>, %arg4: memref<1x128xf32, #tpu.memory_space<vmem>>, %arg5: memref<1x128xf32, #tpu.memory_space<vmem>>, %arg6: memref<128x128xbf16, #tpu.memory_space<vmem>>) attributes {dimension_semantics = [#tpu.dimension_semantics<parallel>], iteration_bounds = array<i64: 1>, scalar_prefetch = 0 : i64, scratch_operands = 0 : i64, tpu.core_type = #tpu.core_type<tc>, window_params = [{transform_indices = @transform_0, window_bounds = array<i64: 128, 540>}, {pipeline_mode = #tpu.pipeline_mode<synchronous>, transform_indices = @transform_1, window_bounds = array<i64: 540, 128>}, {pipeline_mode = #tpu.pipeline_mode<synchronous>, transform_indices = @transform_2, window_bounds = array<i64: 1, 128>}, {pipeline_mode = #tpu.pipeline_mode<synchronous>, transform_indices = @transform_3, window_bounds = array<i64: 1, 128>}, {pipeline_mode = #tpu.pipeline_mode<synchronous>, transform_indices = @transform_4, window_bounds = array<i64: 1, 128>}, {transform_indices = @transform_5, window_bounds = array<i64: 128, 128>}]} {
    %c0 = arith.constant 0 : index
    %c0_0 = arith.constant 0 : index
    %0 = vector.load %arg1[%c0, %c0_0] : memref<128x540xbf16, #tpu.memory_space<vmem>>, vector<128x540xbf16>
    %c0_1 = arith.constant 0 : index
    %c0_2 = arith.constant 0 : index
    %1 = vector.load %arg2[%c0_1, %c0_2] : memref<540x128xbf16, #tpu.memory_space<vmem>>, vector<540x128xbf16>
    %cst = arith.constant dense<0.000000e+00> : vector<128x128xf32>
    %2 = tpu.matmul %0, %1, %cst {dimension_numbers = #tpu.dot_dimension_numbers<[1], [0], [0], [1], [0, 0, 1, 1], [], []>} : vector<128x540xbf16>, vector<540x128xbf16>, vector<128x128xf32> -> vector<128x128xf32>
    %c0_3 = arith.constant 0 : index
    %c0_4 = arith.constant 0 : index
    %3 = vector.load %arg3[%c0_3, %c0_4] : memref<1x128xf32, #tpu.memory_space<vmem>>, vector<1x128xf32>
    %4 = vector.broadcast %3 : vector<1x128xf32> to vector<128x128xf32>
    %5 = arith.mulf %2, %4 : vector<128x128xf32>
    %c0_5 = arith.constant 0 : index
    %c0_6 = arith.constant 0 : index
    %6 = vector.load %arg4[%c0_5, %c0_6] : memref<1x128xf32, #tpu.memory_space<vmem>>, vector<1x128xf32>
    %7 = vector.broadcast %6 : vector<1x128xf32> to vector<128x128xf32>
    %8 = arith.addf %5, %7 : vector<128x128xf32>
    %cst_7 = arith.constant 0.000000e+00 : f32
    %9 = vector.broadcast %cst_7 : f32 to vector<128x128xf32>
    %10 = arith.cmpf oge, %8, %9 : vector<128x128xf32>
    %c0_8 = arith.constant 0 : index
    %c0_9 = arith.constant 0 : index
    %11 = vector.load %arg5[%c0_8, %c0_9] : memref<1x128xf32, #tpu.memory_space<vmem>>, vector<1x128xf32>
    %12 = vector.broadcast %11 : vector<1x128xf32> to vector<128x128xf32>
    %13 = arith.mulf %12, %8 : vector<128x128xf32>
    %14 = arith.select %10, %8, %13 : vector<128x128xi1>, vector<128x128xf32>
    %15 = arith.truncf %14 : vector<128x128xf32> to vector<128x128xbf16>
    %c0_10 = arith.constant 0 : index
    %c0_11 = arith.constant 0 : index
    %16 = vector.load %arg6[%c0_10, %c0_11] : memref<128x128xbf16, #tpu.memory_space<vmem>>, vector<128x128xbf16>
    tpu.vector_store %arg6[%c0_10, %c0_11], %15 {strides = array<i32>} : memref<128x128xbf16, #tpu.memory_space<vmem>>, vector<128x128xbf16>,
    return
  }
  func.func @transform_0(%arg0: i32) -> (i32, i32) {
    %c0_i32 = arith.constant 0 : i32
    %c0_i32_0 = arith.constant 0 : i32
    return %arg0, %c0_i32 : i32, i32
  }
  func.func @transform_1(%arg0: i32) -> (i32, i32) {
    %c0_i32 = arith.constant 0 : i32
    %c0_i32_0 = arith.constant 0 : i32
    %c0_i32_1 = arith.constant 0 : i32
    return %c0_i32, %c0_i32_0 : i32, i32
  }
  func.func @transform_2(%arg0: i32) -> (i32, i32) {
    %c0_i32 = arith.constant 0 : i32
    %c0_i32_0 = arith.constant 0 : i32
    %c0_i32_1 = arith.constant 0 : i32
    return %c0_i32, %c0_i32_0 : i32, i32
  }
  func.func @transform_3(%arg0: i32) -> (i32, i32) {
    %c0_i32 = arith.constant 0 : i32
    %c0_i32_0 = arith.constant 0 : i32
    %c0_i32_1 = arith.constant 0 : i32
    return %c0_i32, %c0_i32_0 : i32, i32
  }
  func.func @transform_4(%arg0: i32) -> (i32, i32) {
    %c0_i32 = arith.constant 0 : i32
    %c0_i32_0 = arith.constant 0 : i32
    %c0_i32_1 = arith.constant 0 : i32
    return %c0_i32, %c0_i32_0 : i32, i32
  }
  func.func @transform_5(%arg0: i32) -> (i32, i32) {
    %c0_i32 = arith.constant 0 : i32
    %c0_i32_0 = arith.constant 0 : i32
    return %arg0, %c0_i32 : i32, i32
  }
}

module attributes {stable_mosaic.version = 11 : i64} {
  func.func @_matmul_bn_prelu_kernel(%arg0: i32, %arg1: memref<128x64xbf16, #tpu.memory_space<vmem>>, %arg2: memref<64x128xbf16, #tpu.memory_space<vmem>>, %arg3: memref<1x128xf32, #tpu.memory_space<vmem>>, %arg4: memref<1x128xf32, #tpu.memory_space<vmem>>, %arg5: memref<1x128xf32, #tpu.memory_space<vmem>>, %arg6: memref<128x128xbf16, #tpu.memory_space<vmem>>) attributes {dimension_semantics = [#tpu.dimension_semantics<parallel>], iteration_bounds = array<i64: 1>, scalar_prefetch = 0 : i64, scratch_operands = 0 : i64, tpu.core_type = #tpu.core_type<tc>, window_params = [{transform_indices = @transform_0, window_bounds = array<i64: 128, 64>}, {pipeline_mode = #tpu.pipeline_mode<synchronous>, transform_indices = @transform_1, window_bounds = array<i64: 64, 128>}, {pipeline_mode = #tpu.pipeline_mode<synchronous>, transform_indices = @transform_2, window_bounds = array<i64: 1, 128>}, {pipeline_mode = #tpu.pipeline_mode<synchronous>, transform_indices = @transform_3, window_bounds = array<i64: 1, 128>}, {pipeline_mode = #tpu.pipeline_mode<synchronous>, transform_indices = @transform_4, window_bounds = array<i64: 1, 128>}, {transform_indices = @transform_5, window_bounds = array<i64: 128, 128>}]} {
    %c0 = arith.constant 0 : index
    %c0_0 = arith.constant 0 : index
    %0 = vector.load %arg1[%c0, %c0_0] : memref<128x64xbf16, #tpu.memory_space<vmem>>, vector<128x64xbf16>
    %c0_1 = arith.constant 0 : index
    %c0_2 = arith.constant 0 : index
    %1 = vector.load %arg2[%c0_1, %c0_2] : memref<64x128xbf16, #tpu.memory_space<vmem>>, vector<64x128xbf16>
    %cst = arith.constant dense<0.000000e+00> : vector<128x128xf32>
    %2 = tpu.matmul %0, %1, %cst {dimension_numbers = #tpu.dot_dimension_numbers<[1], [0], [0], [1], [0, 0, 1, 1], [], []>} : vector<128x64xbf16>, vector<64x128xbf16>, vector<128x128xf32> -> vector<128x128xf32>
    %c0_3 = arith.constant 0 : index
    %c0_4 = arith.constant 0 : index
    %3 = vector.load %arg3[%c0_3, %c0_4] : memref<1x128xf32, #tpu.memory_space<vmem>>, vector<1x128xf32>
    %4 = vector.broadcast %3 : vector<1x128xf32> to vector<128x128xf32>
    %5 = arith.mulf %2, %4 : vector<128x128xf32>
    %c0_5 = arith.constant 0 : index
    %c0_6 = arith.constant 0 : index
    %6 = vector.load %arg4[%c0_5, %c0_6] : memref<1x128xf32, #tpu.memory_space<vmem>>, vector<1x128xf32>
    %7 = vector.broadcast %6 : vector<1x128xf32> to vector<128x128xf32>
    %8 = arith.addf %5, %7 : vector<128x128xf32>
    %cst_7 = arith.constant 0.000000e+00 : f32
    %9 = vector.broadcast %cst_7 : f32 to vector<128x128xf32>
    %10 = arith.cmpf oge, %8, %9 : vector<128x128xf32>
    %c0_8 = arith.constant 0 : index
    %c0_9 = arith.constant 0 : index
    %11 = vector.load %arg5[%c0_8, %c0_9] : memref<1x128xf32, #tpu.memory_space<vmem>>, vector<1x128xf32>
    %12 = vector.broadcast %11 : vector<1x128xf32> to vector<128x128xf32>
    %13 = arith.mulf %12, %8 : vector<128x128xf32>
    %14 = arith.select %10, %8, %13 : vector<128x128xi1>, vector<128x128xf32>
    %15 = arith.truncf %14 : vector<128x128xf32> to vector<128x128xbf16>
    %c0_10 = arith.constant 0 : index
    %c0_11 = arith.constant 0 : index
    %16 = vector.load %arg6[%c0_10, %c0_11] : memref<128x128xbf16, #tpu.memory_space<vmem>>, vector<128x128xbf16>
    tpu.vector_store %arg6[%c0_10, %c0_11], %15 {strides = array<i32>} : memref<128x128xbf16, #tpu.memory_space<vmem>>, vector<128x128xbf16>,
    return
  }
  func.func @transform_0(%arg0: i32) -> (i32, i32) {
    %c0_i32 = arith.constant 0 : i32
    %c0_i32_0 = arith.constant 0 : i32
    return %arg0, %c0_i32 : i32, i32
  }
  func.func @transform_1(%arg0: i32) -> (i32, i32) {
    %c0_i32 = arith.constant 0 : i32
    %c0_i32_0 = arith.constant 0 : i32
    %c0_i32_1 = arith.constant 0 : i32
    return %c0_i32, %c0_i32_0 : i32, i32
  }
  func.func @transform_2(%arg0: i32) -> (i32, i32) {
    %c0_i32 = arith.constant 0 : i32
    %c0_i32_0 = arith.constant 0 : i32
    %c0_i32_1 = arith.constant 0 : i32
    return %c0_i32, %c0_i32_0 : i32, i32
  }
  func.func @transform_3(%arg0: i32) -> (i32, i32) {
    %c0_i32 = arith.constant 0 : i32
    %c0_i32_0 = arith.constant 0 : i32
    %c0_i32_1 = arith.constant 0 : i32
    return %c0_i32, %c0_i32_0 : i32, i32
  }
  func.func @transform_4(%arg0: i32) -> (i32, i32) {
    %c0_i32 = arith.constant 0 : i32
    %c0_i32_0 = arith.constant 0 : i32
    %c0_i32_1 = arith.constant 0 : i32
    return %c0_i32, %c0_i32_0 : i32, i32
  }
  func.func @transform_5(%arg0: i32) -> (i32, i32) {
    %c0_i32 = arith.constant 0 : i32
    %c0_i32_0 = arith.constant 0 : i32
    return %arg0, %c0_i32 : i32, i32
  }
}

module attributes {stable_mosaic.version = 11 : i64} {
  func.func @_matmul_res_bn_prelu_kernel(%arg0: i32, %arg1: memref<128x540xbf16, #tpu.memory_space<vmem>>, %arg2: memref<540x128xbf16, #tpu.memory_space<vmem>>, %arg3: memref<128x128xbf16, #tpu.memory_space<vmem>>, %arg4: memref<1x128xf32, #tpu.memory_space<vmem>>, %arg5: memref<1x128xf32, #tpu.memory_space<vmem>>, %arg6: memref<1x128xf32, #tpu.memory_space<vmem>>, %arg7: memref<128x128xbf16, #tpu.memory_space<vmem>>) attributes {dimension_semantics = [#tpu.dimension_semantics<parallel>], iteration_bounds = array<i64: 1>, scalar_prefetch = 0 : i64, scratch_operands = 0 : i64, tpu.core_type = #tpu.core_type<tc>, window_params = [{transform_indices = @transform_0, window_bounds = array<i64: 128, 540>}, {pipeline_mode = #tpu.pipeline_mode<synchronous>, transform_indices = @transform_1, window_bounds = array<i64: 540, 128>}, {transform_indices = @transform_2, window_bounds = array<i64: 128, 128>}, {pipeline_mode = #tpu.pipeline_mode<synchronous>, transform_indices = @transform_3, window_bounds = array<i64: 1, 128>}, {pipeline_mode = #tpu.pipeline_mode<synchronous>, transform_indices = @transform_4, window_bounds = array<i64: 1, 128>}, {pipeline_mode = #tpu.pipeline_mode<synchronous>, transform_indices = @transform_5, window_bounds = array<i64: 1, 128>}, {transform_indices = @transform_6, window_bounds = array<i64: 128, 128>}]} {
    %c0 = arith.constant 0 : index
    %c0_0 = arith.constant 0 : index
    %0 = vector.load %arg1[%c0, %c0_0] : memref<128x540xbf16, #tpu.memory_space<vmem>>, vector<128x540xbf16>
    %c0_1 = arith.constant 0 : index
    %c0_2 = arith.constant 0 : index
    %1 = vector.load %arg2[%c0_1, %c0_2] : memref<540x128xbf16, #tpu.memory_space<vmem>>, vector<540x128xbf16>
    %cst = arith.constant dense<0.000000e+00> : vector<128x128xf32>
    %2 = tpu.matmul %0, %1, %cst {dimension_numbers = #tpu.dot_dimension_numbers<[1], [0], [0], [1], [0, 0, 1, 1], [], []>} : vector<128x540xbf16>, vector<540x128xbf16>, vector<128x128xf32> -> vector<128x128xf32>
    %c0_3 = arith.constant 0 : index
    %c0_4 = arith.constant 0 : index
    %3 = vector.load %arg3[%c0_3, %c0_4] : memref<128x128xbf16, #tpu.memory_space<vmem>>, vector<128x128xbf16>
    %4 = arith.extf %3 : vector<128x128xbf16> to vector<128x128xf32>
    %5 = arith.addf %2, %4 : vector<128x128xf32>
    %c0_5 = arith.constant 0 : index
    %c0_6 = arith.constant 0 : index
    %6 = vector.load %arg4[%c0_5, %c0_6] : memref<1x128xf32, #tpu.memory_space<vmem>>, vector<1x128xf32>
    %7 = vector.broadcast %6 : vector<1x128xf32> to vector<128x128xf32>
    %8 = arith.mulf %5, %7 : vector<128x128xf32>
    %c0_7 = arith.constant 0 : index
    %c0_8 = arith.constant 0 : index
    %9 = vector.load %arg5[%c0_7, %c0_8] : memref<1x128xf32, #tpu.memory_space<vmem>>, vector<1x128xf32>
    %10 = vector.broadcast %9 : vector<1x128xf32> to vector<128x128xf32>
    %11 = arith.addf %8, %10 : vector<128x128xf32>
    %cst_9 = arith.constant 0.000000e+00 : f32
    %12 = vector.broadcast %cst_9 : f32 to vector<128x128xf32>
    %13 = arith.cmpf oge, %11, %12 : vector<128x128xf32>
    %c0_10 = arith.constant 0 : index
    %c0_11 = arith.constant 0 : index
    %14 = vector.load %arg6[%c0_10, %c0_11] : memref<1x128xf32, #tpu.memory_space<vmem>>, vector<1x128xf32>
    %15 = vector.broadcast %14 : vector<1x128xf32> to vector<128x128xf32>
    %16 = arith.mulf %15, %11 : vector<128x128xf32>
    %17 = arith.select %13, %11, %16 : vector<128x128xi1>, vector<128x128xf32>
    %18 = arith.truncf %17 : vector<128x128xf32> to vector<128x128xbf16>
    %c0_12 = arith.constant 0 : index
    %c0_13 = arith.constant 0 : index
    %19 = vector.load %arg7[%c0_12, %c0_13] : memref<128x128xbf16, #tpu.memory_space<vmem>>, vector<128x128xbf16>
    tpu.vector_store %arg7[%c0_12, %c0_13], %18 {strides = array<i32>} : memref<128x128xbf16, #tpu.memory_space<vmem>>, vector<128x128xbf16>,
    return
  }
  func.func @transform_0(%arg0: i32) -> (i32, i32) {
    %c0_i32 = arith.constant 0 : i32
    %c0_i32_0 = arith.constant 0 : i32
    return %arg0, %c0_i32 : i32, i32
  }
  func.func @transform_1(%arg0: i32) -> (i32, i32) {
    %c0_i32 = arith.constant 0 : i32
    %c0_i32_0 = arith.constant 0 : i32
    %c0_i32_1 = arith.constant 0 : i32
    return %c0_i32, %c0_i32_0 : i32, i32
  }
  func.func @transform_2(%arg0: i32) -> (i32, i32) {
    %c0_i32 = arith.constant 0 : i32
    %c0_i32_0 = arith.constant 0 : i32
    return %arg0, %c0_i32 : i32, i32
  }
  func.func @transform_3(%arg0: i32) -> (i32, i32) {
    %c0_i32 = arith.constant 0 : i32
    %c0_i32_0 = arith.constant 0 : i32
    %c0_i32_1 = arith.constant 0 : i32
    return %c0_i32, %c0_i32_0 : i32, i32
  }
  func.func @transform_4(%arg0: i32) -> (i32, i32) {
    %c0_i32 = arith.constant 0 : i32
    %c0_i32_0 = arith.constant 0 : i32
    %c0_i32_1 = arith.constant 0 : i32
    return %c0_i32, %c0_i32_0 : i32, i32
  }
  func.func @transform_5(%arg0: i32) -> (i32, i32) {
    %c0_i32 = arith.constant 0 : i32
    %c0_i32_0 = arith.constant 0 : i32
    %c0_i32_1 = arith.constant 0 : i32
    return %c0_i32, %c0_i32_0 : i32, i32
  }
  func.func @transform_6(%arg0: i32) -> (i32, i32) {
    %c0_i32 = arith.constant 0 : i32
    %c0_i32_0 = arith.constant 0 : i32
    return %arg0, %c0_i32 : i32, i32
  }
}

module attributes {stable_mosaic.version = 11 : i64} {
  func.func @_matmul_bn_prelu_kernel(%arg0: i32, %arg1: memref<128x131xbf16, #tpu.memory_space<vmem>>, %arg2: memref<131x128xbf16, #tpu.memory_space<vmem>>, %arg3: memref<1x128xf32, #tpu.memory_space<vmem>>, %arg4: memref<1x128xf32, #tpu.memory_space<vmem>>, %arg5: memref<1x128xf32, #tpu.memory_space<vmem>>, %arg6: memref<128x128xbf16, #tpu.memory_space<vmem>>) attributes {dimension_semantics = [#tpu.dimension_semantics<parallel>], iteration_bounds = array<i64: 1>, scalar_prefetch = 0 : i64, scratch_operands = 0 : i64, tpu.core_type = #tpu.core_type<tc>, window_params = [{transform_indices = @transform_0, window_bounds = array<i64: 128, 131>}, {pipeline_mode = #tpu.pipeline_mode<synchronous>, transform_indices = @transform_1, window_bounds = array<i64: 131, 128>}, {pipeline_mode = #tpu.pipeline_mode<synchronous>, transform_indices = @transform_2, window_bounds = array<i64: 1, 128>}, {pipeline_mode = #tpu.pipeline_mode<synchronous>, transform_indices = @transform_3, window_bounds = array<i64: 1, 128>}, {pipeline_mode = #tpu.pipeline_mode<synchronous>, transform_indices = @transform_4, window_bounds = array<i64: 1, 128>}, {transform_indices = @transform_5, window_bounds = array<i64: 128, 128>}]} {
    %c0 = arith.constant 0 : index
    %c0_0 = arith.constant 0 : index
    %0 = vector.load %arg1[%c0, %c0_0] : memref<128x131xbf16, #tpu.memory_space<vmem>>, vector<128x131xbf16>
    %c0_1 = arith.constant 0 : index
    %c0_2 = arith.constant 0 : index
    %1 = vector.load %arg2[%c0_1, %c0_2] : memref<131x128xbf16, #tpu.memory_space<vmem>>, vector<131x128xbf16>
    %cst = arith.constant dense<0.000000e+00> : vector<128x128xf32>
    %2 = tpu.matmul %0, %1, %cst {dimension_numbers = #tpu.dot_dimension_numbers<[1], [0], [0], [1], [0, 0, 1, 1], [], []>} : vector<128x131xbf16>, vector<131x128xbf16>, vector<128x128xf32> -> vector<128x128xf32>
    %c0_3 = arith.constant 0 : index
    %c0_4 = arith.constant 0 : index
    %3 = vector.load %arg3[%c0_3, %c0_4] : memref<1x128xf32, #tpu.memory_space<vmem>>, vector<1x128xf32>
    %4 = vector.broadcast %3 : vector<1x128xf32> to vector<128x128xf32>
    %5 = arith.mulf %2, %4 : vector<128x128xf32>
    %c0_5 = arith.constant 0 : index
    %c0_6 = arith.constant 0 : index
    %6 = vector.load %arg4[%c0_5, %c0_6] : memref<1x128xf32, #tpu.memory_space<vmem>>, vector<1x128xf32>
    %7 = vector.broadcast %6 : vector<1x128xf32> to vector<128x128xf32>
    %8 = arith.addf %5, %7 : vector<128x128xf32>
    %cst_7 = arith.constant 0.000000e+00 : f32
    %9 = vector.broadcast %cst_7 : f32 to vector<128x128xf32>
    %10 = arith.cmpf oge, %8, %9 : vector<128x128xf32>
    %c0_8 = arith.constant 0 : index
    %c0_9 = arith.constant 0 : index
    %11 = vector.load %arg5[%c0_8, %c0_9] : memref<1x128xf32, #tpu.memory_space<vmem>>, vector<1x128xf32>
    %12 = vector.broadcast %11 : vector<1x128xf32> to vector<128x128xf32>
    %13 = arith.mulf %12, %8 : vector<128x128xf32>
    %14 = arith.select %10, %8, %13 : vector<128x128xi1>, vector<128x128xf32>
    %15 = arith.truncf %14 : vector<128x128xf32> to vector<128x128xbf16>
    %c0_10 = arith.constant 0 : index
    %c0_11 = arith.constant 0 : index
    %16 = vector.load %arg6[%c0_10, %c0_11] : memref<128x128xbf16, #tpu.memory_space<vmem>>, vector<128x128xbf16>
    tpu.vector_store %arg6[%c0_10, %c0_11], %15 {strides = array<i32>} : memref<128x128xbf16, #tpu.memory_space<vmem>>, vector<128x128xbf16>,
    return
  }
  func.func @transform_0(%arg0: i32) -> (i32, i32) {
    %c0_i32 = arith.constant 0 : i32
    %c0_i32_0 = arith.constant 0 : i32
    return %arg0, %c0_i32 : i32, i32
  }
  func.func @transform_1(%arg0: i32) -> (i32, i32) {
    %c0_i32 = arith.constant 0 : i32
    %c0_i32_0 = arith.constant 0 : i32
    %c0_i32_1 = arith.constant 0 : i32
    return %c0_i32, %c0_i32_0 : i32, i32
  }
  func.func @transform_2(%arg0: i32) -> (i32, i32) {
    %c0_i32 = arith.constant 0 : i32
    %c0_i32_0 = arith.constant 0 : i32
    %c0_i32_1 = arith.constant 0 : i32
    return %c0_i32, %c0_i32_0 : i32, i32
  }
  func.func @transform_3(%arg0: i32) -> (i32, i32) {
    %c0_i32 = arith.constant 0 : i32
    %c0_i32_0 = arith.constant 0 : i32
    %c0_i32_1 = arith.constant 0 : i32
    return %c0_i32, %c0_i32_0 : i32, i32
  }
  func.func @transform_4(%arg0: i32) -> (i32, i32) {
    %c0_i32 = arith.constant 0 : i32
    %c0_i32_0 = arith.constant 0 : i32
    %c0_i32_1 = arith.constant 0 : i32
    return %c0_i32, %c0_i32_0 : i32, i32
  }
  func.func @transform_5(%arg0: i32) -> (i32, i32) {
    %c0_i32 = arith.constant 0 : i32
    %c0_i32_0 = arith.constant 0 : i32
    return %arg0, %c0_i32 : i32, i32
  }
}

module attributes {stable_mosaic.version = 11 : i64} {
  func.func @_matmul_bn_prelu_kernel(%arg0: i32, %arg1: memref<32x1179xbf16, #tpu.memory_space<vmem>>, %arg2: memref<1179x128xbf16, #tpu.memory_space<vmem>>, %arg3: memref<1x128xf32, #tpu.memory_space<vmem>>, %arg4: memref<1x128xf32, #tpu.memory_space<vmem>>, %arg5: memref<1x128xf32, #tpu.memory_space<vmem>>, %arg6: memref<32x128xbf16, #tpu.memory_space<vmem>>) attributes {dimension_semantics = [#tpu.dimension_semantics<parallel>], iteration_bounds = array<i64: 1>, scalar_prefetch = 0 : i64, scratch_operands = 0 : i64, tpu.core_type = #tpu.core_type<tc>, window_params = [{transform_indices = @transform_0, window_bounds = array<i64: 32, 1179>}, {pipeline_mode = #tpu.pipeline_mode<synchronous>, transform_indices = @transform_1, window_bounds = array<i64: 1179, 128>}, {pipeline_mode = #tpu.pipeline_mode<synchronous>, transform_indices = @transform_2, window_bounds = array<i64: 1, 128>}, {pipeline_mode = #tpu.pipeline_mode<synchronous>, transform_indices = @transform_3, window_bounds = array<i64: 1, 128>}, {pipeline_mode = #tpu.pipeline_mode<synchronous>, transform_indices = @transform_4, window_bounds = array<i64: 1, 128>}, {transform_indices = @transform_5, window_bounds = array<i64: 32, 128>}]} {
    %c0 = arith.constant 0 : index
    %c0_0 = arith.constant 0 : index
    %0 = vector.load %arg1[%c0, %c0_0] : memref<32x1179xbf16, #tpu.memory_space<vmem>>, vector<32x1179xbf16>
    %c0_1 = arith.constant 0 : index
    %c0_2 = arith.constant 0 : index
    %1 = vector.load %arg2[%c0_1, %c0_2] : memref<1179x128xbf16, #tpu.memory_space<vmem>>, vector<1179x128xbf16>
    %cst = arith.constant dense<0.000000e+00> : vector<32x128xf32>
    %2 = tpu.matmul %0, %1, %cst {dimension_numbers = #tpu.dot_dimension_numbers<[1], [0], [0], [1], [0, 0, 1, 1], [], []>} : vector<32x1179xbf16>, vector<1179x128xbf16>, vector<32x128xf32> -> vector<32x128xf32>
    %c0_3 = arith.constant 0 : index
    %c0_4 = arith.constant 0 : index
    %3 = vector.load %arg3[%c0_3, %c0_4] : memref<1x128xf32, #tpu.memory_space<vmem>>, vector<1x128xf32>
    %4 = vector.broadcast %3 : vector<1x128xf32> to vector<32x128xf32>
    %5 = arith.mulf %2, %4 : vector<32x128xf32>
    %c0_5 = arith.constant 0 : index
    %c0_6 = arith.constant 0 : index
    %6 = vector.load %arg4[%c0_5, %c0_6] : memref<1x128xf32, #tpu.memory_space<vmem>>, vector<1x128xf32>
    %7 = vector.broadcast %6 : vector<1x128xf32> to vector<32x128xf32>
    %8 = arith.addf %5, %7 : vector<32x128xf32>
    %cst_7 = arith.constant 0.000000e+00 : f32
    %9 = vector.broadcast %cst_7 : f32 to vector<32x128xf32>
    %10 = arith.cmpf oge, %8, %9 : vector<32x128xf32>
    %c0_8 = arith.constant 0 : index
    %c0_9 = arith.constant 0 : index
    %11 = vector.load %arg5[%c0_8, %c0_9] : memref<1x128xf32, #tpu.memory_space<vmem>>, vector<1x128xf32>
    %12 = vector.broadcast %11 : vector<1x128xf32> to vector<32x128xf32>
    %13 = arith.mulf %12, %8 : vector<32x128xf32>
    %14 = arith.select %10, %8, %13 : vector<32x128xi1>, vector<32x128xf32>
    %15 = arith.truncf %14 : vector<32x128xf32> to vector<32x128xbf16>
    %c0_10 = arith.constant 0 : index
    %c0_11 = arith.constant 0 : index
    %16 = vector.load %arg6[%c0_10, %c0_11] : memref<32x128xbf16, #tpu.memory_space<vmem>>, vector<32x128xbf16>
    tpu.vector_store %arg6[%c0_10, %c0_11], %15 {strides = array<i32>} : memref<32x128xbf16, #tpu.memory_space<vmem>>, vector<32x128xbf16>,
    return
  }
  func.func @transform_0(%arg0: i32) -> (i32, i32) {
    %c0_i32 = arith.constant 0 : i32
    %c0_i32_0 = arith.constant 0 : i32
    return %arg0, %c0_i32 : i32, i32
  }
  func.func @transform_1(%arg0: i32) -> (i32, i32) {
    %c0_i32 = arith.constant 0 : i32
    %c0_i32_0 = arith.constant 0 : i32
    %c0_i32_1 = arith.constant 0 : i32
    return %c0_i32, %c0_i32_0 : i32, i32
  }
  func.func @transform_2(%arg0: i32) -> (i32, i32) {
    %c0_i32 = arith.constant 0 : i32
    %c0_i32_0 = arith.constant 0 : i32
    %c0_i32_1 = arith.constant 0 : i32
    return %c0_i32, %c0_i32_0 : i32, i32
  }
  func.func @transform_3(%arg0: i32) -> (i32, i32) {
    %c0_i32 = arith.constant 0 : i32
    %c0_i32_0 = arith.constant 0 : i32
    %c0_i32_1 = arith.constant 0 : i32
    return %c0_i32, %c0_i32_0 : i32, i32
  }
  func.func @transform_4(%arg0: i32) -> (i32, i32) {
    %c0_i32 = arith.constant 0 : i32
    %c0_i32_0 = arith.constant 0 : i32
    %c0_i32_1 = arith.constant 0 : i32
    return %c0_i32, %c0_i32_0 : i32, i32
  }
  func.func @transform_5(%arg0: i32) -> (i32, i32) {
    %c0_i32 = arith.constant 0 : i32
    %c0_i32_0 = arith.constant 0 : i32
    return %arg0, %c0_i32 : i32, i32
  }
}

module attributes {stable_mosaic.version = 11 : i64} {
  func.func @_matmul_bn_prelu_kernel(%arg0: i32, %arg1: memref<32x1125xbf16, #tpu.memory_space<vmem>>, %arg2: memref<1125x128xbf16, #tpu.memory_space<vmem>>, %arg3: memref<1x128xf32, #tpu.memory_space<vmem>>, %arg4: memref<1x128xf32, #tpu.memory_space<vmem>>, %arg5: memref<1x128xf32, #tpu.memory_space<vmem>>, %arg6: memref<32x128xbf16, #tpu.memory_space<vmem>>) attributes {dimension_semantics = [#tpu.dimension_semantics<parallel>], iteration_bounds = array<i64: 1>, scalar_prefetch = 0 : i64, scratch_operands = 0 : i64, tpu.core_type = #tpu.core_type<tc>, window_params = [{transform_indices = @transform_0, window_bounds = array<i64: 32, 1125>}, {pipeline_mode = #tpu.pipeline_mode<synchronous>, transform_indices = @transform_1, window_bounds = array<i64: 1125, 128>}, {pipeline_mode = #tpu.pipeline_mode<synchronous>, transform_indices = @transform_2, window_bounds = array<i64: 1, 128>}, {pipeline_mode = #tpu.pipeline_mode<synchronous>, transform_indices = @transform_3, window_bounds = array<i64: 1, 128>}, {pipeline_mode = #tpu.pipeline_mode<synchronous>, transform_indices = @transform_4, window_bounds = array<i64: 1, 128>}, {transform_indices = @transform_5, window_bounds = array<i64: 32, 128>}]} {
    %c0 = arith.constant 0 : index
    %c0_0 = arith.constant 0 : index
    %0 = vector.load %arg1[%c0, %c0_0] : memref<32x1125xbf16, #tpu.memory_space<vmem>>, vector<32x1125xbf16>
    %c0_1 = arith.constant 0 : index
    %c0_2 = arith.constant 0 : index
    %1 = vector.load %arg2[%c0_1, %c0_2] : memref<1125x128xbf16, #tpu.memory_space<vmem>>, vector<1125x128xbf16>
    %cst = arith.constant dense<0.000000e+00> : vector<32x128xf32>
    %2 = tpu.matmul %0, %1, %cst {dimension_numbers = #tpu.dot_dimension_numbers<[1], [0], [0], [1], [0, 0, 1, 1], [], []>} : vector<32x1125xbf16>, vector<1125x128xbf16>, vector<32x128xf32> -> vector<32x128xf32>
    %c0_3 = arith.constant 0 : index
    %c0_4 = arith.constant 0 : index
    %3 = vector.load %arg3[%c0_3, %c0_4] : memref<1x128xf32, #tpu.memory_space<vmem>>, vector<1x128xf32>
    %4 = vector.broadcast %3 : vector<1x128xf32> to vector<32x128xf32>
    %5 = arith.mulf %2, %4 : vector<32x128xf32>
    %c0_5 = arith.constant 0 : index
    %c0_6 = arith.constant 0 : index
    %6 = vector.load %arg4[%c0_5, %c0_6] : memref<1x128xf32, #tpu.memory_space<vmem>>, vector<1x128xf32>
    %7 = vector.broadcast %6 : vector<1x128xf32> to vector<32x128xf32>
    %8 = arith.addf %5, %7 : vector<32x128xf32>
    %cst_7 = arith.constant 0.000000e+00 : f32
    %9 = vector.broadcast %cst_7 : f32 to vector<32x128xf32>
    %10 = arith.cmpf oge, %8, %9 : vector<32x128xf32>
    %c0_8 = arith.constant 0 : index
    %c0_9 = arith.constant 0 : index
    %11 = vector.load %arg5[%c0_8, %c0_9] : memref<1x128xf32, #tpu.memory_space<vmem>>, vector<1x128xf32>
    %12 = vector.broadcast %11 : vector<1x128xf32> to vector<32x128xf32>
    %13 = arith.mulf %12, %8 : vector<32x128xf32>
    %14 = arith.select %10, %8, %13 : vector<32x128xi1>, vector<32x128xf32>
    %15 = arith.truncf %14 : vector<32x128xf32> to vector<32x128xbf16>
    %c0_10 = arith.constant 0 : index
    %c0_11 = arith.constant 0 : index
    %16 = vector.load %arg6[%c0_10, %c0_11] : memref<32x128xbf16, #tpu.memory_space<vmem>>, vector<32x128xbf16>
    tpu.vector_store %arg6[%c0_10, %c0_11], %15 {strides = array<i32>} : memref<32x128xbf16, #tpu.memory_space<vmem>>, vector<32x128xbf16>,
    return
  }
  func.func @transform_0(%arg0: i32) -> (i32, i32) {
    %c0_i32 = arith.constant 0 : i32
    %c0_i32_0 = arith.constant 0 : i32
    return %arg0, %c0_i32 : i32, i32
  }
  func.func @transform_1(%arg0: i32) -> (i32, i32) {
    %c0_i32 = arith.constant 0 : i32
    %c0_i32_0 = arith.constant 0 : i32
    %c0_i32_1 = arith.constant 0 : i32
    return %c0_i32, %c0_i32_0 : i32, i32
  }
  func.func @transform_2(%arg0: i32) -> (i32, i32) {
    %c0_i32 = arith.constant 0 : i32
    %c0_i32_0 = arith.constant 0 : i32
    %c0_i32_1 = arith.constant 0 : i32
    return %c0_i32, %c0_i32_0 : i32, i32
  }
  func.func @transform_3(%arg0: i32) -> (i32, i32) {
    %c0_i32 = arith.constant 0 : i32
    %c0_i32_0 = arith.constant 0 : i32
    %c0_i32_1 = arith.constant 0 : i32
    return %c0_i32, %c0_i32_0 : i32, i32
  }
  func.func @transform_4(%arg0: i32) -> (i32, i32) {
    %c0_i32 = arith.constant 0 : i32
    %c0_i32_0 = arith.constant 0 : i32
    %c0_i32_1 = arith.constant 0 : i32
    return %c0_i32, %c0_i32_0 : i32, i32
  }
  func.func @transform_5(%arg0: i32) -> (i32, i32) {
    %c0_i32 = arith.constant 0 : i32
    %c0_i32_0 = arith.constant 0 : i32
    return %arg0, %c0_i32 : i32, i32
  }
}

module attributes {stable_mosaic.version = 11 : i64} {
  func.func @_matmul_bn_prelu_kernel(%arg0: i32, %arg1: memref<32x128xbf16, #tpu.memory_space<vmem>>, %arg2: memref<128x128xbf16, #tpu.memory_space<vmem>>, %arg3: memref<1x128xf32, #tpu.memory_space<vmem>>, %arg4: memref<1x128xf32, #tpu.memory_space<vmem>>, %arg5: memref<1x128xf32, #tpu.memory_space<vmem>>, %arg6: memref<32x128xbf16, #tpu.memory_space<vmem>>) attributes {dimension_semantics = [#tpu.dimension_semantics<parallel>], iteration_bounds = array<i64: 1>, scalar_prefetch = 0 : i64, scratch_operands = 0 : i64, tpu.core_type = #tpu.core_type<tc>, window_params = [{transform_indices = @transform_0, window_bounds = array<i64: 32, 128>}, {pipeline_mode = #tpu.pipeline_mode<synchronous>, transform_indices = @transform_1, window_bounds = array<i64: 128, 128>}, {pipeline_mode = #tpu.pipeline_mode<synchronous>, transform_indices = @transform_2, window_bounds = array<i64: 1, 128>}, {pipeline_mode = #tpu.pipeline_mode<synchronous>, transform_indices = @transform_3, window_bounds = array<i64: 1, 128>}, {pipeline_mode = #tpu.pipeline_mode<synchronous>, transform_indices = @transform_4, window_bounds = array<i64: 1, 128>}, {transform_indices = @transform_5, window_bounds = array<i64: 32, 128>}]} {
    %c0 = arith.constant 0 : index
    %c0_0 = arith.constant 0 : index
    %0 = vector.load %arg1[%c0, %c0_0] : memref<32x128xbf16, #tpu.memory_space<vmem>>, vector<32x128xbf16>
    %c0_1 = arith.constant 0 : index
    %c0_2 = arith.constant 0 : index
    %1 = vector.load %arg2[%c0_1, %c0_2] : memref<128x128xbf16, #tpu.memory_space<vmem>>, vector<128x128xbf16>
    %cst = arith.constant dense<0.000000e+00> : vector<32x128xf32>
    %2 = tpu.matmul %0, %1, %cst {dimension_numbers = #tpu.dot_dimension_numbers<[1], [0], [0], [1], [0, 0, 1, 1], [], []>} : vector<32x128xbf16>, vector<128x128xbf16>, vector<32x128xf32> -> vector<32x128xf32>
    %c0_3 = arith.constant 0 : index
    %c0_4 = arith.constant 0 : index
    %3 = vector.load %arg3[%c0_3, %c0_4] : memref<1x128xf32, #tpu.memory_space<vmem>>, vector<1x128xf32>
    %4 = vector.broadcast %3 : vector<1x128xf32> to vector<32x128xf32>
    %5 = arith.mulf %2, %4 : vector<32x128xf32>
    %c0_5 = arith.constant 0 : index
    %c0_6 = arith.constant 0 : index
    %6 = vector.load %arg4[%c0_5, %c0_6] : memref<1x128xf32, #tpu.memory_space<vmem>>, vector<1x128xf32>
    %7 = vector.broadcast %6 : vector<1x128xf32> to vector<32x128xf32>
    %8 = arith.addf %5, %7 : vector<32x128xf32>
    %cst_7 = arith.constant 0.000000e+00 : f32
    %9 = vector.broadcast %cst_7 : f32 to vector<32x128xf32>
    %10 = arith.cmpf oge, %8, %9 : vector<32x128xf32>
    %c0_8 = arith.constant 0 : index
    %c0_9 = arith.constant 0 : index
    %11 = vector.load %arg5[%c0_8, %c0_9] : memref<1x128xf32, #tpu.memory_space<vmem>>, vector<1x128xf32>
    %12 = vector.broadcast %11 : vector<1x128xf32> to vector<32x128xf32>
    %13 = arith.mulf %12, %8 : vector<32x128xf32>
    %14 = arith.select %10, %8, %13 : vector<32x128xi1>, vector<32x128xf32>
    %15 = arith.truncf %14 : vector<32x128xf32> to vector<32x128xbf16>
    %c0_10 = arith.constant 0 : index
    %c0_11 = arith.constant 0 : index
    %16 = vector.load %arg6[%c0_10, %c0_11] : memref<32x128xbf16, #tpu.memory_space<vmem>>, vector<32x128xbf16>
    tpu.vector_store %arg6[%c0_10, %c0_11], %15 {strides = array<i32>} : memref<32x128xbf16, #tpu.memory_space<vmem>>, vector<32x128xbf16>,
    return
  }
  func.func @transform_0(%arg0: i32) -> (i32, i32) {
    %c0_i32 = arith.constant 0 : i32
    %c0_i32_0 = arith.constant 0 : i32
    return %arg0, %c0_i32 : i32, i32
  }
  func.func @transform_1(%arg0: i32) -> (i32, i32) {
    %c0_i32 = arith.constant 0 : i32
    %c0_i32_0 = arith.constant 0 : i32
    %c0_i32_1 = arith.constant 0 : i32
    return %c0_i32, %c0_i32_0 : i32, i32
  }
  func.func @transform_2(%arg0: i32) -> (i32, i32) {
    %c0_i32 = arith.constant 0 : i32
    %c0_i32_0 = arith.constant 0 : i32
    %c0_i32_1 = arith.constant 0 : i32
    return %c0_i32, %c0_i32_0 : i32, i32
  }
  func.func @transform_3(%arg0: i32) -> (i32, i32) {
    %c0_i32 = arith.constant 0 : i32
    %c0_i32_0 = arith.constant 0 : i32
    %c0_i32_1 = arith.constant 0 : i32
    return %c0_i32, %c0_i32_0 : i32, i32
  }
  func.func @transform_4(%arg0: i32) -> (i32, i32) {
    %c0_i32 = arith.constant 0 : i32
    %c0_i32_0 = arith.constant 0 : i32
    %c0_i32_1 = arith.constant 0 : i32
    return %c0_i32, %c0_i32_0 : i32, i32
  }
  func.func @transform_5(%arg0: i32) -> (i32, i32) {
    %c0_i32 = arith.constant 0 : i32
    %c0_i32_0 = arith.constant 0 : i32
    return %arg0, %c0_i32 : i32, i32
  }
}

module attributes {stable_mosaic.version = 11 : i64} {
  func.func @_matmul_res_bn_prelu_kernel(%arg0: i32, %arg1: memref<32x1125xbf16, #tpu.memory_space<vmem>>, %arg2: memref<1125x128xbf16, #tpu.memory_space<vmem>>, %arg3: memref<32x128xbf16, #tpu.memory_space<vmem>>, %arg4: memref<1x128xf32, #tpu.memory_space<vmem>>, %arg5: memref<1x128xf32, #tpu.memory_space<vmem>>, %arg6: memref<1x128xf32, #tpu.memory_space<vmem>>, %arg7: memref<32x128xbf16, #tpu.memory_space<vmem>>) attributes {dimension_semantics = [#tpu.dimension_semantics<parallel>], iteration_bounds = array<i64: 1>, scalar_prefetch = 0 : i64, scratch_operands = 0 : i64, tpu.core_type = #tpu.core_type<tc>, window_params = [{transform_indices = @transform_0, window_bounds = array<i64: 32, 1125>}, {pipeline_mode = #tpu.pipeline_mode<synchronous>, transform_indices = @transform_1, window_bounds = array<i64: 1125, 128>}, {transform_indices = @transform_2, window_bounds = array<i64: 32, 128>}, {pipeline_mode = #tpu.pipeline_mode<synchronous>, transform_indices = @transform_3, window_bounds = array<i64: 1, 128>}, {pipeline_mode = #tpu.pipeline_mode<synchronous>, transform_indices = @transform_4, window_bounds = array<i64: 1, 128>}, {pipeline_mode = #tpu.pipeline_mode<synchronous>, transform_indices = @transform_5, window_bounds = array<i64: 1, 128>}, {transform_indices = @transform_6, window_bounds = array<i64: 32, 128>}]} {
    %c0 = arith.constant 0 : index
    %c0_0 = arith.constant 0 : index
    %0 = vector.load %arg1[%c0, %c0_0] : memref<32x1125xbf16, #tpu.memory_space<vmem>>, vector<32x1125xbf16>
    %c0_1 = arith.constant 0 : index
    %c0_2 = arith.constant 0 : index
    %1 = vector.load %arg2[%c0_1, %c0_2] : memref<1125x128xbf16, #tpu.memory_space<vmem>>, vector<1125x128xbf16>
    %cst = arith.constant dense<0.000000e+00> : vector<32x128xf32>
    %2 = tpu.matmul %0, %1, %cst {dimension_numbers = #tpu.dot_dimension_numbers<[1], [0], [0], [1], [0, 0, 1, 1], [], []>} : vector<32x1125xbf16>, vector<1125x128xbf16>, vector<32x128xf32> -> vector<32x128xf32>
    %c0_3 = arith.constant 0 : index
    %c0_4 = arith.constant 0 : index
    %3 = vector.load %arg3[%c0_3, %c0_4] : memref<32x128xbf16, #tpu.memory_space<vmem>>, vector<32x128xbf16>
    %4 = arith.extf %3 : vector<32x128xbf16> to vector<32x128xf32>
    %5 = arith.addf %2, %4 : vector<32x128xf32>
    %c0_5 = arith.constant 0 : index
    %c0_6 = arith.constant 0 : index
    %6 = vector.load %arg4[%c0_5, %c0_6] : memref<1x128xf32, #tpu.memory_space<vmem>>, vector<1x128xf32>
    %7 = vector.broadcast %6 : vector<1x128xf32> to vector<32x128xf32>
    %8 = arith.mulf %5, %7 : vector<32x128xf32>
    %c0_7 = arith.constant 0 : index
    %c0_8 = arith.constant 0 : index
    %9 = vector.load %arg5[%c0_7, %c0_8] : memref<1x128xf32, #tpu.memory_space<vmem>>, vector<1x128xf32>
    %10 = vector.broadcast %9 : vector<1x128xf32> to vector<32x128xf32>
    %11 = arith.addf %8, %10 : vector<32x128xf32>
    %cst_9 = arith.constant 0.000000e+00 : f32
    %12 = vector.broadcast %cst_9 : f32 to vector<32x128xf32>
    %13 = arith.cmpf oge, %11, %12 : vector<32x128xf32>
    %c0_10 = arith.constant 0 : index
    %c0_11 = arith.constant 0 : index
    %14 = vector.load %arg6[%c0_10, %c0_11] : memref<1x128xf32, #tpu.memory_space<vmem>>, vector<1x128xf32>
    %15 = vector.broadcast %14 : vector<1x128xf32> to vector<32x128xf32>
    %16 = arith.mulf %15, %11 : vector<32x128xf32>
    %17 = arith.select %13, %11, %16 : vector<32x128xi1>, vector<32x128xf32>
    %18 = arith.truncf %17 : vector<32x128xf32> to vector<32x128xbf16>
    %c0_12 = arith.constant 0 : index
    %c0_13 = arith.constant 0 : index
    %19 = vector.load %arg7[%c0_12, %c0_13] : memref<32x128xbf16, #tpu.memory_space<vmem>>, vector<32x128xbf16>
    tpu.vector_store %arg7[%c0_12, %c0_13], %18 {strides = array<i32>} : memref<32x128xbf16, #tpu.memory_space<vmem>>, vector<32x128xbf16>,
    return
  }
  func.func @transform_0(%arg0: i32) -> (i32, i32) {
    %c0_i32 = arith.constant 0 : i32
    %c0_i32_0 = arith.constant 0 : i32
    return %arg0, %c0_i32 : i32, i32
  }
  func.func @transform_1(%arg0: i32) -> (i32, i32) {
    %c0_i32 = arith.constant 0 : i32
    %c0_i32_0 = arith.constant 0 : i32
    %c0_i32_1 = arith.constant 0 : i32
    return %c0_i32, %c0_i32_0 : i32, i32
  }
  func.func @transform_2(%arg0: i32) -> (i32, i32) {
    %c0_i32 = arith.constant 0 : i32
    %c0_i32_0 = arith.constant 0 : i32
    return %arg0, %c0_i32 : i32, i32
  }
  func.func @transform_3(%arg0: i32) -> (i32, i32) {
    %c0_i32 = arith.constant 0 : i32
    %c0_i32_0 = arith.constant 0 : i32
    %c0_i32_1 = arith.constant 0 : i32
    return %c0_i32, %c0_i32_0 : i32, i32
  }
  func.func @transform_4(%arg0: i32) -> (i32, i32) {
    %c0_i32 = arith.constant 0 : i32
    %c0_i32_0 = arith.constant 0 : i32
    %c0_i32_1 = arith.constant 0 : i32
    return %c0_i32, %c0_i32_0 : i32, i32
  }
  func.func @transform_5(%arg0: i32) -> (i32, i32) {
    %c0_i32 = arith.constant 0 : i32
    %c0_i32_0 = arith.constant 0 : i32
    %c0_i32_1 = arith.constant 0 : i32
    return %c0_i32, %c0_i32_0 : i32, i32
  }
  func.func @transform_6(%arg0: i32) -> (i32, i32) {
    %c0_i32 = arith.constant 0 : i32
    %c0_i32_0 = arith.constant 0 : i32
    return %arg0, %c0_i32 : i32, i32
  }
}

module attributes {stable_mosaic.version = 11 : i64} {
  func.func @_matmul_bn_prelu_kernel(%arg0: i32, %arg1: memref<32x256xbf16, #tpu.memory_space<vmem>>, %arg2: memref<256x128xbf16, #tpu.memory_space<vmem>>, %arg3: memref<1x128xf32, #tpu.memory_space<vmem>>, %arg4: memref<1x128xf32, #tpu.memory_space<vmem>>, %arg5: memref<1x128xf32, #tpu.memory_space<vmem>>, %arg6: memref<32x128xbf16, #tpu.memory_space<vmem>>) attributes {dimension_semantics = [#tpu.dimension_semantics<parallel>], iteration_bounds = array<i64: 1>, scalar_prefetch = 0 : i64, scratch_operands = 0 : i64, tpu.core_type = #tpu.core_type<tc>, window_params = [{transform_indices = @transform_0, window_bounds = array<i64: 32, 256>}, {pipeline_mode = #tpu.pipeline_mode<synchronous>, transform_indices = @transform_1, window_bounds = array<i64: 256, 128>}, {pipeline_mode = #tpu.pipeline_mode<synchronous>, transform_indices = @transform_2, window_bounds = array<i64: 1, 128>}, {pipeline_mode = #tpu.pipeline_mode<synchronous>, transform_indices = @transform_3, window_bounds = array<i64: 1, 128>}, {pipeline_mode = #tpu.pipeline_mode<synchronous>, transform_indices = @transform_4, window_bounds = array<i64: 1, 128>}, {transform_indices = @transform_5, window_bounds = array<i64: 32, 128>}]} {
    %c0 = arith.constant 0 : index
    %c0_0 = arith.constant 0 : index
    %0 = vector.load %arg1[%c0, %c0_0] : memref<32x256xbf16, #tpu.memory_space<vmem>>, vector<32x256xbf16>
    %c0_1 = arith.constant 0 : index
    %c0_2 = arith.constant 0 : index
    %1 = vector.load %arg2[%c0_1, %c0_2] : memref<256x128xbf16, #tpu.memory_space<vmem>>, vector<256x128xbf16>
    %cst = arith.constant dense<0.000000e+00> : vector<32x128xf32>
    %2 = tpu.matmul %0, %1, %cst {dimension_numbers = #tpu.dot_dimension_numbers<[1], [0], [0], [1], [0, 0, 1, 1], [], []>} : vector<32x256xbf16>, vector<256x128xbf16>, vector<32x128xf32> -> vector<32x128xf32>
    %c0_3 = arith.constant 0 : index
    %c0_4 = arith.constant 0 : index
    %3 = vector.load %arg3[%c0_3, %c0_4] : memref<1x128xf32, #tpu.memory_space<vmem>>, vector<1x128xf32>
    %4 = vector.broadcast %3 : vector<1x128xf32> to vector<32x128xf32>
    %5 = arith.mulf %2, %4 : vector<32x128xf32>
    %c0_5 = arith.constant 0 : index
    %c0_6 = arith.constant 0 : index
    %6 = vector.load %arg4[%c0_5, %c0_6] : memref<1x128xf32, #tpu.memory_space<vmem>>, vector<1x128xf32>
    %7 = vector.broadcast %6 : vector<1x128xf32> to vector<32x128xf32>
    %8 = arith.addf %5, %7 : vector<32x128xf32>
    %cst_7 = arith.constant 0.000000e+00 : f32
    %9 = vector.broadcast %cst_7 : f32 to vector<32x128xf32>
    %10 = arith.cmpf oge, %8, %9 : vector<32x128xf32>
    %c0_8 = arith.constant 0 : index
    %c0_9 = arith.constant 0 : index
    %11 = vector.load %arg5[%c0_8, %c0_9] : memref<1x128xf32, #tpu.memory_space<vmem>>, vector<1x128xf32>
    %12 = vector.broadcast %11 : vector<1x128xf32> to vector<32x128xf32>
    %13 = arith.mulf %12, %8 : vector<32x128xf32>
    %14 = arith.select %10, %8, %13 : vector<32x128xi1>, vector<32x128xf32>
    %15 = arith.truncf %14 : vector<32x128xf32> to vector<32x128xbf16>
    %c0_10 = arith.constant 0 : index
    %c0_11 = arith.constant 0 : index
    %16 = vector.load %arg6[%c0_10, %c0_11] : memref<32x128xbf16, #tpu.memory_space<vmem>>, vector<32x128xbf16>
    tpu.vector_store %arg6[%c0_10, %c0_11], %15 {strides = array<i32>} : memref<32x128xbf16, #tpu.memory_space<vmem>>, vector<32x128xbf16>,
    return
  }
  func.func @transform_0(%arg0: i32) -> (i32, i32) {
    %c0_i32 = arith.constant 0 : i32
    %c0_i32_0 = arith.constant 0 : i32
    return %arg0, %c0_i32 : i32, i32
  }
  func.func @transform_1(%arg0: i32) -> (i32, i32) {
    %c0_i32 = arith.constant 0 : i32
    %c0_i32_0 = arith.constant 0 : i32
    %c0_i32_1 = arith.constant 0 : i32
    return %c0_i32, %c0_i32_0 : i32, i32
  }
  func.func @transform_2(%arg0: i32) -> (i32, i32) {
    %c0_i32 = arith.constant 0 : i32
    %c0_i32_0 = arith.constant 0 : i32
    %c0_i32_1 = arith.constant 0 : i32
    return %c0_i32, %c0_i32_0 : i32, i32
  }
  func.func @transform_3(%arg0: i32) -> (i32, i32) {
    %c0_i32 = arith.constant 0 : i32
    %c0_i32_0 = arith.constant 0 : i32
    %c0_i32_1 = arith.constant 0 : i32
    return %c0_i32, %c0_i32_0 : i32, i32
  }
  func.func @transform_4(%arg0: i32) -> (i32, i32) {
    %c0_i32 = arith.constant 0 : i32
    %c0_i32_0 = arith.constant 0 : i32
    %c0_i32_1 = arith.constant 0 : i32
    return %c0_i32, %c0_i32_0 : i32, i32
  }
  func.func @transform_5(%arg0: i32) -> (i32, i32) {
    %c0_i32 = arith.constant 0 : i32
    %c0_i32_0 = arith.constant 0 : i32
    return %arg0, %c0_i32 : i32, i32
  }
}

module attributes {stable_mosaic.version = 11 : i64} {
  func.func @_matmul_bn_prelu_kernel(%arg0: i32, %arg1: memref<32x10xbf16, #tpu.memory_space<vmem>>, %arg2: memref<10x128xbf16, #tpu.memory_space<vmem>>, %arg3: memref<1x128xf32, #tpu.memory_space<vmem>>, %arg4: memref<1x128xf32, #tpu.memory_space<vmem>>, %arg5: memref<1x128xf32, #tpu.memory_space<vmem>>, %arg6: memref<32x128xbf16, #tpu.memory_space<vmem>>) attributes {dimension_semantics = [#tpu.dimension_semantics<parallel>], iteration_bounds = array<i64: 1>, scalar_prefetch = 0 : i64, scratch_operands = 0 : i64, tpu.core_type = #tpu.core_type<tc>, window_params = [{transform_indices = @transform_0, window_bounds = array<i64: 32, 10>}, {pipeline_mode = #tpu.pipeline_mode<synchronous>, transform_indices = @transform_1, window_bounds = array<i64: 10, 128>}, {pipeline_mode = #tpu.pipeline_mode<synchronous>, transform_indices = @transform_2, window_bounds = array<i64: 1, 128>}, {pipeline_mode = #tpu.pipeline_mode<synchronous>, transform_indices = @transform_3, window_bounds = array<i64: 1, 128>}, {pipeline_mode = #tpu.pipeline_mode<synchronous>, transform_indices = @transform_4, window_bounds = array<i64: 1, 128>}, {transform_indices = @transform_5, window_bounds = array<i64: 32, 128>}]} {
    %c0 = arith.constant 0 : index
    %c0_0 = arith.constant 0 : index
    %0 = vector.load %arg1[%c0, %c0_0] : memref<32x10xbf16, #tpu.memory_space<vmem>>, vector<32x10xbf16>
    %c0_1 = arith.constant 0 : index
    %c0_2 = arith.constant 0 : index
    %1 = vector.load %arg2[%c0_1, %c0_2] : memref<10x128xbf16, #tpu.memory_space<vmem>>, vector<10x128xbf16>
    %cst = arith.constant dense<0.000000e+00> : vector<32x128xf32>
    %2 = tpu.matmul %0, %1, %cst {dimension_numbers = #tpu.dot_dimension_numbers<[1], [0], [0], [1], [0, 0, 1, 1], [], []>} : vector<32x10xbf16>, vector<10x128xbf16>, vector<32x128xf32> -> vector<32x128xf32>
    %c0_3 = arith.constant 0 : index
    %c0_4 = arith.constant 0 : index
    %3 = vector.load %arg3[%c0_3, %c0_4] : memref<1x128xf32, #tpu.memory_space<vmem>>, vector<1x128xf32>
    %4 = vector.broadcast %3 : vector<1x128xf32> to vector<32x128xf32>
    %5 = arith.mulf %2, %4 : vector<32x128xf32>
    %c0_5 = arith.constant 0 : index
    %c0_6 = arith.constant 0 : index
    %6 = vector.load %arg4[%c0_5, %c0_6] : memref<1x128xf32, #tpu.memory_space<vmem>>, vector<1x128xf32>
    %7 = vector.broadcast %6 : vector<1x128xf32> to vector<32x128xf32>
    %8 = arith.addf %5, %7 : vector<32x128xf32>
    %cst_7 = arith.constant 0.000000e+00 : f32
    %9 = vector.broadcast %cst_7 : f32 to vector<32x128xf32>
    %10 = arith.cmpf oge, %8, %9 : vector<32x128xf32>
    %c0_8 = arith.constant 0 : index
    %c0_9 = arith.constant 0 : index
    %11 = vector.load %arg5[%c0_8, %c0_9] : memref<1x128xf32, #tpu.memory_space<vmem>>, vector<1x128xf32>
    %12 = vector.broadcast %11 : vector<1x128xf32> to vector<32x128xf32>
    %13 = arith.mulf %12, %8 : vector<32x128xf32>
    %14 = arith.select %10, %8, %13 : vector<32x128xi1>, vector<32x128xf32>
    %15 = arith.truncf %14 : vector<32x128xf32> to vector<32x128xbf16>
    %c0_10 = arith.constant 0 : index
    %c0_11 = arith.constant 0 : index
    %16 = vector.load %arg6[%c0_10, %c0_11] : memref<32x128xbf16, #tpu.memory_space<vmem>>, vector<32x128xbf16>
    tpu.vector_store %arg6[%c0_10, %c0_11], %15 {strides = array<i32>} : memref<32x128xbf16, #tpu.memory_space<vmem>>, vector<32x128xbf16>,
    return
  }
  func.func @transform_0(%arg0: i32) -> (i32, i32) {
    %c0_i32 = arith.constant 0 : i32
    %c0_i32_0 = arith.constant 0 : i32
    return %arg0, %c0_i32 : i32, i32
  }
  func.func @transform_1(%arg0: i32) -> (i32, i32) {
    %c0_i32 = arith.constant 0 : i32
    %c0_i32_0 = arith.constant 0 : i32
    %c0_i32_1 = arith.constant 0 : i32
    return %c0_i32, %c0_i32_0 : i32, i32
  }
  func.func @transform_2(%arg0: i32) -> (i32, i32) {
    %c0_i32 = arith.constant 0 : i32
    %c0_i32_0 = arith.constant 0 : i32
    %c0_i32_1 = arith.constant 0 : i32
    return %c0_i32, %c0_i32_0 : i32, i32
  }
  func.func @transform_3(%arg0: i32) -> (i32, i32) {
    %c0_i32 = arith.constant 0 : i32
    %c0_i32_0 = arith.constant 0 : i32
    %c0_i32_1 = arith.constant 0 : i32
    return %c0_i32, %c0_i32_0 : i32, i32
  }
  func.func @transform_4(%arg0: i32) -> (i32, i32) {
    %c0_i32 = arith.constant 0 : i32
    %c0_i32_0 = arith.constant 0 : i32
    %c0_i32_1 = arith.constant 0 : i32
    return %c0_i32, %c0_i32_0 : i32, i32
  }
  func.func @transform_5(%arg0: i32) -> (i32, i32) {
    %c0_i32 = arith.constant 0 : i32
    %c0_i32_0 = arith.constant 0 : i32
    return %arg0, %c0_i32 : i32, i32
  }
}

module attributes {stable_mosaic.version = 11 : i64} {
  func.func @_matmul_bn_prelu_kernel(%arg0: i32, %arg1: memref<128x20xbf16, #tpu.memory_space<vmem>>, %arg2: memref<20x128xbf16, #tpu.memory_space<vmem>>, %arg3: memref<1x128xf32, #tpu.memory_space<vmem>>, %arg4: memref<1x128xf32, #tpu.memory_space<vmem>>, %arg5: memref<1x128xf32, #tpu.memory_space<vmem>>, %arg6: memref<128x128xbf16, #tpu.memory_space<vmem>>) attributes {dimension_semantics = [#tpu.dimension_semantics<parallel>], iteration_bounds = array<i64: 1>, scalar_prefetch = 0 : i64, scratch_operands = 0 : i64, tpu.core_type = #tpu.core_type<tc>, window_params = [{transform_indices = @transform_0, window_bounds = array<i64: 128, 20>}, {pipeline_mode = #tpu.pipeline_mode<synchronous>, transform_indices = @transform_1, window_bounds = array<i64: 20, 128>}, {pipeline_mode = #tpu.pipeline_mode<synchronous>, transform_indices = @transform_2, window_bounds = array<i64: 1, 128>}, {pipeline_mode = #tpu.pipeline_mode<synchronous>, transform_indices = @transform_3, window_bounds = array<i64: 1, 128>}, {pipeline_mode = #tpu.pipeline_mode<synchronous>, transform_indices = @transform_4, window_bounds = array<i64: 1, 128>}, {transform_indices = @transform_5, window_bounds = array<i64: 128, 128>}]} {
    %c0 = arith.constant 0 : index
    %c0_0 = arith.constant 0 : index
    %0 = vector.load %arg1[%c0, %c0_0] : memref<128x20xbf16, #tpu.memory_space<vmem>>, vector<128x20xbf16>
    %c0_1 = arith.constant 0 : index
    %c0_2 = arith.constant 0 : index
    %1 = vector.load %arg2[%c0_1, %c0_2] : memref<20x128xbf16, #tpu.memory_space<vmem>>, vector<20x128xbf16>
    %cst = arith.constant dense<0.000000e+00> : vector<128x128xf32>
    %2 = tpu.matmul %0, %1, %cst {dimension_numbers = #tpu.dot_dimension_numbers<[1], [0], [0], [1], [0, 0, 1, 1], [], []>} : vector<128x20xbf16>, vector<20x128xbf16>, vector<128x128xf32> -> vector<128x128xf32>
    %c0_3 = arith.constant 0 : index
    %c0_4 = arith.constant 0 : index
    %3 = vector.load %arg3[%c0_3, %c0_4] : memref<1x128xf32, #tpu.memory_space<vmem>>, vector<1x128xf32>
    %4 = vector.broadcast %3 : vector<1x128xf32> to vector<128x128xf32>
    %5 = arith.mulf %2, %4 : vector<128x128xf32>
    %c0_5 = arith.constant 0 : index
    %c0_6 = arith.constant 0 : index
    %6 = vector.load %arg4[%c0_5, %c0_6] : memref<1x128xf32, #tpu.memory_space<vmem>>, vector<1x128xf32>
    %7 = vector.broadcast %6 : vector<1x128xf32> to vector<128x128xf32>
    %8 = arith.addf %5, %7 : vector<128x128xf32>
    %cst_7 = arith.constant 0.000000e+00 : f32
    %9 = vector.broadcast %cst_7 : f32 to vector<128x128xf32>
    %10 = arith.cmpf oge, %8, %9 : vector<128x128xf32>
    %c0_8 = arith.constant 0 : index
    %c0_9 = arith.constant 0 : index
    %11 = vector.load %arg5[%c0_8, %c0_9] : memref<1x128xf32, #tpu.memory_space<vmem>>, vector<1x128xf32>
    %12 = vector.broadcast %11 : vector<1x128xf32> to vector<128x128xf32>
    %13 = arith.mulf %12, %8 : vector<128x128xf32>
    %14 = arith.select %10, %8, %13 : vector<128x128xi1>, vector<128x128xf32>
    %15 = arith.truncf %14 : vector<128x128xf32> to vector<128x128xbf16>
    %c0_10 = arith.constant 0 : index
    %c0_11 = arith.constant 0 : index
    %16 = vector.load %arg6[%c0_10, %c0_11] : memref<128x128xbf16, #tpu.memory_space<vmem>>, vector<128x128xbf16>
    tpu.vector_store %arg6[%c0_10, %c0_11], %15 {strides = array<i32>} : memref<128x128xbf16, #tpu.memory_space<vmem>>, vector<128x128xbf16>,
    return
  }
  func.func @transform_0(%arg0: i32) -> (i32, i32) {
    %c0_i32 = arith.constant 0 : i32
    %c0_i32_0 = arith.constant 0 : i32
    return %arg0, %c0_i32 : i32, i32
  }
  func.func @transform_1(%arg0: i32) -> (i32, i32) {
    %c0_i32 = arith.constant 0 : i32
    %c0_i32_0 = arith.constant 0 : i32
    %c0_i32_1 = arith.constant 0 : i32
    return %c0_i32, %c0_i32_0 : i32, i32
  }
  func.func @transform_2(%arg0: i32) -> (i32, i32) {
    %c0_i32 = arith.constant 0 : i32
    %c0_i32_0 = arith.constant 0 : i32
    %c0_i32_1 = arith.constant 0 : i32
    return %c0_i32, %c0_i32_0 : i32, i32
  }
  func.func @transform_3(%arg0: i32) -> (i32, i32) {
    %c0_i32 = arith.constant 0 : i32
    %c0_i32_0 = arith.constant 0 : i32
    %c0_i32_1 = arith.constant 0 : i32
    return %c0_i32, %c0_i32_0 : i32, i32
  }
  func.func @transform_4(%arg0: i32) -> (i32, i32) {
    %c0_i32 = arith.constant 0 : i32
    %c0_i32_0 = arith.constant 0 : i32
    %c0_i32_1 = arith.constant 0 : i32
    return %c0_i32, %c0_i32_0 : i32, i32
  }
  func.func @transform_5(%arg0: i32) -> (i32, i32) {
    %c0_i32 = arith.constant 0 : i32
    %c0_i32_0 = arith.constant 0 : i32
    return %arg0, %c0_i32 : i32, i32
  }
}

module attributes {stable_mosaic.version = 11 : i64} {
  func.func @_matmul_bn_prelu_kernel(%arg0: i32, %arg1: memref<128x90xbf16, #tpu.memory_space<vmem>>, %arg2: memref<90x128xbf16, #tpu.memory_space<vmem>>, %arg3: memref<1x128xf32, #tpu.memory_space<vmem>>, %arg4: memref<1x128xf32, #tpu.memory_space<vmem>>, %arg5: memref<1x128xf32, #tpu.memory_space<vmem>>, %arg6: memref<128x128xbf16, #tpu.memory_space<vmem>>) attributes {dimension_semantics = [#tpu.dimension_semantics<parallel>], iteration_bounds = array<i64: 1>, scalar_prefetch = 0 : i64, scratch_operands = 0 : i64, tpu.core_type = #tpu.core_type<tc>, window_params = [{transform_indices = @transform_0, window_bounds = array<i64: 128, 90>}, {pipeline_mode = #tpu.pipeline_mode<synchronous>, transform_indices = @transform_1, window_bounds = array<i64: 90, 128>}, {pipeline_mode = #tpu.pipeline_mode<synchronous>, transform_indices = @transform_2, window_bounds = array<i64: 1, 128>}, {pipeline_mode = #tpu.pipeline_mode<synchronous>, transform_indices = @transform_3, window_bounds = array<i64: 1, 128>}, {pipeline_mode = #tpu.pipeline_mode<synchronous>, transform_indices = @transform_4, window_bounds = array<i64: 1, 128>}, {transform_indices = @transform_5, window_bounds = array<i64: 128, 128>}]} {
    %c0 = arith.constant 0 : index
    %c0_0 = arith.constant 0 : index
    %0 = vector.load %arg1[%c0, %c0_0] : memref<128x90xbf16, #tpu.memory_space<vmem>>, vector<128x90xbf16>
    %c0_1 = arith.constant 0 : index
    %c0_2 = arith.constant 0 : index
    %1 = vector.load %arg2[%c0_1, %c0_2] : memref<90x128xbf16, #tpu.memory_space<vmem>>, vector<90x128xbf16>
    %cst = arith.constant dense<0.000000e+00> : vector<128x128xf32>
    %2 = tpu.matmul %0, %1, %cst {dimension_numbers = #tpu.dot_dimension_numbers<[1], [0], [0], [1], [0, 0, 1, 1], [], []>} : vector<128x90xbf16>, vector<90x128xbf16>, vector<128x128xf32> -> vector<128x128xf32>
    %c0_3 = arith.constant 0 : index
    %c0_4 = arith.constant 0 : index
    %3 = vector.load %arg3[%c0_3, %c0_4] : memref<1x128xf32, #tpu.memory_space<vmem>>, vector<1x128xf32>
    %4 = vector.broadcast %3 : vector<1x128xf32> to vector<128x128xf32>
    %5 = arith.mulf %2, %4 : vector<128x128xf32>
    %c0_5 = arith.constant 0 : index
    %c0_6 = arith.constant 0 : index
    %6 = vector.load %arg4[%c0_5, %c0_6] : memref<1x128xf32, #tpu.memory_space<vmem>>, vector<1x128xf32>
    %7 = vector.broadcast %6 : vector<1x128xf32> to vector<128x128xf32>
    %8 = arith.addf %5, %7 : vector<128x128xf32>
    %cst_7 = arith.constant 0.000000e+00 : f32
    %9 = vector.broadcast %cst_7 : f32 to vector<128x128xf32>
    %10 = arith.cmpf oge, %8, %9 : vector<128x128xf32>
    %c0_8 = arith.constant 0 : index
    %c0_9 = arith.constant 0 : index
    %11 = vector.load %arg5[%c0_8, %c0_9] : memref<1x128xf32, #tpu.memory_space<vmem>>, vector<1x128xf32>
    %12 = vector.broadcast %11 : vector<1x128xf32> to vector<128x128xf32>
    %13 = arith.mulf %12, %8 : vector<128x128xf32>
    %14 = arith.select %10, %8, %13 : vector<128x128xi1>, vector<128x128xf32>
    %15 = arith.truncf %14 : vector<128x128xf32> to vector<128x128xbf16>
    %c0_10 = arith.constant 0 : index
    %c0_11 = arith.constant 0 : index
    %16 = vector.load %arg6[%c0_10, %c0_11] : memref<128x128xbf16, #tpu.memory_space<vmem>>, vector<128x128xbf16>
    tpu.vector_store %arg6[%c0_10, %c0_11], %15 {strides = array<i32>} : memref<128x128xbf16, #tpu.memory_space<vmem>>, vector<128x128xbf16>,
    return
  }
  func.func @transform_0(%arg0: i32) -> (i32, i32) {
    %c0_i32 = arith.constant 0 : i32
    %c0_i32_0 = arith.constant 0 : i32
    return %arg0, %c0_i32 : i32, i32
  }
  func.func @transform_1(%arg0: i32) -> (i32, i32) {
    %c0_i32 = arith.constant 0 : i32
    %c0_i32_0 = arith.constant 0 : i32
    %c0_i32_1 = arith.constant 0 : i32
    return %c0_i32, %c0_i32_0 : i32, i32
  }
  func.func @transform_2(%arg0: i32) -> (i32, i32) {
    %c0_i32 = arith.constant 0 : i32
    %c0_i32_0 = arith.constant 0 : i32
    %c0_i32_1 = arith.constant 0 : i32
    return %c0_i32, %c0_i32_0 : i32, i32
  }
  func.func @transform_3(%arg0: i32) -> (i32, i32) {
    %c0_i32 = arith.constant 0 : i32
    %c0_i32_0 = arith.constant 0 : i32
    %c0_i32_1 = arith.constant 0 : i32
    return %c0_i32, %c0_i32_0 : i32, i32
  }
  func.func @transform_4(%arg0: i32) -> (i32, i32) {
    %c0_i32 = arith.constant 0 : i32
    %c0_i32_0 = arith.constant 0 : i32
    %c0_i32_1 = arith.constant 0 : i32
    return %c0_i32, %c0_i32_0 : i32, i32
  }
  func.func @transform_5(%arg0: i32) -> (i32, i32) {
    %c0_i32 = arith.constant 0 : i32
    %c0_i32_0 = arith.constant 0 : i32
    return %arg0, %c0_i32 : i32, i32
  }
}

module attributes {stable_mosaic.version = 11 : i64} {
  func.func @_matmul_bn_prelu_kernel(%arg0: i32, %arg1: memref<128x10xbf16, #tpu.memory_space<vmem>>, %arg2: memref<10x128xbf16, #tpu.memory_space<vmem>>, %arg3: memref<1x128xf32, #tpu.memory_space<vmem>>, %arg4: memref<1x128xf32, #tpu.memory_space<vmem>>, %arg5: memref<1x128xf32, #tpu.memory_space<vmem>>, %arg6: memref<128x128xbf16, #tpu.memory_space<vmem>>) attributes {dimension_semantics = [#tpu.dimension_semantics<parallel>], iteration_bounds = array<i64: 1>, scalar_prefetch = 0 : i64, scratch_operands = 0 : i64, tpu.core_type = #tpu.core_type<tc>, window_params = [{transform_indices = @transform_0, window_bounds = array<i64: 128, 10>}, {pipeline_mode = #tpu.pipeline_mode<synchronous>, transform_indices = @transform_1, window_bounds = array<i64: 10, 128>}, {pipeline_mode = #tpu.pipeline_mode<synchronous>, transform_indices = @transform_2, window_bounds = array<i64: 1, 128>}, {pipeline_mode = #tpu.pipeline_mode<synchronous>, transform_indices = @transform_3, window_bounds = array<i64: 1, 128>}, {pipeline_mode = #tpu.pipeline_mode<synchronous>, transform_indices = @transform_4, window_bounds = array<i64: 1, 128>}, {transform_indices = @transform_5, window_bounds = array<i64: 128, 128>}]} {
    %c0 = arith.constant 0 : index
    %c0_0 = arith.constant 0 : index
    %0 = vector.load %arg1[%c0, %c0_0] : memref<128x10xbf16, #tpu.memory_space<vmem>>, vector<128x10xbf16>
    %c0_1 = arith.constant 0 : index
    %c0_2 = arith.constant 0 : index
    %1 = vector.load %arg2[%c0_1, %c0_2] : memref<10x128xbf16, #tpu.memory_space<vmem>>, vector<10x128xbf16>
    %cst = arith.constant dense<0.000000e+00> : vector<128x128xf32>
    %2 = tpu.matmul %0, %1, %cst {dimension_numbers = #tpu.dot_dimension_numbers<[1], [0], [0], [1], [0, 0, 1, 1], [], []>} : vector<128x10xbf16>, vector<10x128xbf16>, vector<128x128xf32> -> vector<128x128xf32>
    %c0_3 = arith.constant 0 : index
    %c0_4 = arith.constant 0 : index
    %3 = vector.load %arg3[%c0_3, %c0_4] : memref<1x128xf32, #tpu.memory_space<vmem>>, vector<1x128xf32>
    %4 = vector.broadcast %3 : vector<1x128xf32> to vector<128x128xf32>
    %5 = arith.mulf %2, %4 : vector<128x128xf32>
    %c0_5 = arith.constant 0 : index
    %c0_6 = arith.constant 0 : index
    %6 = vector.load %arg4[%c0_5, %c0_6] : memref<1x128xf32, #tpu.memory_space<vmem>>, vector<1x128xf32>
    %7 = vector.broadcast %6 : vector<1x128xf32> to vector<128x128xf32>
    %8 = arith.addf %5, %7 : vector<128x128xf32>
    %cst_7 = arith.constant 0.000000e+00 : f32
    %9 = vector.broadcast %cst_7 : f32 to vector<128x128xf32>
    %10 = arith.cmpf oge, %8, %9 : vector<128x128xf32>
    %c0_8 = arith.constant 0 : index
    %c0_9 = arith.constant 0 : index
    %11 = vector.load %arg5[%c0_8, %c0_9] : memref<1x128xf32, #tpu.memory_space<vmem>>, vector<1x128xf32>
    %12 = vector.broadcast %11 : vector<1x128xf32> to vector<128x128xf32>
    %13 = arith.mulf %12, %8 : vector<128x128xf32>
    %14 = arith.select %10, %8, %13 : vector<128x128xi1>, vector<128x128xf32>
    %15 = arith.truncf %14 : vector<128x128xf32> to vector<128x128xbf16>
    %c0_10 = arith.constant 0 : index
    %c0_11 = arith.constant 0 : index
    %16 = vector.load %arg6[%c0_10, %c0_11] : memref<128x128xbf16, #tpu.memory_space<vmem>>, vector<128x128xbf16>
    tpu.vector_store %arg6[%c0_10, %c0_11], %15 {strides = array<i32>} : memref<128x128xbf16, #tpu.memory_space<vmem>>, vector<128x128xbf16>,
    return
  }
  func.func @transform_0(%arg0: i32) -> (i32, i32) {
    %c0_i32 = arith.constant 0 : i32
    %c0_i32_0 = arith.constant 0 : i32
    return %arg0, %c0_i32 : i32, i32
  }
  func.func @transform_1(%arg0: i32) -> (i32, i32) {
    %c0_i32 = arith.constant 0 : i32
    %c0_i32_0 = arith.constant 0 : i32
    %c0_i32_1 = arith.constant 0 : i32
    return %c0_i32, %c0_i32_0 : i32, i32
  }
  func.func @transform_2(%arg0: i32) -> (i32, i32) {
    %c0_i32 = arith.constant 0 : i32
    %c0_i32_0 = arith.constant 0 : i32
    %c0_i32_1 = arith.constant 0 : i32
    return %c0_i32, %c0_i32_0 : i32, i32
  }
  func.func @transform_3(%arg0: i32) -> (i32, i32) {
    %c0_i32 = arith.constant 0 : i32
    %c0_i32_0 = arith.constant 0 : i32
    %c0_i32_1 = arith.constant 0 : i32
    return %c0_i32, %c0_i32_0 : i32, i32
  }
  func.func @transform_4(%arg0: i32) -> (i32, i32) {
    %c0_i32 = arith.constant 0 : i32
    %c0_i32_0 = arith.constant 0 : i32
    %c0_i32_1 = arith.constant 0 : i32
    return %c0_i32, %c0_i32_0 : i32, i32
  }
  func.func @transform_5(%arg0: i32) -> (i32, i32) {
    %c0_i32 = arith.constant 0 : i32
    %c0_i32_0 = arith.constant 0 : i32
    return %arg0, %c0_i32 : i32, i32
  }
}

module attributes {stable_mosaic.version = 11 : i64} {
  func.func @_matmul_bn_prelu_kernel(%arg0: i32, %arg1: memref<256x10xbf16, #tpu.memory_space<vmem>>, %arg2: memref<10x128xbf16, #tpu.memory_space<vmem>>, %arg3: memref<1x128xf32, #tpu.memory_space<vmem>>, %arg4: memref<1x128xf32, #tpu.memory_space<vmem>>, %arg5: memref<1x128xf32, #tpu.memory_space<vmem>>, %arg6: memref<256x128xf32, #tpu.memory_space<vmem>>) attributes {dimension_semantics = [#tpu.dimension_semantics<parallel>], iteration_bounds = array<i64: 2>, scalar_prefetch = 0 : i64, scratch_operands = 0 : i64, tpu.core_type = #tpu.core_type<tc>, window_params = [{transform_indices = @transform_0, window_bounds = array<i64: 256, 10>}, {pipeline_mode = #tpu.pipeline_mode<synchronous>, transform_indices = @transform_1, window_bounds = array<i64: 10, 128>}, {pipeline_mode = #tpu.pipeline_mode<synchronous>, transform_indices = @transform_2, window_bounds = array<i64: 1, 128>}, {pipeline_mode = #tpu.pipeline_mode<synchronous>, transform_indices = @transform_3, window_bounds = array<i64: 1, 128>}, {pipeline_mode = #tpu.pipeline_mode<synchronous>, transform_indices = @transform_4, window_bounds = array<i64: 1, 128>}, {transform_indices = @transform_5, window_bounds = array<i64: 256, 128>}]} {
    %c0 = arith.constant 0 : index
    %c0_0 = arith.constant 0 : index
    %0 = vector.load %arg1[%c0, %c0_0] : memref<256x10xbf16, #tpu.memory_space<vmem>>, vector<256x10xbf16>
    %c0_1 = arith.constant 0 : index
    %c0_2 = arith.constant 0 : index
    %1 = vector.load %arg2[%c0_1, %c0_2] : memref<10x128xbf16, #tpu.memory_space<vmem>>, vector<10x128xbf16>
    %cst = arith.constant dense<0.000000e+00> : vector<256x128xf32>
    %2 = tpu.matmul %0, %1, %cst {dimension_numbers = #tpu.dot_dimension_numbers<[1], [0], [0], [1], [0, 0, 1, 1], [], []>} : vector<256x10xbf16>, vector<10x128xbf16>, vector<256x128xf32> -> vector<256x128xf32>
    %c0_3 = arith.constant 0 : index
    %c0_4 = arith.constant 0 : index
    %3 = vector.load %arg3[%c0_3, %c0_4] : memref<1x128xf32, #tpu.memory_space<vmem>>, vector<1x128xf32>
    %4 = vector.broadcast %3 : vector<1x128xf32> to vector<256x128xf32>
    %5 = arith.mulf %2, %4 : vector<256x128xf32>
    %c0_5 = arith.constant 0 : index
    %c0_6 = arith.constant 0 : index
    %6 = vector.load %arg4[%c0_5, %c0_6] : memref<1x128xf32, #tpu.memory_space<vmem>>, vector<1x128xf32>
    %7 = vector.broadcast %6 : vector<1x128xf32> to vector<256x128xf32>
    %8 = arith.addf %5, %7 : vector<256x128xf32>
    %cst_7 = arith.constant 0.000000e+00 : f32
    %9 = vector.broadcast %cst_7 : f32 to vector<256x128xf32>
    %10 = arith.cmpf oge, %8, %9 : vector<256x128xf32>
    %c0_8 = arith.constant 0 : index
    %c0_9 = arith.constant 0 : index
    %11 = vector.load %arg5[%c0_8, %c0_9] : memref<1x128xf32, #tpu.memory_space<vmem>>, vector<1x128xf32>
    %12 = vector.broadcast %11 : vector<1x128xf32> to vector<256x128xf32>
    %13 = arith.mulf %12, %8 : vector<256x128xf32>
    %14 = arith.select %10, %8, %13 : vector<256x128xi1>, vector<256x128xf32>
    %c0_10 = arith.constant 0 : index
    %c0_11 = arith.constant 0 : index
    %15 = vector.load %arg6[%c0_10, %c0_11] : memref<256x128xf32, #tpu.memory_space<vmem>>, vector<256x128xf32>
    tpu.vector_store %arg6[%c0_10, %c0_11], %14 {strides = array<i32>} : memref<256x128xf32, #tpu.memory_space<vmem>>, vector<256x128xf32>,
    return
  }
  func.func @transform_0(%arg0: i32) -> (i32, i32) {
    %c0_i32 = arith.constant 0 : i32
    %c0_i32_0 = arith.constant 0 : i32
    return %arg0, %c0_i32 : i32, i32
  }
  func.func @transform_1(%arg0: i32) -> (i32, i32) {
    %c0_i32 = arith.constant 0 : i32
    %c0_i32_0 = arith.constant 0 : i32
    %c0_i32_1 = arith.constant 0 : i32
    return %c0_i32, %c0_i32_0 : i32, i32
  }
  func.func @transform_2(%arg0: i32) -> (i32, i32) {
    %c0_i32 = arith.constant 0 : i32
    %c0_i32_0 = arith.constant 0 : i32
    %c0_i32_1 = arith.constant 0 : i32
    return %c0_i32, %c0_i32_0 : i32, i32
  }
  func.func @transform_3(%arg0: i32) -> (i32, i32) {
    %c0_i32 = arith.constant 0 : i32
    %c0_i32_0 = arith.constant 0 : i32
    %c0_i32_1 = arith.constant 0 : i32
    return %c0_i32, %c0_i32_0 : i32, i32
  }
  func.func @transform_4(%arg0: i32) -> (i32, i32) {
    %c0_i32 = arith.constant 0 : i32
    %c0_i32_0 = arith.constant 0 : i32
    %c0_i32_1 = arith.constant 0 : i32
    return %c0_i32, %c0_i32_0 : i32, i32
  }
  func.func @transform_5(%arg0: i32) -> (i32, i32) {
    %c0_i32 = arith.constant 0 : i32
    %c0_i32_0 = arith.constant 0 : i32
    return %arg0, %c0_i32 : i32, i32
  }
}

module attributes {stable_mosaic.version = 11 : i64} {
  func.func @_matmul_bn_prelu_kernel(%arg0: i32, %arg1: memref<256x20xbf16, #tpu.memory_space<vmem>>, %arg2: memref<20x128xbf16, #tpu.memory_space<vmem>>, %arg3: memref<1x128xf32, #tpu.memory_space<vmem>>, %arg4: memref<1x128xf32, #tpu.memory_space<vmem>>, %arg5: memref<1x128xf32, #tpu.memory_space<vmem>>, %arg6: memref<256x128xbf16, #tpu.memory_space<vmem>>) attributes {dimension_semantics = [#tpu.dimension_semantics<parallel>], iteration_bounds = array<i64: 2>, scalar_prefetch = 0 : i64, scratch_operands = 0 : i64, tpu.core_type = #tpu.core_type<tc>, window_params = [{transform_indices = @transform_0, window_bounds = array<i64: 256, 20>}, {pipeline_mode = #tpu.pipeline_mode<synchronous>, transform_indices = @transform_1, window_bounds = array<i64: 20, 128>}, {pipeline_mode = #tpu.pipeline_mode<synchronous>, transform_indices = @transform_2, window_bounds = array<i64: 1, 128>}, {pipeline_mode = #tpu.pipeline_mode<synchronous>, transform_indices = @transform_3, window_bounds = array<i64: 1, 128>}, {pipeline_mode = #tpu.pipeline_mode<synchronous>, transform_indices = @transform_4, window_bounds = array<i64: 1, 128>}, {transform_indices = @transform_5, window_bounds = array<i64: 256, 128>}]} {
    %c0 = arith.constant 0 : index
    %c0_0 = arith.constant 0 : index
    %0 = vector.load %arg1[%c0, %c0_0] : memref<256x20xbf16, #tpu.memory_space<vmem>>, vector<256x20xbf16>
    %c0_1 = arith.constant 0 : index
    %c0_2 = arith.constant 0 : index
    %1 = vector.load %arg2[%c0_1, %c0_2] : memref<20x128xbf16, #tpu.memory_space<vmem>>, vector<20x128xbf16>
    %cst = arith.constant dense<0.000000e+00> : vector<256x128xf32>
    %2 = tpu.matmul %0, %1, %cst {dimension_numbers = #tpu.dot_dimension_numbers<[1], [0], [0], [1], [0, 0, 1, 1], [], []>} : vector<256x20xbf16>, vector<20x128xbf16>, vector<256x128xf32> -> vector<256x128xf32>
    %c0_3 = arith.constant 0 : index
    %c0_4 = arith.constant 0 : index
    %3 = vector.load %arg3[%c0_3, %c0_4] : memref<1x128xf32, #tpu.memory_space<vmem>>, vector<1x128xf32>
    %4 = vector.broadcast %3 : vector<1x128xf32> to vector<256x128xf32>
    %5 = arith.mulf %2, %4 : vector<256x128xf32>
    %c0_5 = arith.constant 0 : index
    %c0_6 = arith.constant 0 : index
    %6 = vector.load %arg4[%c0_5, %c0_6] : memref<1x128xf32, #tpu.memory_space<vmem>>, vector<1x128xf32>
    %7 = vector.broadcast %6 : vector<1x128xf32> to vector<256x128xf32>
    %8 = arith.addf %5, %7 : vector<256x128xf32>
    %cst_7 = arith.constant 0.000000e+00 : f32
    %9 = vector.broadcast %cst_7 : f32 to vector<256x128xf32>
    %10 = arith.cmpf oge, %8, %9 : vector<256x128xf32>
    %c0_8 = arith.constant 0 : index
    %c0_9 = arith.constant 0 : index
    %11 = vector.load %arg5[%c0_8, %c0_9] : memref<1x128xf32, #tpu.memory_space<vmem>>, vector<1x128xf32>
    %12 = vector.broadcast %11 : vector<1x128xf32> to vector<256x128xf32>
    %13 = arith.mulf %12, %8 : vector<256x128xf32>
    %14 = arith.select %10, %8, %13 : vector<256x128xi1>, vector<256x128xf32>
    %15 = arith.truncf %14 : vector<256x128xf32> to vector<256x128xbf16>
    %c0_10 = arith.constant 0 : index
    %c0_11 = arith.constant 0 : index
    %16 = vector.load %arg6[%c0_10, %c0_11] : memref<256x128xbf16, #tpu.memory_space<vmem>>, vector<256x128xbf16>
    tpu.vector_store %arg6[%c0_10, %c0_11], %15 {strides = array<i32>} : memref<256x128xbf16, #tpu.memory_space<vmem>>, vector<256x128xbf16>,
    return
  }
  func.func @transform_0(%arg0: i32) -> (i32, i32) {
    %c0_i32 = arith.constant 0 : i32
    %c0_i32_0 = arith.constant 0 : i32
    return %arg0, %c0_i32 : i32, i32
  }
  func.func @transform_1(%arg0: i32) -> (i32, i32) {
    %c0_i32 = arith.constant 0 : i32
    %c0_i32_0 = arith.constant 0 : i32
    %c0_i32_1 = arith.constant 0 : i32
    return %c0_i32, %c0_i32_0 : i32, i32
  }
  func.func @transform_2(%arg0: i32) -> (i32, i32) {
    %c0_i32 = arith.constant 0 : i32
    %c0_i32_0 = arith.constant 0 : i32
    %c0_i32_1 = arith.constant 0 : i32
    return %c0_i32, %c0_i32_0 : i32, i32
  }
  func.func @transform_3(%arg0: i32) -> (i32, i32) {
    %c0_i32 = arith.constant 0 : i32
    %c0_i32_0 = arith.constant 0 : i32
    %c0_i32_1 = arith.constant 0 : i32
    return %c0_i32, %c0_i32_0 : i32, i32
  }
  func.func @transform_4(%arg0: i32) -> (i32, i32) {
    %c0_i32 = arith.constant 0 : i32
    %c0_i32_0 = arith.constant 0 : i32
    %c0_i32_1 = arith.constant 0 : i32
    return %c0_i32, %c0_i32_0 : i32, i32
  }
  func.func @transform_5(%arg0: i32) -> (i32, i32) {
    %c0_i32 = arith.constant 0 : i32
    %c0_i32_0 = arith.constant 0 : i32
    return %arg0, %c0_i32 : i32, i32
  }
}

</mosaic_0001>

<llo_original>
// kernel: tile.6
$region0: #{tile.6}
  #allocation0 [shape = 's32[1]{0}', space=sflag, size = 0x4, scoped, tag = 'scoped memory for tile.6']
  %s0 = inlined_call_operand.vmem [shape: f32[10], index: 0, kind: input, shape index: {}]
  %s1 = inlined_call_operand.vmem [shape: f32[4,10], index: 1, kind: output, shape index: {}]
  // Predicated region
  $region2: #{tile.6} parent=0 // pred_check
    _
  $region3: #{tile.6} parent=0 // pred_check_branch
    %3 = sbr.rel (0) target = $region5
  $region4: #{tile.6} parent=0 // pred_region
    _
  $region5: #{tile.6} parent=0 // pred_fallthru
    _
  %v4 = vld [vmem:[%s0] ss:$0 sm:$0xff]
  %5 = vst [vmem:[%s1] sm:$0xf] %v4

// kernel: tile.7
$region0: #{tile.7}
  %s0 = inlined_call_operand.vmem [shape: f32[4,10], index: 0, kind: input, shape index: {}]
  %s1 = inlined_call_operand.vmem [shape: f32[1,40], index: 1, kind: output, shape index: {}]
  $region1: #{tile.7} parent=0
    #allocation0 [shape = 'u8[4096]{0}', space=vmem, size = 0x1000, scoped, tag = 'scoped mem for output reshape']
    #allocation1 [shape = 'u8[4096]{0}', space=vmem, size = 0x1000, scoped, tag = 'scoped mem for input reshape']
    %s3 = ssub.s32 16, 1
    %v4 = vld [vmem:[%s0] sm:%s3]
    %5 = vst [vmem:[#allocation1] sm:%s3] %v4
    %v6 = vld [vmem:[#allocation1] sm:$0x1]
    %vm7 = vcmask 80896
    %8 = vst.msk [vmem:[#allocation0] sm:$0x1] %vm7, %v6
    %s9 = scalar_lea.vmem [#allocation1], 3
    %v10 = vld [vmem:[%s9] sm:$0x1]
    %11 = vrot.lane.b32.xlu0 %v10, 30
    %v12 = vpop.permute.xlu0 %11
    %vm13 = vcmask 326896
    %14 = vst.msk [vmem:[#allocation0] sm:$0x1] %vm13, %v12
    %s15 = scalar_lea.vmem [#allocation1], 2
    %v16 = vld [vmem:[%s15] sm:$0x1]
    %17 = vrot.lane.b32.xlu0 %v16, 20
    %v18 = vpop.permute.xlu0 %17
    %vm19 = vcmask 244896
    %20 = vst.msk [vmem:[#allocation0] sm:$0x1] %vm19, %v18
    %s21 = scalar_lea.vmem [#allocation1], 1
    %v22 = vld [vmem:[%s21] sm:$0x1]
    %23 = vrot.lane.b32.xlu0 %v22, 10
    %v24 = vpop.permute.xlu0 %23
    %vm25 = vcmask 162896
    %26 = vst.msk [vmem:[#allocation0] sm:$0x1] %vm25, %v24
    %s28 = ssub.s32 2, 1
    %v29 = vld [vmem:[#allocation0] sm:%s28]
    %s31 = ssub.s32 2, 1
    %32 = vst [vmem:[%s1] sm:%s31] %v29

// kernel: espnet_forward.39
$region0: #{espnet_forward.39}
  #allocation0 [shape = 'u32[]', space=smem, size = 0x4, offset = 0x4, fixed_abs, tag = 'smem constant byte address 0x4 - core index']
  #allocation1 [shape = 'u32[72,128]{1,0:T(1,128)}', space=vmem, size = 0x9000, scoped, tag = 'internal scratch']
  %s0 = inlined_call_operand.vmem [shape: bf16[512,19], index: 0, kind: input, shape index: {}]
  %s1 = inlined_call_operand.vmem [shape: bf16[19,128], index: 1, kind: input, shape index: {}]
  %s2 = inlined_call_operand.vmem [shape: f32[1,128], index: 2, kind: input, shape index: {}]
  %s3 = inlined_call_operand.vmem [shape: f32[1,128], index: 3, kind: input, shape index: {}]
  %s4 = inlined_call_operand.vmem [shape: f32[1,128], index: 4, kind: input, shape index: {}]
  %s5 = inlined_call_operand.vmem [shape: bf16[512,128], index: 5, kind: output, shape index: {}]
  %s6 = sld [smem:[#allocation0]]
  $region53: #{espnet_forward.39} parent=0
    _
  %s8 = ssub.s32 1, %s6
  %s9 = scalar_select 0, %s8, %s6
  loop: start=0, step=1, limit=4
  $region2: #{espnet_forward.39} parent=0 // loop_pre_header
    _
  $region3: #{espnet_forward.39} parent=0 // loop_header
    %s11 = sphi 0, %s15
    %p12 = scmp.ge.s32.totalorder %s11, 4
    %s21 = sphi 0, %s23
    %s24 = sphi 0, %s21
    %s25 = sphi 0, %s24
    %s41 = sphi 0, %s25
    %s45 = sphi 0, %s45
    %s47 = sphi 0, %s45
    %s48 = sphi 0, %s47
    %s62 = sphi 0, %s48
    %s66 = sphi 0, %s66
    %s68 = sphi 0, %s66
    %s69 = sphi 0, %s68
    %s83 = sphi 0, %s69
    %s87 = sphi 0, %s87
    %s89 = sphi 0, %s87
    %s90 = sphi 0, %s89
    %s104 = sphi 0, %s90
    %s108 = sphi 0, %s108
    %s110 = sphi 0, %s108
    %s111 = sphi 0, %s110
    %s125 = sphi 0, %s111
    %s131 = sphi 0, %s133
    %s134 = sphi 0, %s131
    %s135 = sphi 0, %s134
    %s151 = sphi 0, %s135
  $region4: #{espnet_forward.39} parent=0 // loop_header_branch
    %14 = sbr.rel (%p12) target = $region8
  $region5: #{espnet_forward.39} parent=0 // loop_body
    %s16 = ssub.s32 %s11, 1
    %s17 = ssub.s32 %s11, 2
    %s18 = sadd.s32 %s11, 1
    %s19 = ssub.s32 %s11, %s18
    %p20 = scmp.eq.s32.totalorder %s19, 0
    %s22 = sadd.s32 %s21, 1
    %s23 = scalar_select %p20, %s21, %s22
    %p26 = pneg %p20
    %p27 = scmp.eq.s32.totalorder %s11, 1
    %p28 = por %p26, %p27
    %p29 = scmp.ne.s32.totalorder %s21, %s24
    %p30 = scmp.eq.s32.totalorder %s11, 0
    %p31 = por %p29, %p30
    %p32 = scmp.ne.s32.totalorder %s21, %s24
    %p33 = scmp.eq.s32.totalorder %s16, 1
    %p34 = por %p32, %p33
    %p35 = scmp.ne.s32.totalorder %s24, %s25
    %p36 = scmp.eq.s32.totalorder %s16, 0
    %p37 = por %p35, %p36
    %p38 = scmp.ne.s32.totalorder %s24, %s25
    %p39 = scmp.eq.s32.totalorder %s17, 1
    %p40 = por %p38, %p39
    %p42 = scmp.ne.s32.totalorder %s25, %s41
    %p43 = scmp.eq.s32.totalorder %s17, 0
    %p44 = por %p42, %p43
    %s46 = sadd.s32 %s45, 1
    %p49 = scmp.eq.s32.totalorder %s11, 1
    %p50 = scmp.ne.s32.totalorder %s45, %s47
    %p51 = scmp.eq.s32.totalorder %s11, 0
    %p52 = por %p50, %p51
    %p53 = scmp.ne.s32.totalorder %s45, %s47
    %p54 = scmp.eq.s32.totalorder %s16, 1
    %p55 = por %p53, %p54
    %p56 = scmp.ne.s32.totalorder %s47, %s48
    %p57 = scmp.eq.s32.totalorder %s16, 0
    %p58 = por %p56, %p57
    %p59 = scmp.ne.s32.totalorder %s47, %s48
    %p60 = scmp.eq.s32.totalorder %s17, 1
    %p61 = por %p59, %p60
    %p63 = scmp.ne.s32.totalorder %s48, %s62
    %p64 = scmp.eq.s32.totalorder %s17, 0
    %p65 = por %p63, %p64
    %s67 = sadd.s32 %s66, 1
    %p70 = scmp.eq.s32.totalorder %s11, 1
    %p71 = scmp.ne.s32.totalorder %s66, %s68
    %p72 = scmp.eq.s32.totalorder %s11, 0
    %p73 = por %p71, %p72
    %p74 = scmp.ne.s32.totalorder %s66, %s68
    %p75 = scmp.eq.s32.totalorder %s16, 1
    %p76 = por %p74, %p75
    %p77 = scmp.ne.s32.totalorder %s68, %s69
    %p78 = scmp.eq.s32.totalorder %s16, 0
    %p79 = por %p77, %p78
    %p80 = scmp.ne.s32.totalorder %s68, %s69
    %p81 = scmp.eq.s32.totalorder %s17, 1
    %p82 = por %p80, %p81
    %p84 = scmp.ne.s32.totalorder %s69, %s83
    %p85 = scmp.eq.s32.totalorder %s17, 0
    %p86 = por %p84, %p85
    %s88 = sadd.s32 %s87, 1
    %p91 = scmp.eq.s32.totalorder %s11, 1
    %p92 = scmp.ne.s32.totalorder %s87, %s89
    %p93 = scmp.eq.s32.totalorder %s11, 0
    %p94 = por %p92, %p93
    %p95 = scmp.ne.s32.totalorder %s87, %s89
    %p96 = scmp.eq.s32.totalorder %s16, 1
    %p97 = por %p95, %p96
    %p98 = scmp.ne.s32.totalorder %s89, %s90
    %p99 = scmp.eq.s32.totalorder %s16, 0
    %p100 = por %p98, %p99
    %p101 = scmp.ne.s32.totalorder %s89, %s90
    %p102 = scmp.eq.s32.totalorder %s17, 1
    %p103 = por %p101, %p102
    %p105 = scmp.ne.s32.totalorder %s90, %s104
    %p106 = scmp.eq.s32.totalorder %s17, 0
    %p107 = por %p105, %p106
    %s109 = sadd.s32 %s108, 1
    %p112 = scmp.eq.s32.totalorder %s11, 1
    %p113 = scmp.ne.s32.totalorder %s108, %s110
    %p114 = scmp.eq.s32.totalorder %s11, 0
    %p115 = por %p113, %p114
    %p116 = scmp.ne.s32.totalorder %s108, %s110
    %p117 = scmp.eq.s32.totalorder %s16, 1
    %p118 = por %p116, %p117
    %p119 = scmp.ne.s32.totalorder %s110, %s111
    %p120 = scmp.eq.s32.totalorder %s16, 0
    %p121 = por %p119, %p120
    %p122 = scmp.ne.s32.totalorder %s110, %s111
    %p123 = scmp.eq.s32.totalorder %s17, 1
    %p124 = por %p122, %p123
    %p126 = scmp.ne.s32.totalorder %s111, %s125
    %p127 = scmp.eq.s32.totalorder %s17, 0
    %p128 = por %p126, %p127
    %s129 = ssub.s32 %s11, %s18
    %p130 = scmp.eq.s32.totalorder %s129, 0
    %s132 = sadd.s32 %s131, 1
    %s133 = scalar_select %p130, %s131, %s132
    %p136 = pneg %p130
    %p137 = scmp.eq.s32.totalorder %s11, 1
    %p138 = por %p136, %p137
    %p139 = scmp.ne.s32.totalorder %s131, %s134
    %p140 = scmp.eq.s32.totalorder %s11, 0
    %p141 = por %p139, %p140
    %p142 = scmp.ne.s32.totalorder %s131, %s134
    %p143 = scmp.eq.s32.totalorder %s16, 1
    %p144 = por %p142, %p143
    %p145 = scmp.ne.s32.totalorder %s134, %s135
    %p146 = scmp.eq.s32.totalorder %s16, 0
    %p147 = por %p145, %p146
    %p148 = scmp.ne.s32.totalorder %s134, %s135
    %p149 = scmp.eq.s32.totalorder %s17, 1
    %p150 = por %p148, %p149
    %p152 = scmp.ne.s32.totalorder %s135, %s151
    %p153 = scmp.eq.s32.totalorder %s17, 0
    %p154 = por %p152, %p153
    %p155 = scmp.le.s32.totalorder 1, %s11
    %p156 = scmp.lt.s32.totalorder %s11, 3
    %p157 = pnand %p155, %p156
    %p158 = pneg %p157
    // Predicated region
    $region9: #{espnet_forward.39} parent=5 // pred_check
      _
    $region10: #{espnet_forward.39} parent=5 // pred_check_branch
      %160 = sbr.rel (%p157) target = $region12
    $region11: #{espnet_forward.39} parent=5 // pred_region
      %s161 = ssub.s32 %s11, 1
      // Predicated region
      $region13: #{espnet_forward.39} parent=11 // pred_check
        %p162 = pneg %p58
      $region14: #{espnet_forward.39} parent=11 // pred_check_branch
        %164 = sbr.rel (%p162) target = $region16
      $region15: #{espnet_forward.39} parent=11 // pred_region
        _
      $region16: #{espnet_forward.39} parent=11 // pred_fallthru
        _
      // Predicated region
      $region17: #{espnet_forward.39} parent=11 // pred_check
        %p165 = pneg %p79
      $region18: #{espnet_forward.39} parent=11 // pred_check_branch
        %167 = sbr.rel (%p165) target = $region20
      $region19: #{espnet_forward.39} parent=11 // pred_region
        _
      $region20: #{espnet_forward.39} parent=11 // pred_fallthru
        _
      // Predicated region
      $region21: #{espnet_forward.39} parent=11 // pred_check
        %p168 = pneg %p100
      $region22: #{espnet_forward.39} parent=11 // pred_check_branch
        %170 = sbr.rel (%p168) target = $region24
      $region23: #{espnet_forward.39} parent=11 // pred_region
        _
      $region24: #{espnet_forward.39} parent=11 // pred_fallthru
        _
      // Predicated region
      $region25: #{espnet_forward.39} parent=11 // pred_check
        %p171 = pneg %p121
      $region26: #{espnet_forward.39} parent=11 // pred_check_branch
        %173 = sbr.rel (%p171) target = $region28
      $region27: #{espnet_forward.39} parent=11 // pred_region
        _
      $region28: #{espnet_forward.39} parent=11 // pred_fallthru
        _
    $region12: #{espnet_forward.39} parent=5 // pred_fallthru
      _
    %p174 = scmp.lt.s32.totalorder %s11, 2
    // Predicated region
    $region29: #{espnet_forward.39} parent=5 // pred_check
      %p175 = pneg %p174
    $region30: #{espnet_forward.39} parent=5 // pred_check_branch
      %177 = sbr.rel (%p175) target = $region32
    $region31: #{espnet_forward.39} parent=5 // pred_region
      // Predicated region
      $region33: #{espnet_forward.39} parent=31 // pred_check
        %p178 = pneg %p31
      $region34: #{espnet_forward.39} parent=31 // pred_check_branch
        %180 = sbr.rel (%p178) target = $region36
      $region35: #{espnet_forward.39} parent=31 // pred_region
        %s181 = smul.u32 32, %s11
        %p182 = scmp.lt.s32.totalorder %s181, 63
        %s183 = scalar_select %p182, %s181, 63
        %s184 = smul.addr %s183, 4
        %s185 = scalar_lea.vmem %s0, %s184
        %s186 = smul.u32 32, %s11
      $region36: #{espnet_forward.39} parent=31 // pred_fallthru
        _
    $region32: #{espnet_forward.39} parent=5 // pred_fallthru
      _
    %p187 = scmp.le.s32.totalorder 1, %s11
    %p188 = scmp.lt.s32.totalorder %s11, 3
    %p189 = pnand %p187, %p188
    %p190 = pneg %p189
    // Predicated region
    $region37: #{espnet_forward.39} parent=5 // pred_check
      _
    $region38: #{espnet_forward.39} parent=5 // pred_check_branch
      %192 = sbr.rel (%p189) target = $region40
    $region39: #{espnet_forward.39} parent=5 // pred_region
      %s193 = ssub.s32 %s11, 1
      %s194 = smul.u32 32, %s16
      %p195 = scmp.lt.s32.totalorder %s194, 63
      %s196 = scalar_select %p195, %s194, 63
      %s197 = smul.addr %s196, 4
      %s198 = scalar_lea.vmem %s0, %s197
      %p199 = pneg %p37
      %p200 = pneg %p34
      %p201 = pneg %p58
      %p202 = pneg %p55
      %p203 = pneg %p79
      %p204 = pneg %p76
      %p205 = pneg %p100
      %p206 = pneg %p97
      %p207 = pneg %p121
      %p208 = pneg %p118
      %p209 = pneg %p147
      %p210 = pneg %p144
      %s211 = smul.u32 32, %s16
      %p212 = scmp.lt.s32.totalorder %s211, 63
      %s213 = scalar_select %p212, %s211, 63
      %s214 = smul.addr %s213, 4
      %s215 = scalar_lea.vmem %s5, %s214
      %s216 = smul.u32 32, %s16
      %p217 = scmp.lt.s32.totalorder %s216, 63
      %s218 = scalar_select %p217, %s216, 63
      %s219 = smul.addr %s218, 4
      %s220 = scalar_lea.vmem %s0, %s219
      %s221 = smul.u32 32, %s16
      %s222 = smul.u32 32, %s16
      %p223 = scmp.lt.s32.totalorder %s222, 63
      %s224 = scalar_select %p223, %s222, 63
      %s225 = smul.addr %s224, 4
      %s226 = scalar_lea.vmem %s5, %s225
      %s227 = smul.u32 32, %s16
      %v229 = vld [vmem:[%s220] sm:$0xf]
      %v230 = vld [vmem:[%s220 + $0x4] sm:$0xf]
      %v231 = vld [vmem:[%s220 + $0x8] sm:$0xf]
      %v232 = vld [vmem:[%s220 + $0xc] sm:$0xf]
      %v233 = vld [vmem:[%s220 + $0x10] sm:$0xf]
      %v234 = vld [vmem:[%s220 + $0x14] sm:$0xf]
      %v235 = vld [vmem:[%s220 + $0x18] sm:$0xf]
      %v236 = vld [vmem:[%s220 + $0x1c] sm:$0xf]
      %v237 = vld [vmem:[%s220 + $0x20] sm:$0xf]
      %v238 = vld [vmem:[%s220 + $0x24] sm:$0xf]
      %v239 = vld [vmem:[%s220 + $0x28] sm:$0xf]
      %v240 = vld [vmem:[%s220 + $0x2c] sm:$0xf]
      %v241 = vld [vmem:[%s220 + $0x30] sm:$0xf]
      %v242 = vld [vmem:[%s220 + $0x34] sm:$0xf]
      %v243 = vld [vmem:[%s220 + $0x38] sm:$0xf]
      %v244 = vld [vmem:[%s220 + $0x3c] sm:$0xf]
      %v245 = vld [vmem:[%s220 + $0x40] sm:$0xf]
      %v246 = vld [vmem:[%s220 + $0x44] sm:$0xf]
      %v247 = vld [vmem:[%s220 + $0x48] sm:$0xf]
      %v248 = vld [vmem:[%s220 + $0x4c] sm:$0xf]
      %v249 = vld [vmem:[%s220 + $0x50] sm:$0xf]
      %v250 = vld [vmem:[%s220 + $0x54] sm:$0xf]
      %v251 = vld [vmem:[%s220 + $0x58] sm:$0xf]
      %v252 = vld [vmem:[%s220 + $0x5c] sm:$0xf]
      %v253 = vld [vmem:[%s220 + $0x60] sm:$0xf]
      %v254 = vld [vmem:[%s220 + $0x64] sm:$0xf]
      %v255 = vld [vmem:[%s220 + $0x68] sm:$0xf]
      %v256 = vld [vmem:[%s220 + $0x6c] sm:$0xf]
      %v257 = vld [vmem:[%s220 + $0x70] sm:$0xf]
      %v258 = vld [vmem:[%s220 + $0x74] sm:$0xf]
      %v259 = vld [vmem:[%s220 + $0x78] sm:$0xf]
      %v260 = vld [vmem:[%s220 + $0x7c] sm:$0xf]
      %v261 = vld [vmem:[%s1] sm:$0xf]
      %v262 = vld [vmem:[%s1 + $0x4] sm:$0xf]
      %v263 = vld [vmem:[%s1 + $0x8] sm:$0x3]
      %v296 = vunpack.c.l.b16 %v229
      %v297 = vunpack.c.l.b16 %v230
      %v298 = vunpack.c.l.b16 %v231
      %v299 = vunpack.c.l.b16 %v232
      %v300 = vunpack.c.l.b16 %v233
      %v301 = vunpack.c.l.b16 %v234
      %v302 = vunpack.c.l.b16 %v235
      %v303 = vunpack.c.l.b16 %v236
      %v304 = vunpack.c.l.b16 %v237
      %v305 = vunpack.c.l.b16 %v238
      %v306 = vunpack.c.l.b16 %v239
      %v307 = vunpack.c.l.b16 %v240
      %v308 = vunpack.c.l.b16 %v241
      %v309 = vunpack.c.l.b16 %v242
      %v310 = vunpack.c.l.b16 %v243
      %v311 = vunpack.c.l.b16 %v244
      %v312 = vunpack.c.l.b16 %v245
      %v313 = vunpack.c.l.b16 %v246
      %v314 = vunpack.c.l.b16 %v247
      %v315 = vunpack.c.l.b16 %v248
      %v316 = vunpack.c.l.b16 %v249
      %v317 = vunpack.c.l.b16 %v250
      %v318 = vunpack.c.l.b16 %v251
      %v319 = vunpack.c.l.b16 %v252
      %v320 = vunpack.c.l.b16 %v253
      %v321 = vunpack.c.l.b16 %v254
      %v322 = vunpack.c.l.b16 %v255
      %v323 = vunpack.c.l.b16 %v256
      %v324 = vunpack.c.l.b16 %v257
      %v325 = vunpack.c.l.b16 %v258
      %v326 = vunpack.c.l.b16 %v259
      %v327 = vunpack.c.l.b16 %v260
      %v328 = vpack.c.b16 %v297, %v296
      %v329 = vpack.c.b16 %v299, %v298
      %v330 = vpack.c.b16 %v301, %v300
      %v331 = vpack.c.b16 %v303, %v302
      %v332 = vpack.c.b16 %v305, %v304
      %v333 = vpack.c.b16 %v307, %v306
      %v334 = vpack.c.b16 %v309, %v308
      %v335 = vpack.c.b16 %v311, %v310
      %v336 = vpack.c.b16 %v313, %v312
      %v337 = vpack.c.b16 %v315, %v314
      %v338 = vpack.c.b16 %v317, %v316
      %v339 = vpack.c.b16 %v319, %v318
      %v340 = vpack.c.b16 %v321, %v320
      %v341 = vpack.c.b16 %v323, %v322
      %v342 = vpack.c.b16 %v325, %v324
      %v343 = vpack.c.b16 %v327, %v326
      %v347 = vunpack.c.l.b16 %v261
      %v348 = vunpack.c.l.b16 %v262
      %v349 = vunpack.c.l.b16 %v263
      %v350 = vpack.c.b16 %v348, %v347
      %v351 = vpack.c.b16 %v349, %v349
      %vm353 = vcmask 154624
      %v355 = vsel %vm353, %v328, 0
      %v358 = vsel %vm353, %v329, 0
      %v361 = vsel %vm353, %v330, 0
      %v364 = vsel %vm353, %v331, 0
      %v367 = vsel %vm353, %v332, 0
      %v370 = vsel %vm353, %v333, 0
      %v373 = vsel %vm353, %v334, 0
      %v376 = vsel %vm353, %v335, 0
      %v379 = vsel %vm353, %v336, 0
      %v382 = vsel %vm353, %v337, 0
      %v385 = vsel %vm353, %v338, 0
      %v388 = vsel %vm353, %v339, 0
      %v391 = vsel %vm353, %v340, 0
      %v394 = vsel %vm353, %v341, 0
      %v397 = vsel %vm353, %v342, 0
      %v400 = vsel %vm353, %v343, 0
      %vm402 = vcmask 1040384
      %vm403 = vcmask 1041408
      %v404 = vsel %vm402, 4294967295, 65535
      %v405 = vsel %vm403, %v404, 0
      %v407 = vand.u32 %v351, %v405
      %409 = vmatpush.bf16.msra.mxu0 0
      %410 = vmatpush.bf16.msra.mxu0 0
      %411 = vmatpush.bf16.msra.mxu0 0
      %412 = vmatpush.bf16.msra.mxu0 0
      %413 = vmatpush.bf16.msra.mxu0 0
      %414 = vmatpush.bf16.msra.mxu0 0
      %415 = vmatpush.bf16.msra.mxu0 %v407
      %416 = vmatpush.bf16.msra.mxu0 %v350
      %417 = vmatmul.bf16.gmra.mxu0 %v355
      %v418 = vpop.f32.mrf.mxu0
      %v419 = vadd.f32 0.0, %v418
      %v420 = vpop.f32.mrf.mxu0
      %v421 = vadd.f32 0.0, %v420
      %422 = vmatmul.bf16.gmra.mxu0 %v358
      %v423 = vpop.f32.mrf.mxu0
      %v424 = vadd.f32 0.0, %v423
      %v425 = vpop.f32.mrf.mxu0
      %v426 = vadd.f32 0.0, %v425
      %427 = vmatmul.bf16.gmra.mxu0 %v361
      %v428 = vpop.f32.mrf.mxu0
      %v429 = vadd.f32 0.0, %v428
      %v430 = vpop.f32.mrf.mxu0
      %v431 = vadd.f32 0.0, %v430
      %432 = vmatmul.bf16.gmra.mxu0 %v364
      %v433 = vpop.f32.mrf.mxu0
      %v434 = vadd.f32 0.0, %v433
      %v435 = vpop.f32.mrf.mxu0
      %v436 = vadd.f32 0.0, %v435
      %437 = vmatmul.bf16.gmra.mxu0 %v367
      %v438 = vpop.f32.mrf.mxu0
      %v439 = vadd.f32 0.0, %v438
      %v440 = vpop.f32.mrf.mxu0
      %v441 = vadd.f32 0.0, %v440
      %442 = vmatmul.bf16.gmra.mxu0 %v370
      %v443 = vpop.f32.mrf.mxu0
      %v444 = vadd.f32 0.0, %v443
      %v445 = vpop.f32.mrf.mxu0
      %v446 = vadd.f32 0.0, %v445
      %447 = vmatmul.bf16.gmra.mxu0 %v373
      %v448 = vpop.f32.mrf.mxu0
      %v449 = vadd.f32 0.0, %v448
      %v450 = vpop.f32.mrf.mxu0
      %v451 = vadd.f32 0.0, %v450
      %452 = vmatmul.bf16.gmra.mxu0 %v376
      %v453 = vpop.f32.mrf.mxu0
      %v454 = vadd.f32 0.0, %v453
      %v455 = vpop.f32.mrf.mxu0
      %v456 = vadd.f32 0.0, %v455
      %457 = vmatmul.bf16.gmra.mxu0 %v379
      %v458 = vpop.f32.mrf.mxu0
      %v459 = vadd.f32 0.0, %v458
      %v460 = vpop.f32.mrf.mxu0
      %v461 = vadd.f32 0.0, %v460
      %462 = vmatmul.bf16.gmra.mxu0 %v382
      %v463 = vpop.f32.mrf.mxu0
      %v464 = vadd.f32 0.0, %v463
      %v465 = vpop.f32.mrf.mxu0
      %v466 = vadd.f32 0.0, %v465
      %467 = vmatmul.bf16.gmra.mxu0 %v385
      %v468 = vpop.f32.mrf.mxu0
      %v469 = vadd.f32 0.0, %v468
      %v470 = vpop.f32.mrf.mxu0
      %v471 = vadd.f32 0.0, %v470
      %472 = vmatmul.bf16.gmra.mxu0 %v388
      %v473 = vpop.f32.mrf.mxu0
      %v474 = vadd.f32 0.0, %v473
      %v475 = vpop.f32.mrf.mxu0
      %v476 = vadd.f32 0.0, %v475
      %477 = vmatmul.bf16.gmra.mxu0 %v391
      %v478 = vpop.f32.mrf.mxu0
      %v479 = vadd.f32 0.0, %v478
      %v480 = vpop.f32.mrf.mxu0
      %v481 = vadd.f32 0.0, %v480
      %482 = vmatmul.bf16.gmra.mxu0 %v394
      %v483 = vpop.f32.mrf.mxu0
      %v484 = vadd.f32 0.0, %v483
      %v485 = vpop.f32.mrf.mxu0
      %v486 = vadd.f32 0.0, %v485
      %487 = vmatmul.bf16.gmra.mxu0 %v397
      %v488 = vpop.f32.mrf.mxu0
      %v489 = vadd.f32 0.0, %v488
      %v490 = vpop.f32.mrf.mxu0
      %v491 = vadd.f32 0.0, %v490
      %492 = vmatmul.bf16.gmra.mxu0 %v400
      %v493 = vpop.f32.mrf.mxu0
      %v494 = vadd.f32 0.0, %v493
      %v495 = vpop.f32.mrf.mxu0
      %v496 = vadd.f32 0.0, %v495
      %497 = vdwg.mxu0
      %v498 = vld [vmem:[%s2] sm:$0x1]
      %v500 = vperm.slane %v498, 0
      %v502 = vmul.f32 %v419, %v500
      %v503 = vmul.f32 %v421, %v500
      %v504 = vmul.f32 %v424, %v500
      %v505 = vmul.f32 %v426, %v500
      %v506 = vmul.f32 %v429, %v500
      %v507 = vmul.f32 %v431, %v500
      %v508 = vmul.f32 %v434, %v500
      %v509 = vmul.f32 %v436, %v500
      %v510 = vmul.f32 %v439, %v500
      %v511 = vmul.f32 %v441, %v500
      %v512 = vmul.f32 %v444, %v500
      %v513 = vmul.f32 %v446, %v500
      %v514 = vmul.f32 %v449, %v500
      %v515 = vmul.f32 %v451, %v500
      %v516 = vmul.f32 %v454, %v500
      %v517 = vmul.f32 %v456, %v500
      %v518 = vmul.f32 %v459, %v500
      %v519 = vmul.f32 %v461, %v500
      %v520 = vmul.f32 %v464, %v500
      %v521 = vmul.f32 %v466, %v500
      %v522 = vmul.f32 %v469, %v500
      %v523 = vmul.f32 %v471, %v500
      %v524 = vmul.f32 %v474, %v500
      %v525 = vmul.f32 %v476, %v500
      %v526 = vmul.f32 %v479, %v500
      %v527 = vmul.f32 %v481, %v500
      %v528 = vmul.f32 %v484, %v500
      %v529 = vmul.f32 %v486, %v500
      %v530 = vmul.f32 %v489, %v500
      %v531 = vmul.f32 %v491, %v500
      %v532 = vmul.f32 %v494, %v500
      %v533 = vmul.f32 %v496, %v500
      %v534 = vld [vmem:[%s3] sm:$0x1]
      %v536 = vperm.slane %v534, 0
      %v538 = vadd.f32 %v502, %v536
      %v539 = vadd.f32 %v503, %v536
      %v540 = vadd.f32 %v504, %v536
      %v541 = vadd.f32 %v505, %v536
      %v542 = vadd.f32 %v506, %v536
      %v543 = vadd.f32 %v507, %v536
      %v544 = vadd.f32 %v508, %v536
      %v545 = vadd.f32 %v509, %v536
      %v546 = vadd.f32 %v510, %v536
      %v547 = vadd.f32 %v511, %v536
      %v548 = vadd.f32 %v512, %v536
      %v549 = vadd.f32 %v513, %v536
      %v550 = vadd.f32 %v514, %v536
      %v551 = vadd.f32 %v515, %v536
      %v552 = vadd.f32 %v516, %v536
      %v553 = vadd.f32 %v517, %v536
      %v554 = vadd.f32 %v518, %v536
      %v555 = vadd.f32 %v519, %v536
      %v556 = vadd.f32 %v520, %v536
      %v557 = vadd.f32 %v521, %v536
      %v558 = vadd.f32 %v522, %v536
      %v559 = vadd.f32 %v523, %v536
      %v560 = vadd.f32 %v524, %v536
      %v561 = vadd.f32 %v525, %v536
      %v562 = vadd.f32 %v526, %v536
      %v563 = vadd.f32 %v527, %v536
      %v564 = vadd.f32 %v528, %v536
      %v565 = vadd.f32 %v529, %v536
      %v566 = vadd.f32 %v530, %v536
      %v567 = vadd.f32 %v531, %v536
      %v568 = vadd.f32 %v532, %v536
      %v569 = vadd.f32 %v533, %v536
      %vm570 = vcmp.ge.f32.partialorder %v538, 0.0
      %vm571 = vcmp.ge.f32.partialorder %v539, 0.0
      %vm572 = vcmp.ge.f32.partialorder %v540, 0.0
      %vm573 = vcmp.ge.f32.partialorder %v541, 0.0
      %vm574 = vcmp.ge.f32.partialorder %v542, 0.0
      %vm575 = vcmp.ge.f32.partialorder %v543, 0.0
      %vm576 = vcmp.ge.f32.partialorder %v544, 0.0
      %vm577 = vcmp.ge.f32.partialorder %v545, 0.0
      %vm578 = vcmp.ge.f32.partialorder %v546, 0.0
      %vm579 = vcmp.ge.f32.partialorder %v547, 0.0
      %vm580 = vcmp.ge.f32.partialorder %v548, 0.0
      %vm581 = vcmp.ge.f32.partialorder %v549, 0.0
      %vm582 = vcmp.ge.f32.partialorder %v550, 0.0
      %vm583 = vcmp.ge.f32.partialorder %v551, 0.0
      %vm584 = vcmp.ge.f32.partialorder %v552, 0.0
      %vm585 = vcmp.ge.f32.partialorder %v553, 0.0
      %vm586 = vcmp.ge.f32.partialorder %v554, 0.0
      %vm587 = vcmp.ge.f32.partialorder %v555, 0.0
      %vm588 = vcmp.ge.f32.partialorder %v556, 0.0
      %vm589 = vcmp.ge.f32.partialorder %v557, 0.0
      %vm590 = vcmp.ge.f32.partialorder %v558, 0.0
      %vm591 = vcmp.ge.f32.partialorder %v559, 0.0
      %vm592 = vcmp.ge.f32.partialorder %v560, 0.0
      %vm593 = vcmp.ge.f32.partialorder %v561, 0.0
      %vm594 = vcmp.ge.f32.partialorder %v562, 0.0
      %vm595 = vcmp.ge.f32.partialorder %v563, 0.0
      %vm596 = vcmp.ge.f32.partialorder %v564, 0.0
      %vm597 = vcmp.ge.f32.partialorder %v565, 0.0
      %vm598 = vcmp.ge.f32.partialorder %v566, 0.0
      %vm599 = vcmp.ge.f32.partialorder %v567, 0.0
      %vm600 = vcmp.ge.f32.partialorder %v568, 0.0
      %vm601 = vcmp.ge.f32.partialorder %v569, 0.0
      %v602 = vld [vmem:[%s4] sm:$0x1]
      %v604 = vperm.slane %v602, 0
      %v606 = vmul.f32 %v604, %v538
      %v607 = vmul.f32 %v604, %v539
      %v608 = vmul.f32 %v604, %v540
      %v609 = vmul.f32 %v604, %v541
      %v610 = vmul.f32 %v604, %v542
      %v611 = vmul.f32 %v604, %v543
      %v612 = vmul.f32 %v604, %v544
      %v613 = vmul.f32 %v604, %v545
      %v614 = vmul.f32 %v604, %v546
      %v615 = vmul.f32 %v604, %v547
      %v616 = vmul.f32 %v604, %v548
      %v617 = vmul.f32 %v604, %v549
      %v618 = vmul.f32 %v604, %v550
      %v619 = vmul.f32 %v604, %v551
      %v620 = vmul.f32 %v604, %v552
      %v621 = vmul.f32 %v604, %v553
      %v622 = vmul.f32 %v604, %v554
      %v623 = vmul.f32 %v604, %v555
      %v624 = vmul.f32 %v604, %v556
      %v625 = vmul.f32 %v604, %v557
      %v626 = vmul.f32 %v604, %v558
      %v627 = vmul.f32 %v604, %v559
      %v628 = vmul.f32 %v604, %v560
      %v629 = vmul.f32 %v604, %v561
      %v630 = vmul.f32 %v604, %v562
      %v631 = vmul.f32 %v604, %v563
      %v632 = vmul.f32 %v604, %v564
      %v633 = vmul.f32 %v604, %v565
      %v634 = vmul.f32 %v604, %v566
      %v635 = vmul.f32 %v604, %v567
      %v636 = vmul.f32 %v604, %v568
      %v637 = vmul.f32 %v604, %v569
      %v638 = vsel %vm570, %v538, %v606
      %v639 = vsel %vm571, %v539, %v607
      %v640 = vsel %vm572, %v540, %v608
      %v641 = vsel %vm573, %v541, %v609
      %v642 = vsel %vm574, %v542, %v610
      %v643 = vsel %vm575, %v543, %v611
      %v644 = vsel %vm576, %v544, %v612
      %v645 = vsel %vm577, %v545, %v613
      %v646 = vsel %vm578, %v546, %v614
      %v647 = vsel %vm579, %v547, %v615
      %v648 = vsel %vm580, %v548, %v616
      %v649 = vsel %vm581, %v549, %v617
      %v650 = vsel %vm582, %v550, %v618
      %v651 = vsel %vm583, %v551, %v619
      %v652 = vsel %vm584, %v552, %v620
      %v653 = vsel %vm585, %v553, %v621
      %v654 = vsel %vm586, %v554, %v622
      %v655 = vsel %vm587, %v555, %v623
      %v656 = vsel %vm588, %v556, %v624
      %v657 = vsel %vm589, %v557, %v625
      %v658 = vsel %vm590, %v558, %v626
      %v659 = vsel %vm591, %v559, %v627
      %v660 = vsel %vm592, %v560, %v628
      %v661 = vsel %vm593, %v561, %v629
      %v662 = vsel %vm594, %v562, %v630
      %v663 = vsel %vm595, %v563, %v631
      %v664 = vsel %vm596, %v564, %v632
      %v665 = vsel %vm597, %v565, %v633
      %v666 = vsel %vm598, %v566, %v634
      %v667 = vsel %vm599, %v567, %v635
      %v668 = vsel %vm600, %v568, %v636
      %v669 = vsel %vm601, %v569, %v637
      %v670 = vpack.c.bf16 %v638, %v638
      %v671 = vpack.c.bf16 %v639, %v639
      %v672 = vpack.c.bf16 %v640, %v640
      %v673 = vpack.c.bf16 %v641, %v641
      %v674 = vpack.c.bf16 %v642, %v642
      %v675 = vpack.c.bf16 %v643, %v643
      %v676 = vpack.c.bf16 %v644, %v644
      %v677 = vpack.c.bf16 %v645, %v645
      %v678 = vpack.c.bf16 %v646, %v646
      %v679 = vpack.c.bf16 %v647, %v647
      %v680 = vpack.c.bf16 %v648, %v648
      %v681 = vpack.c.bf16 %v649, %v649
      %v682 = vpack.c.bf16 %v650, %v650
      %v683 = vpack.c.bf16 %v651, %v651
      %v684 = vpack.c.bf16 %v652, %v652
      %v685 = vpack.c.bf16 %v653, %v653
      %v686 = vpack.c.bf16 %v654, %v654
      %v687 = vpack.c.bf16 %v655, %v655
      %v688 = vpack.c.bf16 %v656, %v656
      %v689 = vpack.c.bf16 %v657, %v657
      %v690 = vpack.c.bf16 %v658, %v658
      %v691 = vpack.c.bf16 %v659, %v659
      %v692 = vpack.c.bf16 %v660, %v660
      %v693 = vpack.c.bf16 %v661, %v661
      %v694 = vpack.c.bf16 %v662, %v662
      %v695 = vpack.c.bf16 %v663, %v663
      %v696 = vpack.c.bf16 %v664, %v664
      %v697 = vpack.c.bf16 %v665, %v665
      %v698 = vpack.c.bf16 %v666, %v666
      %v699 = vpack.c.bf16 %v667, %v667
      %v700 = vpack.c.bf16 %v668, %v668
      %v701 = vpack.c.bf16 %v669, %v669
      %702 = vst [vmem:[%s226] sm:$0xf] %v670
      %703 = vst [vmem:[%s226 + $0x4] sm:$0xf] %v671
      %704 = vst [vmem:[%s226 + $0x8] sm:$0xf] %v672
      %705 = vst [vmem:[%s226 + $0xc] sm:$0xf] %v673
      %706 = vst [vmem:[%s226 + $0x10] sm:$0xf] %v674
      %707 = vst [vmem:[%s226 + $0x14] sm:$0xf] %v675
      %708 = vst [vmem:[%s226 + $0x18] sm:$0xf] %v676
      %709 = vst [vmem:[%s226 + $0x1c] sm:$0xf] %v677
      %710 = vst [vmem:[%s226 + $0x20] sm:$0xf] %v678
      %711 = vst [vmem:[%s226 + $0x24] sm:$0xf] %v679
      %712 = vst [vmem:[%s226 + $0x28] sm:$0xf] %v680
      %713 = vst [vmem:[%s226 + $0x2c] sm:$0xf] %v681
      %714 = vst [vmem:[%s226 + $0x30] sm:$0xf] %v682
      %715 = vst [vmem:[%s226 + $0x34] sm:$0xf] %v683
      %716 = vst [vmem:[%s226 + $0x38] sm:$0xf] %v684
      %717 = vst [vmem:[%s226 + $0x3c] sm:$0xf] %v685
      %718 = vst [vmem:[%s226 + $0x40] sm:$0xf] %v686
      %719 = vst [vmem:[%s226 + $0x44] sm:$0xf] %v687
      %720 = vst [vmem:[%s226 + $0x48] sm:$0xf] %v688
      %721 = vst [vmem:[%s226 + $0x4c] sm:$0xf] %v689
      %722 = vst [vmem:[%s226 + $0x50] sm:$0xf] %v690
      %723 = vst [vmem:[%s226 + $0x54] sm:$0xf] %v691
      %724 = vst [vmem:[%s226 + $0x58] sm:$0xf] %v692
      %725 = vst [vmem:[%s226 + $0x5c] sm:$0xf] %v693
      %726 = vst [vmem:[%s226 + $0x60] sm:$0xf] %v694
      %727 = vst [vmem:[%s226 + $0x64] sm:$0xf] %v695
      %728 = vst [vmem:[%s226 + $0x68] sm:$0xf] %v696
      %729 = vst [vmem:[%s226 + $0x6c] sm:$0xf] %v697
      %730 = vst [vmem:[%s226 + $0x70] sm:$0xf] %v698
      %731 = vst [vmem:[%s226 + $0x74] sm:$0xf] %v699
      %732 = vst [vmem:[%s226 + $0x78] sm:$0xf] %v700
      %733 = vst [vmem:[%s226 + $0x7c] sm:$0xf] %v701
      %s734 = smul.u32 32, %s16
      %p735 = scmp.lt.s32.totalorder %s734, 63
      %s736 = scalar_select %p735, %s734, 63
      %s737 = smul.addr %s736, 4
      %s738 = scalar_lea.vmem %s5, %s737
      // Predicated region
      $region41: #{espnet_forward.39} parent=39 // pred_check
        %p739 = pneg %p144
      $region42: #{espnet_forward.39} parent=39 // pred_check_branch
        %741 = sbr.rel (%p739) target = $region44
      $region43: #{espnet_forward.39} parent=39 // pred_region
        %s742 = smul.u32 32, %s16
      $region44: #{espnet_forward.39} parent=39 // pred_fallthru
        _
    $region40: #{espnet_forward.39} parent=5 // pred_fallthru
      _
    %p743 = scmp.le.s32.totalorder 2, %s11
    // Predicated region
    $region45: #{espnet_forward.39} parent=5 // pred_check
      %p744 = pneg %p743
    $region46: #{espnet_forward.39} parent=5 // pred_check_branch
      %746 = sbr.rel (%p744) target = $region48
    $region47: #{espnet_forward.39} parent=5 // pred_region
      %s747 = ssub.s32 %s11, 2
      // Predicated region
      $region49: #{espnet_forward.39} parent=47 // pred_check
        %p748 = pneg %p150
      $region50: #{espnet_forward.39} parent=47 // pred_check_branch
        %750 = sbr.rel (%p748) target = $region52
      $region51: #{espnet_forward.39} parent=47 // pred_region
        %s751 = smul.u32 32, %s17
        %p752 = scmp.lt.s32.totalorder %s751, 63
        %s753 = scalar_select %p752, %s751, 63
        %s754 = smul.addr %s753, 4
        %s755 = scalar_lea.vmem %s5, %s754
      $region52: #{espnet_forward.39} parent=47 // pred_fallthru
        _
    $region48: #{espnet_forward.39} parent=5 // pred_fallthru
      _
  $region6: #{espnet_forward.39} parent=0 // loop_footer
    %s15 = sadd.s32 1, %s11
  $region7: #{espnet_forward.39} parent=0 // loop_footer_branch
    %10 = sbr.rel target = $region3
  $region8: #{espnet_forward.39} parent=0 // loop_exit
    _

// kernel: espnet_forward.24
$region0: #{espnet_forward.24}
  #allocation0 [shape = 'u32[]', space=smem, size = 0x4, offset = 0x4, fixed_abs, tag = 'smem constant byte address 0x4 - core index']
  #allocation1 [shape = 'u32[72,128]{1,0:T(1,128)}', space=vmem, size = 0x9000, scoped, tag = 'internal scratch']
  %s0 = inlined_call_operand.vmem [shape: bf16[512,27], index: 0, kind: input, shape index: {}]
  %s1 = inlined_call_operand.vmem [shape: bf16[27,128], index: 1, kind: input, shape index: {}]
  %s2 = inlined_call_operand.vmem [shape: f32[1,128], index: 2, kind: input, shape index: {}]
  %s3 = inlined_call_operand.vmem [shape: f32[1,128], index: 3, kind: input, shape index: {}]
  %s4 = inlined_call_operand.vmem [shape: f32[1,128], index: 4, kind: input, shape index: {}]
  %s5 = inlined_call_operand.vmem [shape: bf16[512,128], index: 5, kind: output, shape index: {}]
  %s6 = sld [smem:[#allocation0]]
  $region53: #{espnet_forward.24} parent=0
    _
  %s8 = ssub.s32 1, %s6
  %s9 = scalar_select 0, %s8, %s6
  loop: start=0, step=1, limit=4
  $region2: #{espnet_forward.24} parent=0 // loop_pre_header
    _
  $region3: #{espnet_forward.24} parent=0 // loop_header
    %s11 = sphi 0, %s15
    %p12 = scmp.ge.s32.totalorder %s11, 4
    %s21 = sphi 0, %s23
    %s24 = sphi 0, %s21
    %s25 = sphi 0, %s24
    %s41 = sphi 0, %s25
    %s45 = sphi 0, %s45
    %s47 = sphi 0, %s45
    %s48 = sphi 0, %s47
    %s62 = sphi 0, %s48
    %s66 = sphi 0, %s66
    %s68 = sphi 0, %s66
    %s69 = sphi 0, %s68
    %s83 = sphi 0, %s69
    %s87 = sphi 0, %s87
    %s89 = sphi 0, %s87
    %s90 = sphi 0, %s89
    %s104 = sphi 0, %s90
    %s108 = sphi 0, %s108
    %s110 = sphi 0, %s108
    %s111 = sphi 0, %s110
    %s125 = sphi 0, %s111
    %s131 = sphi 0, %s133
    %s134 = sphi 0, %s131
    %s135 = sphi 0, %s134
    %s151 = sphi 0, %s135
  $region4: #{espnet_forward.24} parent=0 // loop_header_branch
    %14 = sbr.rel (%p12) target = $region8
  $region5: #{espnet_forward.24} parent=0 // loop_body
    %s16 = ssub.s32 %s11, 1
    %s17 = ssub.s32 %s11, 2
    %s18 = sadd.s32 %s11, 1
    %s19 = ssub.s32 %s11, %s18
    %p20 = scmp.eq.s32.totalorder %s19, 0
    %s22 = sadd.s32 %s21, 1
    %s23 = scalar_select %p20, %s21, %s22
    %p26 = pneg %p20
    %p27 = scmp.eq.s32.totalorder %s11, 1
    %p28 = por %p26, %p27
    %p29 = scmp.ne.s32.totalorder %s21, %s24
    %p30 = scmp.eq.s32.totalorder %s11, 0
    %p31 = por %p29, %p30
    %p32 = scmp.ne.s32.totalorder %s21, %s24
    %p33 = scmp.eq.s32.totalorder %s16, 1
    %p34 = por %p32, %p33
    %p35 = scmp.ne.s32.totalorder %s24, %s25
    %p36 = scmp.eq.s32.totalorder %s16, 0
    %p37 = por %p35, %p36
    %p38 = scmp.ne.s32.totalorder %s24, %s25
    %p39 = scmp.eq.s32.totalorder %s17, 1
    %p40 = por %p38, %p39
    %p42 = scmp.ne.s32.totalorder %s25, %s41
    %p43 = scmp.eq.s32.totalorder %s17, 0
    %p44 = por %p42, %p43
    %s46 = sadd.s32 %s45, 1
    %p49 = scmp.eq.s32.totalorder %s11, 1
    %p50 = scmp.ne.s32.totalorder %s45, %s47
    %p51 = scmp.eq.s32.totalorder %s11, 0
    %p52 = por %p50, %p51
    %p53 = scmp.ne.s32.totalorder %s45, %s47
    %p54 = scmp.eq.s32.totalorder %s16, 1
    %p55 = por %p53, %p54
    %p56 = scmp.ne.s32.totalorder %s47, %s48
    %p57 = scmp.eq.s32.totalorder %s16, 0
    %p58 = por %p56, %p57
    %p59 = scmp.ne.s32.totalorder %s47, %s48
    %p60 = scmp.eq.s32.totalorder %s17, 1
    %p61 = por %p59, %p60
    %p63 = scmp.ne.s32.totalorder %s48, %s62
    %p64 = scmp.eq.s32.totalorder %s17, 0
    %p65 = por %p63, %p64
    %s67 = sadd.s32 %s66, 1
    %p70 = scmp.eq.s32.totalorder %s11, 1
    %p71 = scmp.ne.s32.totalorder %s66, %s68
    %p72 = scmp.eq.s32.totalorder %s11, 0
    %p73 = por %p71, %p72
    %p74 = scmp.ne.s32.totalorder %s66, %s68
    %p75 = scmp.eq.s32.totalorder %s16, 1
    %p76 = por %p74, %p75
    %p77 = scmp.ne.s32.totalorder %s68, %s69
    %p78 = scmp.eq.s32.totalorder %s16, 0
    %p79 = por %p77, %p78
    %p80 = scmp.ne.s32.totalorder %s68, %s69
    %p81 = scmp.eq.s32.totalorder %s17, 1
    %p82 = por %p80, %p81
    %p84 = scmp.ne.s32.totalorder %s69, %s83
    %p85 = scmp.eq.s32.totalorder %s17, 0
    %p86 = por %p84, %p85
    %s88 = sadd.s32 %s87, 1
    %p91 = scmp.eq.s32.totalorder %s11, 1
    %p92 = scmp.ne.s32.totalorder %s87, %s89
    %p93 = scmp.eq.s32.totalorder %s11, 0
    %p94 = por %p92, %p93
    %p95 = scmp.ne.s32.totalorder %s87, %s89
    %p96 = scmp.eq.s32.totalorder %s16, 1
    %p97 = por %p95, %p96
    %p98 = scmp.ne.s32.totalorder %s89, %s90
    %p99 = scmp.eq.s32.totalorder %s16, 0
    %p100 = por %p98, %p99
    %p101 = scmp.ne.s32.totalorder %s89, %s90
    %p102 = scmp.eq.s32.totalorder %s17, 1
    %p103 = por %p101, %p102
    %p105 = scmp.ne.s32.totalorder %s90, %s104
    %p106 = scmp.eq.s32.totalorder %s17, 0
    %p107 = por %p105, %p106
    %s109 = sadd.s32 %s108, 1
    %p112 = scmp.eq.s32.totalorder %s11, 1
    %p113 = scmp.ne.s32.totalorder %s108, %s110
    %p114 = scmp.eq.s32.totalorder %s11, 0
    %p115 = por %p113, %p114
    %p116 = scmp.ne.s32.totalorder %s108, %s110
    %p117 = scmp.eq.s32.totalorder %s16, 1
    %p118 = por %p116, %p117
    %p119 = scmp.ne.s32.totalorder %s110, %s111
    %p120 = scmp.eq.s32.totalorder %s16, 0
    %p121 = por %p119, %p120
    %p122 = scmp.ne.s32.totalorder %s110, %s111
    %p123 = scmp.eq.s32.totalorder %s17, 1
    %p124 = por %p122, %p123
    %p126 = scmp.ne.s32.totalorder %s111, %s125
    %p127 = scmp.eq.s32.totalorder %s17, 0
    %p128 = por %p126, %p127
    %s129 = ssub.s32 %s11, %s18
    %p130 = scmp.eq.s32.totalorder %s129, 0
    %s132 = sadd.s32 %s131, 1
    %s133 = scalar_select %p130, %s131, %s132
    %p136 = pneg %p130
    %p137 = scmp.eq.s32.totalorder %s11, 1
    %p138 = por %p136, %p137
    %p139 = scmp.ne.s32.totalorder %s131, %s134
    %p140 = scmp.eq.s32.totalorder %s11, 0
    %p141 = por %p139, %p140
    %p142 = scmp.ne.s32.totalorder %s131, %s134
    %p143 = scmp.eq.s32.totalorder %s16, 1
    %p144 = por %p142, %p143
    %p145 = scmp.ne.s32.totalorder %s134, %s135
    %p146 = scmp.eq.s32.totalorder %s16, 0
    %p147 = por %p145, %p146
    %p148 = scmp.ne.s32.totalorder %s134, %s135
    %p149 = scmp.eq.s32.totalorder %s17, 1
    %p150 = por %p148, %p149
    %p152 = scmp.ne.s32.totalorder %s135, %s151
    %p153 = scmp.eq.s32.totalorder %s17, 0
    %p154 = por %p152, %p153
    %p155 = scmp.le.s32.totalorder 1, %s11
    %p156 = scmp.lt.s32.totalorder %s11, 3
    %p157 = pnand %p155, %p156
    %p158 = pneg %p157
    // Predicated region
    $region9: #{espnet_forward.24} parent=5 // pred_check
      _
    $region10: #{espnet_forward.24} parent=5 // pred_check_branch
      %160 = sbr.rel (%p157) target = $region12
    $region11: #{espnet_forward.24} parent=5 // pred_region
      %s161 = ssub.s32 %s11, 1
      // Predicated region
      $region13: #{espnet_forward.24} parent=11 // pred_check
        %p162 = pneg %p58
      $region14: #{espnet_forward.24} parent=11 // pred_check_branch
        %164 = sbr.rel (%p162) target = $region16
      $region15: #{espnet_forward.24} parent=11 // pred_region
        _
      $region16: #{espnet_forward.24} parent=11 // pred_fallthru
        _
      // Predicated region
      $region17: #{espnet_forward.24} parent=11 // pred_check
        %p165 = pneg %p79
      $region18: #{espnet_forward.24} parent=11 // pred_check_branch
        %167 = sbr.rel (%p165) target = $region20
      $region19: #{espnet_forward.24} parent=11 // pred_region
        _
      $region20: #{espnet_forward.24} parent=11 // pred_fallthru
        _
      // Predicated region
      $region21: #{espnet_forward.24} parent=11 // pred_check
        %p168 = pneg %p100
      $region22: #{espnet_forward.24} parent=11 // pred_check_branch
        %170 = sbr.rel (%p168) target = $region24
      $region23: #{espnet_forward.24} parent=11 // pred_region
        _
      $region24: #{espnet_forward.24} parent=11 // pred_fallthru
        _
      // Predicated region
      $region25: #{espnet_forward.24} parent=11 // pred_check
        %p171 = pneg %p121
      $region26: #{espnet_forward.24} parent=11 // pred_check_branch
        %173 = sbr.rel (%p171) target = $region28
      $region27: #{espnet_forward.24} parent=11 // pred_region
        _
      $region28: #{espnet_forward.24} parent=11 // pred_fallthru
        _
    $region12: #{espnet_forward.24} parent=5 // pred_fallthru
      _
    %p174 = scmp.lt.s32.totalorder %s11, 2
    // Predicated region
    $region29: #{espnet_forward.24} parent=5 // pred_check
      %p175 = pneg %p174
    $region30: #{espnet_forward.24} parent=5 // pred_check_branch
      %177 = sbr.rel (%p175) target = $region32
    $region31: #{espnet_forward.24} parent=5 // pred_region
      // Predicated region
      $region33: #{espnet_forward.24} parent=31 // pred_check
        %p178 = pneg %p31
      $region34: #{espnet_forward.24} parent=31 // pred_check_branch
        %180 = sbr.rel (%p178) target = $region36
      $region35: #{espnet_forward.24} parent=31 // pred_region
        %s181 = smul.u32 32, %s11
        %p182 = scmp.lt.s32.totalorder %s181, 63
        %s183 = scalar_select %p182, %s181, 63
        %s184 = smul.addr %s183, 4
        %s185 = scalar_lea.vmem %s0, %s184
        %s186 = smul.u32 32, %s11
      $region36: #{espnet_forward.24} parent=31 // pred_fallthru
        _
    $region32: #{espnet_forward.24} parent=5 // pred_fallthru
      _
    %p187 = scmp.le.s32.totalorder 1, %s11
    %p188 = scmp.lt.s32.totalorder %s11, 3
    %p189 = pnand %p187, %p188
    %p190 = pneg %p189
    // Predicated region
    $region37: #{espnet_forward.24} parent=5 // pred_check
      _
    $region38: #{espnet_forward.24} parent=5 // pred_check_branch
      %192 = sbr.rel (%p189) target = $region40
    $region39: #{espnet_forward.24} parent=5 // pred_region
      %s193 = ssub.s32 %s11, 1
      %s194 = smul.u32 32, %s16
      %p195 = scmp.lt.s32.totalorder %s194, 63
      %s196 = scalar_select %p195, %s194, 63
      %s197 = smul.addr %s196, 4
      %s198 = scalar_lea.vmem %s0, %s197
      %p199 = pneg %p37
      %p200 = pneg %p34
      %p201 = pneg %p58
      %p202 = pneg %p55
      %p203 = pneg %p79
      %p204 = pneg %p76
      %p205 = pneg %p100
      %p206 = pneg %p97
      %p207 = pneg %p121
      %p208 = pneg %p118
      %p209 = pneg %p147
      %p210 = pneg %p144
      %s211 = smul.u32 32, %s16
      %p212 = scmp.lt.s32.totalorder %s211, 63
      %s213 = scalar_select %p212, %s211, 63
      %s214 = smul.addr %s213, 4
      %s215 = scalar_lea.vmem %s5, %s214
      %s216 = smul.u32 32, %s16
      %p217 = scmp.lt.s32.totalorder %s216, 63
      %s218 = scalar_select %p217, %s216, 63
      %s219 = smul.addr %s218, 4
      %s220 = scalar_lea.vmem %s0, %s219
      %s221 = smul.u32 32, %s16
      %s222 = smul.u32 32, %s16
      %p223 = scmp.lt.s32.totalorder %s222, 63
      %s224 = scalar_select %p223, %s222, 63
      %s225 = smul.addr %s224, 4
      %s226 = scalar_lea.vmem %s5, %s225
      %s227 = smul.u32 32, %s16
      %v229 = vld [vmem:[%s220] sm:$0xf]
      %v230 = vld [vmem:[%s220 + $0x4] sm:$0xf]
      %v231 = vld [vmem:[%s220 + $0x8] sm:$0xf]
      %v232 = vld [vmem:[%s220 + $0xc] sm:$0xf]
      %v233 = vld [vmem:[%s220 + $0x10] sm:$0xf]
      %v234 = vld [vmem:[%s220 + $0x14] sm:$0xf]
      %v235 = vld [vmem:[%s220 + $0x18] sm:$0xf]
      %v236 = vld [vmem:[%s220 + $0x1c] sm:$0xf]
      %v237 = vld [vmem:[%s220 + $0x20] sm:$0xf]
      %v238 = vld [vmem:[%s220 + $0x24] sm:$0xf]
      %v239 = vld [vmem:[%s220 + $0x28] sm:$0xf]
      %v240 = vld [vmem:[%s220 + $0x2c] sm:$0xf]
      %v241 = vld [vmem:[%s220 + $0x30] sm:$0xf]
      %v242 = vld [vmem:[%s220 + $0x34] sm:$0xf]
      %v243 = vld [vmem:[%s220 + $0x38] sm:$0xf]
      %v244 = vld [vmem:[%s220 + $0x3c] sm:$0xf]
      %v245 = vld [vmem:[%s220 + $0x40] sm:$0xf]
      %v246 = vld [vmem:[%s220 + $0x44] sm:$0xf]
      %v247 = vld [vmem:[%s220 + $0x48] sm:$0xf]
      %v248 = vld [vmem:[%s220 + $0x4c] sm:$0xf]
      %v249 = vld [vmem:[%s220 + $0x50] sm:$0xf]
      %v250 = vld [vmem:[%s220 + $0x54] sm:$0xf]
      %v251 = vld [vmem:[%s220 + $0x58] sm:$0xf]
      %v252 = vld [vmem:[%s220 + $0x5c] sm:$0xf]
      %v253 = vld [vmem:[%s220 + $0x60] sm:$0xf]
      %v254 = vld [vmem:[%s220 + $0x64] sm:$0xf]
      %v255 = vld [vmem:[%s220 + $0x68] sm:$0xf]
      %v256 = vld [vmem:[%s220 + $0x6c] sm:$0xf]
      %v257 = vld [vmem:[%s220 + $0x70] sm:$0xf]
      %v258 = vld [vmem:[%s220 + $0x74] sm:$0xf]
      %v259 = vld [vmem:[%s220 + $0x78] sm:$0xf]
      %v260 = vld [vmem:[%s220 + $0x7c] sm:$0xf]
      %v261 = vld [vmem:[%s1] sm:$0xf]
      %v262 = vld [vmem:[%s1 + $0x4] sm:$0xf]
      %v263 = vld [vmem:[%s1 + $0x8] sm:$0xf]
      %v264 = vld [vmem:[%s1 + $0xc] sm:$0x3]
      %v297 = vunpack.c.l.b16 %v229
      %v298 = vunpack.c.l.b16 %v230
      %v299 = vunpack.c.l.b16 %v231
      %v300 = vunpack.c.l.b16 %v232
      %v301 = vunpack.c.l.b16 %v233
      %v302 = vunpack.c.l.b16 %v234
      %v303 = vunpack.c.l.b16 %v235
      %v304 = vunpack.c.l.b16 %v236
      %v305 = vunpack.c.l.b16 %v237
      %v306 = vunpack.c.l.b16 %v238
      %v307 = vunpack.c.l.b16 %v239
      %v308 = vunpack.c.l.b16 %v240
      %v309 = vunpack.c.l.b16 %v241
      %v310 = vunpack.c.l.b16 %v242
      %v311 = vunpack.c.l.b16 %v243
      %v312 = vunpack.c.l.b16 %v244
      %v313 = vunpack.c.l.b16 %v245
      %v314 = vunpack.c.l.b16 %v246
      %v315 = vunpack.c.l.b16 %v247
      %v316 = vunpack.c.l.b16 %v248
      %v317 = vunpack.c.l.b16 %v249
      %v318 = vunpack.c.l.b16 %v250
      %v319 = vunpack.c.l.b16 %v251
      %v320 = vunpack.c.l.b16 %v252
      %v321 = vunpack.c.l.b16 %v253
      %v322 = vunpack.c.l.b16 %v254
      %v323 = vunpack.c.l.b16 %v255
      %v324 = vunpack.c.l.b16 %v256
      %v325 = vunpack.c.l.b16 %v257
      %v326 = vunpack.c.l.b16 %v258
      %v327 = vunpack.c.l.b16 %v259
      %v328 = vunpack.c.l.b16 %v260
      %v329 = vpack.c.b16 %v298, %v297
      %v330 = vpack.c.b16 %v300, %v299
      %v331 = vpack.c.b16 %v302, %v301
      %v332 = vpack.c.b16 %v304, %v303
      %v333 = vpack.c.b16 %v306, %v305
      %v334 = vpack.c.b16 %v308, %v307
      %v335 = vpack.c.b16 %v310, %v309
      %v336 = vpack.c.b16 %v312, %v311
      %v337 = vpack.c.b16 %v314, %v313
      %v338 = vpack.c.b16 %v316, %v315
      %v339 = vpack.c.b16 %v318, %v317
      %v340 = vpack.c.b16 %v320, %v319
      %v341 = vpack.c.b16 %v322, %v321
      %v342 = vpack.c.b16 %v324, %v323
      %v343 = vpack.c.b16 %v326, %v325
      %v344 = vpack.c.b16 %v328, %v327
      %v349 = vunpack.c.l.b16 %v261
      %v350 = vunpack.c.l.b16 %v262
      %v351 = vunpack.c.l.b16 %v263
      %v352 = vunpack.c.l.b16 %v264
      %v353 = vpack.c.b16 %v350, %v349
      %v354 = vpack.c.b16 %v352, %v351
      %vm356 = vcmask 220160
      %v358 = vsel %vm356, %v329, 0
      %v361 = vsel %vm356, %v330, 0
      %v364 = vsel %vm356, %v331, 0
      %v367 = vsel %vm356, %v332, 0
      %v370 = vsel %vm356, %v333, 0
      %v373 = vsel %vm356, %v334, 0
      %v376 = vsel %vm356, %v335, 0
      %v379 = vsel %vm356, %v336, 0
      %v382 = vsel %vm356, %v337, 0
      %v385 = vsel %vm356, %v338, 0
      %v388 = vsel %vm356, %v339, 0
      %v391 = vsel %vm356, %v340, 0
      %v394 = vsel %vm356, %v341, 0
      %v397 = vsel %vm356, %v342, 0
      %v400 = vsel %vm356, %v343, 0
      %v403 = vsel %vm356, %v344, 0
      %vm405 = vcmask 1044480
      %vm406 = vcmask 1045504
      %v407 = vsel %vm405, 4294967295, 65535
      %v408 = vsel %vm406, %v407, 0
      %v410 = vand.u32 %v354, %v408
      %412 = vmatpush.bf16.msra.mxu0 0
      %413 = vmatpush.bf16.msra.mxu0 0
      %414 = vmatpush.bf16.msra.mxu0 0
      %415 = vmatpush.bf16.msra.mxu0 0
      %416 = vmatpush.bf16.msra.mxu0 0
      %417 = vmatpush.bf16.msra.mxu0 0
      %418 = vmatpush.bf16.msra.mxu0 %v410
      %419 = vmatpush.bf16.msra.mxu0 %v353
      %420 = vmatmul.bf16.gmra.mxu0 %v358
      %v421 = vpop.f32.mrf.mxu0
      %v422 = vadd.f32 0.0, %v421
      %v423 = vpop.f32.mrf.mxu0
      %v424 = vadd.f32 0.0, %v423
      %425 = vmatmul.bf16.gmra.mxu0 %v361
      %v426 = vpop.f32.mrf.mxu0
      %v427 = vadd.f32 0.0, %v426
      %v428 = vpop.f32.mrf.mxu0
      %v429 = vadd.f32 0.0, %v428
      %430 = vmatmul.bf16.gmra.mxu0 %v364
      %v431 = vpop.f32.mrf.mxu0
      %v432 = vadd.f32 0.0, %v431
      %v433 = vpop.f32.mrf.mxu0
      %v434 = vadd.f32 0.0, %v433
      %435 = vmatmul.bf16.gmra.mxu0 %v367
      %v436 = vpop.f32.mrf.mxu0
      %v437 = vadd.f32 0.0, %v436
      %v438 = vpop.f32.mrf.mxu0
      %v439 = vadd.f32 0.0, %v438
      %440 = vmatmul.bf16.gmra.mxu0 %v370
      %v441 = vpop.f32.mrf.mxu0
      %v442 = vadd.f32 0.0, %v441
      %v443 = vpop.f32.mrf.mxu0
      %v444 = vadd.f32 0.0, %v443
      %445 = vmatmul.bf16.gmra.mxu0 %v373
      %v446 = vpop.f32.mrf.mxu0
      %v447 = vadd.f32 0.0, %v446
      %v448 = vpop.f32.mrf.mxu0
      %v449 = vadd.f32 0.0, %v448
      %450 = vmatmul.bf16.gmra.mxu0 %v376
      %v451 = vpop.f32.mrf.mxu0
      %v452 = vadd.f32 0.0, %v451
      %v453 = vpop.f32.mrf.mxu0
      %v454 = vadd.f32 0.0, %v453
      %455 = vmatmul.bf16.gmra.mxu0 %v379
      %v456 = vpop.f32.mrf.mxu0
      %v457 = vadd.f32 0.0, %v456
      %v458 = vpop.f32.mrf.mxu0
      %v459 = vadd.f32 0.0, %v458
      %460 = vmatmul.bf16.gmra.mxu0 %v382
      %v461 = vpop.f32.mrf.mxu0
      %v462 = vadd.f32 0.0, %v461
      %v463 = vpop.f32.mrf.mxu0
      %v464 = vadd.f32 0.0, %v463
      %465 = vmatmul.bf16.gmra.mxu0 %v385
      %v466 = vpop.f32.mrf.mxu0
      %v467 = vadd.f32 0.0, %v466
      %v468 = vpop.f32.mrf.mxu0
      %v469 = vadd.f32 0.0, %v468
      %470 = vmatmul.bf16.gmra.mxu0 %v388
      %v471 = vpop.f32.mrf.mxu0
      %v472 = vadd.f32 0.0, %v471
      %v473 = vpop.f32.mrf.mxu0
      %v474 = vadd.f32 0.0, %v473
      %475 = vmatmul.bf16.gmra.mxu0 %v391
      %v476 = vpop.f32.mrf.mxu0
      %v477 = vadd.f32 0.0, %v476
      %v478 = vpop.f32.mrf.mxu0
      %v479 = vadd.f32 0.0, %v478
      %480 = vmatmul.bf16.gmra.mxu0 %v394
      %v481 = vpop.f32.mrf.mxu0
      %v482 = vadd.f32 0.0, %v481
      %v483 = vpop.f32.mrf.mxu0
      %v484 = vadd.f32 0.0, %v483
      %485 = vmatmul.bf16.gmra.mxu0 %v397
      %v486 = vpop.f32.mrf.mxu0
      %v487 = vadd.f32 0.0, %v486
      %v488 = vpop.f32.mrf.mxu0
      %v489 = vadd.f32 0.0, %v488
      %490 = vmatmul.bf16.gmra.mxu0 %v400
      %v491 = vpop.f32.mrf.mxu0
      %v492 = vadd.f32 0.0, %v491
      %v493 = vpop.f32.mrf.mxu0
      %v494 = vadd.f32 0.0, %v493
      %495 = vmatmul.bf16.gmra.mxu0 %v403
      %v496 = vpop.f32.mrf.mxu0
      %v497 = vadd.f32 0.0, %v496
      %v498 = vpop.f32.mrf.mxu0
      %v499 = vadd.f32 0.0, %v498
      %500 = vdwg.mxu0
      %v501 = vld [vmem:[%s2] sm:$0x1]
      %v503 = vperm.slane %v501, 0
      %v505 = vmul.f32 %v422, %v503
      %v506 = vmul.f32 %v424, %v503
      %v507 = vmul.f32 %v427, %v503
      %v508 = vmul.f32 %v429, %v503
      %v509 = vmul.f32 %v432, %v503
      %v510 = vmul.f32 %v434, %v503
      %v511 = vmul.f32 %v437, %v503
      %v512 = vmul.f32 %v439, %v503
      %v513 = vmul.f32 %v442, %v503
      %v514 = vmul.f32 %v444, %v503
      %v515 = vmul.f32 %v447, %v503
      %v516 = vmul.f32 %v449, %v503
      %v517 = vmul.f32 %v452, %v503
      %v518 = vmul.f32 %v454, %v503
      %v519 = vmul.f32 %v457, %v503
      %v520 = vmul.f32 %v459, %v503
      %v521 = vmul.f32 %v462, %v503
      %v522 = vmul.f32 %v464, %v503
      %v523 = vmul.f32 %v467, %v503
      %v524 = vmul.f32 %v469, %v503
      %v525 = vmul.f32 %v472, %v503
      %v526 = vmul.f32 %v474, %v503
      %v527 = vmul.f32 %v477, %v503
      %v528 = vmul.f32 %v479, %v503
      %v529 = vmul.f32 %v482, %v503
      %v530 = vmul.f32 %v484, %v503
      %v531 = vmul.f32 %v487, %v503
      %v532 = vmul.f32 %v489, %v503
      %v533 = vmul.f32 %v492, %v503
      %v534 = vmul.f32 %v494, %v503
      %v535 = vmul.f32 %v497, %v503
      %v536 = vmul.f32 %v499, %v503
      %v537 = vld [vmem:[%s3] sm:$0x1]
      %v539 = vperm.slane %v537, 0
      %v541 = vadd.f32 %v505, %v539
      %v542 = vadd.f32 %v506, %v539
      %v543 = vadd.f32 %v507, %v539
      %v544 = vadd.f32 %v508, %v539
      %v545 = vadd.f32 %v509, %v539
      %v546 = vadd.f32 %v510, %v539
      %v547 = vadd.f32 %v511, %v539
      %v548 = vadd.f32 %v512, %v539
      %v549 = vadd.f32 %v513, %v539
      %v550 = vadd.f32 %v514, %v539
      %v551 = vadd.f32 %v515, %v539
      %v552 = vadd.f32 %v516, %v539
      %v553 = vadd.f32 %v517, %v539
      %v554 = vadd.f32 %v518, %v539
      %v555 = vadd.f32 %v519, %v539
      %v556 = vadd.f32 %v520, %v539
      %v557 = vadd.f32 %v521, %v539
      %v558 = vadd.f32 %v522, %v539
      %v559 = vadd.f32 %v523, %v539
      %v560 = vadd.f32 %v524, %v539
      %v561 = vadd.f32 %v525, %v539
      %v562 = vadd.f32 %v526, %v539
      %v563 = vadd.f32 %v527, %v539
      %v564 = vadd.f32 %v528, %v539
      %v565 = vadd.f32 %v529, %v539
      %v566 = vadd.f32 %v530, %v539
      %v567 = vadd.f32 %v531, %v539
      %v568 = vadd.f32 %v532, %v539
      %v569 = vadd.f32 %v533, %v539
      %v570 = vadd.f32 %v534, %v539
      %v571 = vadd.f32 %v535, %v539
      %v572 = vadd.f32 %v536, %v539
      %vm573 = vcmp.ge.f32.partialorder %v541, 0.0
      %vm574 = vcmp.ge.f32.partialorder %v542, 0.0
      %vm575 = vcmp.ge.f32.partialorder %v543, 0.0
      %vm576 = vcmp.ge.f32.partialorder %v544, 0.0
      %vm577 = vcmp.ge.f32.partialorder %v545, 0.0
      %vm578 = vcmp.ge.f32.partialorder %v546, 0.0
      %vm579 = vcmp.ge.f32.partialorder %v547, 0.0
      %vm580 = vcmp.ge.f32.partialorder %v548, 0.0
      %vm581 = vcmp.ge.f32.partialorder %v549, 0.0
      %vm582 = vcmp.ge.f32.partialorder %v550, 0.0
      %vm583 = vcmp.ge.f32.partialorder %v551, 0.0
      %vm584 = vcmp.ge.f32.partialorder %v552, 0.0
      %vm585 = vcmp.ge.f32.partialorder %v553, 0.0
      %vm586 = vcmp.ge.f32.partialorder %v554, 0.0
      %vm587 = vcmp.ge.f32.partialorder %v555, 0.0
      %vm588 = vcmp.ge.f32.partialorder %v556, 0.0
      %vm589 = vcmp.ge.f32.partialorder %v557, 0.0
      %vm590 = vcmp.ge.f32.partialorder %v558, 0.0
      %vm591 = vcmp.ge.f32.partialorder %v559, 0.0
      %vm592 = vcmp.ge.f32.partialorder %v560, 0.0
      %vm593 = vcmp.ge.f32.partialorder %v561, 0.0
      %vm594 = vcmp.ge.f32.partialorder %v562, 0.0
      %vm595 = vcmp.ge.f32.partialorder %v563, 0.0
      %vm596 = vcmp.ge.f32.partialorder %v564, 0.0
      %vm597 = vcmp.ge.f32.partialorder %v565, 0.0
      %vm598 = vcmp.ge.f32.partialorder %v566, 0.0
      %vm599 = vcmp.ge.f32.partialorder %v567, 0.0
      %vm600 = vcmp.ge.f32.partialorder %v568, 0.0
      %vm601 = vcmp.ge.f32.partialorder %v569, 0.0
      %vm602 = vcmp.ge.f32.partialorder %v570, 0.0
      %vm603 = vcmp.ge.f32.partialorder %v571, 0.0
      %vm604 = vcmp.ge.f32.partialorder %v572, 0.0
      %v605 = vld [vmem:[%s4] sm:$0x1]
      %v607 = vperm.slane %v605, 0
      %v609 = vmul.f32 %v607, %v541
      %v610 = vmul.f32 %v607, %v542
      %v611 = vmul.f32 %v607, %v543
      %v612 = vmul.f32 %v607, %v544
      %v613 = vmul.f32 %v607, %v545
      %v614 = vmul.f32 %v607, %v546
      %v615 = vmul.f32 %v607, %v547
      %v616 = vmul.f32 %v607, %v548
      %v617 = vmul.f32 %v607, %v549
      %v618 = vmul.f32 %v607, %v550
      %v619 = vmul.f32 %v607, %v551
      %v620 = vmul.f32 %v607, %v552
      %v621 = vmul.f32 %v607, %v553
      %v622 = vmul.f32 %v607, %v554
      %v623 = vmul.f32 %v607, %v555
      %v624 = vmul.f32 %v607, %v556
      %v625 = vmul.f32 %v607, %v557
      %v626 = vmul.f32 %v607, %v558
      %v627 = vmul.f32 %v607, %v559
      %v628 = vmul.f32 %v607, %v560
      %v629 = vmul.f32 %v607, %v561
      %v630 = vmul.f32 %v607, %v562
      %v631 = vmul.f32 %v607, %v563
      %v632 = vmul.f32 %v607, %v564
      %v633 = vmul.f32 %v607, %v565
      %v634 = vmul.f32 %v607, %v566
      %v635 = vmul.f32 %v607, %v567
      %v636 = vmul.f32 %v607, %v568
      %v637 = vmul.f32 %v607, %v569
      %v638 = vmul.f32 %v607, %v570
      %v639 = vmul.f32 %v607, %v571
      %v640 = vmul.f32 %v607, %v572
      %v641 = vsel %vm573, %v541, %v609
      %v642 = vsel %vm574, %v542, %v610
      %v643 = vsel %vm575, %v543, %v611
      %v644 = vsel %vm576, %v544, %v612
      %v645 = vsel %vm577, %v545, %v613
      %v646 = vsel %vm578, %v546, %v614
      %v647 = vsel %vm579, %v547, %v615
      %v648 = vsel %vm580, %v548, %v616
      %v649 = vsel %vm581, %v549, %v617
      %v650 = vsel %vm582, %v550, %v618
      %v651 = vsel %vm583, %v551, %v619
      %v652 = vsel %vm584, %v552, %v620
      %v653 = vsel %vm585, %v553, %v621
      %v654 = vsel %vm586, %v554, %v622
      %v655 = vsel %vm587, %v555, %v623
      %v656 = vsel %vm588, %v556, %v624
      %v657 = vsel %vm589, %v557, %v625
      %v658 = vsel %vm590, %v558, %v626
      %v659 = vsel %vm591, %v559, %v627
      %v660 = vsel %vm592, %v560, %v628
      %v661 = vsel %vm593, %v561, %v629
      %v662 = vsel %vm594, %v562, %v630
      %v663 = vsel %vm595, %v563, %v631
      %v664 = vsel %vm596, %v564, %v632
      %v665 = vsel %vm597, %v565, %v633
      %v666 = vsel %vm598, %v566, %v634
      %v667 = vsel %vm599, %v567, %v635
      %v668 = vsel %vm600, %v568, %v636
      %v669 = vsel %vm601, %v569, %v637
      %v670 = vsel %vm602, %v570, %v638
      %v671 = vsel %vm603, %v571, %v639
      %v672 = vsel %vm604, %v572, %v640
      %v673 = vpack.c.bf16 %v641, %v641
      %v674 = vpack.c.bf16 %v642, %v642
      %v675 = vpack.c.bf16 %v643, %v643
      %v676 = vpack.c.bf16 %v644, %v644
      %v677 = vpack.c.bf16 %v645, %v645
      %v678 = vpack.c.bf16 %v646, %v646
      %v679 = vpack.c.bf16 %v647, %v647
      %v680 = vpack.c.bf16 %v648, %v648
      %v681 = vpack.c.bf16 %v649, %v649
      %v682 = vpack.c.bf16 %v650, %v650
      %v683 = vpack.c.bf16 %v651, %v651
      %v684 = vpack.c.bf16 %v652, %v652
      %v685 = vpack.c.bf16 %v653, %v653
      %v686 = vpack.c.bf16 %v654, %v654
      %v687 = vpack.c.bf16 %v655, %v655
      %v688 = vpack.c.bf16 %v656, %v656
      %v689 = vpack.c.bf16 %v657, %v657
      %v690 = vpack.c.bf16 %v658, %v658
      %v691 = vpack.c.bf16 %v659, %v659
      %v692 = vpack.c.bf16 %v660, %v660
      %v693 = vpack.c.bf16 %v661, %v661
      %v694 = vpack.c.bf16 %v662, %v662
      %v695 = vpack.c.bf16 %v663, %v663
      %v696 = vpack.c.bf16 %v664, %v664
      %v697 = vpack.c.bf16 %v665, %v665
      %v698 = vpack.c.bf16 %v666, %v666
      %v699 = vpack.c.bf16 %v667, %v667
      %v700 = vpack.c.bf16 %v668, %v668
      %v701 = vpack.c.bf16 %v669, %v669
      %v702 = vpack.c.bf16 %v670, %v670
      %v703 = vpack.c.bf16 %v671, %v671
      %v704 = vpack.c.bf16 %v672, %v672
      %705 = vst [vmem:[%s226] sm:$0xf] %v673
      %706 = vst [vmem:[%s226 + $0x4] sm:$0xf] %v674
      %707 = vst [vmem:[%s226 + $0x8] sm:$0xf] %v675
      %708 = vst [vmem:[%s226 + $0xc] sm:$0xf] %v676
      %709 = vst [vmem:[%s226 + $0x10] sm:$0xf] %v677
      %710 = vst [vmem:[%s226 + $0x14] sm:$0xf] %v678
      %711 = vst [vmem:[%s226 + $0x18] sm:$0xf] %v679
      %712 = vst [vmem:[%s226 + $0x1c] sm:$0xf] %v680
      %713 = vst [vmem:[%s226 + $0x20] sm:$0xf] %v681
      %714 = vst [vmem:[%s226 + $0x24] sm:$0xf] %v682
      %715 = vst [vmem:[%s226 + $0x28] sm:$0xf] %v683
      %716 = vst [vmem:[%s226 + $0x2c] sm:$0xf] %v684
      %717 = vst [vmem:[%s226 + $0x30] sm:$0xf] %v685
      %718 = vst [vmem:[%s226 + $0x34] sm:$0xf] %v686
      %719 = vst [vmem:[%s226 + $0x38] sm:$0xf] %v687
      %720 = vst [vmem:[%s226 + $0x3c] sm:$0xf] %v688
      %721 = vst [vmem:[%s226 + $0x40] sm:$0xf] %v689
      %722 = vst [vmem:[%s226 + $0x44] sm:$0xf] %v690
      %723 = vst [vmem:[%s226 + $0x48] sm:$0xf] %v691
      %724 = vst [vmem:[%s226 + $0x4c] sm:$0xf] %v692
      %725 = vst [vmem:[%s226 + $0x50] sm:$0xf] %v693
      %726 = vst [vmem:[%s226 + $0x54] sm:$0xf] %v694
      %727 = vst [vmem:[%s226 + $0x58] sm:$0xf] %v695
      %728 = vst [vmem:[%s226 + $0x5c] sm:$0xf] %v696
      %729 = vst [vmem:[%s226 + $0x60] sm:$0xf] %v697
      %730 = vst [vmem:[%s226 + $0x64] sm:$0xf] %v698
      %731 = vst [vmem:[%s226 + $0x68] sm:$0xf] %v699
      %732 = vst [vmem:[%s226 + $0x6c] sm:$0xf] %v700
      %733 = vst [vmem:[%s226 + $0x70] sm:$0xf] %v701
      %734 = vst [vmem:[%s226 + $0x74] sm:$0xf] %v702
      %735 = vst [vmem:[%s226 + $0x78] sm:$0xf] %v703
      %736 = vst [vmem:[%s226 + $0x7c] sm:$0xf] %v704
      %s737 = smul.u32 32, %s16
      %p738 = scmp.lt.s32.totalorder %s737, 63
      %s739 = scalar_select %p738, %s737, 63
      %s740 = smul.addr %s739, 4
      %s741 = scalar_lea.vmem %s5, %s740
      // Predicated region
      $region41: #{espnet_forward.24} parent=39 // pred_check
        %p742 = pneg %p144
      $region42: #{espnet_forward.24} parent=39 // pred_check_branch
        %744 = sbr.rel (%p742) target = $region44
      $region43: #{espnet_forward.24} parent=39 // pred_region
        %s745 = smul.u32 32, %s16
      $region44: #{espnet_forward.24} parent=39 // pred_fallthru
        _
    $region40: #{espnet_forward.24} parent=5 // pred_fallthru
      _
    %p746 = scmp.le.s32.totalorder 2, %s11
    // Predicated region
    $region45: #{espnet_forward.24} parent=5 // pred_check
      %p747 = pneg %p746
    $region46: #{espnet_forward.24} parent=5 // pred_check_branch
      %749 = sbr.rel (%p747) target = $region48
    $region47: #{espnet_forward.24} parent=5 // pred_region
      %s750 = ssub.s32 %s11, 2
      // Predicated region
      $region49: #{espnet_forward.24} parent=47 // pred_check
        %p751 = pneg %p150
      $region50: #{espnet_forward.24} parent=47 // pred_check_branch
        %753 = sbr.rel (%p751) target = $region52
      $region51: #{espnet_forward.24} parent=47 // pred_region
        %s754 = smul.u32 32, %s17
        %p755 = scmp.lt.s32.totalorder %s754, 63
        %s756 = scalar_select %p755, %s754, 63
        %s757 = smul.addr %s756, 4
        %s758 = scalar_lea.vmem %s5, %s757
      $region52: #{espnet_forward.24} parent=47 // pred_fallthru
        _
    $region48: #{espnet_forward.24} parent=5 // pred_fallthru
      _
  $region6: #{espnet_forward.24} parent=0 // loop_footer
    %s15 = sadd.s32 1, %s11
  $region7: #{espnet_forward.24} parent=0 // loop_footer_branch
    %10 = sbr.rel target = $region3
  $region8: #{espnet_forward.24} parent=0 // loop_exit
    _

// kernel: espnet_forward.25
$region0: #{espnet_forward.25}
  #allocation0 [shape = 'u32[]', space=smem, size = 0x4, offset = 0x4, fixed_abs, tag = 'smem constant byte address 0x4 - core index']
  #allocation1 [shape = 'u32[72,128]{1,0:T(1,128)}', space=vmem, size = 0x9000, scoped, tag = 'internal scratch']
  %s0 = inlined_call_operand.vmem [shape: bf16[128,171], index: 0, kind: input, shape index: {}]
  %s1 = inlined_call_operand.vmem [shape: bf16[171,128], index: 1, kind: input, shape index: {}]
  %s2 = inlined_call_operand.vmem [shape: f32[1,128], index: 2, kind: input, shape index: {}]
  %s3 = inlined_call_operand.vmem [shape: f32[1,128], index: 3, kind: input, shape index: {}]
  %s4 = inlined_call_operand.vmem [shape: f32[1,128], index: 4, kind: input, shape index: {}]
  %s5 = inlined_call_operand.vmem [shape: bf16[128,128], index: 5, kind: output, shape index: {}]
  %s6 = sld [smem:[#allocation0]]
  $region30: #{espnet_forward.25} parent=0
    _
  %s8 = ssub.s32 1, %s6
  %s9 = scalar_select 0, %s8, %s6
  // Predicated region
  $region2: #{espnet_forward.25} parent=0 // pred_check
    _
  $region3: #{espnet_forward.25} parent=0 // pred_check_branch
    %11 = sbr.rel (0) target = $region5
  $region4: #{espnet_forward.25} parent=0 // pred_region
    _
  $region5: #{espnet_forward.25} parent=0 // pred_fallthru
    _
  // Predicated region
  $region6: #{espnet_forward.25} parent=0 // pred_check
    _
  $region7: #{espnet_forward.25} parent=0 // pred_check_branch
    %13 = sbr.rel (0) target = $region9
  $region8: #{espnet_forward.25} parent=0 // pred_region
    _
  $region9: #{espnet_forward.25} parent=0 // pred_fallthru
    _
  // Predicated region
  $region10: #{espnet_forward.25} parent=0 // pred_check
    _
  $region11: #{espnet_forward.25} parent=0 // pred_check_branch
    %15 = sbr.rel (0) target = $region13
  $region12: #{espnet_forward.25} parent=0 // pred_region
    _
  $region13: #{espnet_forward.25} parent=0 // pred_fallthru
    _
  // Predicated region
  $region14: #{espnet_forward.25} parent=0 // pred_check
    _
  $region15: #{espnet_forward.25} parent=0 // pred_check_branch
    %17 = sbr.rel (0) target = $region17
  $region16: #{espnet_forward.25} parent=0 // pred_region
    _
  $region17: #{espnet_forward.25} parent=0 // pred_fallthru
    _
  // Predicated region
  $region18: #{espnet_forward.25} parent=0 // pred_check
    _
  $region19: #{espnet_forward.25} parent=0 // pred_check_branch
    %19 = sbr.rel (0) target = $region21
  $region20: #{espnet_forward.25} parent=0 // pred_region
    _
  $region21: #{espnet_forward.25} parent=0 // pred_fallthru
    _
  %v21 = vld [vmem:[%s0] sm:$0xff]
  %v22 = vld [vmem:[%s0 + $0x8] sm:$0xff]
  %v23 = vld [vmem:[%s0 + $0x10] sm:$0xff]
  %v24 = vld [vmem:[%s0 + $0x18] sm:$0xff]
  %v25 = vld [vmem:[%s0 + $0x20] sm:$0xff]
  %v26 = vld [vmem:[%s0 + $0x28] sm:$0xff]
  %v27 = vld [vmem:[%s0 + $0x30] sm:$0xff]
  %v28 = vld [vmem:[%s0 + $0x38] sm:$0xff]
  %v29 = vld [vmem:[%s0 + $0x40] sm:$0xff]
  %v30 = vld [vmem:[%s0 + $0x48] sm:$0xff]
  %v31 = vld [vmem:[%s0 + $0x50] sm:$0xff]
  %v32 = vld [vmem:[%s0 + $0x58] sm:$0xff]
  %v33 = vld [vmem:[%s0 + $0x60] sm:$0xff]
  %v34 = vld [vmem:[%s0 + $0x68] sm:$0xff]
  %v35 = vld [vmem:[%s0 + $0x70] sm:$0xff]
  %v36 = vld [vmem:[%s0 + $0x78] sm:$0xff]
  %v37 = vld [vmem:[%s1] sm:$0xf]
  %v38 = vld [vmem:[%s1 + $0x4] sm:$0xf]
  %v39 = vld [vmem:[%s1 + $0x8] sm:$0xf]
  %v40 = vld [vmem:[%s1 + $0xc] sm:$0xf]
  %v41 = vld [vmem:[%s1 + $0x10] sm:$0xf]
  %v42 = vld [vmem:[%s1 + $0x14] sm:$0xf]
  %v43 = vld [vmem:[%s1 + $0x18] sm:$0xf]
  %v44 = vld [vmem:[%s1 + $0x1c] sm:$0xf]
  %v45 = vld [vmem:[%s1 + $0x20] sm:$0xf]
  %v46 = vld [vmem:[%s1 + $0x24] sm:$0xf]
  %v47 = vld [vmem:[%s1 + $0x28] sm:$0xf]
  %v48 = vld [vmem:[%s1 + $0x2c] sm:$0xf]
  %v49 = vld [vmem:[%s1 + $0x30] sm:$0xf]
  %v50 = vld [vmem:[%s1 + $0x34] sm:$0xf]
  %v51 = vld [vmem:[%s1 + $0x38] sm:$0xf]
  %v52 = vld [vmem:[%s1 + $0x3c] sm:$0xf]
  %v53 = vld [vmem:[%s1 + $0x40] sm:$0xf]
  %v54 = vld [vmem:[%s1 + $0x44] sm:$0xf]
  %v55 = vld [vmem:[%s1 + $0x48] sm:$0xf]
  %v56 = vld [vmem:[%s1 + $0x4c] sm:$0xf]
  %v57 = vld [vmem:[%s1 + $0x50] sm:$0xf]
  %v58 = vld [vmem:[%s1 + $0x54] sm:$0x3]
  %v75 = vunpack.c.l.b16 %v21
  %v76 = vunpack.c.h.b16 %v21
  %v77 = vunpack.c.l.b16 %v22
  %v78 = vunpack.c.h.b16 %v22
  %v79 = vunpack.c.l.b16 %v23
  %v80 = vunpack.c.h.b16 %v23
  %v81 = vunpack.c.l.b16 %v24
  %v82 = vunpack.c.h.b16 %v24
  %v83 = vunpack.c.l.b16 %v25
  %v84 = vunpack.c.h.b16 %v25
  %v85 = vunpack.c.l.b16 %v26
  %v86 = vunpack.c.h.b16 %v26
  %v87 = vunpack.c.l.b16 %v27
  %v88 = vunpack.c.h.b16 %v27
  %v89 = vunpack.c.l.b16 %v28
  %v90 = vunpack.c.h.b16 %v28
  %v91 = vunpack.c.l.b16 %v29
  %v92 = vunpack.c.h.b16 %v29
  %v93 = vunpack.c.l.b16 %v30
  %v94 = vunpack.c.h.b16 %v30
  %v95 = vunpack.c.l.b16 %v31
  %v96 = vunpack.c.h.b16 %v31
  %v97 = vunpack.c.l.b16 %v32
  %v98 = vunpack.c.h.b16 %v32
  %v99 = vunpack.c.l.b16 %v33
  %v100 = vunpack.c.h.b16 %v33
  %v101 = vunpack.c.l.b16 %v34
  %v102 = vunpack.c.h.b16 %v34
  %v103 = vunpack.c.l.b16 %v35
  %v104 = vunpack.c.h.b16 %v35
  %v105 = vunpack.c.l.b16 %v36
  %v106 = vunpack.c.h.b16 %v36
  %v107 = vpack.c.b16 %v77, %v75
  %v108 = vpack.c.b16 %v78, %v76
  %v109 = vpack.c.b16 %v81, %v79
  %v110 = vpack.c.b16 %v82, %v80
  %v111 = vpack.c.b16 %v85, %v83
  %v112 = vpack.c.b16 %v86, %v84
  %v113 = vpack.c.b16 %v89, %v87
  %v114 = vpack.c.b16 %v90, %v88
  %v115 = vpack.c.b16 %v93, %v91
  %v116 = vpack.c.b16 %v94, %v92
  %v117 = vpack.c.b16 %v97, %v95
  %v118 = vpack.c.b16 %v98, %v96
  %v119 = vpack.c.b16 %v101, %v99
  %v120 = vpack.c.b16 %v102, %v100
  %v121 = vpack.c.b16 %v105, %v103
  %v122 = vpack.c.b16 %v106, %v104
  %v153 = vunpack.c.l.b16 %v37
  %v154 = vunpack.c.l.b16 %v38
  %v155 = vunpack.c.l.b16 %v39
  %v156 = vunpack.c.l.b16 %v40
  %v157 = vunpack.c.l.b16 %v41
  %v158 = vunpack.c.l.b16 %v42
  %v159 = vunpack.c.l.b16 %v43
  %v160 = vunpack.c.l.b16 %v44
  %v161 = vunpack.c.l.b16 %v45
  %v162 = vunpack.c.l.b16 %v46
  %v163 = vunpack.c.l.b16 %v47
  %v164 = vunpack.c.l.b16 %v48
  %v165 = vunpack.c.l.b16 %v49
  %v166 = vunpack.c.l.b16 %v50
  %v167 = vunpack.c.l.b16 %v51
  %v168 = vunpack.c.l.b16 %v52
  %v169 = vunpack.c.l.b16 %v53
  %v170 = vunpack.c.l.b16 %v54
  %v171 = vunpack.c.l.b16 %v55
  %v172 = vunpack.c.l.b16 %v56
  %v173 = vunpack.c.l.b16 %v57
  %v174 = vunpack.c.l.b16 %v58
  %v175 = vpack.c.b16 %v154, %v153
  %v176 = vpack.c.b16 %v156, %v155
  %v177 = vpack.c.b16 %v158, %v157
  %v178 = vpack.c.b16 %v160, %v159
  %v179 = vpack.c.b16 %v162, %v161
  %v180 = vpack.c.b16 %v164, %v163
  %v181 = vpack.c.b16 %v166, %v165
  %v182 = vpack.c.b16 %v168, %v167
  %v183 = vpack.c.b16 %v170, %v169
  %v184 = vpack.c.b16 %v172, %v171
  %v185 = vpack.c.b16 %v174, %v173
  %vm196 = vcmask 351232
  %v198 = vsel %vm196, %v108, 0
  %v201 = vsel %vm196, %v110, 0
  %v204 = vsel %vm196, %v112, 0
  %v207 = vsel %vm196, %v114, 0
  %v210 = vsel %vm196, %v116, 0
  %v213 = vsel %vm196, %v118, 0
  %v216 = vsel %vm196, %v120, 0
  %v219 = vsel %vm196, %v122, 0
  %vm221 = vcmask 1044480
  %vm222 = vcmask 1045504
  %v223 = vsel %vm221, 4294967295, 65535
  %v224 = vsel %vm222, %v223, 0
  %v226 = vand.u32 %v185, %v224
  %228 = vmatpush.bf16.msra.mxu0 %v182
  %229 = vmatpush.bf16.msra.mxu0 %v181
  %230 = vmatpush.bf16.msra.mxu0 %v180
  %231 = vmatpush.bf16.msra.mxu0 %v179
  %232 = vmatpush.bf16.msra.mxu0 %v178
  %233 = vmatpush.bf16.msra.mxu0 %v177
  %234 = vmatpush.bf16.msra.mxu0 %v176
  %235 = vmatpush.bf16.msra.mxu0 %v175
  %236 = vmatmul.bf16.gmra.mxu0 %v107
  %v237 = vpop.f32.mrf.mxu0
  %v238 = vadd.f32 0.0, %v237
  %v239 = vpop.f32.mrf.mxu0
  %v240 = vadd.f32 0.0, %v239
  %241 = vmatmul.bf16.gmra.mxu0 %v109
  %v242 = vpop.f32.mrf.mxu0
  %v243 = vadd.f32 0.0, %v242
  %v244 = vpop.f32.mrf.mxu0
  %v245 = vadd.f32 0.0, %v244
  %246 = vmatmul.bf16.gmra.mxu0 %v111
  %v247 = vpop.f32.mrf.mxu0
  %v248 = vadd.f32 0.0, %v247
  %v249 = vpop.f32.mrf.mxu0
  %v250 = vadd.f32 0.0, %v249
  %251 = vmatmul.bf16.gmra.mxu0 %v113
  %v252 = vpop.f32.mrf.mxu0
  %v253 = vadd.f32 0.0, %v252
  %v254 = vpop.f32.mrf.mxu0
  %v255 = vadd.f32 0.0, %v254
  %256 = vmatmul.bf16.gmra.mxu0 %v115
  %v257 = vpop.f32.mrf.mxu0
  %v258 = vadd.f32 0.0, %v257
  %v259 = vpop.f32.mrf.mxu0
  %v260 = vadd.f32 0.0, %v259
  %261 = vmatmul.bf16.gmra.mxu0 %v117
  %v262 = vpop.f32.mrf.mxu0
  %v263 = vadd.f32 0.0, %v262
  %v264 = vpop.f32.mrf.mxu0
  %v265 = vadd.f32 0.0, %v264
  %266 = vmatmul.bf16.gmra.mxu0 %v119
  %v267 = vpop.f32.mrf.mxu0
  %v268 = vadd.f32 0.0, %v267
  %v269 = vpop.f32.mrf.mxu0
  %v270 = vadd.f32 0.0, %v269
  %271 = vmatmul.bf16.gmra.mxu0 %v121
  %v272 = vpop.f32.mrf.mxu0
  %v273 = vadd.f32 0.0, %v272
  %v274 = vpop.f32.mrf.mxu0
  %v275 = vadd.f32 0.0, %v274
  %276 = vdwg.mxu0
  %277 = vmatpush.bf16.msra.mxu0 0
  %278 = vmatpush.bf16.msra.mxu0 0
  %279 = vmatpush.bf16.msra.mxu0 0
  %280 = vmatpush.bf16.msra.mxu0 0
  %281 = vmatpush.bf16.msra.mxu0 0
  %282 = vmatpush.bf16.msra.mxu0 %v226
  %283 = vmatpush.bf16.msra.mxu0 %v184
  %284 = vmatpush.bf16.msra.mxu0 %v183
  %285 = vmatmul.bf16.gmra.mxu0 %v198
  %v286 = vpop.f32.mrf.mxu0
  %v287 = vadd.f32 %v238, %v286
  %v288 = vpop.f32.mrf.mxu0
  %v289 = vadd.f32 %v240, %v288
  %290 = vmatmul.bf16.gmra.mxu0 %v201
  %v291 = vpop.f32.mrf.mxu0
  %v292 = vadd.f32 %v243, %v291
  %v293 = vpop.f32.mrf.mxu0
  %v294 = vadd.f32 %v245, %v293
  %295 = vmatmul.bf16.gmra.mxu0 %v204
  %v296 = vpop.f32.mrf.mxu0
  %v297 = vadd.f32 %v248, %v296
  %v298 = vpop.f32.mrf.mxu0
  %v299 = vadd.f32 %v250, %v298
  %300 = vmatmul.bf16.gmra.mxu0 %v207
  %v301 = vpop.f32.mrf.mxu0
  %v302 = vadd.f32 %v253, %v301
  %v303 = vpop.f32.mrf.mxu0
  %v304 = vadd.f32 %v255, %v303
  %305 = vmatmul.bf16.gmra.mxu0 %v210
  %v306 = vpop.f32.mrf.mxu0
  %v307 = vadd.f32 %v258, %v306
  %v308 = vpop.f32.mrf.mxu0
  %v309 = vadd.f32 %v260, %v308
  %310 = vmatmul.bf16.gmra.mxu0 %v213
  %v311 = vpop.f32.mrf.mxu0
  %v312 = vadd.f32 %v263, %v311
  %v313 = vpop.f32.mrf.mxu0
  %v314 = vadd.f32 %v265, %v313
  %315 = vmatmul.bf16.gmra.mxu0 %v216
  %v316 = vpop.f32.mrf.mxu0
  %v317 = vadd.f32 %v268, %v316
  %v318 = vpop.f32.mrf.mxu0
  %v319 = vadd.f32 %v270, %v318
  %320 = vmatmul.bf16.gmra.mxu0 %v219
  %v321 = vpop.f32.mrf.mxu0
  %v322 = vadd.f32 %v273, %v321
  %v323 = vpop.f32.mrf.mxu0
  %v324 = vadd.f32 %v275, %v323
  %325 = vdwg.mxu0
  %v326 = vld [vmem:[%s2] sm:$0x1]
  %v328 = vperm.slane %v326, 0
  %v330 = vmul.f32 %v287, %v328
  %v331 = vmul.f32 %v289, %v328
  %v332 = vmul.f32 %v292, %v328
  %v333 = vmul.f32 %v294, %v328
  %v334 = vmul.f32 %v297, %v328
  %v335 = vmul.f32 %v299, %v328
  %v336 = vmul.f32 %v302, %v328
  %v337 = vmul.f32 %v304, %v328
  %v338 = vmul.f32 %v307, %v328
  %v339 = vmul.f32 %v309, %v328
  %v340 = vmul.f32 %v312, %v328
  %v341 = vmul.f32 %v314, %v328
  %v342 = vmul.f32 %v317, %v328
  %v343 = vmul.f32 %v319, %v328
  %v344 = vmul.f32 %v322, %v328
  %v345 = vmul.f32 %v324, %v328
  %v346 = vld [vmem:[%s3] sm:$0x1]
  %v348 = vperm.slane %v346, 0
  %v350 = vadd.f32 %v330, %v348
  %v351 = vadd.f32 %v331, %v348
  %v352 = vadd.f32 %v332, %v348
  %v353 = vadd.f32 %v333, %v348
  %v354 = vadd.f32 %v334, %v348
  %v355 = vadd.f32 %v335, %v348
  %v356 = vadd.f32 %v336, %v348
  %v357 = vadd.f32 %v337, %v348
  %v358 = vadd.f32 %v338, %v348
  %v359 = vadd.f32 %v339, %v348
  %v360 = vadd.f32 %v340, %v348
  %v361 = vadd.f32 %v341, %v348
  %v362 = vadd.f32 %v342, %v348
  %v363 = vadd.f32 %v343, %v348
  %v364 = vadd.f32 %v344, %v348
  %v365 = vadd.f32 %v345, %v348
  %vm366 = vcmp.ge.f32.partialorder %v350, 0.0
  %vm367 = vcmp.ge.f32.partialorder %v351, 0.0
  %vm368 = vcmp.ge.f32.partialorder %v352, 0.0
  %vm369 = vcmp.ge.f32.partialorder %v353, 0.0
  %vm370 = vcmp.ge.f32.partialorder %v354, 0.0
  %vm371 = vcmp.ge.f32.partialorder %v355, 0.0
  %vm372 = vcmp.ge.f32.partialorder %v356, 0.0
  %vm373 = vcmp.ge.f32.partialorder %v357, 0.0
  %vm374 = vcmp.ge.f32.partialorder %v358, 0.0
  %vm375 = vcmp.ge.f32.partialorder %v359, 0.0
  %vm376 = vcmp.ge.f32.partialorder %v360, 0.0
  %vm377 = vcmp.ge.f32.partialorder %v361, 0.0
  %vm378 = vcmp.ge.f32.partialorder %v362, 0.0
  %vm379 = vcmp.ge.f32.partialorder %v363, 0.0
  %vm380 = vcmp.ge.f32.partialorder %v364, 0.0
  %vm381 = vcmp.ge.f32.partialorder %v365, 0.0
  %v382 = vld [vmem:[%s4] sm:$0x1]
  %v384 = vperm.slane %v382, 0
  %v386 = vmul.f32 %v384, %v350
  %v387 = vmul.f32 %v384, %v351
  %v388 = vmul.f32 %v384, %v352
  %v389 = vmul.f32 %v384, %v353
  %v390 = vmul.f32 %v384, %v354
  %v391 = vmul.f32 %v384, %v355
  %v392 = vmul.f32 %v384, %v356
  %v393 = vmul.f32 %v384, %v357
  %v394 = vmul.f32 %v384, %v358
  %v395 = vmul.f32 %v384, %v359
  %v396 = vmul.f32 %v384, %v360
  %v397 = vmul.f32 %v384, %v361
  %v398 = vmul.f32 %v384, %v362
  %v399 = vmul.f32 %v384, %v363
  %v400 = vmul.f32 %v384, %v364
  %v401 = vmul.f32 %v384, %v365
  %v402 = vsel %vm366, %v350, %v386
  %v403 = vsel %vm367, %v351, %v387
  %v404 = vsel %vm368, %v352, %v388
  %v405 = vsel %vm369, %v353, %v389
  %v406 = vsel %vm370, %v354, %v390
  %v407 = vsel %vm371, %v355, %v391
  %v408 = vsel %vm372, %v356, %v392
  %v409 = vsel %vm373, %v357, %v393
  %v410 = vsel %vm374, %v358, %v394
  %v411 = vsel %vm375, %v359, %v395
  %v412 = vsel %vm376, %v360, %v396
  %v413 = vsel %vm377, %v361, %v397
  %v414 = vsel %vm378, %v362, %v398
  %v415 = vsel %vm379, %v363, %v399
  %v416 = vsel %vm380, %v364, %v400
  %v417 = vsel %vm381, %v365, %v401
  %v418 = vpack.c.bf16 %v402, %v402
  %v419 = vpack.c.bf16 %v403, %v403
  %v420 = vpack.c.bf16 %v404, %v404
  %v421 = vpack.c.bf16 %v405, %v405
  %v422 = vpack.c.bf16 %v406, %v406
  %v423 = vpack.c.bf16 %v407, %v407
  %v424 = vpack.c.bf16 %v408, %v408
  %v425 = vpack.c.bf16 %v409, %v409
  %v426 = vpack.c.bf16 %v410, %v410
  %v427 = vpack.c.bf16 %v411, %v411
  %v428 = vpack.c.bf16 %v412, %v412
  %v429 = vpack.c.bf16 %v413, %v413
  %v430 = vpack.c.bf16 %v414, %v414
  %v431 = vpack.c.bf16 %v415, %v415
  %v432 = vpack.c.bf16 %v416, %v416
  %v433 = vpack.c.bf16 %v417, %v417
  %434 = vst [vmem:[%s5] sm:$0xf] %v418
  %435 = vst [vmem:[%s5 + $0x4] sm:$0xf] %v419
  %436 = vst [vmem:[%s5 + $0x8] sm:$0xf] %v420
  %437 = vst [vmem:[%s5 + $0xc] sm:$0xf] %v421
  %438 = vst [vmem:[%s5 + $0x10] sm:$0xf] %v422
  %439 = vst [vmem:[%s5 + $0x14] sm:$0xf] %v423
  %440 = vst [vmem:[%s5 + $0x18] sm:$0xf] %v424
  %441 = vst [vmem:[%s5 + $0x1c] sm:$0xf] %v425
  %442 = vst [vmem:[%s5 + $0x20] sm:$0xf] %v426
  %443 = vst [vmem:[%s5 + $0x24] sm:$0xf] %v427
  %444 = vst [vmem:[%s5 + $0x28] sm:$0xf] %v428
  %445 = vst [vmem:[%s5 + $0x2c] sm:$0xf] %v429
  %446 = vst [vmem:[%s5 + $0x30] sm:$0xf] %v430
  %447 = vst [vmem:[%s5 + $0x34] sm:$0xf] %v431
  %448 = vst [vmem:[%s5 + $0x38] sm:$0xf] %v432
  %449 = vst [vmem:[%s5 + $0x3c] sm:$0xf] %v433
  // Predicated region
  $region22: #{espnet_forward.25} parent=0 // pred_check
    _
  $region23: #{espnet_forward.25} parent=0 // pred_check_branch
    %451 = sbr.rel (0) target = $region25
  $region24: #{espnet_forward.25} parent=0 // pred_region
    _
  $region25: #{espnet_forward.25} parent=0 // pred_fallthru
    _
  // Predicated region
  $region26: #{espnet_forward.25} parent=0 // pred_check
    _
  $region27: #{espnet_forward.25} parent=0 // pred_check_branch
    %453 = sbr.rel (0) target = $region29
  $region28: #{espnet_forward.25} parent=0 // pred_region
    _
  $region29: #{espnet_forward.25} parent=0 // pred_fallthru
    _

// kernel: espnet_forward.27
$region0: #{espnet_forward.27}
  #allocation0 [shape = 'u32[]', space=smem, size = 0x4, offset = 0x4, fixed_abs, tag = 'smem constant byte address 0x4 - core index']
  #allocation1 [shape = 'u32[72,128]{1,0:T(1,128)}', space=vmem, size = 0x9000, scoped, tag = 'internal scratch']
  %s0 = inlined_call_operand.vmem [shape: bf16[128,64], index: 0, kind: input, shape index: {}]
  %s1 = inlined_call_operand.vmem [shape: bf16[64,128], index: 1, kind: input, shape index: {}]
  %s2 = inlined_call_operand.vmem [shape: f32[1,128], index: 2, kind: input, shape index: {}]
  %s3 = inlined_call_operand.vmem [shape: f32[1,128], index: 3, kind: input, shape index: {}]
  %s4 = inlined_call_operand.vmem [shape: f32[1,128], index: 4, kind: input, shape index: {}]
  %s5 = inlined_call_operand.vmem [shape: bf16[128,128], index: 5, kind: output, shape index: {}]
  %s6 = sld [smem:[#allocation0]]
  $region30: #{espnet_forward.27} parent=0
    _
  %s8 = ssub.s32 1, %s6
  %s9 = scalar_select 0, %s8, %s6
  // Predicated region
  $region2: #{espnet_forward.27} parent=0 // pred_check
    _
  $region3: #{espnet_forward.27} parent=0 // pred_check_branch
    %11 = sbr.rel (0) target = $region5
  $region4: #{espnet_forward.27} parent=0 // pred_region
    _
  $region5: #{espnet_forward.27} parent=0 // pred_fallthru
    _
  // Predicated region
  $region6: #{espnet_forward.27} parent=0 // pred_check
    _
  $region7: #{espnet_forward.27} parent=0 // pred_check_branch
    %13 = sbr.rel (0) target = $region9
  $region8: #{espnet_forward.27} parent=0 // pred_region
    _
  $region9: #{espnet_forward.27} parent=0 // pred_fallthru
    _
  // Predicated region
  $region10: #{espnet_forward.27} parent=0 // pred_check
    _
  $region11: #{espnet_forward.27} parent=0 // pred_check_branch
    %15 = sbr.rel (0) target = $region13
  $region12: #{espnet_forward.27} parent=0 // pred_region
    _
  $region13: #{espnet_forward.27} parent=0 // pred_fallthru
    _
  // Predicated region
  $region14: #{espnet_forward.27} parent=0 // pred_check
    _
  $region15: #{espnet_forward.27} parent=0 // pred_check_branch
    %17 = sbr.rel (0) target = $region17
  $region16: #{espnet_forward.27} parent=0 // pred_region
    _
  $region17: #{espnet_forward.27} parent=0 // pred_fallthru
    _
  // Predicated region
  $region18: #{espnet_forward.27} parent=0 // pred_check
    _
  $region19: #{espnet_forward.27} parent=0 // pred_check_branch
    %19 = sbr.rel (0) target = $region21
  $region20: #{espnet_forward.27} parent=0 // pred_region
    _
  $region21: #{espnet_forward.27} parent=0 // pred_fallthru
    _
  %v21 = vld [vmem:[%s0] sm:$0xf]
  %v22 = vld [vmem:[%s0 + $0x4] sm:$0xf]
  %v23 = vld [vmem:[%s0 + $0x8] sm:$0xf]
  %v24 = vld [vmem:[%s0 + $0xc] sm:$0xf]
  %v25 = vld [vmem:[%s0 + $0x10] sm:$0xf]
  %v26 = vld [vmem:[%s0 + $0x14] sm:$0xf]
  %v27 = vld [vmem:[%s0 + $0x18] sm:$0xf]
  %v28 = vld [vmem:[%s0 + $0x1c] sm:$0xf]
  %v29 = vld [vmem:[%s0 + $0x20] sm:$0xf]
  %v30 = vld [vmem:[%s0 + $0x24] sm:$0xf]
  %v31 = vld [vmem:[%s0 + $0x28] sm:$0xf]
  %v32 = vld [vmem:[%s0 + $0x2c] sm:$0xf]
  %v33 = vld [vmem:[%s0 + $0x30] sm:$0xf]
  %v34 = vld [vmem:[%s0 + $0x34] sm:$0xf]
  %v35 = vld [vmem:[%s0 + $0x38] sm:$0xf]
  %v36 = vld [vmem:[%s0 + $0x3c] sm:$0xf]
  %v37 = vld [vmem:[%s1] sm:$0xf]
  %v38 = vld [vmem:[%s1 + $0x4] sm:$0xf]
  %v39 = vld [vmem:[%s1 + $0x8] sm:$0xf]
  %v40 = vld [vmem:[%s1 + $0xc] sm:$0xf]
  %v41 = vld [vmem:[%s1 + $0x10] sm:$0xf]
  %v42 = vld [vmem:[%s1 + $0x14] sm:$0xf]
  %v43 = vld [vmem:[%s1 + $0x18] sm:$0xf]
  %v44 = vld [vmem:[%s1 + $0x1c] sm:$0xf]
  %v61 = vunpack.c.l.b16 %v21
  %v62 = vunpack.c.l.b16 %v22
  %v63 = vunpack.c.l.b16 %v23
  %v64 = vunpack.c.l.b16 %v24
  %v65 = vunpack.c.l.b16 %v25
  %v66 = vunpack.c.l.b16 %v26
  %v67 = vunpack.c.l.b16 %v27
  %v68 = vunpack.c.l.b16 %v28
  %v69 = vunpack.c.l.b16 %v29
  %v70 = vunpack.c.l.b16 %v30
  %v71 = vunpack.c.l.b16 %v31
  %v72 = vunpack.c.l.b16 %v32
  %v73 = vunpack.c.l.b16 %v33
  %v74 = vunpack.c.l.b16 %v34
  %v75 = vunpack.c.l.b16 %v35
  %v76 = vunpack.c.l.b16 %v36
  %v77 = vpack.c.b16 %v62, %v61
  %v78 = vpack.c.b16 %v64, %v63
  %v79 = vpack.c.b16 %v66, %v65
  %v80 = vpack.c.b16 %v68, %v67
  %v81 = vpack.c.b16 %v70, %v69
  %v82 = vpack.c.b16 %v72, %v71
  %v83 = vpack.c.b16 %v74, %v73
  %v84 = vpack.c.b16 %v76, %v75
  %v93 = vunpack.c.l.b16 %v37
  %v94 = vunpack.c.l.b16 %v38
  %v95 = vunpack.c.l.b16 %v39
  %v96 = vunpack.c.l.b16 %v40
  %v97 = vunpack.c.l.b16 %v41
  %v98 = vunpack.c.l.b16 %v42
  %v99 = vunpack.c.l.b16 %v43
  %v100 = vunpack.c.l.b16 %v44
  %v101 = vpack.c.b16 %v94, %v93
  %v102 = vpack.c.b16 %v96, %v95
  %v103 = vpack.c.b16 %v98, %v97
  %v104 = vpack.c.b16 %v100, %v99
  %vm109 = vcmask 523264
  %v111 = vsel %vm109, %v77, 0
  %v114 = vsel %vm109, %v78, 0
  %v117 = vsel %vm109, %v79, 0
  %v120 = vsel %vm109, %v80, 0
  %v123 = vsel %vm109, %v81, 0
  %v126 = vsel %vm109, %v82, 0
  %v129 = vsel %vm109, %v83, 0
  %v132 = vsel %vm109, %v84, 0
  %134 = vmatpush.bf16.msra.mxu0 0
  %135 = vmatpush.bf16.msra.mxu0 0
  %136 = vmatpush.bf16.msra.mxu0 0
  %137 = vmatpush.bf16.msra.mxu0 0
  %138 = vmatpush.bf16.msra.mxu0 %v104
  %139 = vmatpush.bf16.msra.mxu0 %v103
  %140 = vmatpush.bf16.msra.mxu0 %v102
  %141 = vmatpush.bf16.msra.mxu0 %v101
  %142 = vmatmul.bf16.gmra.mxu0 %v111
  %v143 = vpop.f32.mrf.mxu0
  %v144 = vadd.f32 0.0, %v143
  %v145 = vpop.f32.mrf.mxu0
  %v146 = vadd.f32 0.0, %v145
  %147 = vmatmul.bf16.gmra.mxu0 %v114
  %v148 = vpop.f32.mrf.mxu0
  %v149 = vadd.f32 0.0, %v148
  %v150 = vpop.f32.mrf.mxu0
  %v151 = vadd.f32 0.0, %v150
  %152 = vmatmul.bf16.gmra.mxu0 %v117
  %v153 = vpop.f32.mrf.mxu0
  %v154 = vadd.f32 0.0, %v153
  %v155 = vpop.f32.mrf.mxu0
  %v156 = vadd.f32 0.0, %v155
  %157 = vmatmul.bf16.gmra.mxu0 %v120
  %v158 = vpop.f32.mrf.mxu0
  %v159 = vadd.f32 0.0, %v158
  %v160 = vpop.f32.mrf.mxu0
  %v161 = vadd.f32 0.0, %v160
  %162 = vmatmul.bf16.gmra.mxu0 %v123
  %v163 = vpop.f32.mrf.mxu0
  %v164 = vadd.f32 0.0, %v163
  %v165 = vpop.f32.mrf.mxu0
  %v166 = vadd.f32 0.0, %v165
  %167 = vmatmul.bf16.gmra.mxu0 %v126
  %v168 = vpop.f32.mrf.mxu0
  %v169 = vadd.f32 0.0, %v168
  %v170 = vpop.f32.mrf.mxu0
  %v171 = vadd.f32 0.0, %v170
  %172 = vmatmul.bf16.gmra.mxu0 %v129
  %v173 = vpop.f32.mrf.mxu0
  %v174 = vadd.f32 0.0, %v173
  %v175 = vpop.f32.mrf.mxu0
  %v176 = vadd.f32 0.0, %v175
  %177 = vmatmul.bf16.gmra.mxu0 %v132
  %v178 = vpop.f32.mrf.mxu0
  %v179 = vadd.f32 0.0, %v178
  %v180 = vpop.f32.mrf.mxu0
  %v181 = vadd.f32 0.0, %v180
  %182 = vdwg.mxu0
  %v183 = vld [vmem:[%s2] sm:$0x1]
  %v185 = vperm.slane %v183, 0
  %v187 = vmul.f32 %v144, %v185
  %v188 = vmul.f32 %v146, %v185
  %v189 = vmul.f32 %v149, %v185
  %v190 = vmul.f32 %v151, %v185
  %v191 = vmul.f32 %v154, %v185
  %v192 = vmul.f32 %v156, %v185
  %v193 = vmul.f32 %v159, %v185
  %v194 = vmul.f32 %v161, %v185
  %v195 = vmul.f32 %v164, %v185
  %v196 = vmul.f32 %v166, %v185
  %v197 = vmul.f32 %v169, %v185
  %v198 = vmul.f32 %v171, %v185
  %v199 = vmul.f32 %v174, %v185
  %v200 = vmul.f32 %v176, %v185
  %v201 = vmul.f32 %v179, %v185
  %v202 = vmul.f32 %v181, %v185
  %v203 = vld [vmem:[%s3] sm:$0x1]
  %v205 = vperm.slane %v203, 0
  %v207 = vadd.f32 %v187, %v205
  %v208 = vadd.f32 %v188, %v205
  %v209 = vadd.f32 %v189, %v205
  %v210 = vadd.f32 %v190, %v205
  %v211 = vadd.f32 %v191, %v205
  %v212 = vadd.f32 %v192, %v205
  %v213 = vadd.f32 %v193, %v205
  %v214 = vadd.f32 %v194, %v205
  %v215 = vadd.f32 %v195, %v205
  %v216 = vadd.f32 %v196, %v205
  %v217 = vadd.f32 %v197, %v205
  %v218 = vadd.f32 %v198, %v205
  %v219 = vadd.f32 %v199, %v205
  %v220 = vadd.f32 %v200, %v205
  %v221 = vadd.f32 %v201, %v205
  %v222 = vadd.f32 %v202, %v205
  %vm223 = vcmp.ge.f32.partialorder %v207, 0.0
  %vm224 = vcmp.ge.f32.partialorder %v208, 0.0
  %vm225 = vcmp.ge.f32.partialorder %v209, 0.0
  %vm226 = vcmp.ge.f32.partialorder %v210, 0.0
  %vm227 = vcmp.ge.f32.partialorder %v211, 0.0
  %vm228 = vcmp.ge.f32.partialorder %v212, 0.0
  %vm229 = vcmp.ge.f32.partialorder %v213, 0.0
  %vm230 = vcmp.ge.f32.partialorder %v214, 0.0
  %vm231 = vcmp.ge.f32.partialorder %v215, 0.0
  %vm232 = vcmp.ge.f32.partialorder %v216, 0.0
  %vm233 = vcmp.ge.f32.partialorder %v217, 0.0
  %vm234 = vcmp.ge.f32.partialorder %v218, 0.0
  %vm235 = vcmp.ge.f32.partialorder %v219, 0.0
  %vm236 = vcmp.ge.f32.partialorder %v220, 0.0
  %vm237 = vcmp.ge.f32.partialorder %v221, 0.0
  %vm238 = vcmp.ge.f32.partialorder %v222, 0.0
  %v239 = vld [vmem:[%s4] sm:$0x1]
  %v241 = vperm.slane %v239, 0
  %v243 = vmul.f32 %v241, %v207
  %v244 = vmul.f32 %v241, %v208
  %v245 = vmul.f32 %v241, %v209
  %v246 = vmul.f32 %v241, %v210
  %v247 = vmul.f32 %v241, %v211
  %v248 = vmul.f32 %v241, %v212
  %v249 = vmul.f32 %v241, %v213
  %v250 = vmul.f32 %v241, %v214
  %v251 = vmul.f32 %v241, %v215
  %v252 = vmul.f32 %v241, %v216
  %v253 = vmul.f32 %v241, %v217
  %v254 = vmul.f32 %v241, %v218
  %v255 = vmul.f32 %v241, %v219
  %v256 = vmul.f32 %v241, %v220
  %v257 = vmul.f32 %v241, %v221
  %v258 = vmul.f32 %v241, %v222
  %v259 = vsel %vm223, %v207, %v243
  %v260 = vsel %vm224, %v208, %v244
  %v261 = vsel %vm225, %v209, %v245
  %v262 = vsel %vm226, %v210, %v246
  %v263 = vsel %vm227, %v211, %v247
  %v264 = vsel %vm228, %v212, %v248
  %v265 = vsel %vm229, %v213, %v249
  %v266 = vsel %vm230, %v214, %v250
  %v267 = vsel %vm231, %v215, %v251
  %v268 = vsel %vm232, %v216, %v252
  %v269 = vsel %vm233, %v217, %v253
  %v270 = vsel %vm234, %v218, %v254
  %v271 = vsel %vm235, %v219, %v255
  %v272 = vsel %vm236, %v220, %v256
  %v273 = vsel %vm237, %v221, %v257
  %v274 = vsel %vm238, %v222, %v258
  %v275 = vpack.c.bf16 %v259, %v259
  %v276 = vpack.c.bf16 %v260, %v260
  %v277 = vpack.c.bf16 %v261, %v261
  %v278 = vpack.c.bf16 %v262, %v262
  %v279 = vpack.c.bf16 %v263, %v263
  %v280 = vpack.c.bf16 %v264, %v264
  %v281 = vpack.c.bf16 %v265, %v265
  %v282 = vpack.c.bf16 %v266, %v266
  %v283 = vpack.c.bf16 %v267, %v267
  %v284 = vpack.c.bf16 %v268, %v268
  %v285 = vpack.c.bf16 %v269, %v269
  %v286 = vpack.c.bf16 %v270, %v270
  %v287 = vpack.c.bf16 %v271, %v271
  %v288 = vpack.c.bf16 %v272, %v272
  %v289 = vpack.c.bf16 %v273, %v273
  %v290 = vpack.c.bf16 %v274, %v274
  %291 = vst [vmem:[%s5] sm:$0xf] %v275
  %292 = vst [vmem:[%s5 + $0x4] sm:$0xf] %v276
  %293 = vst [vmem:[%s5 + $0x8] sm:$0xf] %v277
  %294 = vst [vmem:[%s5 + $0xc] sm:$0xf] %v278
  %295 = vst [vmem:[%s5 + $0x10] sm:$0xf] %v279
  %296 = vst [vmem:[%s5 + $0x14] sm:$0xf] %v280
  %297 = vst [vmem:[%s5 + $0x18] sm:$0xf] %v281
  %298 = vst [vmem:[%s5 + $0x1c] sm:$0xf] %v282
  %299 = vst [vmem:[%s5 + $0x20] sm:$0xf] %v283
  %300 = vst [vmem:[%s5 + $0x24] sm:$0xf] %v284
  %301 = vst [vmem:[%s5 + $0x28] sm:$0xf] %v285
  %302 = vst [vmem:[%s5 + $0x2c] sm:$0xf] %v286
  %303 = vst [vmem:[%s5 + $0x30] sm:$0xf] %v287
  %304 = vst [vmem:[%s5 + $0x34] sm:$0xf] %v288
  %305 = vst [vmem:[%s5 + $0x38] sm:$0xf] %v289
  %306 = vst [vmem:[%s5 + $0x3c] sm:$0xf] %v290
  // Predicated region
  $region22: #{espnet_forward.27} parent=0 // pred_check
    _
  $region23: #{espnet_forward.27} parent=0 // pred_check_branch
    %308 = sbr.rel (0) target = $region25
  $region24: #{espnet_forward.27} parent=0 // pred_region
    _
  $region25: #{espnet_forward.27} parent=0 // pred_fallthru
    _
  // Predicated region
  $region26: #{espnet_forward.27} parent=0 // pred_check
    _
  $region27: #{espnet_forward.27} parent=0 // pred_check_branch
    %310 = sbr.rel (0) target = $region29
  $region28: #{espnet_forward.27} parent=0 // pred_region
    _
  $region29: #{espnet_forward.27} parent=0 // pred_fallthru
    _

// kernel: espnet_forward.26
$region0: #{espnet_forward.26}
  #allocation0 [shape = 'u32[]', space=smem, size = 0x4, offset = 0x4, fixed_abs, tag = 'smem constant byte address 0x4 - core index']
  #allocation1 [shape = 'u32[72,128]{1,0:T(1,128)}', space=vmem, size = 0x9000, scoped, tag = 'internal scratch']
  %s0 = inlined_call_operand.vmem [shape: bf16[128,540], index: 0, kind: input, shape index: {}]
  %s1 = inlined_call_operand.vmem [shape: bf16[540,128], index: 1, kind: input, shape index: {}]
  %s2 = inlined_call_operand.vmem [shape: f32[1,128], index: 2, kind: input, shape index: {}]
  %s3 = inlined_call_operand.vmem [shape: f32[1,128], index: 3, kind: input, shape index: {}]
  %s4 = inlined_call_operand.vmem [shape: f32[1,128], index: 4, kind: input, shape index: {}]
  %s5 = inlined_call_operand.vmem [shape: bf16[128,128], index: 5, kind: output, shape index: {}]
  %s6 = sld [smem:[#allocation0]]
  $region30: #{espnet_forward.26} parent=0
    _
  %s8 = ssub.s32 1, %s6
  %s9 = scalar_select 0, %s8, %s6
  // Predicated region
  $region2: #{espnet_forward.26} parent=0 // pred_check
    _
  $region3: #{espnet_forward.26} parent=0 // pred_check_branch
    %11 = sbr.rel (0) target = $region5
  $region4: #{espnet_forward.26} parent=0 // pred_region
    _
  $region5: #{espnet_forward.26} parent=0 // pred_fallthru
    _
  // Predicated region
  $region6: #{espnet_forward.26} parent=0 // pred_check
    _
  $region7: #{espnet_forward.26} parent=0 // pred_check_branch
    %13 = sbr.rel (0) target = $region9
  $region8: #{espnet_forward.26} parent=0 // pred_region
    _
  $region9: #{espnet_forward.26} parent=0 // pred_fallthru
    _
  // Predicated region
  $region10: #{espnet_forward.26} parent=0 // pred_check
    _
  $region11: #{espnet_forward.26} parent=0 // pred_check_branch
    %15 = sbr.rel (0) target = $region13
  $region12: #{espnet_forward.26} parent=0 // pred_region
    _
  $region13: #{espnet_forward.26} parent=0 // pred_fallthru
    _
  // Predicated region
  $region14: #{espnet_forward.26} parent=0 // pred_check
    _
  $region15: #{espnet_forward.26} parent=0 // pred_check_branch
    %17 = sbr.rel (0) target = $region17
  $region16: #{espnet_forward.26} parent=0 // pred_region
    _
  $region17: #{espnet_forward.26} parent=0 // pred_fallthru
    _
  // Predicated region
  $region18: #{espnet_forward.26} parent=0 // pred_check
    _
  $region19: #{espnet_forward.26} parent=0 // pred_check_branch
    %19 = sbr.rel (0) target = $region21
  $region20: #{espnet_forward.26} parent=0 // pred_region
    _
  $region21: #{espnet_forward.26} parent=0 // pred_fallthru
    _
  %v21 = vld [vmem:[%s0] sm:$0xff]
  %v22 = vld [vmem:[%s0 + $0x8] sm:$0xff]
  %v23 = vld [vmem:[%s0 + $0x10] sm:$0xf]
  %v24 = vld [vmem:[%s0 + $0x14] sm:$0xff]
  %v25 = vld [vmem:[%s0 + $0x1c] sm:$0xff]
  %v26 = vld [vmem:[%s0 + $0x24] sm:$0xf]
  %v27 = vld [vmem:[%s0 + $0x28] sm:$0xff]
  %v28 = vld [vmem:[%s0 + $0x30] sm:$0xff]
  %v29 = vld [vmem:[%s0 + $0x38] sm:$0xf]
  %v30 = vld [vmem:[%s0 + $0x3c] sm:$0xff]
  %v31 = vld [vmem:[%s0 + $0x44] sm:$0xff]
  %v32 = vld [vmem:[%s0 + $0x4c] sm:$0xf]
  %v33 = vld [vmem:[%s0 + $0x50] sm:$0xff]
  %v34 = vld [vmem:[%s0 + $0x58] sm:$0xff]
  %v35 = vld [vmem:[%s0 + $0x60] sm:$0xf]
  %v36 = vld [vmem:[%s0 + $0x64] sm:$0xff]
  %v37 = vld [vmem:[%s0 + $0x6c] sm:$0xff]
  %v38 = vld [vmem:[%s0 + $0x74] sm:$0xf]
  %v39 = vld [vmem:[%s0 + $0x78] sm:$0xff]
  %v40 = vld [vmem:[%s0 + $0x80] sm:$0xff]
  %v41 = vld [vmem:[%s0 + $0x88] sm:$0xf]
  %v42 = vld [vmem:[%s0 + $0x8c] sm:$0xff]
  %v43 = vld [vmem:[%s0 + $0x94] sm:$0xff]
  %v44 = vld [vmem:[%s0 + $0x9c] sm:$0xf]
  %v45 = vld [vmem:[%s0 + $0xa0] sm:$0xff]
  %v46 = vld [vmem:[%s0 + $0xa8] sm:$0xff]
  %v47 = vld [vmem:[%s0 + $0xb0] sm:$0xf]
  %v48 = vld [vmem:[%s0 + $0xb4] sm:$0xff]
  %v49 = vld [vmem:[%s0 + $0xbc] sm:$0xff]
  %v50 = vld [vmem:[%s0 + $0xc4] sm:$0xf]
  %v51 = vld [vmem:[%s0 + $0xc8] sm:$0xff]
  %v52 = vld [vmem:[%s0 + $0xd0] sm:$0xff]
  %v53 = vld [vmem:[%s0 + $0xd8] sm:$0xf]
  %v54 = vld [vmem:[%s0 + $0xdc] sm:$0xff]
  %v55 = vld [vmem:[%s0 + $0xe4] sm:$0xff]
  %v56 = vld [vmem:[%s0 + $0xec] sm:$0xf]
  %v57 = vld [vmem:[%s0 + $0xf0] sm:$0xff]
  %v58 = vld [vmem:[%s0 + $0xf8] sm:$0xff]
  %v59 = vld [vmem:[%s0 + $0x100] sm:$0xf]
  %v60 = vld [vmem:[%s0 + $0x104] sm:$0xff]
  %v61 = vld [vmem:[%s0 + $0x10c] sm:$0xff]
  %v62 = vld [vmem:[%s0 + $0x114] sm:$0xf]
  %v63 = vld [vmem:[%s0 + $0x118] sm:$0xff]
  %v64 = vld [vmem:[%s0 + $0x120] sm:$0xff]
  %v65 = vld [vmem:[%s0 + $0x128] sm:$0xf]
  %v66 = vld [vmem:[%s0 + $0x12c] sm:$0xff]
  %v67 = vld [vmem:[%s0 + $0x134] sm:$0xff]
  %v68 = vld [vmem:[%s0 + $0x13c] sm:$0xf]
  %v69 = vld [vmem:[%s1] sm:$0xf]
  %v70 = vld [vmem:[%s1 + $0x4] sm:$0xf]
  %v71 = vld [vmem:[%s1 + $0x8] sm:$0xf]
  %v72 = vld [vmem:[%s1 + $0xc] sm:$0xf]
  %v73 = vld [vmem:[%s1 + $0x10] sm:$0xf]
  %v74 = vld [vmem:[%s1 + $0x14] sm:$0xf]
  %v75 = vld [vmem:[%s1 + $0x18] sm:$0xf]
  %v76 = vld [vmem:[%s1 + $0x1c] sm:$0xf]
  %v77 = vld [vmem:[%s1 + $0x20] sm:$0xf]
  %v78 = vld [vmem:[%s1 + $0x24] sm:$0xf]
  %v79 = vld [vmem:[%s1 + $0x28] sm:$0xf]
  %v80 = vld [vmem:[%s1 + $0x2c] sm:$0xf]
  %v81 = vld [vmem:[%s1 + $0x30] sm:$0xf]
  %v82 = vld [vmem:[%s1 + $0x34] sm:$0xf]
  %v83 = vld [vmem:[%s1 + $0x38] sm:$0xf]
  %v84 = vld [vmem:[%s1 + $0x3c] sm:$0xf]
  %v85 = vld [vmem:[%s1 + $0x40] sm:$0xf]
  %v86 = vld [vmem:[%s1 + $0x44] sm:$0xf]
  %v87 = vld [vmem:[%s1 + $0x48] sm:$0xf]
  %v88 = vld [vmem:[%s1 + $0x4c] sm:$0xf]
  %v89 = vld [vmem:[%s1 + $0x50] sm:$0xf]
  %v90 = vld [vmem:[%s1 + $0x54] sm:$0xf]
  %v91 = vld [vmem:[%s1 + $0x58] sm:$0xf]
  %v92 = vld [vmem:[%s1 + $0x5c] sm:$0xf]
  %v93 = vld [vmem:[%s1 + $0x60] sm:$0xf]
  %v94 = vld [vmem:[%s1 + $0x64] sm:$0xf]
  %v95 = vld [vmem:[%s1 + $0x68] sm:$0xf]
  %v96 = vld [vmem:[%s1 + $0x6c] sm:$0xf]
  %v97 = vld [vmem:[%s1 + $0x70] sm:$0xf]
  %v98 = vld [vmem:[%s1 + $0x74] sm:$0xf]
  %v99 = vld [vmem:[%s1 + $0x78] sm:$0xf]
  %v100 = vld [vmem:[%s1 + $0x7c] sm:$0xf]
  %v101 = vld [vmem:[%s1 + $0x80] sm:$0xf]
  %v102 = vld [vmem:[%s1 + $0x84] sm:$0xf]
  %v103 = vld [vmem:[%s1 + $0x88] sm:$0xf]
  %v104 = vld [vmem:[%s1 + $0x8c] sm:$0xf]
  %v105 = vld [vmem:[%s1 + $0x90] sm:$0xf]
  %v106 = vld [vmem:[%s1 + $0x94] sm:$0xf]
  %v107 = vld [vmem:[%s1 + $0x98] sm:$0xf]
  %v108 = vld [vmem:[%s1 + $0x9c] sm:$0xf]
  %v109 = vld [vmem:[%s1 + $0xa0] sm:$0xf]
  %v110 = vld [vmem:[%s1 + $0xa4] sm:$0xf]
  %v111 = vld [vmem:[%s1 + $0xa8] sm:$0xf]
  %v112 = vld [vmem:[%s1 + $0xac] sm:$0xf]
  %v113 = vld [vmem:[%s1 + $0xb0] sm:$0xf]
  %v114 = vld [vmem:[%s1 + $0xb4] sm:$0xf]
  %v115 = vld [vmem:[%s1 + $0xb8] sm:$0xf]
  %v116 = vld [vmem:[%s1 + $0xbc] sm:$0xf]
  %v117 = vld [vmem:[%s1 + $0xc0] sm:$0xf]
  %v118 = vld [vmem:[%s1 + $0xc4] sm:$0xf]
  %v119 = vld [vmem:[%s1 + $0xc8] sm:$0xf]
  %v120 = vld [vmem:[%s1 + $0xcc] sm:$0xf]
  %v121 = vld [vmem:[%s1 + $0xd0] sm:$0xf]
  %v122 = vld [vmem:[%s1 + $0xd4] sm:$0xf]
  %v123 = vld [vmem:[%s1 + $0xd8] sm:$0xf]
  %v124 = vld [vmem:[%s1 + $0xdc] sm:$0xf]
  %v125 = vld [vmem:[%s1 + $0xe0] sm:$0xf]
  %v126 = vld [vmem:[%s1 + $0xe4] sm:$0xf]
  %v127 = vld [vmem:[%s1 + $0xe8] sm:$0xf]
  %v128 = vld [vmem:[%s1 + $0xec] sm:$0xf]
  %v129 = vld [vmem:[%s1 + $0xf0] sm:$0xf]
  %v130 = vld [vmem:[%s1 + $0xf4] sm:$0xf]
  %v131 = vld [vmem:[%s1 + $0xf8] sm:$0xf]
  %v132 = vld [vmem:[%s1 + $0xfc] sm:$0xf]
  %v133 = vld [vmem:[%s1 + $0x100] sm:$0xf]
  %v134 = vld [vmem:[%s1 + $0x104] sm:$0xf]
  %v135 = vld [vmem:[%s1 + $0x108] sm:$0xf]
  %v136 = vld [vmem:[%s1 + $0x10c] sm:$0x3]
  %v185 = vunpack.c.l.b16 %v21
  %v186 = vunpack.c.h.b16 %v21
  %v187 = vunpack.c.l.b16 %v22
  %v188 = vunpack.c.h.b16 %v22
  %v189 = vunpack.c.l.b16 %v23
  %v190 = vunpack.c.l.b16 %v24
  %v191 = vunpack.c.h.b16 %v24
  %v192 = vunpack.c.l.b16 %v25
  %v193 = vunpack.c.h.b16 %v25
  %v194 = vunpack.c.l.b16 %v26
  %v195 = vunpack.c.l.b16 %v27
  %v196 = vunpack.c.h.b16 %v27
  %v197 = vunpack.c.l.b16 %v28
  %v198 = vunpack.c.h.b16 %v28
  %v199 = vunpack.c.l.b16 %v29
  %v200 = vunpack.c.l.b16 %v30
  %v201 = vunpack.c.h.b16 %v30
  %v202 = vunpack.c.l.b16 %v31
  %v203 = vunpack.c.h.b16 %v31
  %v204 = vunpack.c.l.b16 %v32
  %v205 = vunpack.c.l.b16 %v33
  %v206 = vunpack.c.h.b16 %v33
  %v207 = vunpack.c.l.b16 %v34
  %v208 = vunpack.c.h.b16 %v34
  %v209 = vunpack.c.l.b16 %v35
  %v210 = vunpack.c.l.b16 %v36
  %v211 = vunpack.c.h.b16 %v36
  %v212 = vunpack.c.l.b16 %v37
  %v213 = vunpack.c.h.b16 %v37
  %v214 = vunpack.c.l.b16 %v38
  %v215 = vunpack.c.l.b16 %v39
  %v216 = vunpack.c.h.b16 %v39
  %v217 = vunpack.c.l.b16 %v40
  %v218 = vunpack.c.h.b16 %v40
  %v219 = vunpack.c.l.b16 %v41
  %v220 = vunpack.c.l.b16 %v42
  %v221 = vunpack.c.h.b16 %v42
  %v222 = vunpack.c.l.b16 %v43
  %v223 = vunpack.c.h.b16 %v43
  %v224 = vunpack.c.l.b16 %v44
  %v225 = vunpack.c.l.b16 %v45
  %v226 = vunpack.c.h.b16 %v45
  %v227 = vunpack.c.l.b16 %v46
  %v228 = vunpack.c.h.b16 %v46
  %v229 = vunpack.c.l.b16 %v47
  %v230 = vunpack.c.l.b16 %v48
  %v231 = vunpack.c.h.b16 %v48
  %v232 = vunpack.c.l.b16 %v49
  %v233 = vunpack.c.h.b16 %v49
  %v234 = vunpack.c.l.b16 %v50
  %v235 = vunpack.c.l.b16 %v51
  %v236 = vunpack.c.h.b16 %v51
  %v237 = vunpack.c.l.b16 %v52
  %v238 = vunpack.c.h.b16 %v52
  %v239 = vunpack.c.l.b16 %v53
  %v240 = vunpack.c.l.b16 %v54
  %v241 = vunpack.c.h.b16 %v54
  %v242 = vunpack.c.l.b16 %v55
  %v243 = vunpack.c.h.b16 %v55
  %v244 = vunpack.c.l.b16 %v56
  %v245 = vunpack.c.l.b16 %v57
  %v246 = vunpack.c.h.b16 %v57
  %v247 = vunpack.c.l.b16 %v58
  %v248 = vunpack.c.h.b16 %v58
  %v249 = vunpack.c.l.b16 %v59
  %v250 = vunpack.c.l.b16 %v60
  %v251 = vunpack.c.h.b16 %v60
  %v252 = vunpack.c.l.b16 %v61
  %v253 = vunpack.c.h.b16 %v61
  %v254 = vunpack.c.l.b16 %v62
  %v255 = vunpack.c.l.b16 %v63
  %v256 = vunpack.c.h.b16 %v63
  %v257 = vunpack.c.l.b16 %v64
  %v258 = vunpack.c.h.b16 %v64
  %v259 = vunpack.c.l.b16 %v65
  %v260 = vunpack.c.l.b16 %v66
  %v261 = vunpack.c.h.b16 %v66
  %v262 = vunpack.c.l.b16 %v67
  %v263 = vunpack.c.h.b16 %v67
  %v264 = vunpack.c.l.b16 %v68
  %v265 = vpack.c.b16 %v190, %v185
  %v266 = vpack.c.b16 %v191, %v186
  %v267 = vpack.c.b16 %v192, %v187
  %v268 = vpack.c.b16 %v193, %v188
  %v269 = vpack.c.b16 %v194, %v189
  %v270 = vpack.c.b16 %v200, %v195
  %v271 = vpack.c.b16 %v201, %v196
  %v272 = vpack.c.b16 %v202, %v197
  %v273 = vpack.c.b16 %v203, %v198
  %v274 = vpack.c.b16 %v204, %v199
  %v275 = vpack.c.b16 %v210, %v205
  %v276 = vpack.c.b16 %v211, %v206
  %v277 = vpack.c.b16 %v212, %v207
  %v278 = vpack.c.b16 %v213, %v208
  %v279 = vpack.c.b16 %v214, %v209
  %v280 = vpack.c.b16 %v220, %v215
  %v281 = vpack.c.b16 %v221, %v216
  %v282 = vpack.c.b16 %v222, %v217
  %v283 = vpack.c.b16 %v223, %v218
  %v284 = vpack.c.b16 %v224, %v219
  %v285 = vpack.c.b16 %v230, %v225
  %v286 = vpack.c.b16 %v231, %v226
  %v287 = vpack.c.b16 %v232, %v227
  %v288 = vpack.c.b16 %v233, %v228
  %v289 = vpack.c.b16 %v234, %v229
  %v290 = vpack.c.b16 %v240, %v235
  %v291 = vpack.c.b16 %v241, %v236
  %v292 = vpack.c.b16 %v242, %v237
  %v293 = vpack.c.b16 %v243, %v238
  %v294 = vpack.c.b16 %v244, %v239
  %v295 = vpack.c.b16 %v250, %v245
  %v296 = vpack.c.b16 %v251, %v246
  %v297 = vpack.c.b16 %v252, %v247
  %v298 = vpack.c.b16 %v253, %v248
  %v299 = vpack.c.b16 %v254, %v249
  %v300 = vpack.c.b16 %v260, %v255
  %v301 = vpack.c.b16 %v261, %v256
  %v302 = vpack.c.b16 %v262, %v257
  %v303 = vpack.c.b16 %v263, %v258
  %v304 = vpack.c.b16 %v264, %v259
  %v405 = vunpack.c.l.b16 %v69
  %v406 = vunpack.c.l.b16 %v70
  %v407 = vunpack.c.l.b16 %v71
  %v408 = vunpack.c.l.b16 %v72
  %v409 = vunpack.c.l.b16 %v73
  %v410 = vunpack.c.l.b16 %v74
  %v411 = vunpack.c.l.b16 %v75
  %v412 = vunpack.c.l.b16 %v76
  %v413 = vunpack.c.l.b16 %v77
  %v414 = vunpack.c.l.b16 %v78
  %v415 = vunpack.c.l.b16 %v79
  %v416 = vunpack.c.l.b16 %v80
  %v417 = vunpack.c.l.b16 %v81
  %v418 = vunpack.c.l.b16 %v82
  %v419 = vunpack.c.l.b16 %v83
  %v420 = vunpack.c.l.b16 %v84
  %v421 = vunpack.c.l.b16 %v85
  %v422 = vunpack.c.l.b16 %v86
  %v423 = vunpack.c.l.b16 %v87
  %v424 = vunpack.c.l.b16 %v88
  %v425 = vunpack.c.l.b16 %v89
  %v426 = vunpack.c.l.b16 %v90
  %v427 = vunpack.c.l.b16 %v91
  %v428 = vunpack.c.l.b16 %v92
  %v429 = vunpack.c.l.b16 %v93
  %v430 = vunpack.c.l.b16 %v94
  %v431 = vunpack.c.l.b16 %v95
  %v432 = vunpack.c.l.b16 %v96
  %v433 = vunpack.c.l.b16 %v97
  %v434 = vunpack.c.l.b16 %v98
  %v435 = vunpack.c.l.b16 %v99
  %v436 = vunpack.c.l.b16 %v100
  %v437 = vunpack.c.l.b16 %v101
  %v438 = vunpack.c.l.b16 %v102
  %v439 = vunpack.c.l.b16 %v103
  %v440 = vunpack.c.l.b16 %v104
  %v441 = vunpack.c.l.b16 %v105
  %v442 = vunpack.c.l.b16 %v106
  %v443 = vunpack.c.l.b16 %v107
  %v444 = vunpack.c.l.b16 %v108
  %v445 = vunpack.c.l.b16 %v109
  %v446 = vunpack.c.l.b16 %v110
  %v447 = vunpack.c.l.b16 %v111
  %v448 = vunpack.c.l.b16 %v112
  %v449 = vunpack.c.l.b16 %v113
  %v450 = vunpack.c.l.b16 %v114
  %v451 = vunpack.c.l.b16 %v115
  %v452 = vunpack.c.l.b16 %v116
  %v453 = vunpack.c.l.b16 %v117
  %v454 = vunpack.c.l.b16 %v118
  %v455 = vunpack.c.l.b16 %v119
  %v456 = vunpack.c.l.b16 %v120
  %v457 = vunpack.c.l.b16 %v121
  %v458 = vunpack.c.l.b16 %v122
  %v459 = vunpack.c.l.b16 %v123
  %v460 = vunpack.c.l.b16 %v124
  %v461 = vunpack.c.l.b16 %v125
  %v462 = vunpack.c.l.b16 %v126
  %v463 = vunpack.c.l.b16 %v127
  %v464 = vunpack.c.l.b16 %v128
  %v465 = vunpack.c.l.b16 %v129
  %v466 = vunpack.c.l.b16 %v130
  %v467 = vunpack.c.l.b16 %v131
  %v468 = vunpack.c.l.b16 %v132
  %v469 = vunpack.c.l.b16 %v133
  %v470 = vunpack.c.l.b16 %v134
  %v471 = vunpack.c.l.b16 %v135
  %v472 = vunpack.c.l.b16 %v136
  %v473 = vpack.c.b16 %v406, %v405
  %v474 = vpack.c.b16 %v408, %v407
  %v475 = vpack.c.b16 %v410, %v409
  %v476 = vpack.c.b16 %v412, %v411
  %v477 = vpack.c.b16 %v414, %v413
  %v478 = vpack.c.b16 %v416, %v415
  %v479 = vpack.c.b16 %v418, %v417
  %v480 = vpack.c.b16 %v420, %v419
  %v481 = vpack.c.b16 %v422, %v421
  %v482 = vpack.c.b16 %v424, %v423
  %v483 = vpack.c.b16 %v426, %v425
  %v484 = vpack.c.b16 %v428, %v427
  %v485 = vpack.c.b16 %v430, %v429
  %v486 = vpack.c.b16 %v432, %v431
  %v487 = vpack.c.b16 %v434, %v433
  %v488 = vpack.c.b16 %v436, %v435
  %v489 = vpack.c.b16 %v438, %v437
  %v490 = vpack.c.b16 %v440, %v439
  %v491 = vpack.c.b16 %v442, %v441
  %v492 = vpack.c.b16 %v444, %v443
  %v493 = vpack.c.b16 %v446, %v445
  %v494 = vpack.c.b16 %v448, %v447
  %v495 = vpack.c.b16 %v450, %v449
  %v496 = vpack.c.b16 %v452, %v451
  %v497 = vpack.c.b16 %v454, %v453
  %v498 = vpack.c.b16 %v456, %v455
  %v499 = vpack.c.b16 %v458, %v457
  %v500 = vpack.c.b16 %v460, %v459
  %v501 = vpack.c.b16 %v462, %v461
  %v502 = vpack.c.b16 %v464, %v463
  %v503 = vpack.c.b16 %v466, %v465
  %v504 = vpack.c.b16 %v468, %v467
  %v505 = vpack.c.b16 %v470, %v469
  %v506 = vpack.c.b16 %v472, %v471
  %vm540 = vcmask 228352
  %v542 = vsel %vm540, %v269, 0
  %v545 = vsel %vm540, %v274, 0
  %v548 = vsel %vm540, %v279, 0
  %v551 = vsel %vm540, %v284, 0
  %v554 = vsel %vm540, %v289, 0
  %v557 = vsel %vm540, %v294, 0
  %v560 = vsel %vm540, %v299, 0
  %v563 = vsel %vm540, %v304, 0
  %vm565 = vcmask 1045504
  %v567 = vsel %vm565, %v506, 0
  %569 = vmatpush.bf16.msra.mxu0 %v480
  %570 = vmatpush.bf16.msra.mxu0 %v479
  %571 = vmatpush.bf16.msra.mxu0 %v478
  %572 = vmatpush.bf16.msra.mxu0 %v477
  %573 = vmatpush.bf16.msra.mxu0 %v476
  %574 = vmatpush.bf16.msra.mxu0 %v475
  %575 = vmatpush.bf16.msra.mxu0 %v474
  %576 = vmatpush.bf16.msra.mxu0 %v473
  %577 = vmatmul.bf16.gmra.mxu0 %v265
  %v578 = vpop.f32.mrf.mxu0
  %v579 = vadd.f32 0.0, %v578
  %v580 = vpop.f32.mrf.mxu0
  %v581 = vadd.f32 0.0, %v580
  %582 = vmatmul.bf16.gmra.mxu0 %v270
  %v583 = vpop.f32.mrf.mxu0
  %v584 = vadd.f32 0.0, %v583
  %v585 = vpop.f32.mrf.mxu0
  %v586 = vadd.f32 0.0, %v585
  %587 = vmatmul.bf16.gmra.mxu0 %v275
  %v588 = vpop.f32.mrf.mxu0
  %v589 = vadd.f32 0.0, %v588
  %v590 = vpop.f32.mrf.mxu0
  %v591 = vadd.f32 0.0, %v590
  %592 = vmatmul.bf16.gmra.mxu0 %v280
  %v593 = vpop.f32.mrf.mxu0
  %v594 = vadd.f32 0.0, %v593
  %v595 = vpop.f32.mrf.mxu0
  %v596 = vadd.f32 0.0, %v595
  %597 = vmatmul.bf16.gmra.mxu0 %v285
  %v598 = vpop.f32.mrf.mxu0
  %v599 = vadd.f32 0.0, %v598
  %v600 = vpop.f32.mrf.mxu0
  %v601 = vadd.f32 0.0, %v600
  %602 = vmatmul.bf16.gmra.mxu0 %v290
  %v603 = vpop.f32.mrf.mxu0
  %v604 = vadd.f32 0.0, %v603
  %v605 = vpop.f32.mrf.mxu0
  %v606 = vadd.f32 0.0, %v605
  %607 = vmatmul.bf16.gmra.mxu0 %v295
  %v608 = vpop.f32.mrf.mxu0
  %v609 = vadd.f32 0.0, %v608
  %v610 = vpop.f32.mrf.mxu0
  %v611 = vadd.f32 0.0, %v610
  %612 = vmatmul.bf16.gmra.mxu0 %v300
  %v613 = vpop.f32.mrf.mxu0
  %v614 = vadd.f32 0.0, %v613
  %v615 = vpop.f32.mrf.mxu0
  %v616 = vadd.f32 0.0, %v615
  %617 = vdwg.mxu0
  %618 = vmatpush.bf16.msra.mxu0 %v488
  %619 = vmatpush.bf16.msra.mxu0 %v487
  %620 = vmatpush.bf16.msra.mxu0 %v486
  %621 = vmatpush.bf16.msra.mxu0 %v485
  %622 = vmatpush.bf16.msra.mxu0 %v484
  %623 = vmatpush.bf16.msra.mxu0 %v483
  %624 = vmatpush.bf16.msra.mxu0 %v482
  %625 = vmatpush.bf16.msra.mxu0 %v481
  %626 = vmatmul.bf16.gmra.mxu0 %v266
  %v627 = vpop.f32.mrf.mxu0
  %v628 = vadd.f32 %v579, %v627
  %v629 = vpop.f32.mrf.mxu0
  %v630 = vadd.f32 %v581, %v629
  %631 = vmatmul.bf16.gmra.mxu0 %v271
  %v632 = vpop.f32.mrf.mxu0
  %v633 = vadd.f32 %v584, %v632
  %v634 = vpop.f32.mrf.mxu0
  %v635 = vadd.f32 %v586, %v634
  %636 = vmatmul.bf16.gmra.mxu0 %v276
  %v637 = vpop.f32.mrf.mxu0
  %v638 = vadd.f32 %v589, %v637
  %v639 = vpop.f32.mrf.mxu0
  %v640 = vadd.f32 %v591, %v639
  %641 = vmatmul.bf16.gmra.mxu0 %v281
  %v642 = vpop.f32.mrf.mxu0
  %v643 = vadd.f32 %v594, %v642
  %v644 = vpop.f32.mrf.mxu0
  %v645 = vadd.f32 %v596, %v644
  %646 = vmatmul.bf16.gmra.mxu0 %v286
  %v647 = vpop.f32.mrf.mxu0
  %v648 = vadd.f32 %v599, %v647
  %v649 = vpop.f32.mrf.mxu0
  %v650 = vadd.f32 %v601, %v649
  %651 = vmatmul.bf16.gmra.mxu0 %v291
  %v652 = vpop.f32.mrf.mxu0
  %v653 = vadd.f32 %v604, %v652
  %v654 = vpop.f32.mrf.mxu0
  %v655 = vadd.f32 %v606, %v654
  %656 = vmatmul.bf16.gmra.mxu0 %v296
  %v657 = vpop.f32.mrf.mxu0
  %v658 = vadd.f32 %v609, %v657
  %v659 = vpop.f32.mrf.mxu0
  %v660 = vadd.f32 %v611, %v659
  %661 = vmatmul.bf16.gmra.mxu0 %v301
  %v662 = vpop.f32.mrf.mxu0
  %v663 = vadd.f32 %v614, %v662
  %v664 = vpop.f32.mrf.mxu0
  %v665 = vadd.f32 %v616, %v664
  %666 = vdwg.mxu0
  %667 = vmatpush.bf16.msra.mxu0 %v496
  %668 = vmatpush.bf16.msra.mxu0 %v495
  %669 = vmatpush.bf16.msra.mxu0 %v494
  %670 = vmatpush.bf16.msra.mxu0 %v493
  %671 = vmatpush.bf16.msra.mxu0 %v492
  %672 = vmatpush.bf16.msra.mxu0 %v491
  %673 = vmatpush.bf16.msra.mxu0 %v490
  %674 = vmatpush.bf16.msra.mxu0 %v489
  %675 = vmatmul.bf16.gmra.mxu0 %v267
  %v676 = vpop.f32.mrf.mxu0
  %v677 = vadd.f32 %v628, %v676
  %v678 = vpop.f32.mrf.mxu0
  %v679 = vadd.f32 %v630, %v678
  %680 = vmatmul.bf16.gmra.mxu0 %v272
  %v681 = vpop.f32.mrf.mxu0
  %v682 = vadd.f32 %v633, %v681
  %v683 = vpop.f32.mrf.mxu0
  %v684 = vadd.f32 %v635, %v683
  %685 = vmatmul.bf16.gmra.mxu0 %v277
  %v686 = vpop.f32.mrf.mxu0
  %v687 = vadd.f32 %v638, %v686
  %v688 = vpop.f32.mrf.mxu0
  %v689 = vadd.f32 %v640, %v688
  %690 = vmatmul.bf16.gmra.mxu0 %v282
  %v691 = vpop.f32.mrf.mxu0
  %v692 = vadd.f32 %v643, %v691
  %v693 = vpop.f32.mrf.mxu0
  %v694 = vadd.f32 %v645, %v693
  %695 = vmatmul.bf16.gmra.mxu0 %v287
  %v696 = vpop.f32.mrf.mxu0
  %v697 = vadd.f32 %v648, %v696
  %v698 = vpop.f32.mrf.mxu0
  %v699 = vadd.f32 %v650, %v698
  %700 = vmatmul.bf16.gmra.mxu0 %v292
  %v701 = vpop.f32.mrf.mxu0
  %v702 = vadd.f32 %v653, %v701
  %v703 = vpop.f32.mrf.mxu0
  %v704 = vadd.f32 %v655, %v703
  %705 = vmatmul.bf16.gmra.mxu0 %v297
  %v706 = vpop.f32.mrf.mxu0
  %v707 = vadd.f32 %v658, %v706
  %v708 = vpop.f32.mrf.mxu0
  %v709 = vadd.f32 %v660, %v708
  %710 = vmatmul.bf16.gmra.mxu0 %v302
  %v711 = vpop.f32.mrf.mxu0
  %v712 = vadd.f32 %v663, %v711
  %v713 = vpop.f32.mrf.mxu0
  %v714 = vadd.f32 %v665, %v713
  %715 = vdwg.mxu0
  %716 = vmatpush.bf16.msra.mxu0 %v504
  %717 = vmatpush.bf16.msra.mxu0 %v503
  %718 = vmatpush.bf16.msra.mxu0 %v502
  %719 = vmatpush.bf16.msra.mxu0 %v501
  %720 = vmatpush.bf16.msra.mxu0 %v500
  %721 = vmatpush.bf16.msra.mxu0 %v499
  %722 = vmatpush.bf16.msra.mxu0 %v498
  %723 = vmatpush.bf16.msra.mxu0 %v497
  %724 = vmatmul.bf16.gmra.mxu0 %v268
  %v725 = vpop.f32.mrf.mxu0
  %v726 = vadd.f32 %v677, %v725
  %v727 = vpop.f32.mrf.mxu0
  %v728 = vadd.f32 %v679, %v727
  %729 = vmatmul.bf16.gmra.mxu0 %v273
  %v730 = vpop.f32.mrf.mxu0
  %v731 = vadd.f32 %v682, %v730
  %v732 = vpop.f32.mrf.mxu0
  %v733 = vadd.f32 %v684, %v732
  %734 = vmatmul.bf16.gmra.mxu0 %v278
  %v735 = vpop.f32.mrf.mxu0
  %v736 = vadd.f32 %v687, %v735
  %v737 = vpop.f32.mrf.mxu0
  %v738 = vadd.f32 %v689, %v737
  %739 = vmatmul.bf16.gmra.mxu0 %v283
  %v740 = vpop.f32.mrf.mxu0
  %v741 = vadd.f32 %v692, %v740
  %v742 = vpop.f32.mrf.mxu0
  %v743 = vadd.f32 %v694, %v742
  %744 = vmatmul.bf16.gmra.mxu0 %v288
  %v745 = vpop.f32.mrf.mxu0
  %v746 = vadd.f32 %v697, %v745
  %v747 = vpop.f32.mrf.mxu0
  %v748 = vadd.f32 %v699, %v747
  %749 = vmatmul.bf16.gmra.mxu0 %v293
  %v750 = vpop.f32.mrf.mxu0
  %v751 = vadd.f32 %v702, %v750
  %v752 = vpop.f32.mrf.mxu0
  %v753 = vadd.f32 %v704, %v752
  %754 = vmatmul.bf16.gmra.mxu0 %v298
  %v755 = vpop.f32.mrf.mxu0
  %v756 = vadd.f32 %v707, %v755
  %v757 = vpop.f32.mrf.mxu0
  %v758 = vadd.f32 %v709, %v757
  %759 = vmatmul.bf16.gmra.mxu0 %v303
  %v760 = vpop.f32.mrf.mxu0
  %v761 = vadd.f32 %v712, %v760
  %v762 = vpop.f32.mrf.mxu0
  %v763 = vadd.f32 %v714, %v762
  %764 = vdwg.mxu0
  %765 = vmatpush.bf16.msra.mxu0 0
  %766 = vmatpush.bf16.msra.mxu0 0
  %767 = vmatpush.bf16.msra.mxu0 0
  %768 = vmatpush.bf16.msra.mxu0 0
  %769 = vmatpush.bf16.msra.mxu0 0
  %770 = vmatpush.bf16.msra.mxu0 0
  %771 = vmatpush.bf16.msra.mxu0 %v567
  %772 = vmatpush.bf16.msra.mxu0 %v505
  %773 = vmatmul.bf16.gmra.mxu0 %v542
  %v774 = vpop.f32.mrf.mxu0
  %v775 = vadd.f32 %v726, %v774
  %v776 = vpop.f32.mrf.mxu0
  %v777 = vadd.f32 %v728, %v776
  %778 = vmatmul.bf16.gmra.mxu0 %v545
  %v779 = vpop.f32.mrf.mxu0
  %v780 = vadd.f32 %v731, %v779
  %v781 = vpop.f32.mrf.mxu0
  %v782 = vadd.f32 %v733, %v781
  %783 = vmatmul.bf16.gmra.mxu0 %v548
  %v784 = vpop.f32.mrf.mxu0
  %v785 = vadd.f32 %v736, %v784
  %v786 = vpop.f32.mrf.mxu0
  %v787 = vadd.f32 %v738, %v786
  %788 = vmatmul.bf16.gmra.mxu0 %v551
  %v789 = vpop.f32.mrf.mxu0
  %v790 = vadd.f32 %v741, %v789
  %v791 = vpop.f32.mrf.mxu0
  %v792 = vadd.f32 %v743, %v791
  %793 = vmatmul.bf16.gmra.mxu0 %v554
  %v794 = vpop.f32.mrf.mxu0
  %v795 = vadd.f32 %v746, %v794
  %v796 = vpop.f32.mrf.mxu0
  %v797 = vadd.f32 %v748, %v796
  %798 = vmatmul.bf16.gmra.mxu0 %v557
  %v799 = vpop.f32.mrf.mxu0
  %v800 = vadd.f32 %v751, %v799
  %v801 = vpop.f32.mrf.mxu0
  %v802 = vadd.f32 %v753, %v801
  %803 = vmatmul.bf16.gmra.mxu0 %v560
  %v804 = vpop.f32.mrf.mxu0
  %v805 = vadd.f32 %v756, %v804
  %v806 = vpop.f32.mrf.mxu0
  %v807 = vadd.f32 %v758, %v806
  %808 = vmatmul.bf16.gmra.mxu0 %v563
  %v809 = vpop.f32.mrf.mxu0
  %v810 = vadd.f32 %v761, %v809
  %v811 = vpop.f32.mrf.mxu0
  %v812 = vadd.f32 %v763, %v811
  %813 = vdwg.mxu0
  %v814 = vld [vmem:[%s2] sm:$0x1]
  %v816 = vperm.slane %v814, 0
  %v818 = vmul.f32 %v775, %v816
  %v819 = vmul.f32 %v777, %v816
  %v820 = vmul.f32 %v780, %v816
  %v821 = vmul.f32 %v782, %v816
  %v822 = vmul.f32 %v785, %v816
  %v823 = vmul.f32 %v787, %v816
  %v824 = vmul.f32 %v790, %v816
  %v825 = vmul.f32 %v792, %v816
  %v826 = vmul.f32 %v795, %v816
  %v827 = vmul.f32 %v797, %v816
  %v828 = vmul.f32 %v800, %v816
  %v829 = vmul.f32 %v802, %v816
  %v830 = vmul.f32 %v805, %v816
  %v831 = vmul.f32 %v807, %v816
  %v832 = vmul.f32 %v810, %v816
  %v833 = vmul.f32 %v812, %v816
  %v834 = vld [vmem:[%s3] sm:$0x1]
  %v836 = vperm.slane %v834, 0
  %v838 = vadd.f32 %v818, %v836
  %v839 = vadd.f32 %v819, %v836
  %v840 = vadd.f32 %v820, %v836
  %v841 = vadd.f32 %v821, %v836
  %v842 = vadd.f32 %v822, %v836
  %v843 = vadd.f32 %v823, %v836
  %v844 = vadd.f32 %v824, %v836
  %v845 = vadd.f32 %v825, %v836
  %v846 = vadd.f32 %v826, %v836
  %v847 = vadd.f32 %v827, %v836
  %v848 = vadd.f32 %v828, %v836
  %v849 = vadd.f32 %v829, %v836
  %v850 = vadd.f32 %v830, %v836
  %v851 = vadd.f32 %v831, %v836
  %v852 = vadd.f32 %v832, %v836
  %v853 = vadd.f32 %v833, %v836
  %vm854 = vcmp.ge.f32.partialorder %v838, 0.0
  %vm855 = vcmp.ge.f32.partialorder %v839, 0.0
  %vm856 = vcmp.ge.f32.partialorder %v840, 0.0
  %vm857 = vcmp.ge.f32.partialorder %v841, 0.0
  %vm858 = vcmp.ge.f32.partialorder %v842, 0.0
  %vm859 = vcmp.ge.f32.partialorder %v843, 0.0
  %vm860 = vcmp.ge.f32.partialorder %v844, 0.0
  %vm861 = vcmp.ge.f32.partialorder %v845, 0.0
  %vm862 = vcmp.ge.f32.partialorder %v846, 0.0
  %vm863 = vcmp.ge.f32.partialorder %v847, 0.0
  %vm864 = vcmp.ge.f32.partialorder %v848, 0.0
  %vm865 = vcmp.ge.f32.partialorder %v849, 0.0
  %vm866 = vcmp.ge.f32.partialorder %v850, 0.0
  %vm867 = vcmp.ge.f32.partialorder %v851, 0.0
  %vm868 = vcmp.ge.f32.partialorder %v852, 0.0
  %vm869 = vcmp.ge.f32.partialorder %v853, 0.0
  %v870 = vld [vmem:[%s4] sm:$0x1]
  %v872 = vperm.slane %v870, 0
  %v874 = vmul.f32 %v872, %v838
  %v875 = vmul.f32 %v872, %v839
  %v876 = vmul.f32 %v872, %v840
  %v877 = vmul.f32 %v872, %v841
  %v878 = vmul.f32 %v872, %v842
  %v879 = vmul.f32 %v872, %v843
  %v880 = vmul.f32 %v872, %v844
  %v881 = vmul.f32 %v872, %v845
  %v882 = vmul.f32 %v872, %v846
  %v883 = vmul.f32 %v872, %v847
  %v884 = vmul.f32 %v872, %v848
  %v885 = vmul.f32 %v872, %v849
  %v886 = vmul.f32 %v872, %v850
  %v887 = vmul.f32 %v872, %v851
  %v888 = vmul.f32 %v872, %v852
  %v889 = vmul.f32 %v872, %v853
  %v890 = vsel %vm854, %v838, %v874
  %v891 = vsel %vm855, %v839, %v875
  %v892 = vsel %vm856, %v840, %v876
  %v893 = vsel %vm857, %v841, %v877
  %v894 = vsel %vm858, %v842, %v878
  %v895 = vsel %vm859, %v843, %v879
  %v896 = vsel %vm860, %v844, %v880
  %v897 = vsel %vm861, %v845, %v881
  %v898 = vsel %vm862, %v846, %v882
  %v899 = vsel %vm863, %v847, %v883
  %v900 = vsel %vm864, %v848, %v884
  %v901 = vsel %vm865, %v849, %v885
  %v902 = vsel %vm866, %v850, %v886
  %v903 = vsel %vm867, %v851, %v887
  %v904 = vsel %vm868, %v852, %v888
  %v905 = vsel %vm869, %v853, %v889
  %v906 = vpack.c.bf16 %v890, %v890
  %v907 = vpack.c.bf16 %v891, %v891
  %v908 = vpack.c.bf16 %v892, %v892
  %v909 = vpack.c.bf16 %v893, %v893
  %v910 = vpack.c.bf16 %v894, %v894
  %v911 = vpack.c.bf16 %v895, %v895
  %v912 = vpack.c.bf16 %v896, %v896
  %v913 = vpack.c.bf16 %v897, %v897
  %v914 = vpack.c.bf16 %v898, %v898
  %v915 = vpack.c.bf16 %v899, %v899
  %v916 = vpack.c.bf16 %v900, %v900
  %v917 = vpack.c.bf16 %v901, %v901
  %v918 = vpack.c.bf16 %v902, %v902
  %v919 = vpack.c.bf16 %v903, %v903
  %v920 = vpack.c.bf16 %v904, %v904
  %v921 = vpack.c.bf16 %v905, %v905
  %922 = vst [vmem:[%s5] sm:$0xf] %v906
  %923 = vst [vmem:[%s5 + $0x4] sm:$0xf] %v907
  %924 = vst [vmem:[%s5 + $0x8] sm:$0xf] %v908
  %925 = vst [vmem:[%s5 + $0xc] sm:$0xf] %v909
  %926 = vst [vmem:[%s5 + $0x10] sm:$0xf] %v910
  %927 = vst [vmem:[%s5 + $0x14] sm:$0xf] %v911
  %928 = vst [vmem:[%s5 + $0x18] sm:$0xf] %v912
  %929 = vst [vmem:[%s5 + $0x1c] sm:$0xf] %v913
  %930 = vst [vmem:[%s5 + $0x20] sm:$0xf] %v914
  %931 = vst [vmem:[%s5 + $0x24] sm:$0xf] %v915
  %932 = vst [vmem:[%s5 + $0x28] sm:$0xf] %v916
  %933 = vst [vmem:[%s5 + $0x2c] sm:$0xf] %v917
  %934 = vst [vmem:[%s5 + $0x30] sm:$0xf] %v918
  %935 = vst [vmem:[%s5 + $0x34] sm:$0xf] %v919
  %936 = vst [vmem:[%s5 + $0x38] sm:$0xf] %v920
  %937 = vst [vmem:[%s5 + $0x3c] sm:$0xf] %v921
  // Predicated region
  $region22: #{espnet_forward.26} parent=0 // pred_check
    _
  $region23: #{espnet_forward.26} parent=0 // pred_check_branch
    %939 = sbr.rel (0) target = $region25
  $region24: #{espnet_forward.26} parent=0 // pred_region
    _
  $region25: #{espnet_forward.26} parent=0 // pred_fallthru
    _
  // Predicated region
  $region26: #{espnet_forward.26} parent=0 // pred_check
    _
  $region27: #{espnet_forward.26} parent=0 // pred_check_branch
    %941 = sbr.rel (0) target = $region29
  $region28: #{espnet_forward.26} parent=0 // pred_region
    _
  $region29: #{espnet_forward.26} parent=0 // pred_fallthru
    _

// kernel: espnet_forward.28
$region0: #{espnet_forward.28}
  #allocation0 [shape = 'u32[]', space=smem, size = 0x4, offset = 0x4, fixed_abs, tag = 'smem constant byte address 0x4 - core index']
  #allocation1 [shape = 'u32[72,128]{1,0:T(1,128)}', space=vmem, size = 0x9000, scoped, tag = 'internal scratch']
  %s0 = inlined_call_operand.vmem [shape: bf16[128,540], index: 0, kind: input, shape index: {}]
  %s1 = inlined_call_operand.vmem [shape: bf16[540,128], index: 1, kind: input, shape index: {}]
  %s2 = inlined_call_operand.vmem [shape: bf16[128,128], index: 2, kind: input, shape index: {}]
  %s3 = inlined_call_operand.vmem [shape: f32[1,128], index: 3, kind: input, shape index: {}]
  %s4 = inlined_call_operand.vmem [shape: f32[1,128], index: 4, kind: input, shape index: {}]
  %s5 = inlined_call_operand.vmem [shape: f32[1,128], index: 5, kind: input, shape index: {}]
  %s6 = inlined_call_operand.vmem [shape: bf16[128,128], index: 6, kind: output, shape index: {}]
  %s7 = sld [smem:[#allocation0]]
  $region34: #{espnet_forward.28} parent=0
    _
  %s9 = ssub.s32 1, %s7
  %s10 = scalar_select 0, %s9, %s7
  // Predicated region
  $region2: #{espnet_forward.28} parent=0 // pred_check
    _
  $region3: #{espnet_forward.28} parent=0 // pred_check_branch
    %12 = sbr.rel (0) target = $region5
  $region4: #{espnet_forward.28} parent=0 // pred_region
    _
  $region5: #{espnet_forward.28} parent=0 // pred_fallthru
    _
  // Predicated region
  $region6: #{espnet_forward.28} parent=0 // pred_check
    _
  $region7: #{espnet_forward.28} parent=0 // pred_check_branch
    %14 = sbr.rel (0) target = $region9
  $region8: #{espnet_forward.28} parent=0 // pred_region
    _
  $region9: #{espnet_forward.28} parent=0 // pred_fallthru
    _
  // Predicated region
  $region10: #{espnet_forward.28} parent=0 // pred_check
    _
  $region11: #{espnet_forward.28} parent=0 // pred_check_branch
    %16 = sbr.rel (0) target = $region13
  $region12: #{espnet_forward.28} parent=0 // pred_region
    _
  $region13: #{espnet_forward.28} parent=0 // pred_fallthru
    _
  // Predicated region
  $region14: #{espnet_forward.28} parent=0 // pred_check
    _
  $region15: #{espnet_forward.28} parent=0 // pred_check_branch
    %18 = sbr.rel (0) target = $region17
  $region16: #{espnet_forward.28} parent=0 // pred_region
    _
  $region17: #{espnet_forward.28} parent=0 // pred_fallthru
    _
  // Predicated region
  $region18: #{espnet_forward.28} parent=0 // pred_check
    _
  $region19: #{espnet_forward.28} parent=0 // pred_check_branch
    %20 = sbr.rel (0) target = $region21
  $region20: #{espnet_forward.28} parent=0 // pred_region
    _
  $region21: #{espnet_forward.28} parent=0 // pred_fallthru
    _
  // Predicated region
  $region22: #{espnet_forward.28} parent=0 // pred_check
    _
  $region23: #{espnet_forward.28} parent=0 // pred_check_branch
    %22 = sbr.rel (0) target = $region25
  $region24: #{espnet_forward.28} parent=0 // pred_region
    _
  $region25: #{espnet_forward.28} parent=0 // pred_fallthru
    _
  %v24 = vld [vmem:[%s0] sm:$0xff]
  %v25 = vld [vmem:[%s0 + $0x8] sm:$0xff]
  %v26 = vld [vmem:[%s0 + $0x10] sm:$0xf]
  %v27 = vld [vmem:[%s0 + $0x14] sm:$0xff]
  %v28 = vld [vmem:[%s0 + $0x1c] sm:$0xff]
  %v29 = vld [vmem:[%s0 + $0x24] sm:$0xf]
  %v30 = vld [vmem:[%s0 + $0x28] sm:$0xff]
  %v31 = vld [vmem:[%s0 + $0x30] sm:$0xff]
  %v32 = vld [vmem:[%s0 + $0x38] sm:$0xf]
  %v33 = vld [vmem:[%s0 + $0x3c] sm:$0xff]
  %v34 = vld [vmem:[%s0 + $0x44] sm:$0xff]
  %v35 = vld [vmem:[%s0 + $0x4c] sm:$0xf]
  %v36 = vld [vmem:[%s0 + $0x50] sm:$0xff]
  %v37 = vld [vmem:[%s0 + $0x58] sm:$0xff]
  %v38 = vld [vmem:[%s0 + $0x60] sm:$0xf]
  %v39 = vld [vmem:[%s0 + $0x64] sm:$0xff]
  %v40 = vld [vmem:[%s0 + $0x6c] sm:$0xff]
  %v41 = vld [vmem:[%s0 + $0x74] sm:$0xf]
  %v42 = vld [vmem:[%s0 + $0x78] sm:$0xff]
  %v43 = vld [vmem:[%s0 + $0x80] sm:$0xff]
  %v44 = vld [vmem:[%s0 + $0x88] sm:$0xf]
  %v45 = vld [vmem:[%s0 + $0x8c] sm:$0xff]
  %v46 = vld [vmem:[%s0 + $0x94] sm:$0xff]
  %v47 = vld [vmem:[%s0 + $0x9c] sm:$0xf]
  %v48 = vld [vmem:[%s0 + $0xa0] sm:$0xff]
  %v49 = vld [vmem:[%s0 + $0xa8] sm:$0xff]
  %v50 = vld [vmem:[%s0 + $0xb0] sm:$0xf]
  %v51 = vld [vmem:[%s0 + $0xb4] sm:$0xff]
  %v52 = vld [vmem:[%s0 + $0xbc] sm:$0xff]
  %v53 = vld [vmem:[%s0 + $0xc4] sm:$0xf]
  %v54 = vld [vmem:[%s0 + $0xc8] sm:$0xff]
  %v55 = vld [vmem:[%s0 + $0xd0] sm:$0xff]
  %v56 = vld [vmem:[%s0 + $0xd8] sm:$0xf]
  %v57 = vld [vmem:[%s0 + $0xdc] sm:$0xff]
  %v58 = vld [vmem:[%s0 + $0xe4] sm:$0xff]
  %v59 = vld [vmem:[%s0 + $0xec] sm:$0xf]
  %v60 = vld [vmem:[%s0 + $0xf0] sm:$0xff]
  %v61 = vld [vmem:[%s0 + $0xf8] sm:$0xff]
  %v62 = vld [vmem:[%s0 + $0x100] sm:$0xf]
  %v63 = vld [vmem:[%s0 + $0x104] sm:$0xff]
  %v64 = vld [vmem:[%s0 + $0x10c] sm:$0xff]
  %v65 = vld [vmem:[%s0 + $0x114] sm:$0xf]
  %v66 = vld [vmem:[%s0 + $0x118] sm:$0xff]
  %v67 = vld [vmem:[%s0 + $0x120] sm:$0xff]
  %v68 = vld [vmem:[%s0 + $0x128] sm:$0xf]
  %v69 = vld [vmem:[%s0 + $0x12c] sm:$0xff]
  %v70 = vld [vmem:[%s0 + $0x134] sm:$0xff]
  %v71 = vld [vmem:[%s0 + $0x13c] sm:$0xf]
  %v72 = vld [vmem:[%s1] sm:$0xf]
  %v73 = vld [vmem:[%s1 + $0x4] sm:$0xf]
  %v74 = vld [vmem:[%s1 + $0x8] sm:$0xf]
  %v75 = vld [vmem:[%s1 + $0xc] sm:$0xf]
  %v76 = vld [vmem:[%s1 + $0x10] sm:$0xf]
  %v77 = vld [vmem:[%s1 + $0x14] sm:$0xf]
  %v78 = vld [vmem:[%s1 + $0x18] sm:$0xf]
  %v79 = vld [vmem:[%s1 + $0x1c] sm:$0xf]
  %v80 = vld [vmem:[%s1 + $0x20] sm:$0xf]
  %v81 = vld [vmem:[%s1 + $0x24] sm:$0xf]
  %v82 = vld [vmem:[%s1 + $0x28] sm:$0xf]
  %v83 = vld [vmem:[%s1 + $0x2c] sm:$0xf]
  %v84 = vld [vmem:[%s1 + $0x30] sm:$0xf]
  %v85 = vld [vmem:[%s1 + $0x34] sm:$0xf]
  %v86 = vld [vmem:[%s1 + $0x38] sm:$0xf]
  %v87 = vld [vmem:[%s1 + $0x3c] sm:$0xf]
  %v88 = vld [vmem:[%s1 + $0x40] sm:$0xf]
  %v89 = vld [vmem:[%s1 + $0x44] sm:$0xf]
  %v90 = vld [vmem:[%s1 + $0x48] sm:$0xf]
  %v91 = vld [vmem:[%s1 + $0x4c] sm:$0xf]
  %v92 = vld [vmem:[%s1 + $0x50] sm:$0xf]
  %v93 = vld [vmem:[%s1 + $0x54] sm:$0xf]
  %v94 = vld [vmem:[%s1 + $0x58] sm:$0xf]
  %v95 = vld [vmem:[%s1 + $0x5c] sm:$0xf]
  %v96 = vld [vmem:[%s1 + $0x60] sm:$0xf]
  %v97 = vld [vmem:[%s1 + $0x64] sm:$0xf]
  %v98 = vld [vmem:[%s1 + $0x68] sm:$0xf]
  %v99 = vld [vmem:[%s1 + $0x6c] sm:$0xf]
  %v100 = vld [vmem:[%s1 + $0x70] sm:$0xf]
  %v101 = vld [vmem:[%s1 + $0x74] sm:$0xf]
  %v102 = vld [vmem:[%s1 + $0x78] sm:$0xf]
  %v103 = vld [vmem:[%s1 + $0x7c] sm:$0xf]
  %v104 = vld [vmem:[%s1 + $0x80] sm:$0xf]
  %v105 = vld [vmem:[%s1 + $0x84] sm:$0xf]
  %v106 = vld [vmem:[%s1 + $0x88] sm:$0xf]
  %v107 = vld [vmem:[%s1 + $0x8c] sm:$0xf]
  %v108 = vld [vmem:[%s1 + $0x90] sm:$0xf]
  %v109 = vld [vmem:[%s1 + $0x94] sm:$0xf]
  %v110 = vld [vmem:[%s1 + $0x98] sm:$0xf]
  %v111 = vld [vmem:[%s1 + $0x9c] sm:$0xf]
  %v112 = vld [vmem:[%s1 + $0xa0] sm:$0xf]
  %v113 = vld [vmem:[%s1 + $0xa4] sm:$0xf]
  %v114 = vld [vmem:[%s1 + $0xa8] sm:$0xf]
  %v115 = vld [vmem:[%s1 + $0xac] sm:$0xf]
  %v116 = vld [vmem:[%s1 + $0xb0] sm:$0xf]
  %v117 = vld [vmem:[%s1 + $0xb4] sm:$0xf]
  %v118 = vld [vmem:[%s1 + $0xb8] sm:$0xf]
  %v119 = vld [vmem:[%s1 + $0xbc] sm:$0xf]
  %v120 = vld [vmem:[%s1 + $0xc0] sm:$0xf]
  %v121 = vld [vmem:[%s1 + $0xc4] sm:$0xf]
  %v122 = vld [vmem:[%s1 + $0xc8] sm:$0xf]
  %v123 = vld [vmem:[%s1 + $0xcc] sm:$0xf]
  %v124 = vld [vmem:[%s1 + $0xd0] sm:$0xf]
  %v125 = vld [vmem:[%s1 + $0xd4] sm:$0xf]
  %v126 = vld [vmem:[%s1 + $0xd8] sm:$0xf]
  %v127 = vld [vmem:[%s1 + $0xdc] sm:$0xf]
  %v128 = vld [vmem:[%s1 + $0xe0] sm:$0xf]
  %v129 = vld [vmem:[%s1 + $0xe4] sm:$0xf]
  %v130 = vld [vmem:[%s1 + $0xe8] sm:$0xf]
  %v131 = vld [vmem:[%s1 + $0xec] sm:$0xf]
  %v132 = vld [vmem:[%s1 + $0xf0] sm:$0xf]
  %v133 = vld [vmem:[%s1 + $0xf4] sm:$0xf]
  %v134 = vld [vmem:[%s1 + $0xf8] sm:$0xf]
  %v135 = vld [vmem:[%s1 + $0xfc] sm:$0xf]
  %v136 = vld [vmem:[%s1 + $0x100] sm:$0xf]
  %v137 = vld [vmem:[%s1 + $0x104] sm:$0xf]
  %v138 = vld [vmem:[%s1 + $0x108] sm:$0xf]
  %v139 = vld [vmem:[%s1 + $0x10c] sm:$0x3]
  %v140 = vld [vmem:[%s2] sm:$0xf]
  %v141 = vld [vmem:[%s2 + $0x4] sm:$0xf]
  %v142 = vld [vmem:[%s2 + $0x8] sm:$0xf]
  %v143 = vld [vmem:[%s2 + $0xc] sm:$0xf]
  %v144 = vld [vmem:[%s2 + $0x10] sm:$0xf]
  %v145 = vld [vmem:[%s2 + $0x14] sm:$0xf]
  %v146 = vld [vmem:[%s2 + $0x18] sm:$0xf]
  %v147 = vld [vmem:[%s2 + $0x1c] sm:$0xf]
  %v148 = vld [vmem:[%s2 + $0x20] sm:$0xf]
  %v149 = vld [vmem:[%s2 + $0x24] sm:$0xf]
  %v150 = vld [vmem:[%s2 + $0x28] sm:$0xf]
  %v151 = vld [vmem:[%s2 + $0x2c] sm:$0xf]
  %v152 = vld [vmem:[%s2 + $0x30] sm:$0xf]
  %v153 = vld [vmem:[%s2 + $0x34] sm:$0xf]
  %v154 = vld [vmem:[%s2 + $0x38] sm:$0xf]
  %v155 = vld [vmem:[%s2 + $0x3c] sm:$0xf]
  %v156 = vunpack.c.l.bf16 %v140
  %v157 = vunpack.c.l.bf16 %v141
  %v158 = vunpack.c.l.bf16 %v142
  %v159 = vunpack.c.l.bf16 %v143
  %v160 = vunpack.c.l.bf16 %v144
  %v161 = vunpack.c.l.bf16 %v145
  %v162 = vunpack.c.l.bf16 %v146
  %v163 = vunpack.c.l.bf16 %v147
  %v164 = vunpack.c.l.bf16 %v148
  %v165 = vunpack.c.l.bf16 %v149
  %v166 = vunpack.c.l.bf16 %v150
  %v167 = vunpack.c.l.bf16 %v151
  %v168 = vunpack.c.l.bf16 %v152
  %v169 = vunpack.c.l.bf16 %v153
  %v170 = vunpack.c.l.bf16 %v154
  %v171 = vunpack.c.l.bf16 %v155
  %v220 = vunpack.c.l.b16 %v24
  %v221 = vunpack.c.h.b16 %v24
  %v222 = vunpack.c.l.b16 %v25
  %v223 = vunpack.c.h.b16 %v25
  %v224 = vunpack.c.l.b16 %v26
  %v225 = vunpack.c.l.b16 %v27
  %v226 = vunpack.c.h.b16 %v27
  %v227 = vunpack.c.l.b16 %v28
  %v228 = vunpack.c.h.b16 %v28
  %v229 = vunpack.c.l.b16 %v29
  %v230 = vunpack.c.l.b16 %v30
  %v231 = vunpack.c.h.b16 %v30
  %v232 = vunpack.c.l.b16 %v31
  %v233 = vunpack.c.h.b16 %v31
  %v234 = vunpack.c.l.b16 %v32
  %v235 = vunpack.c.l.b16 %v33
  %v236 = vunpack.c.h.b16 %v33
  %v237 = vunpack.c.l.b16 %v34
  %v238 = vunpack.c.h.b16 %v34
  %v239 = vunpack.c.l.b16 %v35
  %v240 = vunpack.c.l.b16 %v36
  %v241 = vunpack.c.h.b16 %v36
  %v242 = vunpack.c.l.b16 %v37
  %v243 = vunpack.c.h.b16 %v37
  %v244 = vunpack.c.l.b16 %v38
  %v245 = vunpack.c.l.b16 %v39
  %v246 = vunpack.c.h.b16 %v39
  %v247 = vunpack.c.l.b16 %v40
  %v248 = vunpack.c.h.b16 %v40
  %v249 = vunpack.c.l.b16 %v41
  %v250 = vunpack.c.l.b16 %v42
  %v251 = vunpack.c.h.b16 %v42
  %v252 = vunpack.c.l.b16 %v43
  %v253 = vunpack.c.h.b16 %v43
  %v254 = vunpack.c.l.b16 %v44
  %v255 = vunpack.c.l.b16 %v45
  %v256 = vunpack.c.h.b16 %v45
  %v257 = vunpack.c.l.b16 %v46
  %v258 = vunpack.c.h.b16 %v46
  %v259 = vunpack.c.l.b16 %v47
  %v260 = vunpack.c.l.b16 %v48
  %v261 = vunpack.c.h.b16 %v48
  %v262 = vunpack.c.l.b16 %v49
  %v263 = vunpack.c.h.b16 %v49
  %v264 = vunpack.c.l.b16 %v50
  %v265 = vunpack.c.l.b16 %v51
  %v266 = vunpack.c.h.b16 %v51
  %v267 = vunpack.c.l.b16 %v52
  %v268 = vunpack.c.h.b16 %v52
  %v269 = vunpack.c.l.b16 %v53
  %v270 = vunpack.c.l.b16 %v54
  %v271 = vunpack.c.h.b16 %v54
  %v272 = vunpack.c.l.b16 %v55
  %v273 = vunpack.c.h.b16 %v55
  %v274 = vunpack.c.l.b16 %v56
  %v275 = vunpack.c.l.b16 %v57
  %v276 = vunpack.c.h.b16 %v57
  %v277 = vunpack.c.l.b16 %v58
  %v278 = vunpack.c.h.b16 %v58
  %v279 = vunpack.c.l.b16 %v59
  %v280 = vunpack.c.l.b16 %v60
  %v281 = vunpack.c.h.b16 %v60
  %v282 = vunpack.c.l.b16 %v61
  %v283 = vunpack.c.h.b16 %v61
  %v284 = vunpack.c.l.b16 %v62
  %v285 = vunpack.c.l.b16 %v63
  %v286 = vunpack.c.h.b16 %v63
  %v287 = vunpack.c.l.b16 %v64
  %v288 = vunpack.c.h.b16 %v64
  %v289 = vunpack.c.l.b16 %v65
  %v290 = vunpack.c.l.b16 %v66
  %v291 = vunpack.c.h.b16 %v66
  %v292 = vunpack.c.l.b16 %v67
  %v293 = vunpack.c.h.b16 %v67
  %v294 = vunpack.c.l.b16 %v68
  %v295 = vunpack.c.l.b16 %v69
  %v296 = vunpack.c.h.b16 %v69
  %v297 = vunpack.c.l.b16 %v70
  %v298 = vunpack.c.h.b16 %v70
  %v299 = vunpack.c.l.b16 %v71
  %v300 = vpack.c.b16 %v225, %v220
  %v301 = vpack.c.b16 %v226, %v221
  %v302 = vpack.c.b16 %v227, %v222
  %v303 = vpack.c.b16 %v228, %v223
  %v304 = vpack.c.b16 %v229, %v224
  %v305 = vpack.c.b16 %v235, %v230
  %v306 = vpack.c.b16 %v236, %v231
  %v307 = vpack.c.b16 %v237, %v232
  %v308 = vpack.c.b16 %v238, %v233
  %v309 = vpack.c.b16 %v239, %v234
  %v310 = vpack.c.b16 %v245, %v240
  %v311 = vpack.c.b16 %v246, %v241
  %v312 = vpack.c.b16 %v247, %v242
  %v313 = vpack.c.b16 %v248, %v243
  %v314 = vpack.c.b16 %v249, %v244
  %v315 = vpack.c.b16 %v255, %v250
  %v316 = vpack.c.b16 %v256, %v251
  %v317 = vpack.c.b16 %v257, %v252
  %v318 = vpack.c.b16 %v258, %v253
  %v319 = vpack.c.b16 %v259, %v254
  %v320 = vpack.c.b16 %v265, %v260
  %v321 = vpack.c.b16 %v266, %v261
  %v322 = vpack.c.b16 %v267, %v262
  %v323 = vpack.c.b16 %v268, %v263
  %v324 = vpack.c.b16 %v269, %v264
  %v325 = vpack.c.b16 %v275, %v270
  %v326 = vpack.c.b16 %v276, %v271
  %v327 = vpack.c.b16 %v277, %v272
  %v328 = vpack.c.b16 %v278, %v273
  %v329 = vpack.c.b16 %v279, %v274
  %v330 = vpack.c.b16 %v285, %v280
  %v331 = vpack.c.b16 %v286, %v281
  %v332 = vpack.c.b16 %v287, %v282
  %v333 = vpack.c.b16 %v288, %v283
  %v334 = vpack.c.b16 %v289, %v284
  %v335 = vpack.c.b16 %v295, %v290
  %v336 = vpack.c.b16 %v296, %v291
  %v337 = vpack.c.b16 %v297, %v292
  %v338 = vpack.c.b16 %v298, %v293
  %v339 = vpack.c.b16 %v299, %v294
  %v440 = vunpack.c.l.b16 %v72
  %v441 = vunpack.c.l.b16 %v73
  %v442 = vunpack.c.l.b16 %v74
  %v443 = vunpack.c.l.b16 %v75
  %v444 = vunpack.c.l.b16 %v76
  %v445 = vunpack.c.l.b16 %v77
  %v446 = vunpack.c.l.b16 %v78
  %v447 = vunpack.c.l.b16 %v79
  %v448 = vunpack.c.l.b16 %v80
  %v449 = vunpack.c.l.b16 %v81
  %v450 = vunpack.c.l.b16 %v82
  %v451 = vunpack.c.l.b16 %v83
  %v452 = vunpack.c.l.b16 %v84
  %v453 = vunpack.c.l.b16 %v85
  %v454 = vunpack.c.l.b16 %v86
  %v455 = vunpack.c.l.b16 %v87
  %v456 = vunpack.c.l.b16 %v88
  %v457 = vunpack.c.l.b16 %v89
  %v458 = vunpack.c.l.b16 %v90
  %v459 = vunpack.c.l.b16 %v91
  %v460 = vunpack.c.l.b16 %v92
  %v461 = vunpack.c.l.b16 %v93
  %v462 = vunpack.c.l.b16 %v94
  %v463 = vunpack.c.l.b16 %v95
  %v464 = vunpack.c.l.b16 %v96
  %v465 = vunpack.c.l.b16 %v97
  %v466 = vunpack.c.l.b16 %v98
  %v467 = vunpack.c.l.b16 %v99
  %v468 = vunpack.c.l.b16 %v100
  %v469 = vunpack.c.l.b16 %v101
  %v470 = vunpack.c.l.b16 %v102
  %v471 = vunpack.c.l.b16 %v103
  %v472 = vunpack.c.l.b16 %v104
  %v473 = vunpack.c.l.b16 %v105
  %v474 = vunpack.c.l.b16 %v106
  %v475 = vunpack.c.l.b16 %v107
  %v476 = vunpack.c.l.b16 %v108
  %v477 = vunpack.c.l.b16 %v109
  %v478 = vunpack.c.l.b16 %v110
  %v479 = vunpack.c.l.b16 %v111
  %v480 = vunpack.c.l.b16 %v112
  %v481 = vunpack.c.l.b16 %v113
  %v482 = vunpack.c.l.b16 %v114
  %v483 = vunpack.c.l.b16 %v115
  %v484 = vunpack.c.l.b16 %v116
  %v485 = vunpack.c.l.b16 %v117
  %v486 = vunpack.c.l.b16 %v118
  %v487 = vunpack.c.l.b16 %v119
  %v488 = vunpack.c.l.b16 %v120
  %v489 = vunpack.c.l.b16 %v121
  %v490 = vunpack.c.l.b16 %v122
  %v491 = vunpack.c.l.b16 %v123
  %v492 = vunpack.c.l.b16 %v124
  %v493 = vunpack.c.l.b16 %v125
  %v494 = vunpack.c.l.b16 %v126
  %v495 = vunpack.c.l.b16 %v127
  %v496 = vunpack.c.l.b16 %v128
  %v497 = vunpack.c.l.b16 %v129
  %v498 = vunpack.c.l.b16 %v130
  %v499 = vunpack.c.l.b16 %v131
  %v500 = vunpack.c.l.b16 %v132
  %v501 = vunpack.c.l.b16 %v133
  %v502 = vunpack.c.l.b16 %v134
  %v503 = vunpack.c.l.b16 %v135
  %v504 = vunpack.c.l.b16 %v136
  %v505 = vunpack.c.l.b16 %v137
  %v506 = vunpack.c.l.b16 %v138
  %v507 = vunpack.c.l.b16 %v139
  %v508 = vpack.c.b16 %v441, %v440
  %v509 = vpack.c.b16 %v443, %v442
  %v510 = vpack.c.b16 %v445, %v444
  %v511 = vpack.c.b16 %v447, %v446
  %v512 = vpack.c.b16 %v449, %v448
  %v513 = vpack.c.b16 %v451, %v450
  %v514 = vpack.c.b16 %v453, %v452
  %v515 = vpack.c.b16 %v455, %v454
  %v516 = vpack.c.b16 %v457, %v456
  %v517 = vpack.c.b16 %v459, %v458
  %v518 = vpack.c.b16 %v461, %v460
  %v519 = vpack.c.b16 %v463, %v462
  %v520 = vpack.c.b16 %v465, %v464
  %v521 = vpack.c.b16 %v467, %v466
  %v522 = vpack.c.b16 %v469, %v468
  %v523 = vpack.c.b16 %v471, %v470
  %v524 = vpack.c.b16 %v473, %v472
  %v525 = vpack.c.b16 %v475, %v474
  %v526 = vpack.c.b16 %v477, %v476
  %v527 = vpack.c.b16 %v479, %v478
  %v528 = vpack.c.b16 %v481, %v480
  %v529 = vpack.c.b16 %v483, %v482
  %v530 = vpack.c.b16 %v485, %v484
  %v531 = vpack.c.b16 %v487, %v486
  %v532 = vpack.c.b16 %v489, %v488
  %v533 = vpack.c.b16 %v491, %v490
  %v534 = vpack.c.b16 %v493, %v492
  %v535 = vpack.c.b16 %v495, %v494
  %v536 = vpack.c.b16 %v497, %v496
  %v537 = vpack.c.b16 %v499, %v498
  %v538 = vpack.c.b16 %v501, %v500
  %v539 = vpack.c.b16 %v503, %v502
  %v540 = vpack.c.b16 %v505, %v504
  %v541 = vpack.c.b16 %v507, %v506
  %vm575 = vcmask 228352
  %v577 = vsel %vm575, %v304, 0
  %v580 = vsel %vm575, %v309, 0
  %v583 = vsel %vm575, %v314, 0
  %v586 = vsel %vm575, %v319, 0
  %v589 = vsel %vm575, %v324, 0
  %v592 = vsel %vm575, %v329, 0
  %v595 = vsel %vm575, %v334, 0
  %v598 = vsel %vm575, %v339, 0
  %vm600 = vcmask 1045504
  %v602 = vsel %vm600, %v541, 0
  %604 = vmatpush.bf16.msra.mxu0 %v515
  %605 = vmatpush.bf16.msra.mxu0 %v514
  %606 = vmatpush.bf16.msra.mxu0 %v513
  %607 = vmatpush.bf16.msra.mxu0 %v512
  %608 = vmatpush.bf16.msra.mxu0 %v511
  %609 = vmatpush.bf16.msra.mxu0 %v510
  %610 = vmatpush.bf16.msra.mxu0 %v509
  %611 = vmatpush.bf16.msra.mxu0 %v508
  %612 = vmatmul.bf16.gmra.mxu0 %v300
  %v613 = vpop.f32.mrf.mxu0
  %v614 = vadd.f32 %v156, %v613
  %v615 = vpop.f32.mrf.mxu0
  %v616 = vadd.f32 %v157, %v615
  %617 = vmatmul.bf16.gmra.mxu0 %v305
  %v618 = vpop.f32.mrf.mxu0
  %v619 = vadd.f32 %v158, %v618
  %v620 = vpop.f32.mrf.mxu0
  %v621 = vadd.f32 %v159, %v620
  %622 = vmatmul.bf16.gmra.mxu0 %v310
  %v623 = vpop.f32.mrf.mxu0
  %v624 = vadd.f32 %v160, %v623
  %v625 = vpop.f32.mrf.mxu0
  %v626 = vadd.f32 %v161, %v625
  %627 = vmatmul.bf16.gmra.mxu0 %v315
  %v628 = vpop.f32.mrf.mxu0
  %v629 = vadd.f32 %v162, %v628
  %v630 = vpop.f32.mrf.mxu0
  %v631 = vadd.f32 %v163, %v630
  %632 = vmatmul.bf16.gmra.mxu0 %v320
  %v633 = vpop.f32.mrf.mxu0
  %v634 = vadd.f32 %v164, %v633
  %v635 = vpop.f32.mrf.mxu0
  %v636 = vadd.f32 %v165, %v635
  %637 = vmatmul.bf16.gmra.mxu0 %v325
  %v638 = vpop.f32.mrf.mxu0
  %v639 = vadd.f32 %v166, %v638
  %v640 = vpop.f32.mrf.mxu0
  %v641 = vadd.f32 %v167, %v640
  %642 = vmatmul.bf16.gmra.mxu0 %v330
  %v643 = vpop.f32.mrf.mxu0
  %v644 = vadd.f32 %v168, %v643
  %v645 = vpop.f32.mrf.mxu0
  %v646 = vadd.f32 %v169, %v645
  %647 = vmatmul.bf16.gmra.mxu0 %v335
  %v648 = vpop.f32.mrf.mxu0
  %v649 = vadd.f32 %v170, %v648
  %v650 = vpop.f32.mrf.mxu0
  %v651 = vadd.f32 %v171, %v650
  %652 = vdwg.mxu0
  %653 = vmatpush.bf16.msra.mxu0 %v523
  %654 = vmatpush.bf16.msra.mxu0 %v522
  %655 = vmatpush.bf16.msra.mxu0 %v521
  %656 = vmatpush.bf16.msra.mxu0 %v520
  %657 = vmatpush.bf16.msra.mxu0 %v519
  %658 = vmatpush.bf16.msra.mxu0 %v518
  %659 = vmatpush.bf16.msra.mxu0 %v517
  %660 = vmatpush.bf16.msra.mxu0 %v516
  %661 = vmatmul.bf16.gmra.mxu0 %v301
  %v662 = vpop.f32.mrf.mxu0
  %v663 = vadd.f32 %v614, %v662
  %v664 = vpop.f32.mrf.mxu0
  %v665 = vadd.f32 %v616, %v664
  %666 = vmatmul.bf16.gmra.mxu0 %v306
  %v667 = vpop.f32.mrf.mxu0
  %v668 = vadd.f32 %v619, %v667
  %v669 = vpop.f32.mrf.mxu0
  %v670 = vadd.f32 %v621, %v669
  %671 = vmatmul.bf16.gmra.mxu0 %v311
  %v672 = vpop.f32.mrf.mxu0
  %v673 = vadd.f32 %v624, %v672
  %v674 = vpop.f32.mrf.mxu0
  %v675 = vadd.f32 %v626, %v674
  %676 = vmatmul.bf16.gmra.mxu0 %v316
  %v677 = vpop.f32.mrf.mxu0
  %v678 = vadd.f32 %v629, %v677
  %v679 = vpop.f32.mrf.mxu0
  %v680 = vadd.f32 %v631, %v679
  %681 = vmatmul.bf16.gmra.mxu0 %v321
  %v682 = vpop.f32.mrf.mxu0
  %v683 = vadd.f32 %v634, %v682
  %v684 = vpop.f32.mrf.mxu0
  %v685 = vadd.f32 %v636, %v684
  %686 = vmatmul.bf16.gmra.mxu0 %v326
  %v687 = vpop.f32.mrf.mxu0
  %v688 = vadd.f32 %v639, %v687
  %v689 = vpop.f32.mrf.mxu0
  %v690 = vadd.f32 %v641, %v689
  %691 = vmatmul.bf16.gmra.mxu0 %v331
  %v692 = vpop.f32.mrf.mxu0
  %v693 = vadd.f32 %v644, %v692
  %v694 = vpop.f32.mrf.mxu0
  %v695 = vadd.f32 %v646, %v694
  %696 = vmatmul.bf16.gmra.mxu0 %v336
  %v697 = vpop.f32.mrf.mxu0
  %v698 = vadd.f32 %v649, %v697
  %v699 = vpop.f32.mrf.mxu0
  %v700 = vadd.f32 %v651, %v699
  %701 = vdwg.mxu0
  %702 = vmatpush.bf16.msra.mxu0 %v531
  %703 = vmatpush.bf16.msra.mxu0 %v530
  %704 = vmatpush.bf16.msra.mxu0 %v529
  %705 = vmatpush.bf16.msra.mxu0 %v528
  %706 = vmatpush.bf16.msra.mxu0 %v527
  %707 = vmatpush.bf16.msra.mxu0 %v526
  %708 = vmatpush.bf16.msra.mxu0 %v525
  %709 = vmatpush.bf16.msra.mxu0 %v524
  %710 = vmatmul.bf16.gmra.mxu0 %v302
  %v711 = vpop.f32.mrf.mxu0
  %v712 = vadd.f32 %v663, %v711
  %v713 = vpop.f32.mrf.mxu0
  %v714 = vadd.f32 %v665, %v713
  %715 = vmatmul.bf16.gmra.mxu0 %v307
  %v716 = vpop.f32.mrf.mxu0
  %v717 = vadd.f32 %v668, %v716
  %v718 = vpop.f32.mrf.mxu0
  %v719 = vadd.f32 %v670, %v718
  %720 = vmatmul.bf16.gmra.mxu0 %v312
  %v721 = vpop.f32.mrf.mxu0
  %v722 = vadd.f32 %v673, %v721
  %v723 = vpop.f32.mrf.mxu0
  %v724 = vadd.f32 %v675, %v723
  %725 = vmatmul.bf16.gmra.mxu0 %v317
  %v726 = vpop.f32.mrf.mxu0
  %v727 = vadd.f32 %v678, %v726
  %v728 = vpop.f32.mrf.mxu0
  %v729 = vadd.f32 %v680, %v728
  %730 = vmatmul.bf16.gmra.mxu0 %v322
  %v731 = vpop.f32.mrf.mxu0
  %v732 = vadd.f32 %v683, %v731
  %v733 = vpop.f32.mrf.mxu0
  %v734 = vadd.f32 %v685, %v733
  %735 = vmatmul.bf16.gmra.mxu0 %v327
  %v736 = vpop.f32.mrf.mxu0
  %v737 = vadd.f32 %v688, %v736
  %v738 = vpop.f32.mrf.mxu0
  %v739 = vadd.f32 %v690, %v738
  %740 = vmatmul.bf16.gmra.mxu0 %v332
  %v741 = vpop.f32.mrf.mxu0
  %v742 = vadd.f32 %v693, %v741
  %v743 = vpop.f32.mrf.mxu0
  %v744 = vadd.f32 %v695, %v743
  %745 = vmatmul.bf16.gmra.mxu0 %v337
  %v746 = vpop.f32.mrf.mxu0
  %v747 = vadd.f32 %v698, %v746
  %v748 = vpop.f32.mrf.mxu0
  %v749 = vadd.f32 %v700, %v748
  %750 = vdwg.mxu0
  %751 = vmatpush.bf16.msra.mxu0 %v539
  %752 = vmatpush.bf16.msra.mxu0 %v538
  %753 = vmatpush.bf16.msra.mxu0 %v537
  %754 = vmatpush.bf16.msra.mxu0 %v536
  %755 = vmatpush.bf16.msra.mxu0 %v535
  %756 = vmatpush.bf16.msra.mxu0 %v534
  %757 = vmatpush.bf16.msra.mxu0 %v533
  %758 = vmatpush.bf16.msra.mxu0 %v532
  %759 = vmatmul.bf16.gmra.mxu0 %v303
  %v760 = vpop.f32.mrf.mxu0
  %v761 = vadd.f32 %v712, %v760
  %v762 = vpop.f32.mrf.mxu0
  %v763 = vadd.f32 %v714, %v762
  %764 = vmatmul.bf16.gmra.mxu0 %v308
  %v765 = vpop.f32.mrf.mxu0
  %v766 = vadd.f32 %v717, %v765
  %v767 = vpop.f32.mrf.mxu0
  %v768 = vadd.f32 %v719, %v767
  %769 = vmatmul.bf16.gmra.mxu0 %v313
  %v770 = vpop.f32.mrf.mxu0
  %v771 = vadd.f32 %v722, %v770
  %v772 = vpop.f32.mrf.mxu0
  %v773 = vadd.f32 %v724, %v772
  %774 = vmatmul.bf16.gmra.mxu0 %v318
  %v775 = vpop.f32.mrf.mxu0
  %v776 = vadd.f32 %v727, %v775
  %v777 = vpop.f32.mrf.mxu0
  %v778 = vadd.f32 %v729, %v777
  %779 = vmatmul.bf16.gmra.mxu0 %v323
  %v780 = vpop.f32.mrf.mxu0
  %v781 = vadd.f32 %v732, %v780
  %v782 = vpop.f32.mrf.mxu0
  %v783 = vadd.f32 %v734, %v782
  %784 = vmatmul.bf16.gmra.mxu0 %v328
  %v785 = vpop.f32.mrf.mxu0
  %v786 = vadd.f32 %v737, %v785
  %v787 = vpop.f32.mrf.mxu0
  %v788 = vadd.f32 %v739, %v787
  %789 = vmatmul.bf16.gmra.mxu0 %v333
  %v790 = vpop.f32.mrf.mxu0
  %v791 = vadd.f32 %v742, %v790
  %v792 = vpop.f32.mrf.mxu0
  %v793 = vadd.f32 %v744, %v792
  %794 = vmatmul.bf16.gmra.mxu0 %v338
  %v795 = vpop.f32.mrf.mxu0
  %v796 = vadd.f32 %v747, %v795
  %v797 = vpop.f32.mrf.mxu0
  %v798 = vadd.f32 %v749, %v797
  %799 = vdwg.mxu0
  %800 = vmatpush.bf16.msra.mxu0 0
  %801 = vmatpush.bf16.msra.mxu0 0
  %802 = vmatpush.bf16.msra.mxu0 0
  %803 = vmatpush.bf16.msra.mxu0 0
  %804 = vmatpush.bf16.msra.mxu0 0
  %805 = vmatpush.bf16.msra.mxu0 0
  %806 = vmatpush.bf16.msra.mxu0 %v602
  %807 = vmatpush.bf16.msra.mxu0 %v540
  %808 = vmatmul.bf16.gmra.mxu0 %v577
  %v809 = vpop.f32.mrf.mxu0
  %v810 = vadd.f32 %v761, %v809
  %v811 = vpop.f32.mrf.mxu0
  %v812 = vadd.f32 %v763, %v811
  %813 = vmatmul.bf16.gmra.mxu0 %v580
  %v814 = vpop.f32.mrf.mxu0
  %v815 = vadd.f32 %v766, %v814
  %v816 = vpop.f32.mrf.mxu0
  %v817 = vadd.f32 %v768, %v816
  %818 = vmatmul.bf16.gmra.mxu0 %v583
  %v819 = vpop.f32.mrf.mxu0
  %v820 = vadd.f32 %v771, %v819
  %v821 = vpop.f32.mrf.mxu0
  %v822 = vadd.f32 %v773, %v821
  %823 = vmatmul.bf16.gmra.mxu0 %v586
  %v824 = vpop.f32.mrf.mxu0
  %v825 = vadd.f32 %v776, %v824
  %v826 = vpop.f32.mrf.mxu0
  %v827 = vadd.f32 %v778, %v826
  %828 = vmatmul.bf16.gmra.mxu0 %v589
  %v829 = vpop.f32.mrf.mxu0
  %v830 = vadd.f32 %v781, %v829
  %v831 = vpop.f32.mrf.mxu0
  %v832 = vadd.f32 %v783, %v831
  %833 = vmatmul.bf16.gmra.mxu0 %v592
  %v834 = vpop.f32.mrf.mxu0
  %v835 = vadd.f32 %v786, %v834
  %v836 = vpop.f32.mrf.mxu0
  %v837 = vadd.f32 %v788, %v836
  %838 = vmatmul.bf16.gmra.mxu0 %v595
  %v839 = vpop.f32.mrf.mxu0
  %v840 = vadd.f32 %v791, %v839
  %v841 = vpop.f32.mrf.mxu0
  %v842 = vadd.f32 %v793, %v841
  %843 = vmatmul.bf16.gmra.mxu0 %v598
  %v844 = vpop.f32.mrf.mxu0
  %v845 = vadd.f32 %v796, %v844
  %v846 = vpop.f32.mrf.mxu0
  %v847 = vadd.f32 %v798, %v846
  %848 = vdwg.mxu0
  %v849 = vld [vmem:[%s3] sm:$0x1]
  %v851 = vperm.slane %v849, 0
  %v853 = vmul.f32 %v810, %v851
  %v854 = vmul.f32 %v812, %v851
  %v855 = vmul.f32 %v815, %v851
  %v856 = vmul.f32 %v817, %v851
  %v857 = vmul.f32 %v820, %v851
  %v858 = vmul.f32 %v822, %v851
  %v859 = vmul.f32 %v825, %v851
  %v860 = vmul.f32 %v827, %v851
  %v861 = vmul.f32 %v830, %v851
  %v862 = vmul.f32 %v832, %v851
  %v863 = vmul.f32 %v835, %v851
  %v864 = vmul.f32 %v837, %v851
  %v865 = vmul.f32 %v840, %v851
  %v866 = vmul.f32 %v842, %v851
  %v867 = vmul.f32 %v845, %v851
  %v868 = vmul.f32 %v847, %v851
  %v869 = vld [vmem:[%s4] sm:$0x1]
  %v871 = vperm.slane %v869, 0
  %v873 = vadd.f32 %v853, %v871
  %v874 = vadd.f32 %v854, %v871
  %v875 = vadd.f32 %v855, %v871
  %v876 = vadd.f32 %v856, %v871
  %v877 = vadd.f32 %v857, %v871
  %v878 = vadd.f32 %v858, %v871
  %v879 = vadd.f32 %v859, %v871
  %v880 = vadd.f32 %v860, %v871
  %v881 = vadd.f32 %v861, %v871
  %v882 = vadd.f32 %v862, %v871
  %v883 = vadd.f32 %v863, %v871
  %v884 = vadd.f32 %v864, %v871
  %v885 = vadd.f32 %v865, %v871
  %v886 = vadd.f32 %v866, %v871
  %v887 = vadd.f32 %v867, %v871
  %v888 = vadd.f32 %v868, %v871
  %vm889 = vcmp.ge.f32.partialorder %v873, 0.0
  %vm890 = vcmp.ge.f32.partialorder %v874, 0.0
  %vm891 = vcmp.ge.f32.partialorder %v875, 0.0
  %vm892 = vcmp.ge.f32.partialorder %v876, 0.0
  %vm893 = vcmp.ge.f32.partialorder %v877, 0.0
  %vm894 = vcmp.ge.f32.partialorder %v878, 0.0
  %vm895 = vcmp.ge.f32.partialorder %v879, 0.0
  %vm896 = vcmp.ge.f32.partialorder %v880, 0.0
  %vm897 = vcmp.ge.f32.partialorder %v881, 0.0
  %vm898 = vcmp.ge.f32.partialorder %v882, 0.0
  %vm899 = vcmp.ge.f32.partialorder %v883, 0.0
  %vm900 = vcmp.ge.f32.partialorder %v884, 0.0
  %vm901 = vcmp.ge.f32.partialorder %v885, 0.0
  %vm902 = vcmp.ge.f32.partialorder %v886, 0.0
  %vm903 = vcmp.ge.f32.partialorder %v887, 0.0
  %vm904 = vcmp.ge.f32.partialorder %v888, 0.0
  %v905 = vld [vmem:[%s5] sm:$0x1]
  %v907 = vperm.slane %v905, 0
  %v909 = vmul.f32 %v907, %v873
  %v910 = vmul.f32 %v907, %v874
  %v911 = vmul.f32 %v907, %v875
  %v912 = vmul.f32 %v907, %v876
  %v913 = vmul.f32 %v907, %v877
  %v914 = vmul.f32 %v907, %v878
  %v915 = vmul.f32 %v907, %v879
  %v916 = vmul.f32 %v907, %v880
  %v917 = vmul.f32 %v907, %v881
  %v918 = vmul.f32 %v907, %v882
  %v919 = vmul.f32 %v907, %v883
  %v920 = vmul.f32 %v907, %v884
  %v921 = vmul.f32 %v907, %v885
  %v922 = vmul.f32 %v907, %v886
  %v923 = vmul.f32 %v907, %v887
  %v924 = vmul.f32 %v907, %v888
  %v925 = vsel %vm889, %v873, %v909
  %v926 = vsel %vm890, %v874, %v910
  %v927 = vsel %vm891, %v875, %v911
  %v928 = vsel %vm892, %v876, %v912
  %v929 = vsel %vm893, %v877, %v913
  %v930 = vsel %vm894, %v878, %v914
  %v931 = vsel %vm895, %v879, %v915
  %v932 = vsel %vm896, %v880, %v916
  %v933 = vsel %vm897, %v881, %v917
  %v934 = vsel %vm898, %v882, %v918
  %v935 = vsel %vm899, %v883, %v919
  %v936 = vsel %vm900, %v884, %v920
  %v937 = vsel %vm901, %v885, %v921
  %v938 = vsel %vm902, %v886, %v922
  %v939 = vsel %vm903, %v887, %v923
  %v940 = vsel %vm904, %v888, %v924
  %v941 = vpack.c.bf16 %v925, %v925
  %v942 = vpack.c.bf16 %v926, %v926
  %v943 = vpack.c.bf16 %v927, %v927
  %v944 = vpack.c.bf16 %v928, %v928
  %v945 = vpack.c.bf16 %v929, %v929
  %v946 = vpack.c.bf16 %v930, %v930
  %v947 = vpack.c.bf16 %v931, %v931
  %v948 = vpack.c.bf16 %v932, %v932
  %v949 = vpack.c.bf16 %v933, %v933
  %v950 = vpack.c.bf16 %v934, %v934
  %v951 = vpack.c.bf16 %v935, %v935
  %v952 = vpack.c.bf16 %v936, %v936
  %v953 = vpack.c.bf16 %v937, %v937
  %v954 = vpack.c.bf16 %v938, %v938
  %v955 = vpack.c.bf16 %v939, %v939
  %v956 = vpack.c.bf16 %v940, %v940
  %957 = vst [vmem:[%s6] sm:$0xf] %v941
  %958 = vst [vmem:[%s6 + $0x4] sm:$0xf] %v942
  %959 = vst [vmem:[%s6 + $0x8] sm:$0xf] %v943
  %960 = vst [vmem:[%s6 + $0xc] sm:$0xf] %v944
  %961 = vst [vmem:[%s6 + $0x10] sm:$0xf] %v945
  %962 = vst [vmem:[%s6 + $0x14] sm:$0xf] %v946
  %963 = vst [vmem:[%s6 + $0x18] sm:$0xf] %v947
  %964 = vst [vmem:[%s6 + $0x1c] sm:$0xf] %v948
  %965 = vst [vmem:[%s6 + $0x20] sm:$0xf] %v949
  %966 = vst [vmem:[%s6 + $0x24] sm:$0xf] %v950
  %967 = vst [vmem:[%s6 + $0x28] sm:$0xf] %v951
  %968 = vst [vmem:[%s6 + $0x2c] sm:$0xf] %v952
  %969 = vst [vmem:[%s6 + $0x30] sm:$0xf] %v953
  %970 = vst [vmem:[%s6 + $0x34] sm:$0xf] %v954
  %971 = vst [vmem:[%s6 + $0x38] sm:$0xf] %v955
  %972 = vst [vmem:[%s6 + $0x3c] sm:$0xf] %v956
  // Predicated region
  $region26: #{espnet_forward.28} parent=0 // pred_check
    _
  $region27: #{espnet_forward.28} parent=0 // pred_check_branch
    %974 = sbr.rel (0) target = $region29
  $region28: #{espnet_forward.28} parent=0 // pred_region
    _
  $region29: #{espnet_forward.28} parent=0 // pred_fallthru
    _
  // Predicated region
  $region30: #{espnet_forward.28} parent=0 // pred_check
    _
  $region31: #{espnet_forward.28} parent=0 // pred_check_branch
    %976 = sbr.rel (0) target = $region33
  $region32: #{espnet_forward.28} parent=0 // pred_region
    _
  $region33: #{espnet_forward.28} parent=0 // pred_fallthru
    _

// kernel: espnet_forward.40
$region0: #{espnet_forward.40}
  #allocation0 [shape = 'u32[]', space=smem, size = 0x4, offset = 0x4, fixed_abs, tag = 'smem constant byte address 0x4 - core index']
  #allocation1 [shape = 'u32[72,128]{1,0:T(1,128)}', space=vmem, size = 0x9000, scoped, tag = 'internal scratch']
  %s0 = inlined_call_operand.vmem [shape: bf16[128,131], index: 0, kind: input, shape index: {}]
  %s1 = inlined_call_operand.vmem [shape: bf16[131,128], index: 1, kind: input, shape index: {}]
  %s2 = inlined_call_operand.vmem [shape: f32[1,128], index: 2, kind: input, shape index: {}]
  %s3 = inlined_call_operand.vmem [shape: f32[1,128], index: 3, kind: input, shape index: {}]
  %s4 = inlined_call_operand.vmem [shape: f32[1,128], index: 4, kind: input, shape index: {}]
  %s5 = inlined_call_operand.vmem [shape: bf16[128,128], index: 5, kind: output, shape index: {}]
  %s6 = sld [smem:[#allocation0]]
  $region30: #{espnet_forward.40} parent=0
    _
  %s8 = ssub.s32 1, %s6
  %s9 = scalar_select 0, %s8, %s6
  // Predicated region
  $region2: #{espnet_forward.40} parent=0 // pred_check
    _
  $region3: #{espnet_forward.40} parent=0 // pred_check_branch
    %11 = sbr.rel (0) target = $region5
  $region4: #{espnet_forward.40} parent=0 // pred_region
    _
  $region5: #{espnet_forward.40} parent=0 // pred_fallthru
    _
  // Predicated region
  $region6: #{espnet_forward.40} parent=0 // pred_check
    _
  $region7: #{espnet_forward.40} parent=0 // pred_check_branch
    %13 = sbr.rel (0) target = $region9
  $region8: #{espnet_forward.40} parent=0 // pred_region
    _
  $region9: #{espnet_forward.40} parent=0 // pred_fallthru
    _
  // Predicated region
  $region10: #{espnet_forward.40} parent=0 // pred_check
    _
  $region11: #{espnet_forward.40} parent=0 // pred_check_branch
    %15 = sbr.rel (0) target = $region13
  $region12: #{espnet_forward.40} parent=0 // pred_region
    _
  $region13: #{espnet_forward.40} parent=0 // pred_fallthru
    _
  // Predicated region
  $region14: #{espnet_forward.40} parent=0 // pred_check
    _
  $region15: #{espnet_forward.40} parent=0 // pred_check_branch
    %17 = sbr.rel (0) target = $region17
  $region16: #{espnet_forward.40} parent=0 // pred_region
    _
  $region17: #{espnet_forward.40} parent=0 // pred_fallthru
    _
  // Predicated region
  $region18: #{espnet_forward.40} parent=0 // pred_check
    _
  $region19: #{espnet_forward.40} parent=0 // pred_check_branch
    %19 = sbr.rel (0) target = $region21
  $region20: #{espnet_forward.40} parent=0 // pred_region
    _
  $region21: #{espnet_forward.40} parent=0 // pred_fallthru
    _
  %v21 = vld [vmem:[%s0] sm:$0xff]
  %v22 = vld [vmem:[%s0 + $0x8] sm:$0xff]
  %v23 = vld [vmem:[%s0 + $0x10] sm:$0xff]
  %v24 = vld [vmem:[%s0 + $0x18] sm:$0xff]
  %v25 = vld [vmem:[%s0 + $0x20] sm:$0xff]
  %v26 = vld [vmem:[%s0 + $0x28] sm:$0xff]
  %v27 = vld [vmem:[%s0 + $0x30] sm:$0xff]
  %v28 = vld [vmem:[%s0 + $0x38] sm:$0xff]
  %v29 = vld [vmem:[%s0 + $0x40] sm:$0xff]
  %v30 = vld [vmem:[%s0 + $0x48] sm:$0xff]
  %v31 = vld [vmem:[%s0 + $0x50] sm:$0xff]
  %v32 = vld [vmem:[%s0 + $0x58] sm:$0xff]
  %v33 = vld [vmem:[%s0 + $0x60] sm:$0xff]
  %v34 = vld [vmem:[%s0 + $0x68] sm:$0xff]
  %v35 = vld [vmem:[%s0 + $0x70] sm:$0xff]
  %v36 = vld [vmem:[%s0 + $0x78] sm:$0xff]
  %v37 = vld [vmem:[%s1] sm:$0xf]
  %v38 = vld [vmem:[%s1 + $0x4] sm:$0xf]
  %v39 = vld [vmem:[%s1 + $0x8] sm:$0xf]
  %v40 = vld [vmem:[%s1 + $0xc] sm:$0xf]
  %v41 = vld [vmem:[%s1 + $0x10] sm:$0xf]
  %v42 = vld [vmem:[%s1 + $0x14] sm:$0xf]
  %v43 = vld [vmem:[%s1 + $0x18] sm:$0xf]
  %v44 = vld [vmem:[%s1 + $0x1c] sm:$0xf]
  %v45 = vld [vmem:[%s1 + $0x20] sm:$0xf]
  %v46 = vld [vmem:[%s1 + $0x24] sm:$0xf]
  %v47 = vld [vmem:[%s1 + $0x28] sm:$0xf]
  %v48 = vld [vmem:[%s1 + $0x2c] sm:$0xf]
  %v49 = vld [vmem:[%s1 + $0x30] sm:$0xf]
  %v50 = vld [vmem:[%s1 + $0x34] sm:$0xf]
  %v51 = vld [vmem:[%s1 + $0x38] sm:$0xf]
  %v52 = vld [vmem:[%s1 + $0x3c] sm:$0xf]
  %v53 = vld [vmem:[%s1 + $0x40] sm:$0x3]
  %v70 = vunpack.c.l.b16 %v21
  %v71 = vunpack.c.h.b16 %v21
  %v72 = vunpack.c.l.b16 %v22
  %v73 = vunpack.c.h.b16 %v22
  %v74 = vunpack.c.l.b16 %v23
  %v75 = vunpack.c.h.b16 %v23
  %v76 = vunpack.c.l.b16 %v24
  %v77 = vunpack.c.h.b16 %v24
  %v78 = vunpack.c.l.b16 %v25
  %v79 = vunpack.c.h.b16 %v25
  %v80 = vunpack.c.l.b16 %v26
  %v81 = vunpack.c.h.b16 %v26
  %v82 = vunpack.c.l.b16 %v27
  %v83 = vunpack.c.h.b16 %v27
  %v84 = vunpack.c.l.b16 %v28
  %v85 = vunpack.c.h.b16 %v28
  %v86 = vunpack.c.l.b16 %v29
  %v87 = vunpack.c.h.b16 %v29
  %v88 = vunpack.c.l.b16 %v30
  %v89 = vunpack.c.h.b16 %v30
  %v90 = vunpack.c.l.b16 %v31
  %v91 = vunpack.c.h.b16 %v31
  %v92 = vunpack.c.l.b16 %v32
  %v93 = vunpack.c.h.b16 %v32
  %v94 = vunpack.c.l.b16 %v33
  %v95 = vunpack.c.h.b16 %v33
  %v96 = vunpack.c.l.b16 %v34
  %v97 = vunpack.c.h.b16 %v34
  %v98 = vunpack.c.l.b16 %v35
  %v99 = vunpack.c.h.b16 %v35
  %v100 = vunpack.c.l.b16 %v36
  %v101 = vunpack.c.h.b16 %v36
  %v102 = vpack.c.b16 %v72, %v70
  %v103 = vpack.c.b16 %v73, %v71
  %v104 = vpack.c.b16 %v76, %v74
  %v105 = vpack.c.b16 %v77, %v75
  %v106 = vpack.c.b16 %v80, %v78
  %v107 = vpack.c.b16 %v81, %v79
  %v108 = vpack.c.b16 %v84, %v82
  %v109 = vpack.c.b16 %v85, %v83
  %v110 = vpack.c.b16 %v88, %v86
  %v111 = vpack.c.b16 %v89, %v87
  %v112 = vpack.c.b16 %v92, %v90
  %v113 = vpack.c.b16 %v93, %v91
  %v114 = vpack.c.b16 %v96, %v94
  %v115 = vpack.c.b16 %v97, %v95
  %v116 = vpack.c.b16 %v100, %v98
  %v117 = vpack.c.b16 %v101, %v99
  %v143 = vunpack.c.l.b16 %v37
  %v144 = vunpack.c.l.b16 %v38
  %v145 = vunpack.c.l.b16 %v39
  %v146 = vunpack.c.l.b16 %v40
  %v147 = vunpack.c.l.b16 %v41
  %v148 = vunpack.c.l.b16 %v42
  %v149 = vunpack.c.l.b16 %v43
  %v150 = vunpack.c.l.b16 %v44
  %v151 = vunpack.c.l.b16 %v45
  %v152 = vunpack.c.l.b16 %v46
  %v153 = vunpack.c.l.b16 %v47
  %v154 = vunpack.c.l.b16 %v48
  %v155 = vunpack.c.l.b16 %v49
  %v156 = vunpack.c.l.b16 %v50
  %v157 = vunpack.c.l.b16 %v51
  %v158 = vunpack.c.l.b16 %v52
  %v159 = vunpack.c.l.b16 %v53
  %v160 = vpack.c.b16 %v144, %v143
  %v161 = vpack.c.b16 %v146, %v145
  %v162 = vpack.c.b16 %v148, %v147
  %v163 = vpack.c.b16 %v150, %v149
  %v164 = vpack.c.b16 %v152, %v151
  %v165 = vpack.c.b16 %v154, %v153
  %v166 = vpack.c.b16 %v156, %v155
  %v167 = vpack.c.b16 %v158, %v157
  %v168 = vpack.c.b16 %v159, %v159
  %vm177 = vcmask 23552
  %v179 = vsel %vm177, %v103, 0
  %v182 = vsel %vm177, %v105, 0
  %v185 = vsel %vm177, %v107, 0
  %v188 = vsel %vm177, %v109, 0
  %v191 = vsel %vm177, %v111, 0
  %v194 = vsel %vm177, %v113, 0
  %v197 = vsel %vm177, %v115, 0
  %v200 = vsel %vm177, %v117, 0
  %vm202 = vcmask 1040384
  %vm203 = vcmask 1041408
  %v204 = vsel %vm202, 4294967295, 65535
  %v205 = vsel %vm203, %v204, 0
  %v207 = vand.u32 %v168, %v205
  %209 = vmatpush.bf16.msra.mxu0 %v167
  %210 = vmatpush.bf16.msra.mxu0 %v166
  %211 = vmatpush.bf16.msra.mxu0 %v165
  %212 = vmatpush.bf16.msra.mxu0 %v164
  %213 = vmatpush.bf16.msra.mxu0 %v163
  %214 = vmatpush.bf16.msra.mxu0 %v162
  %215 = vmatpush.bf16.msra.mxu0 %v161
  %216 = vmatpush.bf16.msra.mxu0 %v160
  %217 = vmatmul.bf16.gmra.mxu0 %v102
  %v218 = vpop.f32.mrf.mxu0
  %v219 = vadd.f32 0.0, %v218
  %v220 = vpop.f32.mrf.mxu0
  %v221 = vadd.f32 0.0, %v220
  %222 = vmatmul.bf16.gmra.mxu0 %v104
  %v223 = vpop.f32.mrf.mxu0
  %v224 = vadd.f32 0.0, %v223
  %v225 = vpop.f32.mrf.mxu0
  %v226 = vadd.f32 0.0, %v225
  %227 = vmatmul.bf16.gmra.mxu0 %v106
  %v228 = vpop.f32.mrf.mxu0
  %v229 = vadd.f32 0.0, %v228
  %v230 = vpop.f32.mrf.mxu0
  %v231 = vadd.f32 0.0, %v230
  %232 = vmatmul.bf16.gmra.mxu0 %v108
  %v233 = vpop.f32.mrf.mxu0
  %v234 = vadd.f32 0.0, %v233
  %v235 = vpop.f32.mrf.mxu0
  %v236 = vadd.f32 0.0, %v235
  %237 = vmatmul.bf16.gmra.mxu0 %v110
  %v238 = vpop.f32.mrf.mxu0
  %v239 = vadd.f32 0.0, %v238
  %v240 = vpop.f32.mrf.mxu0
  %v241 = vadd.f32 0.0, %v240
  %242 = vmatmul.bf16.gmra.mxu0 %v112
  %v243 = vpop.f32.mrf.mxu0
  %v244 = vadd.f32 0.0, %v243
  %v245 = vpop.f32.mrf.mxu0
  %v246 = vadd.f32 0.0, %v245
  %247 = vmatmul.bf16.gmra.mxu0 %v114
  %v248 = vpop.f32.mrf.mxu0
  %v249 = vadd.f32 0.0, %v248
  %v250 = vpop.f32.mrf.mxu0
  %v251 = vadd.f32 0.0, %v250
  %252 = vmatmul.bf16.gmra.mxu0 %v116
  %v253 = vpop.f32.mrf.mxu0
  %v254 = vadd.f32 0.0, %v253
  %v255 = vpop.f32.mrf.mxu0
  %v256 = vadd.f32 0.0, %v255
  %257 = vdwg.mxu0
  %258 = vmatpush.bf16.msra.mxu0 0
  %259 = vmatpush.bf16.msra.mxu0 0
  %260 = vmatpush.bf16.msra.mxu0 0
  %261 = vmatpush.bf16.msra.mxu0 0
  %262 = vmatpush.bf16.msra.mxu0 0
  %263 = vmatpush.bf16.msra.mxu0 0
  %264 = vmatpush.bf16.msra.mxu0 0
  %265 = vmatpush.bf16.msra.mxu0 %v207
  %266 = vmatmul.bf16.gmra.mxu0 %v179
  %v267 = vpop.f32.mrf.mxu0
  %v268 = vadd.f32 %v219, %v267
  %v269 = vpop.f32.mrf.mxu0
  %v270 = vadd.f32 %v221, %v269
  %271 = vmatmul.bf16.gmra.mxu0 %v182
  %v272 = vpop.f32.mrf.mxu0
  %v273 = vadd.f32 %v224, %v272
  %v274 = vpop.f32.mrf.mxu0
  %v275 = vadd.f32 %v226, %v274
  %276 = vmatmul.bf16.gmra.mxu0 %v185
  %v277 = vpop.f32.mrf.mxu0
  %v278 = vadd.f32 %v229, %v277
  %v279 = vpop.f32.mrf.mxu0
  %v280 = vadd.f32 %v231, %v279
  %281 = vmatmul.bf16.gmra.mxu0 %v188
  %v282 = vpop.f32.mrf.mxu0
  %v283 = vadd.f32 %v234, %v282
  %v284 = vpop.f32.mrf.mxu0
  %v285 = vadd.f32 %v236, %v284
  %286 = vmatmul.bf16.gmra.mxu0 %v191
  %v287 = vpop.f32.mrf.mxu0
  %v288 = vadd.f32 %v239, %v287
  %v289 = vpop.f32.mrf.mxu0
  %v290 = vadd.f32 %v241, %v289
  %291 = vmatmul.bf16.gmra.mxu0 %v194
  %v292 = vpop.f32.mrf.mxu0
  %v293 = vadd.f32 %v244, %v292
  %v294 = vpop.f32.mrf.mxu0
  %v295 = vadd.f32 %v246, %v294
  %296 = vmatmul.bf16.gmra.mxu0 %v197
  %v297 = vpop.f32.mrf.mxu0
  %v298 = vadd.f32 %v249, %v297
  %v299 = vpop.f32.mrf.mxu0
  %v300 = vadd.f32 %v251, %v299
  %301 = vmatmul.bf16.gmra.mxu0 %v200
  %v302 = vpop.f32.mrf.mxu0
  %v303 = vadd.f32 %v254, %v302
  %v304 = vpop.f32.mrf.mxu0
  %v305 = vadd.f32 %v256, %v304
  %306 = vdwg.mxu0
  %v307 = vld [vmem:[%s2] sm:$0x1]
  %v309 = vperm.slane %v307, 0
  %v311 = vmul.f32 %v268, %v309
  %v312 = vmul.f32 %v270, %v309
  %v313 = vmul.f32 %v273, %v309
  %v314 = vmul.f32 %v275, %v309
  %v315 = vmul.f32 %v278, %v309
  %v316 = vmul.f32 %v280, %v309
  %v317 = vmul.f32 %v283, %v309
  %v318 = vmul.f32 %v285, %v309
  %v319 = vmul.f32 %v288, %v309
  %v320 = vmul.f32 %v290, %v309
  %v321 = vmul.f32 %v293, %v309
  %v322 = vmul.f32 %v295, %v309
  %v323 = vmul.f32 %v298, %v309
  %v324 = vmul.f32 %v300, %v309
  %v325 = vmul.f32 %v303, %v309
  %v326 = vmul.f32 %v305, %v309
  %v327 = vld [vmem:[%s3] sm:$0x1]
  %v329 = vperm.slane %v327, 0
  %v331 = vadd.f32 %v311, %v329
  %v332 = vadd.f32 %v312, %v329
  %v333 = vadd.f32 %v313, %v329
  %v334 = vadd.f32 %v314, %v329
  %v335 = vadd.f32 %v315, %v329
  %v336 = vadd.f32 %v316, %v329
  %v337 = vadd.f32 %v317, %v329
  %v338 = vadd.f32 %v318, %v329
  %v339 = vadd.f32 %v319, %v329
  %v340 = vadd.f32 %v320, %v329
  %v341 = vadd.f32 %v321, %v329
  %v342 = vadd.f32 %v322, %v329
  %v343 = vadd.f32 %v323, %v329
  %v344 = vadd.f32 %v324, %v329
  %v345 = vadd.f32 %v325, %v329
  %v346 = vadd.f32 %v326, %v329
  %vm347 = vcmp.ge.f32.partialorder %v331, 0.0
  %vm348 = vcmp.ge.f32.partialorder %v332, 0.0
  %vm349 = vcmp.ge.f32.partialorder %v333, 0.0
  %vm350 = vcmp.ge.f32.partialorder %v334, 0.0
  %vm351 = vcmp.ge.f32.partialorder %v335, 0.0
  %vm352 = vcmp.ge.f32.partialorder %v336, 0.0
  %vm353 = vcmp.ge.f32.partialorder %v337, 0.0
  %vm354 = vcmp.ge.f32.partialorder %v338, 0.0
  %vm355 = vcmp.ge.f32.partialorder %v339, 0.0
  %vm356 = vcmp.ge.f32.partialorder %v340, 0.0
  %vm357 = vcmp.ge.f32.partialorder %v341, 0.0
  %vm358 = vcmp.ge.f32.partialorder %v342, 0.0
  %vm359 = vcmp.ge.f32.partialorder %v343, 0.0
  %vm360 = vcmp.ge.f32.partialorder %v344, 0.0
  %vm361 = vcmp.ge.f32.partialorder %v345, 0.0
  %vm362 = vcmp.ge.f32.partialorder %v346, 0.0
  %v363 = vld [vmem:[%s4] sm:$0x1]
  %v365 = vperm.slane %v363, 0
  %v367 = vmul.f32 %v365, %v331
  %v368 = vmul.f32 %v365, %v332
  %v369 = vmul.f32 %v365, %v333
  %v370 = vmul.f32 %v365, %v334
  %v371 = vmul.f32 %v365, %v335
  %v372 = vmul.f32 %v365, %v336
  %v373 = vmul.f32 %v365, %v337
  %v374 = vmul.f32 %v365, %v338
  %v375 = vmul.f32 %v365, %v339
  %v376 = vmul.f32 %v365, %v340
  %v377 = vmul.f32 %v365, %v341
  %v378 = vmul.f32 %v365, %v342
  %v379 = vmul.f32 %v365, %v343
  %v380 = vmul.f32 %v365, %v344
  %v381 = vmul.f32 %v365, %v345
  %v382 = vmul.f32 %v365, %v346
  %v383 = vsel %vm347, %v331, %v367
  %v384 = vsel %vm348, %v332, %v368
  %v385 = vsel %vm349, %v333, %v369
  %v386 = vsel %vm350, %v334, %v370
  %v387 = vsel %vm351, %v335, %v371
  %v388 = vsel %vm352, %v336, %v372
  %v389 = vsel %vm353, %v337, %v373
  %v390 = vsel %vm354, %v338, %v374
  %v391 = vsel %vm355, %v339, %v375
  %v392 = vsel %vm356, %v340, %v376
  %v393 = vsel %vm357, %v341, %v377
  %v394 = vsel %vm358, %v342, %v378
  %v395 = vsel %vm359, %v343, %v379
  %v396 = vsel %vm360, %v344, %v380
  %v397 = vsel %vm361, %v345, %v381
  %v398 = vsel %vm362, %v346, %v382
  %v399 = vpack.c.bf16 %v383, %v383
  %v400 = vpack.c.bf16 %v384, %v384
  %v401 = vpack.c.bf16 %v385, %v385
  %v402 = vpack.c.bf16 %v386, %v386
  %v403 = vpack.c.bf16 %v387, %v387
  %v404 = vpack.c.bf16 %v388, %v388
  %v405 = vpack.c.bf16 %v389, %v389
  %v406 = vpack.c.bf16 %v390, %v390
  %v407 = vpack.c.bf16 %v391, %v391
  %v408 = vpack.c.bf16 %v392, %v392
  %v409 = vpack.c.bf16 %v393, %v393
  %v410 = vpack.c.bf16 %v394, %v394
  %v411 = vpack.c.bf16 %v395, %v395
  %v412 = vpack.c.bf16 %v396, %v396
  %v413 = vpack.c.bf16 %v397, %v397
  %v414 = vpack.c.bf16 %v398, %v398
  %415 = vst [vmem:[%s5] sm:$0xf] %v399
  %416 = vst [vmem:[%s5 + $0x4] sm:$0xf] %v400
  %417 = vst [vmem:[%s5 + $0x8] sm:$0xf] %v401
  %418 = vst [vmem:[%s5 + $0xc] sm:$0xf] %v402
  %419 = vst [vmem:[%s5 + $0x10] sm:$0xf] %v403
  %420 = vst [vmem:[%s5 + $0x14] sm:$0xf] %v404
  %421 = vst [vmem:[%s5 + $0x18] sm:$0xf] %v405
  %422 = vst [vmem:[%s5 + $0x1c] sm:$0xf] %v406
  %423 = vst [vmem:[%s5 + $0x20] sm:$0xf] %v407
  %424 = vst [vmem:[%s5 + $0x24] sm:$0xf] %v408
  %425 = vst [vmem:[%s5 + $0x28] sm:$0xf] %v409
  %426 = vst [vmem:[%s5 + $0x2c] sm:$0xf] %v410
  %427 = vst [vmem:[%s5 + $0x30] sm:$0xf] %v411
  %428 = vst [vmem:[%s5 + $0x34] sm:$0xf] %v412
  %429 = vst [vmem:[%s5 + $0x38] sm:$0xf] %v413
  %430 = vst [vmem:[%s5 + $0x3c] sm:$0xf] %v414
  // Predicated region
  $region22: #{espnet_forward.40} parent=0 // pred_check
    _
  $region23: #{espnet_forward.40} parent=0 // pred_check_branch
    %432 = sbr.rel (0) target = $region25
  $region24: #{espnet_forward.40} parent=0 // pred_region
    _
  $region25: #{espnet_forward.40} parent=0 // pred_fallthru
    _
  // Predicated region
  $region26: #{espnet_forward.40} parent=0 // pred_check
    _
  $region27: #{espnet_forward.40} parent=0 // pred_check_branch
    %434 = sbr.rel (0) target = $region29
  $region28: #{espnet_forward.40} parent=0 // pred_region
    _
  $region29: #{espnet_forward.40} parent=0 // pred_fallthru
    _

// kernel: espnet_forward.33
$region0: #{espnet_forward.33}
  #allocation0 [shape = 'u32[]', space=smem, size = 0x4, offset = 0x4, fixed_abs, tag = 'smem constant byte address 0x4 - core index']
  #allocation1 [shape = 'u32[72,128]{1,0:T(1,128)}', space=vmem, size = 0x9000, scoped, tag = 'internal scratch']
  %s0 = inlined_call_operand.vmem [shape: bf16[32,128], index: 0, kind: input, shape index: {}]
  %s1 = inlined_call_operand.vmem [shape: bf16[128,128], index: 1, kind: input, shape index: {}]
  %s2 = inlined_call_operand.vmem [shape: f32[1,128], index: 2, kind: input, shape index: {}]
  %s3 = inlined_call_operand.vmem [shape: f32[1,128], index: 3, kind: input, shape index: {}]
  %s4 = inlined_call_operand.vmem [shape: f32[1,128], index: 4, kind: input, shape index: {}]
  %s5 = inlined_call_operand.vmem [shape: bf16[32,128], index: 5, kind: output, shape index: {}]
  %s6 = sld [smem:[#allocation0]]
  $region30: #{espnet_forward.33} parent=0
    _
  %s8 = ssub.s32 1, %s6
  %s9 = scalar_select 0, %s8, %s6
  // Predicated region
  $region2: #{espnet_forward.33} parent=0 // pred_check
    _
  $region3: #{espnet_forward.33} parent=0 // pred_check_branch
    %11 = sbr.rel (0) target = $region5
  $region4: #{espnet_forward.33} parent=0 // pred_region
    _
  $region5: #{espnet_forward.33} parent=0 // pred_fallthru
    _
  // Predicated region
  $region6: #{espnet_forward.33} parent=0 // pred_check
    _
  $region7: #{espnet_forward.33} parent=0 // pred_check_branch
    %13 = sbr.rel (0) target = $region9
  $region8: #{espnet_forward.33} parent=0 // pred_region
    _
  $region9: #{espnet_forward.33} parent=0 // pred_fallthru
    _
  // Predicated region
  $region10: #{espnet_forward.33} parent=0 // pred_check
    _
  $region11: #{espnet_forward.33} parent=0 // pred_check_branch
    %15 = sbr.rel (0) target = $region13
  $region12: #{espnet_forward.33} parent=0 // pred_region
    _
  $region13: #{espnet_forward.33} parent=0 // pred_fallthru
    _
  // Predicated region
  $region14: #{espnet_forward.33} parent=0 // pred_check
    _
  $region15: #{espnet_forward.33} parent=0 // pred_check_branch
    %17 = sbr.rel (0) target = $region17
  $region16: #{espnet_forward.33} parent=0 // pred_region
    _
  $region17: #{espnet_forward.33} parent=0 // pred_fallthru
    _
  // Predicated region
  $region18: #{espnet_forward.33} parent=0 // pred_check
    _
  $region19: #{espnet_forward.33} parent=0 // pred_check_branch
    %19 = sbr.rel (0) target = $region21
  $region20: #{espnet_forward.33} parent=0 // pred_region
    _
  $region21: #{espnet_forward.33} parent=0 // pred_fallthru
    _
  %v20 = vld [vmem:[%s0] sm:$0xf]
  %v21 = vld [vmem:[%s0 + $0x4] sm:$0xf]
  %v22 = vld [vmem:[%s0 + $0x8] sm:$0xf]
  %v23 = vld [vmem:[%s0 + $0xc] sm:$0xf]
  %v24 = vld [vmem:[%s1] sm:$0xf]
  %v25 = vld [vmem:[%s1 + $0x4] sm:$0xf]
  %v26 = vld [vmem:[%s1 + $0x8] sm:$0xf]
  %v27 = vld [vmem:[%s1 + $0xc] sm:$0xf]
  %v28 = vld [vmem:[%s1 + $0x10] sm:$0xf]
  %v29 = vld [vmem:[%s1 + $0x14] sm:$0xf]
  %v30 = vld [vmem:[%s1 + $0x18] sm:$0xf]
  %v31 = vld [vmem:[%s1 + $0x1c] sm:$0xf]
  %v32 = vld [vmem:[%s1 + $0x20] sm:$0xf]
  %v33 = vld [vmem:[%s1 + $0x24] sm:$0xf]
  %v34 = vld [vmem:[%s1 + $0x28] sm:$0xf]
  %v35 = vld [vmem:[%s1 + $0x2c] sm:$0xf]
  %v36 = vld [vmem:[%s1 + $0x30] sm:$0xf]
  %v37 = vld [vmem:[%s1 + $0x34] sm:$0xf]
  %v38 = vld [vmem:[%s1 + $0x38] sm:$0xf]
  %v39 = vld [vmem:[%s1 + $0x3c] sm:$0xf]
  %v44 = vunpack.c.l.b16 %v20
  %v45 = vunpack.c.l.b16 %v21
  %v46 = vunpack.c.l.b16 %v22
  %v47 = vunpack.c.l.b16 %v23
  %v48 = vpack.c.b16 %v45, %v44
  %v49 = vpack.c.b16 %v47, %v46
  %v68 = vunpack.c.l.b16 %v24
  %v69 = vunpack.c.l.b16 %v25
  %v70 = vunpack.c.l.b16 %v26
  %v71 = vunpack.c.l.b16 %v27
  %v72 = vunpack.c.l.b16 %v28
  %v73 = vunpack.c.l.b16 %v29
  %v74 = vunpack.c.l.b16 %v30
  %v75 = vunpack.c.l.b16 %v31
  %v76 = vunpack.c.l.b16 %v32
  %v77 = vunpack.c.l.b16 %v33
  %v78 = vunpack.c.l.b16 %v34
  %v79 = vunpack.c.l.b16 %v35
  %v80 = vunpack.c.l.b16 %v36
  %v81 = vunpack.c.l.b16 %v37
  %v82 = vunpack.c.l.b16 %v38
  %v83 = vunpack.c.l.b16 %v39
  %v84 = vpack.c.b16 %v69, %v68
  %v85 = vpack.c.b16 %v71, %v70
  %v86 = vpack.c.b16 %v73, %v72
  %v87 = vpack.c.b16 %v75, %v74
  %v88 = vpack.c.b16 %v77, %v76
  %v89 = vpack.c.b16 %v79, %v78
  %v90 = vpack.c.b16 %v81, %v80
  %v91 = vpack.c.b16 %v83, %v82
  %100 = vmatpush.bf16.msra.mxu0 %v91
  %101 = vmatpush.bf16.msra.mxu0 %v90
  %102 = vmatpush.bf16.msra.mxu0 %v89
  %103 = vmatpush.bf16.msra.mxu0 %v88
  %104 = vmatpush.bf16.msra.mxu0 %v87
  %105 = vmatpush.bf16.msra.mxu0 %v86
  %106 = vmatpush.bf16.msra.mxu0 %v85
  %107 = vmatpush.bf16.msra.mxu0 %v84
  %108 = vmatmul.bf16.gmra.mxu0 %v48
  %v109 = vpop.f32.mrf.mxu0
  %v110 = vadd.f32 0.0, %v109
  %v111 = vpop.f32.mrf.mxu0
  %v112 = vadd.f32 0.0, %v111
  %113 = vmatmul.bf16.gmra.mxu0 %v49
  %v114 = vpop.f32.mrf.mxu0
  %v115 = vadd.f32 0.0, %v114
  %v116 = vpop.f32.mrf.mxu0
  %v117 = vadd.f32 0.0, %v116
  %118 = vdwg.mxu0
  %v119 = vld [vmem:[%s2] sm:$0x1]
  %v121 = vperm.slane %v119, 0
  %v123 = vmul.f32 %v110, %v121
  %v124 = vmul.f32 %v112, %v121
  %v125 = vmul.f32 %v115, %v121
  %v126 = vmul.f32 %v117, %v121
  %v127 = vld [vmem:[%s3] sm:$0x1]
  %v129 = vperm.slane %v127, 0
  %v131 = vadd.f32 %v123, %v129
  %v132 = vadd.f32 %v124, %v129
  %v133 = vadd.f32 %v125, %v129
  %v134 = vadd.f32 %v126, %v129
  %vm135 = vcmp.ge.f32.partialorder %v131, 0.0
  %vm136 = vcmp.ge.f32.partialorder %v132, 0.0
  %vm137 = vcmp.ge.f32.partialorder %v133, 0.0
  %vm138 = vcmp.ge.f32.partialorder %v134, 0.0
  %v139 = vld [vmem:[%s4] sm:$0x1]
  %v141 = vperm.slane %v139, 0
  %v143 = vmul.f32 %v141, %v131
  %v144 = vmul.f32 %v141, %v132
  %v145 = vmul.f32 %v141, %v133
  %v146 = vmul.f32 %v141, %v134
  %v147 = vsel %vm135, %v131, %v143
  %v148 = vsel %vm136, %v132, %v144
  %v149 = vsel %vm137, %v133, %v145
  %v150 = vsel %vm138, %v134, %v146
  %v151 = vpack.c.bf16 %v147, %v147
  %v152 = vpack.c.bf16 %v148, %v148
  %v153 = vpack.c.bf16 %v149, %v149
  %v154 = vpack.c.bf16 %v150, %v150
  %155 = vst [vmem:[%s5] sm:$0xf] %v151
  %156 = vst [vmem:[%s5 + $0x4] sm:$0xf] %v152
  %157 = vst [vmem:[%s5 + $0x8] sm:$0xf] %v153
  %158 = vst [vmem:[%s5 + $0xc] sm:$0xf] %v154
  // Predicated region
  $region22: #{espnet_forward.33} parent=0 // pred_check
    _
  $region23: #{espnet_forward.33} parent=0 // pred_check_branch
    %160 = sbr.rel (0) target = $region25
  $region24: #{espnet_forward.33} parent=0 // pred_region
    _
  $region25: #{espnet_forward.33} parent=0 // pred_fallthru
    _
  // Predicated region
  $region26: #{espnet_forward.33} parent=0 // pred_check
    _
  $region27: #{espnet_forward.33} parent=0 // pred_check_branch
    %162 = sbr.rel (0) target = $region29
  $region28: #{espnet_forward.33} parent=0 // pred_region
    _
  $region29: #{espnet_forward.33} parent=0 // pred_fallthru
    _

// kernel: espnet_forward.31
$region0: #{espnet_forward.31}
  #allocation0 [shape = 'u32[]', space=smem, size = 0x4, offset = 0x4, fixed_abs, tag = 'smem constant byte address 0x4 - core index']
  #allocation1 [shape = 'u32[72,128]{1,0:T(1,128)}', space=vmem, size = 0x9000, scoped, tag = 'internal scratch']
  %s0 = inlined_call_operand.vmem [shape: bf16[32,1179], index: 0, kind: input, shape index: {}]
  %s1 = inlined_call_operand.vmem [shape: bf16[1179,128], index: 1, kind: input, shape index: {}]
  %s2 = inlined_call_operand.vmem [shape: f32[1,128], index: 2, kind: input, shape index: {}]
  %s3 = inlined_call_operand.vmem [shape: f32[1,128], index: 3, kind: input, shape index: {}]
  %s4 = inlined_call_operand.vmem [shape: f32[1,128], index: 4, kind: input, shape index: {}]
  %s5 = inlined_call_operand.vmem [shape: bf16[32,128], index: 5, kind: output, shape index: {}]
  %s6 = sld [smem:[#allocation0]]
  $region30: #{espnet_forward.31} parent=0
    _
  %s8 = ssub.s32 1, %s6
  %s9 = scalar_select 0, %s8, %s6
  // Predicated region
  $region2: #{espnet_forward.31} parent=0 // pred_check
    _
  $region3: #{espnet_forward.31} parent=0 // pred_check_branch
    %11 = sbr.rel (0) target = $region5
  $region4: #{espnet_forward.31} parent=0 // pred_region
    _
  $region5: #{espnet_forward.31} parent=0 // pred_fallthru
    _
  // Predicated region
  $region6: #{espnet_forward.31} parent=0 // pred_check
    _
  $region7: #{espnet_forward.31} parent=0 // pred_check_branch
    %13 = sbr.rel (0) target = $region9
  $region8: #{espnet_forward.31} parent=0 // pred_region
    _
  $region9: #{espnet_forward.31} parent=0 // pred_fallthru
    _
  // Predicated region
  $region10: #{espnet_forward.31} parent=0 // pred_check
    _
  $region11: #{espnet_forward.31} parent=0 // pred_check_branch
    %15 = sbr.rel (0) target = $region13
  $region12: #{espnet_forward.31} parent=0 // pred_region
    _
  $region13: #{espnet_forward.31} parent=0 // pred_fallthru
    _
  // Predicated region
  $region14: #{espnet_forward.31} parent=0 // pred_check
    _
  $region15: #{espnet_forward.31} parent=0 // pred_check_branch
    %17 = sbr.rel (0) target = $region17
  $region16: #{espnet_forward.31} parent=0 // pred_region
    _
  $region17: #{espnet_forward.31} parent=0 // pred_fallthru
    _
  // Predicated region
  $region18: #{espnet_forward.31} parent=0 // pred_check
    _
  $region19: #{espnet_forward.31} parent=0 // pred_check_branch
    %19 = sbr.rel (0) target = $region21
  $region20: #{espnet_forward.31} parent=0 // pred_region
    _
  $region21: #{espnet_forward.31} parent=0 // pred_fallthru
    _
  %v21 = vld [vmem:[%s0] sm:$0xff]
  %v22 = vld [vmem:[%s0 + $0x8] sm:$0xff]
  %v23 = vld [vmem:[%s0 + $0x10] sm:$0xff]
  %v24 = vld [vmem:[%s0 + $0x18] sm:$0xff]
  %v25 = vld [vmem:[%s0 + $0x20] sm:$0xff]
  %v26 = vld [vmem:[%s0 + $0x28] sm:$0xff]
  %v27 = vld [vmem:[%s0 + $0x30] sm:$0xff]
  %v28 = vld [vmem:[%s0 + $0x38] sm:$0xff]
  %v29 = vld [vmem:[%s0 + $0x40] sm:$0xff]
  %v30 = vld [vmem:[%s0 + $0x48] sm:$0xff]
  %v31 = vld [vmem:[%s0 + $0x50] sm:$0xff]
  %v32 = vld [vmem:[%s0 + $0x58] sm:$0xff]
  %v33 = vld [vmem:[%s0 + $0x60] sm:$0xff]
  %v34 = vld [vmem:[%s0 + $0x68] sm:$0xff]
  %v35 = vld [vmem:[%s0 + $0x70] sm:$0xff]
  %v36 = vld [vmem:[%s0 + $0x78] sm:$0xff]
  %v37 = vld [vmem:[%s0 + $0x80] sm:$0xff]
  %v38 = vld [vmem:[%s0 + $0x88] sm:$0xff]
  %v39 = vld [vmem:[%s0 + $0x90] sm:$0xff]
  %v40 = vld [vmem:[%s0 + $0x98] sm:$0xff]
  %v41 = vld [vmem:[%s1] sm:$0xf]
  %v42 = vld [vmem:[%s1 + $0x4] sm:$0xf]
  %v43 = vld [vmem:[%s1 + $0x8] sm:$0xf]
  %v44 = vld [vmem:[%s1 + $0xc] sm:$0xf]
  %v45 = vld [vmem:[%s1 + $0x10] sm:$0xf]
  %v46 = vld [vmem:[%s1 + $0x14] sm:$0xf]
  %v47 = vld [vmem:[%s1 + $0x18] sm:$0xf]
  %v48 = vld [vmem:[%s1 + $0x1c] sm:$0xf]
  %v49 = vld [vmem:[%s1 + $0x20] sm:$0xf]
  %v50 = vld [vmem:[%s1 + $0x24] sm:$0xf]
  %v51 = vld [vmem:[%s1 + $0x28] sm:$0xf]
  %v52 = vld [vmem:[%s1 + $0x2c] sm:$0xf]
  %v53 = vld [vmem:[%s1 + $0x30] sm:$0xf]
  %v54 = vld [vmem:[%s1 + $0x34] sm:$0xf]
  %v55 = vld [vmem:[%s1 + $0x38] sm:$0xf]
  %v56 = vld [vmem:[%s1 + $0x3c] sm:$0xf]
  %v57 = vld [vmem:[%s1 + $0x40] sm:$0xf]
  %v58 = vld [vmem:[%s1 + $0x44] sm:$0xf]
  %v59 = vld [vmem:[%s1 + $0x48] sm:$0xf]
  %v60 = vld [vmem:[%s1 + $0x4c] sm:$0xf]
  %v61 = vld [vmem:[%s1 + $0x50] sm:$0xf]
  %v62 = vld [vmem:[%s1 + $0x54] sm:$0xf]
  %v63 = vld [vmem:[%s1 + $0x58] sm:$0xf]
  %v64 = vld [vmem:[%s1 + $0x5c] sm:$0xf]
  %v65 = vld [vmem:[%s1 + $0x60] sm:$0xf]
  %v66 = vld [vmem:[%s1 + $0x64] sm:$0xf]
  %v67 = vld [vmem:[%s1 + $0x68] sm:$0xf]
  %v68 = vld [vmem:[%s1 + $0x6c] sm:$0xf]
  %v69 = vld [vmem:[%s1 + $0x70] sm:$0xf]
  %v70 = vld [vmem:[%s1 + $0x74] sm:$0xf]
  %v71 = vld [vmem:[%s1 + $0x78] sm:$0xf]
  %v72 = vld [vmem:[%s1 + $0x7c] sm:$0xf]
  %v73 = vld [vmem:[%s1 + $0x80] sm:$0xf]
  %v74 = vld [vmem:[%s1 + $0x84] sm:$0xf]
  %v75 = vld [vmem:[%s1 + $0x88] sm:$0xf]
  %v76 = vld [vmem:[%s1 + $0x8c] sm:$0xf]
  %v77 = vld [vmem:[%s1 + $0x90] sm:$0xf]
  %v78 = vld [vmem:[%s1 + $0x94] sm:$0xf]
  %v79 = vld [vmem:[%s1 + $0x98] sm:$0xf]
  %v80 = vld [vmem:[%s1 + $0x9c] sm:$0xf]
  %v81 = vld [vmem:[%s1 + $0xa0] sm:$0xf]
  %v82 = vld [vmem:[%s1 + $0xa4] sm:$0xf]
  %v83 = vld [vmem:[%s1 + $0xa8] sm:$0xf]
  %v84 = vld [vmem:[%s1 + $0xac] sm:$0xf]
  %v85 = vld [vmem:[%s1 + $0xb0] sm:$0xf]
  %v86 = vld [vmem:[%s1 + $0xb4] sm:$0xf]
  %v87 = vld [vmem:[%s1 + $0xb8] sm:$0xf]
  %v88 = vld [vmem:[%s1 + $0xbc] sm:$0xf]
  %v89 = vld [vmem:[%s1 + $0xc0] sm:$0xf]
  %v90 = vld [vmem:[%s1 + $0xc4] sm:$0xf]
  %v91 = vld [vmem:[%s1 + $0xc8] sm:$0xf]
  %v92 = vld [vmem:[%s1 + $0xcc] sm:$0xf]
  %v93 = vld [vmem:[%s1 + $0xd0] sm:$0xf]
  %v94 = vld [vmem:[%s1 + $0xd4] sm:$0xf]
  %v95 = vld [vmem:[%s1 + $0xd8] sm:$0xf]
  %v96 = vld [vmem:[%s1 + $0xdc] sm:$0xf]
  %v97 = vld [vmem:[%s1 + $0xe0] sm:$0xf]
  %v98 = vld [vmem:[%s1 + $0xe4] sm:$0xf]
  %v99 = vld [vmem:[%s1 + $0xe8] sm:$0xf]
  %v100 = vld [vmem:[%s1 + $0xec] sm:$0xf]
  %v101 = vld [vmem:[%s1 + $0xf0] sm:$0xf]
  %v102 = vld [vmem:[%s1 + $0xf4] sm:$0xf]
  %v103 = vld [vmem:[%s1 + $0xf8] sm:$0xf]
  %v104 = vld [vmem:[%s1 + $0xfc] sm:$0xf]
  %v105 = vld [vmem:[%s1 + $0x100] sm:$0xf]
  %v106 = vld [vmem:[%s1 + $0x104] sm:$0xf]
  %v107 = vld [vmem:[%s1 + $0x108] sm:$0xf]
  %v108 = vld [vmem:[%s1 + $0x10c] sm:$0xf]
  %v109 = vld [vmem:[%s1 + $0x110] sm:$0xf]
  %v110 = vld [vmem:[%s1 + $0x114] sm:$0xf]
  %v111 = vld [vmem:[%s1 + $0x118] sm:$0xf]
  %v112 = vld [vmem:[%s1 + $0x11c] sm:$0xf]
  %v113 = vld [vmem:[%s1 + $0x120] sm:$0xf]
  %v114 = vld [vmem:[%s1 + $0x124] sm:$0xf]
  %v115 = vld [vmem:[%s1 + $0x128] sm:$0xf]
  %v116 = vld [vmem:[%s1 + $0x12c] sm:$0xf]
  %v117 = vld [vmem:[%s1 + $0x130] sm:$0xf]
  %v118 = vld [vmem:[%s1 + $0x134] sm:$0xf]
  %v119 = vld [vmem:[%s1 + $0x138] sm:$0xf]
  %v120 = vld [vmem:[%s1 + $0x13c] sm:$0xf]
  %v121 = vld [vmem:[%s1 + $0x140] sm:$0xf]
  %v122 = vld [vmem:[%s1 + $0x144] sm:$0xf]
  %v123 = vld [vmem:[%s1 + $0x148] sm:$0xf]
  %v124 = vld [vmem:[%s1 + $0x14c] sm:$0xf]
  %v125 = vld [vmem:[%s1 + $0x150] sm:$0xf]
  %v126 = vld [vmem:[%s1 + $0x154] sm:$0xf]
  %v127 = vld [vmem:[%s1 + $0x158] sm:$0xf]
  %v128 = vld [vmem:[%s1 + $0x15c] sm:$0xf]
  %v129 = vld [vmem:[%s1 + $0x160] sm:$0xf]
  %v130 = vld [vmem:[%s1 + $0x164] sm:$0xf]
  %v131 = vld [vmem:[%s1 + $0x168] sm:$0xf]
  %v132 = vld [vmem:[%s1 + $0x16c] sm:$0xf]
  %v133 = vld [vmem:[%s1 + $0x170] sm:$0xf]
  %v134 = vld [vmem:[%s1 + $0x174] sm:$0xf]
  %v135 = vld [vmem:[%s1 + $0x178] sm:$0xf]
  %v136 = vld [vmem:[%s1 + $0x17c] sm:$0xf]
  %v137 = vld [vmem:[%s1 + $0x180] sm:$0xf]
  %v138 = vld [vmem:[%s1 + $0x184] sm:$0xf]
  %v139 = vld [vmem:[%s1 + $0x188] sm:$0xf]
  %v140 = vld [vmem:[%s1 + $0x18c] sm:$0xf]
  %v141 = vld [vmem:[%s1 + $0x190] sm:$0xf]
  %v142 = vld [vmem:[%s1 + $0x194] sm:$0xf]
  %v143 = vld [vmem:[%s1 + $0x198] sm:$0xf]
  %v144 = vld [vmem:[%s1 + $0x19c] sm:$0xf]
  %v145 = vld [vmem:[%s1 + $0x1a0] sm:$0xf]
  %v146 = vld [vmem:[%s1 + $0x1a4] sm:$0xf]
  %v147 = vld [vmem:[%s1 + $0x1a8] sm:$0xf]
  %v148 = vld [vmem:[%s1 + $0x1ac] sm:$0xf]
  %v149 = vld [vmem:[%s1 + $0x1b0] sm:$0xf]
  %v150 = vld [vmem:[%s1 + $0x1b4] sm:$0xf]
  %v151 = vld [vmem:[%s1 + $0x1b8] sm:$0xf]
  %v152 = vld [vmem:[%s1 + $0x1bc] sm:$0xf]
  %v153 = vld [vmem:[%s1 + $0x1c0] sm:$0xf]
  %v154 = vld [vmem:[%s1 + $0x1c4] sm:$0xf]
  %v155 = vld [vmem:[%s1 + $0x1c8] sm:$0xf]
  %v156 = vld [vmem:[%s1 + $0x1cc] sm:$0xf]
  %v157 = vld [vmem:[%s1 + $0x1d0] sm:$0xf]
  %v158 = vld [vmem:[%s1 + $0x1d4] sm:$0xf]
  %v159 = vld [vmem:[%s1 + $0x1d8] sm:$0xf]
  %v160 = vld [vmem:[%s1 + $0x1dc] sm:$0xf]
  %v161 = vld [vmem:[%s1 + $0x1e0] sm:$0xf]
  %v162 = vld [vmem:[%s1 + $0x1e4] sm:$0xf]
  %v163 = vld [vmem:[%s1 + $0x1e8] sm:$0xf]
  %v164 = vld [vmem:[%s1 + $0x1ec] sm:$0xf]
  %v165 = vld [vmem:[%s1 + $0x1f0] sm:$0xf]
  %v166 = vld [vmem:[%s1 + $0x1f4] sm:$0xf]
  %v167 = vld [vmem:[%s1 + $0x1f8] sm:$0xf]
  %v168 = vld [vmem:[%s1 + $0x1fc] sm:$0xf]
  %v169 = vld [vmem:[%s1 + $0x200] sm:$0xf]
  %v170 = vld [vmem:[%s1 + $0x204] sm:$0xf]
  %v171 = vld [vmem:[%s1 + $0x208] sm:$0xf]
  %v172 = vld [vmem:[%s1 + $0x20c] sm:$0xf]
  %v173 = vld [vmem:[%s1 + $0x210] sm:$0xf]
  %v174 = vld [vmem:[%s1 + $0x214] sm:$0xf]
  %v175 = vld [vmem:[%s1 + $0x218] sm:$0xf]
  %v176 = vld [vmem:[%s1 + $0x21c] sm:$0xf]
  %v177 = vld [vmem:[%s1 + $0x220] sm:$0xf]
  %v178 = vld [vmem:[%s1 + $0x224] sm:$0xf]
  %v179 = vld [vmem:[%s1 + $0x228] sm:$0xf]
  %v180 = vld [vmem:[%s1 + $0x22c] sm:$0xf]
  %v181 = vld [vmem:[%s1 + $0x230] sm:$0xf]
  %v182 = vld [vmem:[%s1 + $0x234] sm:$0xf]
  %v183 = vld [vmem:[%s1 + $0x238] sm:$0xf]
  %v184 = vld [vmem:[%s1 + $0x23c] sm:$0xf]
  %v185 = vld [vmem:[%s1 + $0x240] sm:$0xf]
  %v186 = vld [vmem:[%s1 + $0x244] sm:$0xf]
  %v187 = vld [vmem:[%s1 + $0x248] sm:$0xf]
  %v188 = vld [vmem:[%s1 + $0x24c] sm:$0x3]
  %v209 = vunpack.c.l.b16 %v21
  %v210 = vunpack.c.h.b16 %v21
  %v211 = vunpack.c.l.b16 %v22
  %v212 = vunpack.c.h.b16 %v22
  %v213 = vunpack.c.l.b16 %v23
  %v214 = vunpack.c.h.b16 %v23
  %v215 = vunpack.c.l.b16 %v24
  %v216 = vunpack.c.h.b16 %v24
  %v217 = vunpack.c.l.b16 %v25
  %v218 = vunpack.c.h.b16 %v25
  %v219 = vunpack.c.l.b16 %v26
  %v220 = vunpack.c.h.b16 %v26
  %v221 = vunpack.c.l.b16 %v27
  %v222 = vunpack.c.h.b16 %v27
  %v223 = vunpack.c.l.b16 %v28
  %v224 = vunpack.c.h.b16 %v28
  %v225 = vunpack.c.l.b16 %v29
  %v226 = vunpack.c.h.b16 %v29
  %v227 = vunpack.c.l.b16 %v30
  %v228 = vunpack.c.h.b16 %v30
  %v229 = vunpack.c.l.b16 %v31
  %v230 = vunpack.c.h.b16 %v31
  %v231 = vunpack.c.l.b16 %v32
  %v232 = vunpack.c.h.b16 %v32
  %v233 = vunpack.c.l.b16 %v33
  %v234 = vunpack.c.h.b16 %v33
  %v235 = vunpack.c.l.b16 %v34
  %v236 = vunpack.c.h.b16 %v34
  %v237 = vunpack.c.l.b16 %v35
  %v238 = vunpack.c.h.b16 %v35
  %v239 = vunpack.c.l.b16 %v36
  %v240 = vunpack.c.h.b16 %v36
  %v241 = vunpack.c.l.b16 %v37
  %v242 = vunpack.c.h.b16 %v37
  %v243 = vunpack.c.l.b16 %v38
  %v244 = vunpack.c.h.b16 %v38
  %v245 = vunpack.c.l.b16 %v39
  %v246 = vunpack.c.h.b16 %v39
  %v247 = vunpack.c.l.b16 %v40
  %v248 = vunpack.c.h.b16 %v40
  %v249 = vpack.c.b16 %v219, %v209
  %v250 = vpack.c.b16 %v220, %v210
  %v251 = vpack.c.b16 %v221, %v211
  %v252 = vpack.c.b16 %v222, %v212
  %v253 = vpack.c.b16 %v223, %v213
  %v254 = vpack.c.b16 %v224, %v214
  %v255 = vpack.c.b16 %v225, %v215
  %v256 = vpack.c.b16 %v226, %v216
  %v257 = vpack.c.b16 %v227, %v217
  %v258 = vpack.c.b16 %v228, %v218
  %v259 = vpack.c.b16 %v239, %v229
  %v260 = vpack.c.b16 %v240, %v230
  %v261 = vpack.c.b16 %v241, %v231
  %v262 = vpack.c.b16 %v242, %v232
  %v263 = vpack.c.b16 %v243, %v233
  %v264 = vpack.c.b16 %v244, %v234
  %v265 = vpack.c.b16 %v245, %v235
  %v266 = vpack.c.b16 %v246, %v236
  %v267 = vpack.c.b16 %v247, %v237
  %v268 = vpack.c.b16 %v248, %v238
  %v435 = vunpack.c.l.b16 %v41
  %v436 = vunpack.c.l.b16 %v42
  %v437 = vunpack.c.l.b16 %v43
  %v438 = vunpack.c.l.b16 %v44
  %v439 = vunpack.c.l.b16 %v45
  %v440 = vunpack.c.l.b16 %v46
  %v441 = vunpack.c.l.b16 %v47
  %v442 = vunpack.c.l.b16 %v48
  %v443 = vunpack.c.l.b16 %v49
  %v444 = vunpack.c.l.b16 %v50
  %v445 = vunpack.c.l.b16 %v51
  %v446 = vunpack.c.l.b16 %v52
  %v447 = vunpack.c.l.b16 %v53
  %v448 = vunpack.c.l.b16 %v54
  %v449 = vunpack.c.l.b16 %v55
  %v450 = vunpack.c.l.b16 %v56
  %v451 = vunpack.c.l.b16 %v57
  %v452 = vunpack.c.l.b16 %v58
  %v453 = vunpack.c.l.b16 %v59
  %v454 = vunpack.c.l.b16 %v60
  %v455 = vunpack.c.l.b16 %v61
  %v456 = vunpack.c.l.b16 %v62
  %v457 = vunpack.c.l.b16 %v63
  %v458 = vunpack.c.l.b16 %v64
  %v459 = vunpack.c.l.b16 %v65
  %v460 = vunpack.c.l.b16 %v66
  %v461 = vunpack.c.l.b16 %v67
  %v462 = vunpack.c.l.b16 %v68
  %v463 = vunpack.c.l.b16 %v69
  %v464 = vunpack.c.l.b16 %v70
  %v465 = vunpack.c.l.b16 %v71
  %v466 = vunpack.c.l.b16 %v72
  %v467 = vunpack.c.l.b16 %v73
  %v468 = vunpack.c.l.b16 %v74
  %v469 = vunpack.c.l.b16 %v75
  %v470 = vunpack.c.l.b16 %v76
  %v471 = vunpack.c.l.b16 %v77
  %v472 = vunpack.c.l.b16 %v78
  %v473 = vunpack.c.l.b16 %v79
  %v474 = vunpack.c.l.b16 %v80
  %v475 = vunpack.c.l.b16 %v81
  %v476 = vunpack.c.l.b16 %v82
  %v477 = vunpack.c.l.b16 %v83
  %v478 = vunpack.c.l.b16 %v84
  %v479 = vunpack.c.l.b16 %v85
  %v480 = vunpack.c.l.b16 %v86
  %v481 = vunpack.c.l.b16 %v87
  %v482 = vunpack.c.l.b16 %v88
  %v483 = vunpack.c.l.b16 %v89
  %v484 = vunpack.c.l.b16 %v90
  %v485 = vunpack.c.l.b16 %v91
  %v486 = vunpack.c.l.b16 %v92
  %v487 = vunpack.c.l.b16 %v93
  %v488 = vunpack.c.l.b16 %v94
  %v489 = vunpack.c.l.b16 %v95
  %v490 = vunpack.c.l.b16 %v96
  %v491 = vunpack.c.l.b16 %v97
  %v492 = vunpack.c.l.b16 %v98
  %v493 = vunpack.c.l.b16 %v99
  %v494 = vunpack.c.l.b16 %v100
  %v495 = vunpack.c.l.b16 %v101
  %v496 = vunpack.c.l.b16 %v102
  %v497 = vunpack.c.l.b16 %v103
  %v498 = vunpack.c.l.b16 %v104
  %v499 = vunpack.c.l.b16 %v105
  %v500 = vunpack.c.l.b16 %v106
  %v501 = vunpack.c.l.b16 %v107
  %v502 = vunpack.c.l.b16 %v108
  %v503 = vunpack.c.l.b16 %v109
  %v504 = vunpack.c.l.b16 %v110
  %v505 = vunpack.c.l.b16 %v111
  %v506 = vunpack.c.l.b16 %v112
  %v507 = vunpack.c.l.b16 %v113
  %v508 = vunpack.c.l.b16 %v114
  %v509 = vunpack.c.l.b16 %v115
  %v510 = vunpack.c.l.b16 %v116
  %v511 = vunpack.c.l.b16 %v117
  %v512 = vunpack.c.l.b16 %v118
  %v513 = vunpack.c.l.b16 %v119
  %v514 = vunpack.c.l.b16 %v120
  %v515 = vunpack.c.l.b16 %v121
  %v516 = vunpack.c.l.b16 %v122
  %v517 = vunpack.c.l.b16 %v123
  %v518 = vunpack.c.l.b16 %v124
  %v519 = vunpack.c.l.b16 %v125
  %v520 = vunpack.c.l.b16 %v126
  %v521 = vunpack.c.l.b16 %v127
  %v522 = vunpack.c.l.b16 %v128
  %v523 = vunpack.c.l.b16 %v129
  %v524 = vunpack.c.l.b16 %v130
  %v525 = vunpack.c.l.b16 %v131
  %v526 = vunpack.c.l.b16 %v132
  %v527 = vunpack.c.l.b16 %v133
  %v528 = vunpack.c.l.b16 %v134
  %v529 = vunpack.c.l.b16 %v135
  %v530 = vunpack.c.l.b16 %v136
  %v531 = vunpack.c.l.b16 %v137
  %v532 = vunpack.c.l.b16 %v138
  %v533 = vunpack.c.l.b16 %v139
  %v534 = vunpack.c.l.b16 %v140
  %v535 = vunpack.c.l.b16 %v141
  %v536 = vunpack.c.l.b16 %v142
  %v537 = vunpack.c.l.b16 %v143
  %v538 = vunpack.c.l.b16 %v144
  %v539 = vunpack.c.l.b16 %v145
  %v540 = vunpack.c.l.b16 %v146
  %v541 = vunpack.c.l.b16 %v147
  %v542 = vunpack.c.l.b16 %v148
  %v543 = vunpack.c.l.b16 %v149
  %v544 = vunpack.c.l.b16 %v150
  %v545 = vunpack.c.l.b16 %v151
  %v546 = vunpack.c.l.b16 %v152
  %v547 = vunpack.c.l.b16 %v153
  %v548 = vunpack.c.l.b16 %v154
  %v549 = vunpack.c.l.b16 %v155
  %v550 = vunpack.c.l.b16 %v156
  %v551 = vunpack.c.l.b16 %v157
  %v552 = vunpack.c.l.b16 %v158
  %v553 = vunpack.c.l.b16 %v159
  %v554 = vunpack.c.l.b16 %v160
  %v555 = vunpack.c.l.b16 %v161
  %v556 = vunpack.c.l.b16 %v162
  %v557 = vunpack.c.l.b16 %v163
  %v558 = vunpack.c.l.b16 %v164
  %v559 = vunpack.c.l.b16 %v165
  %v560 = vunpack.c.l.b16 %v166
  %v561 = vunpack.c.l.b16 %v167
  %v562 = vunpack.c.l.b16 %v168
  %v563 = vunpack.c.l.b16 %v169
  %v564 = vunpack.c.l.b16 %v170
  %v565 = vunpack.c.l.b16 %v171
  %v566 = vunpack.c.l.b16 %v172
  %v567 = vunpack.c.l.b16 %v173
  %v568 = vunpack.c.l.b16 %v174
  %v569 = vunpack.c.l.b16 %v175
  %v570 = vunpack.c.l.b16 %v176
  %v571 = vunpack.c.l.b16 %v177
  %v572 = vunpack.c.l.b16 %v178
  %v573 = vunpack.c.l.b16 %v179
  %v574 = vunpack.c.l.b16 %v180
  %v575 = vunpack.c.l.b16 %v181
  %v576 = vunpack.c.l.b16 %v182
  %v577 = vunpack.c.l.b16 %v183
  %v578 = vunpack.c.l.b16 %v184
  %v579 = vunpack.c.l.b16 %v185
  %v580 = vunpack.c.l.b16 %v186
  %v581 = vunpack.c.l.b16 %v187
  %v582 = vunpack.c.l.b16 %v188
  %v583 = vpack.c.b16 %v436, %v435
  %v584 = vpack.c.b16 %v438, %v437
  %v585 = vpack.c.b16 %v440, %v439
  %v586 = vpack.c.b16 %v442, %v441
  %v587 = vpack.c.b16 %v444, %v443
  %v588 = vpack.c.b16 %v446, %v445
  %v589 = vpack.c.b16 %v448, %v447
  %v590 = vpack.c.b16 %v450, %v449
  %v591 = vpack.c.b16 %v452, %v451
  %v592 = vpack.c.b16 %v454, %v453
  %v593 = vpack.c.b16 %v456, %v455
  %v594 = vpack.c.b16 %v458, %v457
  %v595 = vpack.c.b16 %v460, %v459
  %v596 = vpack.c.b16 %v462, %v461
  %v597 = vpack.c.b16 %v464, %v463
  %v598 = vpack.c.b16 %v466, %v465
  %v599 = vpack.c.b16 %v468, %v467
  %v600 = vpack.c.b16 %v470, %v469
  %v601 = vpack.c.b16 %v472, %v471
  %v602 = vpack.c.b16 %v474, %v473
  %v603 = vpack.c.b16 %v476, %v475
  %v604 = vpack.c.b16 %v478, %v477
  %v605 = vpack.c.b16 %v480, %v479
  %v606 = vpack.c.b16 %v482, %v481
  %v607 = vpack.c.b16 %v484, %v483
  %v608 = vpack.c.b16 %v486, %v485
  %v609 = vpack.c.b16 %v488, %v487
  %v610 = vpack.c.b16 %v490, %v489
  %v611 = vpack.c.b16 %v492, %v491
  %v612 = vpack.c.b16 %v494, %v493
  %v613 = vpack.c.b16 %v496, %v495
  %v614 = vpack.c.b16 %v498, %v497
  %v615 = vpack.c.b16 %v500, %v499
  %v616 = vpack.c.b16 %v502, %v501
  %v617 = vpack.c.b16 %v504, %v503
  %v618 = vpack.c.b16 %v506, %v505
  %v619 = vpack.c.b16 %v508, %v507
  %v620 = vpack.c.b16 %v510, %v509
  %v621 = vpack.c.b16 %v512, %v511
  %v622 = vpack.c.b16 %v514, %v513
  %v623 = vpack.c.b16 %v516, %v515
  %v624 = vpack.c.b16 %v518, %v517
  %v625 = vpack.c.b16 %v520, %v519
  %v626 = vpack.c.b16 %v522, %v521
  %v627 = vpack.c.b16 %v524, %v523
  %v628 = vpack.c.b16 %v526, %v525
  %v629 = vpack.c.b16 %v528, %v527
  %v630 = vpack.c.b16 %v530, %v529
  %v631 = vpack.c.b16 %v532, %v531
  %v632 = vpack.c.b16 %v534, %v533
  %v633 = vpack.c.b16 %v536, %v535
  %v634 = vpack.c.b16 %v538, %v537
  %v635 = vpack.c.b16 %v540, %v539
  %v636 = vpack.c.b16 %v542, %v541
  %v637 = vpack.c.b16 %v544, %v543
  %v638 = vpack.c.b16 %v546, %v545
  %v639 = vpack.c.b16 %v548, %v547
  %v640 = vpack.c.b16 %v550, %v549
  %v641 = vpack.c.b16 %v552, %v551
  %v642 = vpack.c.b16 %v554, %v553
  %v643 = vpack.c.b16 %v556, %v555
  %v644 = vpack.c.b16 %v558, %v557
  %v645 = vpack.c.b16 %v560, %v559
  %v646 = vpack.c.b16 %v562, %v561
  %v647 = vpack.c.b16 %v564, %v563
  %v648 = vpack.c.b16 %v566, %v565
  %v649 = vpack.c.b16 %v568, %v567
  %v650 = vpack.c.b16 %v570, %v569
  %v651 = vpack.c.b16 %v572, %v571
  %v652 = vpack.c.b16 %v574, %v573
  %v653 = vpack.c.b16 %v576, %v575
  %v654 = vpack.c.b16 %v578, %v577
  %v655 = vpack.c.b16 %v580, %v579
  %v656 = vpack.c.b16 %v582, %v581
  %vm730 = vcmask 220160
  %v732 = vsel %vm730, %v258, 0
  %v735 = vsel %vm730, %v268, 0
  %vm737 = vcmask 1044480
  %vm738 = vcmask 1045504
  %v739 = vsel %vm737, 4294967295, 65535
  %v740 = vsel %vm738, %v739, 0
  %v742 = vand.u32 %v656, %v740
  %744 = vmatpush.bf16.msra.mxu0 %v590
  %745 = vmatpush.bf16.msra.mxu0 %v589
  %746 = vmatpush.bf16.msra.mxu0 %v588
  %747 = vmatpush.bf16.msra.mxu0 %v587
  %748 = vmatpush.bf16.msra.mxu0 %v586
  %749 = vmatpush.bf16.msra.mxu0 %v585
  %750 = vmatpush.bf16.msra.mxu0 %v584
  %751 = vmatpush.bf16.msra.mxu0 %v583
  %752 = vmatmul.bf16.gmra.mxu0 %v249
  %v753 = vpop.f32.mrf.mxu0
  %v754 = vadd.f32 0.0, %v753
  %v755 = vpop.f32.mrf.mxu0
  %v756 = vadd.f32 0.0, %v755
  %757 = vmatmul.bf16.gmra.mxu0 %v259
  %v758 = vpop.f32.mrf.mxu0
  %v759 = vadd.f32 0.0, %v758
  %v760 = vpop.f32.mrf.mxu0
  %v761 = vadd.f32 0.0, %v760
  %762 = vdwg.mxu0
  %763 = vmatpush.bf16.msra.mxu0 %v598
  %764 = vmatpush.bf16.msra.mxu0 %v597
  %765 = vmatpush.bf16.msra.mxu0 %v596
  %766 = vmatpush.bf16.msra.mxu0 %v595
  %767 = vmatpush.bf16.msra.mxu0 %v594
  %768 = vmatpush.bf16.msra.mxu0 %v593
  %769 = vmatpush.bf16.msra.mxu0 %v592
  %770 = vmatpush.bf16.msra.mxu0 %v591
  %771 = vmatmul.bf16.gmra.mxu0 %v250
  %v772 = vpop.f32.mrf.mxu0
  %v773 = vadd.f32 %v754, %v772
  %v774 = vpop.f32.mrf.mxu0
  %v775 = vadd.f32 %v756, %v774
  %776 = vmatmul.bf16.gmra.mxu0 %v260
  %v777 = vpop.f32.mrf.mxu0
  %v778 = vadd.f32 %v759, %v777
  %v779 = vpop.f32.mrf.mxu0
  %v780 = vadd.f32 %v761, %v779
  %781 = vdwg.mxu0
  %782 = vmatpush.bf16.msra.mxu0 %v606
  %783 = vmatpush.bf16.msra.mxu0 %v605
  %784 = vmatpush.bf16.msra.mxu0 %v604
  %785 = vmatpush.bf16.msra.mxu0 %v603
  %786 = vmatpush.bf16.msra.mxu0 %v602
  %787 = vmatpush.bf16.msra.mxu0 %v601
  %788 = vmatpush.bf16.msra.mxu0 %v600
  %789 = vmatpush.bf16.msra.mxu0 %v599
  %790 = vmatmul.bf16.gmra.mxu0 %v251
  %v791 = vpop.f32.mrf.mxu0
  %v792 = vadd.f32 %v773, %v791
  %v793 = vpop.f32.mrf.mxu0
  %v794 = vadd.f32 %v775, %v793
  %795 = vmatmul.bf16.gmra.mxu0 %v261
  %v796 = vpop.f32.mrf.mxu0
  %v797 = vadd.f32 %v778, %v796
  %v798 = vpop.f32.mrf.mxu0
  %v799 = vadd.f32 %v780, %v798
  %800 = vdwg.mxu0
  %801 = vmatpush.bf16.msra.mxu0 %v614
  %802 = vmatpush.bf16.msra.mxu0 %v613
  %803 = vmatpush.bf16.msra.mxu0 %v612
  %804 = vmatpush.bf16.msra.mxu0 %v611
  %805 = vmatpush.bf16.msra.mxu0 %v610
  %806 = vmatpush.bf16.msra.mxu0 %v609
  %807 = vmatpush.bf16.msra.mxu0 %v608
  %808 = vmatpush.bf16.msra.mxu0 %v607
  %809 = vmatmul.bf16.gmra.mxu0 %v252
  %v810 = vpop.f32.mrf.mxu0
  %v811 = vadd.f32 %v792, %v810
  %v812 = vpop.f32.mrf.mxu0
  %v813 = vadd.f32 %v794, %v812
  %814 = vmatmul.bf16.gmra.mxu0 %v262
  %v815 = vpop.f32.mrf.mxu0
  %v816 = vadd.f32 %v797, %v815
  %v817 = vpop.f32.mrf.mxu0
  %v818 = vadd.f32 %v799, %v817
  %819 = vdwg.mxu0
  %820 = vmatpush.bf16.msra.mxu0 %v622
  %821 = vmatpush.bf16.msra.mxu0 %v621
  %822 = vmatpush.bf16.msra.mxu0 %v620
  %823 = vmatpush.bf16.msra.mxu0 %v619
  %824 = vmatpush.bf16.msra.mxu0 %v618
  %825 = vmatpush.bf16.msra.mxu0 %v617
  %826 = vmatpush.bf16.msra.mxu0 %v616
  %827 = vmatpush.bf16.msra.mxu0 %v615
  %828 = vmatmul.bf16.gmra.mxu0 %v253
  %v829 = vpop.f32.mrf.mxu0
  %v830 = vadd.f32 %v811, %v829
  %v831 = vpop.f32.mrf.mxu0
  %v832 = vadd.f32 %v813, %v831
  %833 = vmatmul.bf16.gmra.mxu0 %v263
  %v834 = vpop.f32.mrf.mxu0
  %v835 = vadd.f32 %v816, %v834
  %v836 = vpop.f32.mrf.mxu0
  %v837 = vadd.f32 %v818, %v836
  %838 = vdwg.mxu0
  %839 = vmatpush.bf16.msra.mxu0 %v630
  %840 = vmatpush.bf16.msra.mxu0 %v629
  %841 = vmatpush.bf16.msra.mxu0 %v628
  %842 = vmatpush.bf16.msra.mxu0 %v627
  %843 = vmatpush.bf16.msra.mxu0 %v626
  %844 = vmatpush.bf16.msra.mxu0 %v625
  %845 = vmatpush.bf16.msra.mxu0 %v624
  %846 = vmatpush.bf16.msra.mxu0 %v623
  %847 = vmatmul.bf16.gmra.mxu0 %v254
  %v848 = vpop.f32.mrf.mxu0
  %v849 = vadd.f32 %v830, %v848
  %v850 = vpop.f32.mrf.mxu0
  %v851 = vadd.f32 %v832, %v850
  %852 = vmatmul.bf16.gmra.mxu0 %v264
  %v853 = vpop.f32.mrf.mxu0
  %v854 = vadd.f32 %v835, %v853
  %v855 = vpop.f32.mrf.mxu0
  %v856 = vadd.f32 %v837, %v855
  %857 = vdwg.mxu0
  %858 = vmatpush.bf16.msra.mxu0 %v638
  %859 = vmatpush.bf16.msra.mxu0 %v637
  %860 = vmatpush.bf16.msra.mxu0 %v636
  %861 = vmatpush.bf16.msra.mxu0 %v635
  %862 = vmatpush.bf16.msra.mxu0 %v634
  %863 = vmatpush.bf16.msra.mxu0 %v633
  %864 = vmatpush.bf16.msra.mxu0 %v632
  %865 = vmatpush.bf16.msra.mxu0 %v631
  %866 = vmatmul.bf16.gmra.mxu0 %v255
  %v867 = vpop.f32.mrf.mxu0
  %v868 = vadd.f32 %v849, %v867
  %v869 = vpop.f32.mrf.mxu0
  %v870 = vadd.f32 %v851, %v869
  %871 = vmatmul.bf16.gmra.mxu0 %v265
  %v872 = vpop.f32.mrf.mxu0
  %v873 = vadd.f32 %v854, %v872
  %v874 = vpop.f32.mrf.mxu0
  %v875 = vadd.f32 %v856, %v874
  %876 = vdwg.mxu0
  %877 = vmatpush.bf16.msra.mxu0 %v646
  %878 = vmatpush.bf16.msra.mxu0 %v645
  %879 = vmatpush.bf16.msra.mxu0 %v644
  %880 = vmatpush.bf16.msra.mxu0 %v643
  %881 = vmatpush.bf16.msra.mxu0 %v642
  %882 = vmatpush.bf16.msra.mxu0 %v641
  %883 = vmatpush.bf16.msra.mxu0 %v640
  %884 = vmatpush.bf16.msra.mxu0 %v639
  %885 = vmatmul.bf16.gmra.mxu0 %v256
  %v886 = vpop.f32.mrf.mxu0
  %v887 = vadd.f32 %v868, %v886
  %v888 = vpop.f32.mrf.mxu0
  %v889 = vadd.f32 %v870, %v888
  %890 = vmatmul.bf16.gmra.mxu0 %v266
  %v891 = vpop.f32.mrf.mxu0
  %v892 = vadd.f32 %v873, %v891
  %v893 = vpop.f32.mrf.mxu0
  %v894 = vadd.f32 %v875, %v893
  %895 = vdwg.mxu0
  %896 = vmatpush.bf16.msra.mxu0 %v654
  %897 = vmatpush.bf16.msra.mxu0 %v653
  %898 = vmatpush.bf16.msra.mxu0 %v652
  %899 = vmatpush.bf16.msra.mxu0 %v651
  %900 = vmatpush.bf16.msra.mxu0 %v650
  %901 = vmatpush.bf16.msra.mxu0 %v649
  %902 = vmatpush.bf16.msra.mxu0 %v648
  %903 = vmatpush.bf16.msra.mxu0 %v647
  %904 = vmatmul.bf16.gmra.mxu0 %v257
  %v905 = vpop.f32.mrf.mxu0
  %v906 = vadd.f32 %v887, %v905
  %v907 = vpop.f32.mrf.mxu0
  %v908 = vadd.f32 %v889, %v907
  %909 = vmatmul.bf16.gmra.mxu0 %v267
  %v910 = vpop.f32.mrf.mxu0
  %v911 = vadd.f32 %v892, %v910
  %v912 = vpop.f32.mrf.mxu0
  %v913 = vadd.f32 %v894, %v912
  %914 = vdwg.mxu0
  %915 = vmatpush.bf16.msra.mxu0 0
  %916 = vmatpush.bf16.msra.mxu0 0
  %917 = vmatpush.bf16.msra.mxu0 0
  %918 = vmatpush.bf16.msra.mxu0 0
  %919 = vmatpush.bf16.msra.mxu0 0
  %920 = vmatpush.bf16.msra.mxu0 0
  %921 = vmatpush.bf16.msra.mxu0 %v742
  %922 = vmatpush.bf16.msra.mxu0 %v655
  %923 = vmatmul.bf16.gmra.mxu0 %v732
  %v924 = vpop.f32.mrf.mxu0
  %v925 = vadd.f32 %v906, %v924
  %v926 = vpop.f32.mrf.mxu0
  %v927 = vadd.f32 %v908, %v926
  %928 = vmatmul.bf16.gmra.mxu0 %v735
  %v929 = vpop.f32.mrf.mxu0
  %v930 = vadd.f32 %v911, %v929
  %v931 = vpop.f32.mrf.mxu0
  %v932 = vadd.f32 %v913, %v931
  %933 = vdwg.mxu0
  %v934 = vld [vmem:[%s2] sm:$0x1]
  %v936 = vperm.slane %v934, 0
  %v938 = vmul.f32 %v925, %v936
  %v939 = vmul.f32 %v927, %v936
  %v940 = vmul.f32 %v930, %v936
  %v941 = vmul.f32 %v932, %v936
  %v942 = vld [vmem:[%s3] sm:$0x1]
  %v944 = vperm.slane %v942, 0
  %v946 = vadd.f32 %v938, %v944
  %v947 = vadd.f32 %v939, %v944
  %v948 = vadd.f32 %v940, %v944
  %v949 = vadd.f32 %v941, %v944
  %vm950 = vcmp.ge.f32.partialorder %v946, 0.0
  %vm951 = vcmp.ge.f32.partialorder %v947, 0.0
  %vm952 = vcmp.ge.f32.partialorder %v948, 0.0
  %vm953 = vcmp.ge.f32.partialorder %v949, 0.0
  %v954 = vld [vmem:[%s4] sm:$0x1]
  %v956 = vperm.slane %v954, 0
  %v958 = vmul.f32 %v956, %v946
  %v959 = vmul.f32 %v956, %v947
  %v960 = vmul.f32 %v956, %v948
  %v961 = vmul.f32 %v956, %v949
  %v962 = vsel %vm950, %v946, %v958
  %v963 = vsel %vm951, %v947, %v959
  %v964 = vsel %vm952, %v948, %v960
  %v965 = vsel %vm953, %v949, %v961
  %v966 = vpack.c.bf16 %v962, %v962
  %v967 = vpack.c.bf16 %v963, %v963
  %v968 = vpack.c.bf16 %v964, %v964
  %v969 = vpack.c.bf16 %v965, %v965
  %970 = vst [vmem:[%s5] sm:$0xf] %v966
  %971 = vst [vmem:[%s5 + $0x4] sm:$0xf] %v967
  %972 = vst [vmem:[%s5 + $0x8] sm:$0xf] %v968
  %973 = vst [vmem:[%s5 + $0xc] sm:$0xf] %v969
  // Predicated region
  $region22: #{espnet_forward.31} parent=0 // pred_check
    _
  $region23: #{espnet_forward.31} parent=0 // pred_check_branch
    %975 = sbr.rel (0) target = $region25
  $region24: #{espnet_forward.31} parent=0 // pred_region
    _
  $region25: #{espnet_forward.31} parent=0 // pred_fallthru
    _
  // Predicated region
  $region26: #{espnet_forward.31} parent=0 // pred_check
    _
  $region27: #{espnet_forward.31} parent=0 // pred_check_branch
    %977 = sbr.rel (0) target = $region29
  $region28: #{espnet_forward.31} parent=0 // pred_region
    _
  $region29: #{espnet_forward.31} parent=0 // pred_fallthru
    _

// kernel: espnet_forward.32
$region0: #{espnet_forward.32}
  #allocation0 [shape = 'u32[]', space=smem, size = 0x4, offset = 0x4, fixed_abs, tag = 'smem constant byte address 0x4 - core index']
  #allocation1 [shape = 'u32[72,128]{1,0:T(1,128)}', space=vmem, size = 0x9000, scoped, tag = 'internal scratch']
  %s0 = inlined_call_operand.vmem [shape: bf16[32,1125], index: 0, kind: input, shape index: {}]
  %s1 = inlined_call_operand.vmem [shape: bf16[1125,128], index: 1, kind: input, shape index: {}]
  %s2 = inlined_call_operand.vmem [shape: f32[1,128], index: 2, kind: input, shape index: {}]
  %s3 = inlined_call_operand.vmem [shape: f32[1,128], index: 3, kind: input, shape index: {}]
  %s4 = inlined_call_operand.vmem [shape: f32[1,128], index: 4, kind: input, shape index: {}]
  %s5 = inlined_call_operand.vmem [shape: bf16[32,128], index: 5, kind: output, shape index: {}]
  %s6 = sld [smem:[#allocation0]]
  $region30: #{espnet_forward.32} parent=0
    _
  %s8 = ssub.s32 1, %s6
  %s9 = scalar_select 0, %s8, %s6
  // Predicated region
  $region2: #{espnet_forward.32} parent=0 // pred_check
    _
  $region3: #{espnet_forward.32} parent=0 // pred_check_branch
    %11 = sbr.rel (0) target = $region5
  $region4: #{espnet_forward.32} parent=0 // pred_region
    _
  $region5: #{espnet_forward.32} parent=0 // pred_fallthru
    _
  // Predicated region
  $region6: #{espnet_forward.32} parent=0 // pred_check
    _
  $region7: #{espnet_forward.32} parent=0 // pred_check_branch
    %13 = sbr.rel (0) target = $region9
  $region8: #{espnet_forward.32} parent=0 // pred_region
    _
  $region9: #{espnet_forward.32} parent=0 // pred_fallthru
    _
  // Predicated region
  $region10: #{espnet_forward.32} parent=0 // pred_check
    _
  $region11: #{espnet_forward.32} parent=0 // pred_check_branch
    %15 = sbr.rel (0) target = $region13
  $region12: #{espnet_forward.32} parent=0 // pred_region
    _
  $region13: #{espnet_forward.32} parent=0 // pred_fallthru
    _
  // Predicated region
  $region14: #{espnet_forward.32} parent=0 // pred_check
    _
  $region15: #{espnet_forward.32} parent=0 // pred_check_branch
    %17 = sbr.rel (0) target = $region17
  $region16: #{espnet_forward.32} parent=0 // pred_region
    _
  $region17: #{espnet_forward.32} parent=0 // pred_fallthru
    _
  // Predicated region
  $region18: #{espnet_forward.32} parent=0 // pred_check
    _
  $region19: #{espnet_forward.32} parent=0 // pred_check_branch
    %19 = sbr.rel (0) target = $region21
  $region20: #{espnet_forward.32} parent=0 // pred_region
    _
  $region21: #{espnet_forward.32} parent=0 // pred_fallthru
    _
  %v21 = vld [vmem:[%s0] sm:$0xff]
  %v22 = vld [vmem:[%s0 + $0x8] sm:$0xff]
  %v23 = vld [vmem:[%s0 + $0x10] sm:$0xff]
  %v24 = vld [vmem:[%s0 + $0x18] sm:$0xff]
  %v25 = vld [vmem:[%s0 + $0x20] sm:$0xf]
  %v26 = vld [vmem:[%s0 + $0x24] sm:$0xff]
  %v27 = vld [vmem:[%s0 + $0x2c] sm:$0xff]
  %v28 = vld [vmem:[%s0 + $0x34] sm:$0xff]
  %v29 = vld [vmem:[%s0 + $0x3c] sm:$0xff]
  %v30 = vld [vmem:[%s0 + $0x44] sm:$0xf]
  %v31 = vld [vmem:[%s0 + $0x48] sm:$0xff]
  %v32 = vld [vmem:[%s0 + $0x50] sm:$0xff]
  %v33 = vld [vmem:[%s0 + $0x58] sm:$0xff]
  %v34 = vld [vmem:[%s0 + $0x60] sm:$0xff]
  %v35 = vld [vmem:[%s0 + $0x68] sm:$0xf]
  %v36 = vld [vmem:[%s0 + $0x6c] sm:$0xff]
  %v37 = vld [vmem:[%s0 + $0x74] sm:$0xff]
  %v38 = vld [vmem:[%s0 + $0x7c] sm:$0xff]
  %v39 = vld [vmem:[%s0 + $0x84] sm:$0xff]
  %v40 = vld [vmem:[%s0 + $0x8c] sm:$0xf]
  %v41 = vld [vmem:[%s1] sm:$0xf]
  %v42 = vld [vmem:[%s1 + $0x4] sm:$0xf]
  %v43 = vld [vmem:[%s1 + $0x8] sm:$0xf]
  %v44 = vld [vmem:[%s1 + $0xc] sm:$0xf]
  %v45 = vld [vmem:[%s1 + $0x10] sm:$0xf]
  %v46 = vld [vmem:[%s1 + $0x14] sm:$0xf]
  %v47 = vld [vmem:[%s1 + $0x18] sm:$0xf]
  %v48 = vld [vmem:[%s1 + $0x1c] sm:$0xf]
  %v49 = vld [vmem:[%s1 + $0x20] sm:$0xf]
  %v50 = vld [vmem:[%s1 + $0x24] sm:$0xf]
  %v51 = vld [vmem:[%s1 + $0x28] sm:$0xf]
  %v52 = vld [vmem:[%s1 + $0x2c] sm:$0xf]
  %v53 = vld [vmem:[%s1 + $0x30] sm:$0xf]
  %v54 = vld [vmem:[%s1 + $0x34] sm:$0xf]
  %v55 = vld [vmem:[%s1 + $0x38] sm:$0xf]
  %v56 = vld [vmem:[%s1 + $0x3c] sm:$0xf]
  %v57 = vld [vmem:[%s1 + $0x40] sm:$0xf]
  %v58 = vld [vmem:[%s1 + $0x44] sm:$0xf]
  %v59 = vld [vmem:[%s1 + $0x48] sm:$0xf]
  %v60 = vld [vmem:[%s1 + $0x4c] sm:$0xf]
  %v61 = vld [vmem:[%s1 + $0x50] sm:$0xf]
  %v62 = vld [vmem:[%s1 + $0x54] sm:$0xf]
  %v63 = vld [vmem:[%s1 + $0x58] sm:$0xf]
  %v64 = vld [vmem:[%s1 + $0x5c] sm:$0xf]
  %v65 = vld [vmem:[%s1 + $0x60] sm:$0xf]
  %v66 = vld [vmem:[%s1 + $0x64] sm:$0xf]
  %v67 = vld [vmem:[%s1 + $0x68] sm:$0xf]
  %v68 = vld [vmem:[%s1 + $0x6c] sm:$0xf]
  %v69 = vld [vmem:[%s1 + $0x70] sm:$0xf]
  %v70 = vld [vmem:[%s1 + $0x74] sm:$0xf]
  %v71 = vld [vmem:[%s1 + $0x78] sm:$0xf]
  %v72 = vld [vmem:[%s1 + $0x7c] sm:$0xf]
  %v73 = vld [vmem:[%s1 + $0x80] sm:$0xf]
  %v74 = vld [vmem:[%s1 + $0x84] sm:$0xf]
  %v75 = vld [vmem:[%s1 + $0x88] sm:$0xf]
  %v76 = vld [vmem:[%s1 + $0x8c] sm:$0xf]
  %v77 = vld [vmem:[%s1 + $0x90] sm:$0xf]
  %v78 = vld [vmem:[%s1 + $0x94] sm:$0xf]
  %v79 = vld [vmem:[%s1 + $0x98] sm:$0xf]
  %v80 = vld [vmem:[%s1 + $0x9c] sm:$0xf]
  %v81 = vld [vmem:[%s1 + $0xa0] sm:$0xf]
  %v82 = vld [vmem:[%s1 + $0xa4] sm:$0xf]
  %v83 = vld [vmem:[%s1 + $0xa8] sm:$0xf]
  %v84 = vld [vmem:[%s1 + $0xac] sm:$0xf]
  %v85 = vld [vmem:[%s1 + $0xb0] sm:$0xf]
  %v86 = vld [vmem:[%s1 + $0xb4] sm:$0xf]
  %v87 = vld [vmem:[%s1 + $0xb8] sm:$0xf]
  %v88 = vld [vmem:[%s1 + $0xbc] sm:$0xf]
  %v89 = vld [vmem:[%s1 + $0xc0] sm:$0xf]
  %v90 = vld [vmem:[%s1 + $0xc4] sm:$0xf]
  %v91 = vld [vmem:[%s1 + $0xc8] sm:$0xf]
  %v92 = vld [vmem:[%s1 + $0xcc] sm:$0xf]
  %v93 = vld [vmem:[%s1 + $0xd0] sm:$0xf]
  %v94 = vld [vmem:[%s1 + $0xd4] sm:$0xf]
  %v95 = vld [vmem:[%s1 + $0xd8] sm:$0xf]
  %v96 = vld [vmem:[%s1 + $0xdc] sm:$0xf]
  %v97 = vld [vmem:[%s1 + $0xe0] sm:$0xf]
  %v98 = vld [vmem:[%s1 + $0xe4] sm:$0xf]
  %v99 = vld [vmem:[%s1 + $0xe8] sm:$0xf]
  %v100 = vld [vmem:[%s1 + $0xec] sm:$0xf]
  %v101 = vld [vmem:[%s1 + $0xf0] sm:$0xf]
  %v102 = vld [vmem:[%s1 + $0xf4] sm:$0xf]
  %v103 = vld [vmem:[%s1 + $0xf8] sm:$0xf]
  %v104 = vld [vmem:[%s1 + $0xfc] sm:$0xf]
  %v105 = vld [vmem:[%s1 + $0x100] sm:$0xf]
  %v106 = vld [vmem:[%s1 + $0x104] sm:$0xf]
  %v107 = vld [vmem:[%s1 + $0x108] sm:$0xf]
  %v108 = vld [vmem:[%s1 + $0x10c] sm:$0xf]
  %v109 = vld [vmem:[%s1 + $0x110] sm:$0xf]
  %v110 = vld [vmem:[%s1 + $0x114] sm:$0xf]
  %v111 = vld [vmem:[%s1 + $0x118] sm:$0xf]
  %v112 = vld [vmem:[%s1 + $0x11c] sm:$0xf]
  %v113 = vld [vmem:[%s1 + $0x120] sm:$0xf]
  %v114 = vld [vmem:[%s1 + $0x124] sm:$0xf]
  %v115 = vld [vmem:[%s1 + $0x128] sm:$0xf]
  %v116 = vld [vmem:[%s1 + $0x12c] sm:$0xf]
  %v117 = vld [vmem:[%s1 + $0x130] sm:$0xf]
  %v118 = vld [vmem:[%s1 + $0x134] sm:$0xf]
  %v119 = vld [vmem:[%s1 + $0x138] sm:$0xf]
  %v120 = vld [vmem:[%s1 + $0x13c] sm:$0xf]
  %v121 = vld [vmem:[%s1 + $0x140] sm:$0xf]
  %v122 = vld [vmem:[%s1 + $0x144] sm:$0xf]
  %v123 = vld [vmem:[%s1 + $0x148] sm:$0xf]
  %v124 = vld [vmem:[%s1 + $0x14c] sm:$0xf]
  %v125 = vld [vmem:[%s1 + $0x150] sm:$0xf]
  %v126 = vld [vmem:[%s1 + $0x154] sm:$0xf]
  %v127 = vld [vmem:[%s1 + $0x158] sm:$0xf]
  %v128 = vld [vmem:[%s1 + $0x15c] sm:$0xf]
  %v129 = vld [vmem:[%s1 + $0x160] sm:$0xf]
  %v130 = vld [vmem:[%s1 + $0x164] sm:$0xf]
  %v131 = vld [vmem:[%s1 + $0x168] sm:$0xf]
  %v132 = vld [vmem:[%s1 + $0x16c] sm:$0xf]
  %v133 = vld [vmem:[%s1 + $0x170] sm:$0xf]
  %v134 = vld [vmem:[%s1 + $0x174] sm:$0xf]
  %v135 = vld [vmem:[%s1 + $0x178] sm:$0xf]
  %v136 = vld [vmem:[%s1 + $0x17c] sm:$0xf]
  %v137 = vld [vmem:[%s1 + $0x180] sm:$0xf]
  %v138 = vld [vmem:[%s1 + $0x184] sm:$0xf]
  %v139 = vld [vmem:[%s1 + $0x188] sm:$0xf]
  %v140 = vld [vmem:[%s1 + $0x18c] sm:$0xf]
  %v141 = vld [vmem:[%s1 + $0x190] sm:$0xf]
  %v142 = vld [vmem:[%s1 + $0x194] sm:$0xf]
  %v143 = vld [vmem:[%s1 + $0x198] sm:$0xf]
  %v144 = vld [vmem:[%s1 + $0x19c] sm:$0xf]
  %v145 = vld [vmem:[%s1 + $0x1a0] sm:$0xf]
  %v146 = vld [vmem:[%s1 + $0x1a4] sm:$0xf]
  %v147 = vld [vmem:[%s1 + $0x1a8] sm:$0xf]
  %v148 = vld [vmem:[%s1 + $0x1ac] sm:$0xf]
  %v149 = vld [vmem:[%s1 + $0x1b0] sm:$0xf]
  %v150 = vld [vmem:[%s1 + $0x1b4] sm:$0xf]
  %v151 = vld [vmem:[%s1 + $0x1b8] sm:$0xf]
  %v152 = vld [vmem:[%s1 + $0x1bc] sm:$0xf]
  %v153 = vld [vmem:[%s1 + $0x1c0] sm:$0xf]
  %v154 = vld [vmem:[%s1 + $0x1c4] sm:$0xf]
  %v155 = vld [vmem:[%s1 + $0x1c8] sm:$0xf]
  %v156 = vld [vmem:[%s1 + $0x1cc] sm:$0xf]
  %v157 = vld [vmem:[%s1 + $0x1d0] sm:$0xf]
  %v158 = vld [vmem:[%s1 + $0x1d4] sm:$0xf]
  %v159 = vld [vmem:[%s1 + $0x1d8] sm:$0xf]
  %v160 = vld [vmem:[%s1 + $0x1dc] sm:$0xf]
  %v161 = vld [vmem:[%s1 + $0x1e0] sm:$0xf]
  %v162 = vld [vmem:[%s1 + $0x1e4] sm:$0xf]
  %v163 = vld [vmem:[%s1 + $0x1e8] sm:$0xf]
  %v164 = vld [vmem:[%s1 + $0x1ec] sm:$0xf]
  %v165 = vld [vmem:[%s1 + $0x1f0] sm:$0xf]
  %v166 = vld [vmem:[%s1 + $0x1f4] sm:$0xf]
  %v167 = vld [vmem:[%s1 + $0x1f8] sm:$0xf]
  %v168 = vld [vmem:[%s1 + $0x1fc] sm:$0xf]
  %v169 = vld [vmem:[%s1 + $0x200] sm:$0xf]
  %v170 = vld [vmem:[%s1 + $0x204] sm:$0xf]
  %v171 = vld [vmem:[%s1 + $0x208] sm:$0xf]
  %v172 = vld [vmem:[%s1 + $0x20c] sm:$0xf]
  %v173 = vld [vmem:[%s1 + $0x210] sm:$0xf]
  %v174 = vld [vmem:[%s1 + $0x214] sm:$0xf]
  %v175 = vld [vmem:[%s1 + $0x218] sm:$0xf]
  %v176 = vld [vmem:[%s1 + $0x21c] sm:$0xf]
  %v177 = vld [vmem:[%s1 + $0x220] sm:$0xf]
  %v178 = vld [vmem:[%s1 + $0x224] sm:$0xf]
  %v179 = vld [vmem:[%s1 + $0x228] sm:$0xf]
  %v180 = vld [vmem:[%s1 + $0x22c] sm:$0xf]
  %v181 = vld [vmem:[%s1 + $0x230] sm:$0x7]
  %v202 = vunpack.c.l.b16 %v21
  %v203 = vunpack.c.h.b16 %v21
  %v204 = vunpack.c.l.b16 %v22
  %v205 = vunpack.c.h.b16 %v22
  %v206 = vunpack.c.l.b16 %v23
  %v207 = vunpack.c.h.b16 %v23
  %v208 = vunpack.c.l.b16 %v24
  %v209 = vunpack.c.h.b16 %v24
  %v210 = vunpack.c.l.b16 %v25
  %v211 = vunpack.c.l.b16 %v26
  %v212 = vunpack.c.h.b16 %v26
  %v213 = vunpack.c.l.b16 %v27
  %v214 = vunpack.c.h.b16 %v27
  %v215 = vunpack.c.l.b16 %v28
  %v216 = vunpack.c.h.b16 %v28
  %v217 = vunpack.c.l.b16 %v29
  %v218 = vunpack.c.h.b16 %v29
  %v219 = vunpack.c.l.b16 %v30
  %v220 = vunpack.c.l.b16 %v31
  %v221 = vunpack.c.h.b16 %v31
  %v222 = vunpack.c.l.b16 %v32
  %v223 = vunpack.c.h.b16 %v32
  %v224 = vunpack.c.l.b16 %v33
  %v225 = vunpack.c.h.b16 %v33
  %v226 = vunpack.c.l.b16 %v34
  %v227 = vunpack.c.h.b16 %v34
  %v228 = vunpack.c.l.b16 %v35
  %v229 = vunpack.c.l.b16 %v36
  %v230 = vunpack.c.h.b16 %v36
  %v231 = vunpack.c.l.b16 %v37
  %v232 = vunpack.c.h.b16 %v37
  %v233 = vunpack.c.l.b16 %v38
  %v234 = vunpack.c.h.b16 %v38
  %v235 = vunpack.c.l.b16 %v39
  %v236 = vunpack.c.h.b16 %v39
  %v237 = vunpack.c.l.b16 %v40
  %v238 = vpack.c.b16 %v211, %v202
  %v239 = vpack.c.b16 %v212, %v203
  %v240 = vpack.c.b16 %v213, %v204
  %v241 = vpack.c.b16 %v214, %v205
  %v242 = vpack.c.b16 %v215, %v206
  %v243 = vpack.c.b16 %v216, %v207
  %v244 = vpack.c.b16 %v217, %v208
  %v245 = vpack.c.b16 %v218, %v209
  %v246 = vpack.c.b16 %v219, %v210
  %v247 = vpack.c.b16 %v229, %v220
  %v248 = vpack.c.b16 %v230, %v221
  %v249 = vpack.c.b16 %v231, %v222
  %v250 = vpack.c.b16 %v232, %v223
  %v251 = vpack.c.b16 %v233, %v224
  %v252 = vpack.c.b16 %v234, %v225
  %v253 = vpack.c.b16 %v235, %v226
  %v254 = vpack.c.b16 %v236, %v227
  %v255 = vpack.c.b16 %v237, %v228
  %v413 = vunpack.c.l.b16 %v41
  %v414 = vunpack.c.l.b16 %v42
  %v415 = vunpack.c.l.b16 %v43
  %v416 = vunpack.c.l.b16 %v44
  %v417 = vunpack.c.l.b16 %v45
  %v418 = vunpack.c.l.b16 %v46
  %v419 = vunpack.c.l.b16 %v47
  %v420 = vunpack.c.l.b16 %v48
  %v421 = vunpack.c.l.b16 %v49
  %v422 = vunpack.c.l.b16 %v50
  %v423 = vunpack.c.l.b16 %v51
  %v424 = vunpack.c.l.b16 %v52
  %v425 = vunpack.c.l.b16 %v53
  %v426 = vunpack.c.l.b16 %v54
  %v427 = vunpack.c.l.b16 %v55
  %v428 = vunpack.c.l.b16 %v56
  %v429 = vunpack.c.l.b16 %v57
  %v430 = vunpack.c.l.b16 %v58
  %v431 = vunpack.c.l.b16 %v59
  %v432 = vunpack.c.l.b16 %v60
  %v433 = vunpack.c.l.b16 %v61
  %v434 = vunpack.c.l.b16 %v62
  %v435 = vunpack.c.l.b16 %v63
  %v436 = vunpack.c.l.b16 %v64
  %v437 = vunpack.c.l.b16 %v65
  %v438 = vunpack.c.l.b16 %v66
  %v439 = vunpack.c.l.b16 %v67
  %v440 = vunpack.c.l.b16 %v68
  %v441 = vunpack.c.l.b16 %v69
  %v442 = vunpack.c.l.b16 %v70
  %v443 = vunpack.c.l.b16 %v71
  %v444 = vunpack.c.l.b16 %v72
  %v445 = vunpack.c.l.b16 %v73
  %v446 = vunpack.c.l.b16 %v74
  %v447 = vunpack.c.l.b16 %v75
  %v448 = vunpack.c.l.b16 %v76
  %v449 = vunpack.c.l.b16 %v77
  %v450 = vunpack.c.l.b16 %v78
  %v451 = vunpack.c.l.b16 %v79
  %v452 = vunpack.c.l.b16 %v80
  %v453 = vunpack.c.l.b16 %v81
  %v454 = vunpack.c.l.b16 %v82
  %v455 = vunpack.c.l.b16 %v83
  %v456 = vunpack.c.l.b16 %v84
  %v457 = vunpack.c.l.b16 %v85
  %v458 = vunpack.c.l.b16 %v86
  %v459 = vunpack.c.l.b16 %v87
  %v460 = vunpack.c.l.b16 %v88
  %v461 = vunpack.c.l.b16 %v89
  %v462 = vunpack.c.l.b16 %v90
  %v463 = vunpack.c.l.b16 %v91
  %v464 = vunpack.c.l.b16 %v92
  %v465 = vunpack.c.l.b16 %v93
  %v466 = vunpack.c.l.b16 %v94
  %v467 = vunpack.c.l.b16 %v95
  %v468 = vunpack.c.l.b16 %v96
  %v469 = vunpack.c.l.b16 %v97
  %v470 = vunpack.c.l.b16 %v98
  %v471 = vunpack.c.l.b16 %v99
  %v472 = vunpack.c.l.b16 %v100
  %v473 = vunpack.c.l.b16 %v101
  %v474 = vunpack.c.l.b16 %v102
  %v475 = vunpack.c.l.b16 %v103
  %v476 = vunpack.c.l.b16 %v104
  %v477 = vunpack.c.l.b16 %v105
  %v478 = vunpack.c.l.b16 %v106
  %v479 = vunpack.c.l.b16 %v107
  %v480 = vunpack.c.l.b16 %v108
  %v481 = vunpack.c.l.b16 %v109
  %v482 = vunpack.c.l.b16 %v110
  %v483 = vunpack.c.l.b16 %v111
  %v484 = vunpack.c.l.b16 %v112
  %v485 = vunpack.c.l.b16 %v113
  %v486 = vunpack.c.l.b16 %v114
  %v487 = vunpack.c.l.b16 %v115
  %v488 = vunpack.c.l.b16 %v116
  %v489 = vunpack.c.l.b16 %v117
  %v490 = vunpack.c.l.b16 %v118
  %v491 = vunpack.c.l.b16 %v119
  %v492 = vunpack.c.l.b16 %v120
  %v493 = vunpack.c.l.b16 %v121
  %v494 = vunpack.c.l.b16 %v122
  %v495 = vunpack.c.l.b16 %v123
  %v496 = vunpack.c.l.b16 %v124
  %v497 = vunpack.c.l.b16 %v125
  %v498 = vunpack.c.l.b16 %v126
  %v499 = vunpack.c.l.b16 %v127
  %v500 = vunpack.c.l.b16 %v128
  %v501 = vunpack.c.l.b16 %v129
  %v502 = vunpack.c.l.b16 %v130
  %v503 = vunpack.c.l.b16 %v131
  %v504 = vunpack.c.l.b16 %v132
  %v505 = vunpack.c.l.b16 %v133
  %v506 = vunpack.c.l.b16 %v134
  %v507 = vunpack.c.l.b16 %v135
  %v508 = vunpack.c.l.b16 %v136
  %v509 = vunpack.c.l.b16 %v137
  %v510 = vunpack.c.l.b16 %v138
  %v511 = vunpack.c.l.b16 %v139
  %v512 = vunpack.c.l.b16 %v140
  %v513 = vunpack.c.l.b16 %v141
  %v514 = vunpack.c.l.b16 %v142
  %v515 = vunpack.c.l.b16 %v143
  %v516 = vunpack.c.l.b16 %v144
  %v517 = vunpack.c.l.b16 %v145
  %v518 = vunpack.c.l.b16 %v146
  %v519 = vunpack.c.l.b16 %v147
  %v520 = vunpack.c.l.b16 %v148
  %v521 = vunpack.c.l.b16 %v149
  %v522 = vunpack.c.l.b16 %v150
  %v523 = vunpack.c.l.b16 %v151
  %v524 = vunpack.c.l.b16 %v152
  %v525 = vunpack.c.l.b16 %v153
  %v526 = vunpack.c.l.b16 %v154
  %v527 = vunpack.c.l.b16 %v155
  %v528 = vunpack.c.l.b16 %v156
  %v529 = vunpack.c.l.b16 %v157
  %v530 = vunpack.c.l.b16 %v158
  %v531 = vunpack.c.l.b16 %v159
  %v532 = vunpack.c.l.b16 %v160
  %v533 = vunpack.c.l.b16 %v161
  %v534 = vunpack.c.l.b16 %v162
  %v535 = vunpack.c.l.b16 %v163
  %v536 = vunpack.c.l.b16 %v164
  %v537 = vunpack.c.l.b16 %v165
  %v538 = vunpack.c.l.b16 %v166
  %v539 = vunpack.c.l.b16 %v167
  %v540 = vunpack.c.l.b16 %v168
  %v541 = vunpack.c.l.b16 %v169
  %v542 = vunpack.c.l.b16 %v170
  %v543 = vunpack.c.l.b16 %v171
  %v544 = vunpack.c.l.b16 %v172
  %v545 = vunpack.c.l.b16 %v173
  %v546 = vunpack.c.l.b16 %v174
  %v547 = vunpack.c.l.b16 %v175
  %v548 = vunpack.c.l.b16 %v176
  %v549 = vunpack.c.l.b16 %v177
  %v550 = vunpack.c.l.b16 %v178
  %v551 = vunpack.c.l.b16 %v179
  %v552 = vunpack.c.l.b16 %v180
  %v553 = vunpack.c.l.b16 %v181
  %v554 = vpack.c.b16 %v414, %v413
  %v555 = vpack.c.b16 %v416, %v415
  %v556 = vpack.c.b16 %v418, %v417
  %v557 = vpack.c.b16 %v420, %v419
  %v558 = vpack.c.b16 %v422, %v421
  %v559 = vpack.c.b16 %v424, %v423
  %v560 = vpack.c.b16 %v426, %v425
  %v561 = vpack.c.b16 %v428, %v427
  %v562 = vpack.c.b16 %v430, %v429
  %v563 = vpack.c.b16 %v432, %v431
  %v564 = vpack.c.b16 %v434, %v433
  %v565 = vpack.c.b16 %v436, %v435
  %v566 = vpack.c.b16 %v438, %v437
  %v567 = vpack.c.b16 %v440, %v439
  %v568 = vpack.c.b16 %v442, %v441
  %v569 = vpack.c.b16 %v444, %v443
  %v570 = vpack.c.b16 %v446, %v445
  %v571 = vpack.c.b16 %v448, %v447
  %v572 = vpack.c.b16 %v450, %v449
  %v573 = vpack.c.b16 %v452, %v451
  %v574 = vpack.c.b16 %v454, %v453
  %v575 = vpack.c.b16 %v456, %v455
  %v576 = vpack.c.b16 %v458, %v457
  %v577 = vpack.c.b16 %v460, %v459
  %v578 = vpack.c.b16 %v462, %v461
  %v579 = vpack.c.b16 %v464, %v463
  %v580 = vpack.c.b16 %v466, %v465
  %v581 = vpack.c.b16 %v468, %v467
  %v582 = vpack.c.b16 %v470, %v469
  %v583 = vpack.c.b16 %v472, %v471
  %v584 = vpack.c.b16 %v474, %v473
  %v585 = vpack.c.b16 %v476, %v475
  %v586 = vpack.c.b16 %v478, %v477
  %v587 = vpack.c.b16 %v480, %v479
  %v588 = vpack.c.b16 %v482, %v481
  %v589 = vpack.c.b16 %v484, %v483
  %v590 = vpack.c.b16 %v486, %v485
  %v591 = vpack.c.b16 %v488, %v487
  %v592 = vpack.c.b16 %v490, %v489
  %v593 = vpack.c.b16 %v492, %v491
  %v594 = vpack.c.b16 %v494, %v493
  %v595 = vpack.c.b16 %v496, %v495
  %v596 = vpack.c.b16 %v498, %v497
  %v597 = vpack.c.b16 %v500, %v499
  %v598 = vpack.c.b16 %v502, %v501
  %v599 = vpack.c.b16 %v504, %v503
  %v600 = vpack.c.b16 %v506, %v505
  %v601 = vpack.c.b16 %v508, %v507
  %v602 = vpack.c.b16 %v510, %v509
  %v603 = vpack.c.b16 %v512, %v511
  %v604 = vpack.c.b16 %v514, %v513
  %v605 = vpack.c.b16 %v516, %v515
  %v606 = vpack.c.b16 %v518, %v517
  %v607 = vpack.c.b16 %v520, %v519
  %v608 = vpack.c.b16 %v522, %v521
  %v609 = vpack.c.b16 %v524, %v523
  %v610 = vpack.c.b16 %v526, %v525
  %v611 = vpack.c.b16 %v528, %v527
  %v612 = vpack.c.b16 %v530, %v529
  %v613 = vpack.c.b16 %v532, %v531
  %v614 = vpack.c.b16 %v534, %v533
  %v615 = vpack.c.b16 %v536, %v535
  %v616 = vpack.c.b16 %v538, %v537
  %v617 = vpack.c.b16 %v540, %v539
  %v618 = vpack.c.b16 %v542, %v541
  %v619 = vpack.c.b16 %v544, %v543
  %v620 = vpack.c.b16 %v546, %v545
  %v621 = vpack.c.b16 %v548, %v547
  %v622 = vpack.c.b16 %v550, %v549
  %v623 = vpack.c.b16 %v552, %v551
  %v624 = vpack.c.b16 %v553, %v553
  %vm695 = vcmask 826368
  %v697 = vsel %vm695, %v246, 0
  %v700 = vsel %vm695, %v255, 0
  %vm702 = vcmask 1041408
  %vm703 = vcmask 1042432
  %v704 = vsel %vm702, 4294967295, 65535
  %v705 = vsel %vm703, %v704, 0
  %v707 = vand.u32 %v624, %v705
  %709 = vmatpush.bf16.msra.mxu0 %v561
  %710 = vmatpush.bf16.msra.mxu0 %v560
  %711 = vmatpush.bf16.msra.mxu0 %v559
  %712 = vmatpush.bf16.msra.mxu0 %v558
  %713 = vmatpush.bf16.msra.mxu0 %v557
  %714 = vmatpush.bf16.msra.mxu0 %v556
  %715 = vmatpush.bf16.msra.mxu0 %v555
  %716 = vmatpush.bf16.msra.mxu0 %v554
  %717 = vmatmul.bf16.gmra.mxu0 %v238
  %v718 = vpop.f32.mrf.mxu0
  %v719 = vadd.f32 0.0, %v718
  %v720 = vpop.f32.mrf.mxu0
  %v721 = vadd.f32 0.0, %v720
  %722 = vmatmul.bf16.gmra.mxu0 %v247
  %v723 = vpop.f32.mrf.mxu0
  %v724 = vadd.f32 0.0, %v723
  %v725 = vpop.f32.mrf.mxu0
  %v726 = vadd.f32 0.0, %v725
  %727 = vdwg.mxu0
  %728 = vmatpush.bf16.msra.mxu0 %v569
  %729 = vmatpush.bf16.msra.mxu0 %v568
  %730 = vmatpush.bf16.msra.mxu0 %v567
  %731 = vmatpush.bf16.msra.mxu0 %v566
  %732 = vmatpush.bf16.msra.mxu0 %v565
  %733 = vmatpush.bf16.msra.mxu0 %v564
  %734 = vmatpush.bf16.msra.mxu0 %v563
  %735 = vmatpush.bf16.msra.mxu0 %v562
  %736 = vmatmul.bf16.gmra.mxu0 %v239
  %v737 = vpop.f32.mrf.mxu0
  %v738 = vadd.f32 %v719, %v737
  %v739 = vpop.f32.mrf.mxu0
  %v740 = vadd.f32 %v721, %v739
  %741 = vmatmul.bf16.gmra.mxu0 %v248
  %v742 = vpop.f32.mrf.mxu0
  %v743 = vadd.f32 %v724, %v742
  %v744 = vpop.f32.mrf.mxu0
  %v745 = vadd.f32 %v726, %v744
  %746 = vdwg.mxu0
  %747 = vmatpush.bf16.msra.mxu0 %v577
  %748 = vmatpush.bf16.msra.mxu0 %v576
  %749 = vmatpush.bf16.msra.mxu0 %v575
  %750 = vmatpush.bf16.msra.mxu0 %v574
  %751 = vmatpush.bf16.msra.mxu0 %v573
  %752 = vmatpush.bf16.msra.mxu0 %v572
  %753 = vmatpush.bf16.msra.mxu0 %v571
  %754 = vmatpush.bf16.msra.mxu0 %v570
  %755 = vmatmul.bf16.gmra.mxu0 %v240
  %v756 = vpop.f32.mrf.mxu0
  %v757 = vadd.f32 %v738, %v756
  %v758 = vpop.f32.mrf.mxu0
  %v759 = vadd.f32 %v740, %v758
  %760 = vmatmul.bf16.gmra.mxu0 %v249
  %v761 = vpop.f32.mrf.mxu0
  %v762 = vadd.f32 %v743, %v761
  %v763 = vpop.f32.mrf.mxu0
  %v764 = vadd.f32 %v745, %v763
  %765 = vdwg.mxu0
  %766 = vmatpush.bf16.msra.mxu0 %v585
  %767 = vmatpush.bf16.msra.mxu0 %v584
  %768 = vmatpush.bf16.msra.mxu0 %v583
  %769 = vmatpush.bf16.msra.mxu0 %v582
  %770 = vmatpush.bf16.msra.mxu0 %v581
  %771 = vmatpush.bf16.msra.mxu0 %v580
  %772 = vmatpush.bf16.msra.mxu0 %v579
  %773 = vmatpush.bf16.msra.mxu0 %v578
  %774 = vmatmul.bf16.gmra.mxu0 %v241
  %v775 = vpop.f32.mrf.mxu0
  %v776 = vadd.f32 %v757, %v775
  %v777 = vpop.f32.mrf.mxu0
  %v778 = vadd.f32 %v759, %v777
  %779 = vmatmul.bf16.gmra.mxu0 %v250
  %v780 = vpop.f32.mrf.mxu0
  %v781 = vadd.f32 %v762, %v780
  %v782 = vpop.f32.mrf.mxu0
  %v783 = vadd.f32 %v764, %v782
  %784 = vdwg.mxu0
  %785 = vmatpush.bf16.msra.mxu0 %v593
  %786 = vmatpush.bf16.msra.mxu0 %v592
  %787 = vmatpush.bf16.msra.mxu0 %v591
  %788 = vmatpush.bf16.msra.mxu0 %v590
  %789 = vmatpush.bf16.msra.mxu0 %v589
  %790 = vmatpush.bf16.msra.mxu0 %v588
  %791 = vmatpush.bf16.msra.mxu0 %v587
  %792 = vmatpush.bf16.msra.mxu0 %v586
  %793 = vmatmul.bf16.gmra.mxu0 %v242
  %v794 = vpop.f32.mrf.mxu0
  %v795 = vadd.f32 %v776, %v794
  %v796 = vpop.f32.mrf.mxu0
  %v797 = vadd.f32 %v778, %v796
  %798 = vmatmul.bf16.gmra.mxu0 %v251
  %v799 = vpop.f32.mrf.mxu0
  %v800 = vadd.f32 %v781, %v799
  %v801 = vpop.f32.mrf.mxu0
  %v802 = vadd.f32 %v783, %v801
  %803 = vdwg.mxu0
  %804 = vmatpush.bf16.msra.mxu0 %v601
  %805 = vmatpush.bf16.msra.mxu0 %v600
  %806 = vmatpush.bf16.msra.mxu0 %v599
  %807 = vmatpush.bf16.msra.mxu0 %v598
  %808 = vmatpush.bf16.msra.mxu0 %v597
  %809 = vmatpush.bf16.msra.mxu0 %v596
  %810 = vmatpush.bf16.msra.mxu0 %v595
  %811 = vmatpush.bf16.msra.mxu0 %v594
  %812 = vmatmul.bf16.gmra.mxu0 %v243
  %v813 = vpop.f32.mrf.mxu0
  %v814 = vadd.f32 %v795, %v813
  %v815 = vpop.f32.mrf.mxu0
  %v816 = vadd.f32 %v797, %v815
  %817 = vmatmul.bf16.gmra.mxu0 %v252
  %v818 = vpop.f32.mrf.mxu0
  %v819 = vadd.f32 %v800, %v818
  %v820 = vpop.f32.mrf.mxu0
  %v821 = vadd.f32 %v802, %v820
  %822 = vdwg.mxu0
  %823 = vmatpush.bf16.msra.mxu0 %v609
  %824 = vmatpush.bf16.msra.mxu0 %v608
  %825 = vmatpush.bf16.msra.mxu0 %v607
  %826 = vmatpush.bf16.msra.mxu0 %v606
  %827 = vmatpush.bf16.msra.mxu0 %v605
  %828 = vmatpush.bf16.msra.mxu0 %v604
  %829 = vmatpush.bf16.msra.mxu0 %v603
  %830 = vmatpush.bf16.msra.mxu0 %v602
  %831 = vmatmul.bf16.gmra.mxu0 %v244
  %v832 = vpop.f32.mrf.mxu0
  %v833 = vadd.f32 %v814, %v832
  %v834 = vpop.f32.mrf.mxu0
  %v835 = vadd.f32 %v816, %v834
  %836 = vmatmul.bf16.gmra.mxu0 %v253
  %v837 = vpop.f32.mrf.mxu0
  %v838 = vadd.f32 %v819, %v837
  %v839 = vpop.f32.mrf.mxu0
  %v840 = vadd.f32 %v821, %v839
  %841 = vdwg.mxu0
  %842 = vmatpush.bf16.msra.mxu0 %v617
  %843 = vmatpush.bf16.msra.mxu0 %v616
  %844 = vmatpush.bf16.msra.mxu0 %v615
  %845 = vmatpush.bf16.msra.mxu0 %v614
  %846 = vmatpush.bf16.msra.mxu0 %v613
  %847 = vmatpush.bf16.msra.mxu0 %v612
  %848 = vmatpush.bf16.msra.mxu0 %v611
  %849 = vmatpush.bf16.msra.mxu0 %v610
  %850 = vmatmul.bf16.gmra.mxu0 %v245
  %v851 = vpop.f32.mrf.mxu0
  %v852 = vadd.f32 %v833, %v851
  %v853 = vpop.f32.mrf.mxu0
  %v854 = vadd.f32 %v835, %v853
  %855 = vmatmul.bf16.gmra.mxu0 %v254
  %v856 = vpop.f32.mrf.mxu0
  %v857 = vadd.f32 %v838, %v856
  %v858 = vpop.f32.mrf.mxu0
  %v859 = vadd.f32 %v840, %v858
  %860 = vdwg.mxu0
  %861 = vmatpush.bf16.msra.mxu0 0
  %862 = vmatpush.bf16.msra.mxu0 %v707
  %863 = vmatpush.bf16.msra.mxu0 %v623
  %864 = vmatpush.bf16.msra.mxu0 %v622
  %865 = vmatpush.bf16.msra.mxu0 %v621
  %866 = vmatpush.bf16.msra.mxu0 %v620
  %867 = vmatpush.bf16.msra.mxu0 %v619
  %868 = vmatpush.bf16.msra.mxu0 %v618
  %869 = vmatmul.bf16.gmra.mxu0 %v697
  %v870 = vpop.f32.mrf.mxu0
  %v871 = vadd.f32 %v852, %v870
  %v872 = vpop.f32.mrf.mxu0
  %v873 = vadd.f32 %v854, %v872
  %874 = vmatmul.bf16.gmra.mxu0 %v700
  %v875 = vpop.f32.mrf.mxu0
  %v876 = vadd.f32 %v857, %v875
  %v877 = vpop.f32.mrf.mxu0
  %v878 = vadd.f32 %v859, %v877
  %879 = vdwg.mxu0
  %v880 = vld [vmem:[%s2] sm:$0x1]
  %v882 = vperm.slane %v880, 0
  %v884 = vmul.f32 %v871, %v882
  %v885 = vmul.f32 %v873, %v882
  %v886 = vmul.f32 %v876, %v882
  %v887 = vmul.f32 %v878, %v882
  %v888 = vld [vmem:[%s3] sm:$0x1]
  %v890 = vperm.slane %v888, 0
  %v892 = vadd.f32 %v884, %v890
  %v893 = vadd.f32 %v885, %v890
  %v894 = vadd.f32 %v886, %v890
  %v895 = vadd.f32 %v887, %v890
  %vm896 = vcmp.ge.f32.partialorder %v892, 0.0
  %vm897 = vcmp.ge.f32.partialorder %v893, 0.0
  %vm898 = vcmp.ge.f32.partialorder %v894, 0.0
  %vm899 = vcmp.ge.f32.partialorder %v895, 0.0
  %v900 = vld [vmem:[%s4] sm:$0x1]
  %v902 = vperm.slane %v900, 0
  %v904 = vmul.f32 %v902, %v892
  %v905 = vmul.f32 %v902, %v893
  %v906 = vmul.f32 %v902, %v894
  %v907 = vmul.f32 %v902, %v895
  %v908 = vsel %vm896, %v892, %v904
  %v909 = vsel %vm897, %v893, %v905
  %v910 = vsel %vm898, %v894, %v906
  %v911 = vsel %vm899, %v895, %v907
  %v912 = vpack.c.bf16 %v908, %v908
  %v913 = vpack.c.bf16 %v909, %v909
  %v914 = vpack.c.bf16 %v910, %v910
  %v915 = vpack.c.bf16 %v911, %v911
  %916 = vst [vmem:[%s5] sm:$0xf] %v912
  %917 = vst [vmem:[%s5 + $0x4] sm:$0xf] %v913
  %918 = vst [vmem:[%s5 + $0x8] sm:$0xf] %v914
  %919 = vst [vmem:[%s5 + $0xc] sm:$0xf] %v915
  // Predicated region
  $region22: #{espnet_forward.32} parent=0 // pred_check
    _
  $region23: #{espnet_forward.32} parent=0 // pred_check_branch
    %921 = sbr.rel (0) target = $region25
  $region24: #{espnet_forward.32} parent=0 // pred_region
    _
  $region25: #{espnet_forward.32} parent=0 // pred_fallthru
    _
  // Predicated region
  $region26: #{espnet_forward.32} parent=0 // pred_check
    _
  $region27: #{espnet_forward.32} parent=0 // pred_check_branch
    %923 = sbr.rel (0) target = $region29
  $region28: #{espnet_forward.32} parent=0 // pred_region
    _
  $region29: #{espnet_forward.32} parent=0 // pred_fallthru
    _

// kernel: espnet_forward.41
$region0: #{espnet_forward.41}
  #allocation0 [shape = 'u32[]', space=smem, size = 0x4, offset = 0x4, fixed_abs, tag = 'smem constant byte address 0x4 - core index']
  #allocation1 [shape = 'u32[72,128]{1,0:T(1,128)}', space=vmem, size = 0x9000, scoped, tag = 'internal scratch']
  %s0 = inlined_call_operand.vmem [shape: bf16[32,256], index: 0, kind: input, shape index: {}]
  %s1 = inlined_call_operand.vmem [shape: bf16[256,128], index: 1, kind: input, shape index: {}]
  %s2 = inlined_call_operand.vmem [shape: f32[1,128], index: 2, kind: input, shape index: {}]
  %s3 = inlined_call_operand.vmem [shape: f32[1,128], index: 3, kind: input, shape index: {}]
  %s4 = inlined_call_operand.vmem [shape: f32[1,128], index: 4, kind: input, shape index: {}]
  %s5 = inlined_call_operand.vmem [shape: bf16[32,128], index: 5, kind: output, shape index: {}]
  %s6 = sld [smem:[#allocation0]]
  $region30: #{espnet_forward.41} parent=0
    _
  %s8 = ssub.s32 1, %s6
  %s9 = scalar_select 0, %s8, %s6
  // Predicated region
  $region2: #{espnet_forward.41} parent=0 // pred_check
    _
  $region3: #{espnet_forward.41} parent=0 // pred_check_branch
    %11 = sbr.rel (0) target = $region5
  $region4: #{espnet_forward.41} parent=0 // pred_region
    _
  $region5: #{espnet_forward.41} parent=0 // pred_fallthru
    _
  // Predicated region
  $region6: #{espnet_forward.41} parent=0 // pred_check
    _
  $region7: #{espnet_forward.41} parent=0 // pred_check_branch
    %13 = sbr.rel (0) target = $region9
  $region8: #{espnet_forward.41} parent=0 // pred_region
    _
  $region9: #{espnet_forward.41} parent=0 // pred_fallthru
    _
  // Predicated region
  $region10: #{espnet_forward.41} parent=0 // pred_check
    _
  $region11: #{espnet_forward.41} parent=0 // pred_check_branch
    %15 = sbr.rel (0) target = $region13
  $region12: #{espnet_forward.41} parent=0 // pred_region
    _
  $region13: #{espnet_forward.41} parent=0 // pred_fallthru
    _
  // Predicated region
  $region14: #{espnet_forward.41} parent=0 // pred_check
    _
  $region15: #{espnet_forward.41} parent=0 // pred_check_branch
    %17 = sbr.rel (0) target = $region17
  $region16: #{espnet_forward.41} parent=0 // pred_region
    _
  $region17: #{espnet_forward.41} parent=0 // pred_fallthru
    _
  // Predicated region
  $region18: #{espnet_forward.41} parent=0 // pred_check
    _
  $region19: #{espnet_forward.41} parent=0 // pred_check_branch
    %19 = sbr.rel (0) target = $region21
  $region20: #{espnet_forward.41} parent=0 // pred_region
    _
  $region21: #{espnet_forward.41} parent=0 // pred_fallthru
    _
  %v20 = vld [vmem:[%s0] sm:$0xff]
  %v21 = vld [vmem:[%s0 + $0x8] sm:$0xff]
  %v22 = vld [vmem:[%s0 + $0x10] sm:$0xff]
  %v23 = vld [vmem:[%s0 + $0x18] sm:$0xff]
  %v24 = vld [vmem:[%s1] sm:$0xf]
  %v25 = vld [vmem:[%s1 + $0x4] sm:$0xf]
  %v26 = vld [vmem:[%s1 + $0x8] sm:$0xf]
  %v27 = vld [vmem:[%s1 + $0xc] sm:$0xf]
  %v28 = vld [vmem:[%s1 + $0x10] sm:$0xf]
  %v29 = vld [vmem:[%s1 + $0x14] sm:$0xf]
  %v30 = vld [vmem:[%s1 + $0x18] sm:$0xf]
  %v31 = vld [vmem:[%s1 + $0x1c] sm:$0xf]
  %v32 = vld [vmem:[%s1 + $0x20] sm:$0xf]
  %v33 = vld [vmem:[%s1 + $0x24] sm:$0xf]
  %v34 = vld [vmem:[%s1 + $0x28] sm:$0xf]
  %v35 = vld [vmem:[%s1 + $0x2c] sm:$0xf]
  %v36 = vld [vmem:[%s1 + $0x30] sm:$0xf]
  %v37 = vld [vmem:[%s1 + $0x34] sm:$0xf]
  %v38 = vld [vmem:[%s1 + $0x38] sm:$0xf]
  %v39 = vld [vmem:[%s1 + $0x3c] sm:$0xf]
  %v40 = vld [vmem:[%s1 + $0x40] sm:$0xf]
  %v41 = vld [vmem:[%s1 + $0x44] sm:$0xf]
  %v42 = vld [vmem:[%s1 + $0x48] sm:$0xf]
  %v43 = vld [vmem:[%s1 + $0x4c] sm:$0xf]
  %v44 = vld [vmem:[%s1 + $0x50] sm:$0xf]
  %v45 = vld [vmem:[%s1 + $0x54] sm:$0xf]
  %v46 = vld [vmem:[%s1 + $0x58] sm:$0xf]
  %v47 = vld [vmem:[%s1 + $0x5c] sm:$0xf]
  %v48 = vld [vmem:[%s1 + $0x60] sm:$0xf]
  %v49 = vld [vmem:[%s1 + $0x64] sm:$0xf]
  %v50 = vld [vmem:[%s1 + $0x68] sm:$0xf]
  %v51 = vld [vmem:[%s1 + $0x6c] sm:$0xf]
  %v52 = vld [vmem:[%s1 + $0x70] sm:$0xf]
  %v53 = vld [vmem:[%s1 + $0x74] sm:$0xf]
  %v54 = vld [vmem:[%s1 + $0x78] sm:$0xf]
  %v55 = vld [vmem:[%s1 + $0x7c] sm:$0xf]
  %v60 = vunpack.c.l.b16 %v20
  %v61 = vunpack.c.h.b16 %v20
  %v62 = vunpack.c.l.b16 %v21
  %v63 = vunpack.c.h.b16 %v21
  %v64 = vunpack.c.l.b16 %v22
  %v65 = vunpack.c.h.b16 %v22
  %v66 = vunpack.c.l.b16 %v23
  %v67 = vunpack.c.h.b16 %v23
  %v68 = vpack.c.b16 %v62, %v60
  %v69 = vpack.c.b16 %v63, %v61
  %v70 = vpack.c.b16 %v66, %v64
  %v71 = vpack.c.b16 %v67, %v65
  %v108 = vunpack.c.l.b16 %v24
  %v109 = vunpack.c.l.b16 %v25
  %v110 = vunpack.c.l.b16 %v26
  %v111 = vunpack.c.l.b16 %v27
  %v112 = vunpack.c.l.b16 %v28
  %v113 = vunpack.c.l.b16 %v29
  %v114 = vunpack.c.l.b16 %v30
  %v115 = vunpack.c.l.b16 %v31
  %v116 = vunpack.c.l.b16 %v32
  %v117 = vunpack.c.l.b16 %v33
  %v118 = vunpack.c.l.b16 %v34
  %v119 = vunpack.c.l.b16 %v35
  %v120 = vunpack.c.l.b16 %v36
  %v121 = vunpack.c.l.b16 %v37
  %v122 = vunpack.c.l.b16 %v38
  %v123 = vunpack.c.l.b16 %v39
  %v124 = vunpack.c.l.b16 %v40
  %v125 = vunpack.c.l.b16 %v41
  %v126 = vunpack.c.l.b16 %v42
  %v127 = vunpack.c.l.b16 %v43
  %v128 = vunpack.c.l.b16 %v44
  %v129 = vunpack.c.l.b16 %v45
  %v130 = vunpack.c.l.b16 %v46
  %v131 = vunpack.c.l.b16 %v47
  %v132 = vunpack.c.l.b16 %v48
  %v133 = vunpack.c.l.b16 %v49
  %v134 = vunpack.c.l.b16 %v50
  %v135 = vunpack.c.l.b16 %v51
  %v136 = vunpack.c.l.b16 %v52
  %v137 = vunpack.c.l.b16 %v53
  %v138 = vunpack.c.l.b16 %v54
  %v139 = vunpack.c.l.b16 %v55
  %v140 = vpack.c.b16 %v109, %v108
  %v141 = vpack.c.b16 %v111, %v110
  %v142 = vpack.c.b16 %v113, %v112
  %v143 = vpack.c.b16 %v115, %v114
  %v144 = vpack.c.b16 %v117, %v116
  %v145 = vpack.c.b16 %v119, %v118
  %v146 = vpack.c.b16 %v121, %v120
  %v147 = vpack.c.b16 %v123, %v122
  %v148 = vpack.c.b16 %v125, %v124
  %v149 = vpack.c.b16 %v127, %v126
  %v150 = vpack.c.b16 %v129, %v128
  %v151 = vpack.c.b16 %v131, %v130
  %v152 = vpack.c.b16 %v133, %v132
  %v153 = vpack.c.b16 %v135, %v134
  %v154 = vpack.c.b16 %v137, %v136
  %v155 = vpack.c.b16 %v139, %v138
  %172 = vmatpush.bf16.msra.mxu0 %v147
  %173 = vmatpush.bf16.msra.mxu0 %v146
  %174 = vmatpush.bf16.msra.mxu0 %v145
  %175 = vmatpush.bf16.msra.mxu0 %v144
  %176 = vmatpush.bf16.msra.mxu0 %v143
  %177 = vmatpush.bf16.msra.mxu0 %v142
  %178 = vmatpush.bf16.msra.mxu0 %v141
  %179 = vmatpush.bf16.msra.mxu0 %v140
  %180 = vmatmul.bf16.gmra.mxu0 %v68
  %v181 = vpop.f32.mrf.mxu0
  %v182 = vadd.f32 0.0, %v181
  %v183 = vpop.f32.mrf.mxu0
  %v184 = vadd.f32 0.0, %v183
  %185 = vmatmul.bf16.gmra.mxu0 %v70
  %v186 = vpop.f32.mrf.mxu0
  %v187 = vadd.f32 0.0, %v186
  %v188 = vpop.f32.mrf.mxu0
  %v189 = vadd.f32 0.0, %v188
  %190 = vdwg.mxu0
  %191 = vmatpush.bf16.msra.mxu0 %v155
  %192 = vmatpush.bf16.msra.mxu0 %v154
  %193 = vmatpush.bf16.msra.mxu0 %v153
  %194 = vmatpush.bf16.msra.mxu0 %v152
  %195 = vmatpush.bf16.msra.mxu0 %v151
  %196 = vmatpush.bf16.msra.mxu0 %v150
  %197 = vmatpush.bf16.msra.mxu0 %v149
  %198 = vmatpush.bf16.msra.mxu0 %v148
  %199 = vmatmul.bf16.gmra.mxu0 %v69
  %v200 = vpop.f32.mrf.mxu0
  %v201 = vadd.f32 %v182, %v200
  %v202 = vpop.f32.mrf.mxu0
  %v203 = vadd.f32 %v184, %v202
  %204 = vmatmul.bf16.gmra.mxu0 %v71
  %v205 = vpop.f32.mrf.mxu0
  %v206 = vadd.f32 %v187, %v205
  %v207 = vpop.f32.mrf.mxu0
  %v208 = vadd.f32 %v189, %v207
  %209 = vdwg.mxu0
  %v210 = vld [vmem:[%s2] sm:$0x1]
  %v212 = vperm.slane %v210, 0
  %v214 = vmul.f32 %v201, %v212
  %v215 = vmul.f32 %v203, %v212
  %v216 = vmul.f32 %v206, %v212
  %v217 = vmul.f32 %v208, %v212
  %v218 = vld [vmem:[%s3] sm:$0x1]
  %v220 = vperm.slane %v218, 0
  %v222 = vadd.f32 %v214, %v220
  %v223 = vadd.f32 %v215, %v220
  %v224 = vadd.f32 %v216, %v220
  %v225 = vadd.f32 %v217, %v220
  %vm226 = vcmp.ge.f32.partialorder %v222, 0.0
  %vm227 = vcmp.ge.f32.partialorder %v223, 0.0
  %vm228 = vcmp.ge.f32.partialorder %v224, 0.0
  %vm229 = vcmp.ge.f32.partialorder %v225, 0.0
  %v230 = vld [vmem:[%s4] sm:$0x1]
  %v232 = vperm.slane %v230, 0
  %v234 = vmul.f32 %v232, %v222
  %v235 = vmul.f32 %v232, %v223
  %v236 = vmul.f32 %v232, %v224
  %v237 = vmul.f32 %v232, %v225
  %v238 = vsel %vm226, %v222, %v234
  %v239 = vsel %vm227, %v223, %v235
  %v240 = vsel %vm228, %v224, %v236
  %v241 = vsel %vm229, %v225, %v237
  %v242 = vpack.c.bf16 %v238, %v238
  %v243 = vpack.c.bf16 %v239, %v239
  %v244 = vpack.c.bf16 %v240, %v240
  %v245 = vpack.c.bf16 %v241, %v241
  %246 = vst [vmem:[%s5] sm:$0xf] %v242
  %247 = vst [vmem:[%s5 + $0x4] sm:$0xf] %v243
  %248 = vst [vmem:[%s5 + $0x8] sm:$0xf] %v244
  %249 = vst [vmem:[%s5 + $0xc] sm:$0xf] %v245
  // Predicated region
  $region22: #{espnet_forward.41} parent=0 // pred_check
    _
  $region23: #{espnet_forward.41} parent=0 // pred_check_branch
    %251 = sbr.rel (0) target = $region25
  $region24: #{espnet_forward.41} parent=0 // pred_region
    _
  $region25: #{espnet_forward.41} parent=0 // pred_fallthru
    _
  // Predicated region
  $region26: #{espnet_forward.41} parent=0 // pred_check
    _
  $region27: #{espnet_forward.41} parent=0 // pred_check_branch
    %253 = sbr.rel (0) target = $region29
  $region28: #{espnet_forward.41} parent=0 // pred_region
    _
  $region29: #{espnet_forward.41} parent=0 // pred_fallthru
    _

// kernel: espnet_forward.42
$region0: #{espnet_forward.42}
  #allocation0 [shape = 'u32[]', space=smem, size = 0x4, offset = 0x4, fixed_abs, tag = 'smem constant byte address 0x4 - core index']
  #allocation1 [shape = 'u32[72,128]{1,0:T(1,128)}', space=vmem, size = 0x9000, scoped, tag = 'internal scratch']
  %s0 = inlined_call_operand.vmem [shape: bf16[32,10], index: 0, kind: input, shape index: {}]
  %s1 = inlined_call_operand.vmem [shape: bf16[10,128], index: 1, kind: input, shape index: {}]
  %s2 = inlined_call_operand.vmem [shape: f32[1,128], index: 2, kind: input, shape index: {}]
  %s3 = inlined_call_operand.vmem [shape: f32[1,128], index: 3, kind: input, shape index: {}]
  %s4 = inlined_call_operand.vmem [shape: f32[1,128], index: 4, kind: input, shape index: {}]
  %s5 = inlined_call_operand.vmem [shape: bf16[32,128], index: 5, kind: output, shape index: {}]
  %s6 = sld [smem:[#allocation0]]
  $region30: #{espnet_forward.42} parent=0
    _
  %s8 = ssub.s32 1, %s6
  %s9 = scalar_select 0, %s8, %s6
  // Predicated region
  $region2: #{espnet_forward.42} parent=0 // pred_check
    _
  $region3: #{espnet_forward.42} parent=0 // pred_check_branch
    %11 = sbr.rel (0) target = $region5
  $region4: #{espnet_forward.42} parent=0 // pred_region
    _
  $region5: #{espnet_forward.42} parent=0 // pred_fallthru
    _
  // Predicated region
  $region6: #{espnet_forward.42} parent=0 // pred_check
    _
  $region7: #{espnet_forward.42} parent=0 // pred_check_branch
    %13 = sbr.rel (0) target = $region9
  $region8: #{espnet_forward.42} parent=0 // pred_region
    _
  $region9: #{espnet_forward.42} parent=0 // pred_fallthru
    _
  // Predicated region
  $region10: #{espnet_forward.42} parent=0 // pred_check
    _
  $region11: #{espnet_forward.42} parent=0 // pred_check_branch
    %15 = sbr.rel (0) target = $region13
  $region12: #{espnet_forward.42} parent=0 // pred_region
    _
  $region13: #{espnet_forward.42} parent=0 // pred_fallthru
    _
  // Predicated region
  $region14: #{espnet_forward.42} parent=0 // pred_check
    _
  $region15: #{espnet_forward.42} parent=0 // pred_check_branch
    %17 = sbr.rel (0) target = $region17
  $region16: #{espnet_forward.42} parent=0 // pred_region
    _
  $region17: #{espnet_forward.42} parent=0 // pred_fallthru
    _
  // Predicated region
  $region18: #{espnet_forward.42} parent=0 // pred_check
    _
  $region19: #{espnet_forward.42} parent=0 // pred_check_branch
    %19 = sbr.rel (0) target = $region21
  $region20: #{espnet_forward.42} parent=0 // pred_region
    _
  $region21: #{espnet_forward.42} parent=0 // pred_fallthru
    _
  %v21 = vld [vmem:[%s0] sm:$0xf]
  %v22 = vld [vmem:[%s0 + $0x4] sm:$0xf]
  %v23 = vld [vmem:[%s0 + $0x8] sm:$0xf]
  %v24 = vld [vmem:[%s0 + $0xc] sm:$0xf]
  %v25 = vld [vmem:[%s1] sm:$0xf]
  %v26 = vld [vmem:[%s1 + $0x4] sm:$0x1]
  %v31 = vunpack.c.l.b16 %v21
  %v32 = vunpack.c.l.b16 %v22
  %v33 = vunpack.c.l.b16 %v23
  %v34 = vunpack.c.l.b16 %v24
  %v35 = vpack.c.b16 %v32, %v31
  %v36 = vpack.c.b16 %v34, %v33
  %v39 = vunpack.c.l.b16 %v25
  %v40 = vunpack.c.l.b16 %v26
  %v41 = vpack.c.b16 %v40, %v39
  %vm42 = vcmask 80896
  %v44 = vsel %vm42, %v35, 0
  %v47 = vsel %vm42, %v36, 0
  %vm49 = vcmask 1044480
  %v51 = vsel %vm49, %v41, 0
  %53 = vmatpush.bf16.msra.mxu0 0
  %54 = vmatpush.bf16.msra.mxu0 0
  %55 = vmatpush.bf16.msra.mxu0 0
  %56 = vmatpush.bf16.msra.mxu0 0
  %57 = vmatpush.bf16.msra.mxu0 0
  %58 = vmatpush.bf16.msra.mxu0 0
  %59 = vmatpush.bf16.msra.mxu0 0
  %60 = vmatpush.bf16.msra.mxu0 %v51
  %61 = vmatmul.bf16.gmra.mxu0 %v44
  %v62 = vpop.f32.mrf.mxu0
  %v63 = vadd.f32 0.0, %v62
  %v64 = vpop.f32.mrf.mxu0
  %v65 = vadd.f32 0.0, %v64
  %66 = vmatmul.bf16.gmra.mxu0 %v47
  %v67 = vpop.f32.mrf.mxu0
  %v68 = vadd.f32 0.0, %v67
  %v69 = vpop.f32.mrf.mxu0
  %v70 = vadd.f32 0.0, %v69
  %71 = vdwg.mxu0
  %v72 = vld [vmem:[%s2] sm:$0x1]
  %v74 = vperm.slane %v72, 0
  %v76 = vmul.f32 %v63, %v74
  %v77 = vmul.f32 %v65, %v74
  %v78 = vmul.f32 %v68, %v74
  %v79 = vmul.f32 %v70, %v74
  %v80 = vld [vmem:[%s3] sm:$0x1]
  %v82 = vperm.slane %v80, 0
  %v84 = vadd.f32 %v76, %v82
  %v85 = vadd.f32 %v77, %v82
  %v86 = vadd.f32 %v78, %v82
  %v87 = vadd.f32 %v79, %v82
  %vm88 = vcmp.ge.f32.partialorder %v84, 0.0
  %vm89 = vcmp.ge.f32.partialorder %v85, 0.0
  %vm90 = vcmp.ge.f32.partialorder %v86, 0.0
  %vm91 = vcmp.ge.f32.partialorder %v87, 0.0
  %v92 = vld [vmem:[%s4] sm:$0x1]
  %v94 = vperm.slane %v92, 0
  %v96 = vmul.f32 %v94, %v84
  %v97 = vmul.f32 %v94, %v85
  %v98 = vmul.f32 %v94, %v86
  %v99 = vmul.f32 %v94, %v87
  %v100 = vsel %vm88, %v84, %v96
  %v101 = vsel %vm89, %v85, %v97
  %v102 = vsel %vm90, %v86, %v98
  %v103 = vsel %vm91, %v87, %v99
  %v104 = vpack.c.bf16 %v100, %v100
  %v105 = vpack.c.bf16 %v101, %v101
  %v106 = vpack.c.bf16 %v102, %v102
  %v107 = vpack.c.bf16 %v103, %v103
  %108 = vst [vmem:[%s5] sm:$0xf] %v104
  %109 = vst [vmem:[%s5 + $0x4] sm:$0xf] %v105
  %110 = vst [vmem:[%s5 + $0x8] sm:$0xf] %v106
  %111 = vst [vmem:[%s5 + $0xc] sm:$0xf] %v107
  // Predicated region
  $region22: #{espnet_forward.42} parent=0 // pred_check
    _
  $region23: #{espnet_forward.42} parent=0 // pred_check_branch
    %113 = sbr.rel (0) target = $region25
  $region24: #{espnet_forward.42} parent=0 // pred_region
    _
  $region25: #{espnet_forward.42} parent=0 // pred_fallthru
    _
  // Predicated region
  $region26: #{espnet_forward.42} parent=0 // pred_check
    _
  $region27: #{espnet_forward.42} parent=0 // pred_check_branch
    %115 = sbr.rel (0) target = $region29
  $region28: #{espnet_forward.42} parent=0 // pred_region
    _
  $region29: #{espnet_forward.42} parent=0 // pred_fallthru
    _

// kernel: espnet_forward.34
$region0: #{espnet_forward.34}
  #allocation0 [shape = 'u32[]', space=smem, size = 0x4, offset = 0x4, fixed_abs, tag = 'smem constant byte address 0x4 - core index']
  #allocation1 [shape = 'u32[72,128]{1,0:T(1,128)}', space=vmem, size = 0x9000, scoped, tag = 'internal scratch']
  %s0 = inlined_call_operand.vmem [shape: bf16[32,1125], index: 0, kind: input, shape index: {}]
  %s1 = inlined_call_operand.vmem [shape: bf16[1125,128], index: 1, kind: input, shape index: {}]
  %s2 = inlined_call_operand.vmem [shape: bf16[32,128], index: 2, kind: input, shape index: {}]
  %s3 = inlined_call_operand.vmem [shape: f32[1,128], index: 3, kind: input, shape index: {}]
  %s4 = inlined_call_operand.vmem [shape: f32[1,128], index: 4, kind: input, shape index: {}]
  %s5 = inlined_call_operand.vmem [shape: f32[1,128], index: 5, kind: input, shape index: {}]
  %s6 = inlined_call_operand.vmem [shape: bf16[32,128], index: 6, kind: output, shape index: {}]
  %s7 = sld [smem:[#allocation0]]
  $region34: #{espnet_forward.34} parent=0
    _
  %s9 = ssub.s32 1, %s7
  %s10 = scalar_select 0, %s9, %s7
  // Predicated region
  $region2: #{espnet_forward.34} parent=0 // pred_check
    _
  $region3: #{espnet_forward.34} parent=0 // pred_check_branch
    %12 = sbr.rel (0) target = $region5
  $region4: #{espnet_forward.34} parent=0 // pred_region
    _
  $region5: #{espnet_forward.34} parent=0 // pred_fallthru
    _
  // Predicated region
  $region6: #{espnet_forward.34} parent=0 // pred_check
    _
  $region7: #{espnet_forward.34} parent=0 // pred_check_branch
    %14 = sbr.rel (0) target = $region9
  $region8: #{espnet_forward.34} parent=0 // pred_region
    _
  $region9: #{espnet_forward.34} parent=0 // pred_fallthru
    _
  // Predicated region
  $region10: #{espnet_forward.34} parent=0 // pred_check
    _
  $region11: #{espnet_forward.34} parent=0 // pred_check_branch
    %16 = sbr.rel (0) target = $region13
  $region12: #{espnet_forward.34} parent=0 // pred_region
    _
  $region13: #{espnet_forward.34} parent=0 // pred_fallthru
    _
  // Predicated region
  $region14: #{espnet_forward.34} parent=0 // pred_check
    _
  $region15: #{espnet_forward.34} parent=0 // pred_check_branch
    %18 = sbr.rel (0) target = $region17
  $region16: #{espnet_forward.34} parent=0 // pred_region
    _
  $region17: #{espnet_forward.34} parent=0 // pred_fallthru
    _
  // Predicated region
  $region18: #{espnet_forward.34} parent=0 // pred_check
    _
  $region19: #{espnet_forward.34} parent=0 // pred_check_branch
    %20 = sbr.rel (0) target = $region21
  $region20: #{espnet_forward.34} parent=0 // pred_region
    _
  $region21: #{espnet_forward.34} parent=0 // pred_fallthru
    _
  // Predicated region
  $region22: #{espnet_forward.34} parent=0 // pred_check
    _
  $region23: #{espnet_forward.34} parent=0 // pred_check_branch
    %22 = sbr.rel (0) target = $region25
  $region24: #{espnet_forward.34} parent=0 // pred_region
    _
  $region25: #{espnet_forward.34} parent=0 // pred_fallthru
    _
  %v24 = vld [vmem:[%s0] sm:$0xff]
  %v25 = vld [vmem:[%s0 + $0x8] sm:$0xff]
  %v26 = vld [vmem:[%s0 + $0x10] sm:$0xff]
  %v27 = vld [vmem:[%s0 + $0x18] sm:$0xff]
  %v28 = vld [vmem:[%s0 + $0x20] sm:$0xf]
  %v29 = vld [vmem:[%s0 + $0x24] sm:$0xff]
  %v30 = vld [vmem:[%s0 + $0x2c] sm:$0xff]
  %v31 = vld [vmem:[%s0 + $0x34] sm:$0xff]
  %v32 = vld [vmem:[%s0 + $0x3c] sm:$0xff]
  %v33 = vld [vmem:[%s0 + $0x44] sm:$0xf]
  %v34 = vld [vmem:[%s0 + $0x48] sm:$0xff]
  %v35 = vld [vmem:[%s0 + $0x50] sm:$0xff]
  %v36 = vld [vmem:[%s0 + $0x58] sm:$0xff]
  %v37 = vld [vmem:[%s0 + $0x60] sm:$0xff]
  %v38 = vld [vmem:[%s0 + $0x68] sm:$0xf]
  %v39 = vld [vmem:[%s0 + $0x6c] sm:$0xff]
  %v40 = vld [vmem:[%s0 + $0x74] sm:$0xff]
  %v41 = vld [vmem:[%s0 + $0x7c] sm:$0xff]
  %v42 = vld [vmem:[%s0 + $0x84] sm:$0xff]
  %v43 = vld [vmem:[%s0 + $0x8c] sm:$0xf]
  %v44 = vld [vmem:[%s1] sm:$0xf]
  %v45 = vld [vmem:[%s1 + $0x4] sm:$0xf]
  %v46 = vld [vmem:[%s1 + $0x8] sm:$0xf]
  %v47 = vld [vmem:[%s1 + $0xc] sm:$0xf]
  %v48 = vld [vmem:[%s1 + $0x10] sm:$0xf]
  %v49 = vld [vmem:[%s1 + $0x14] sm:$0xf]
  %v50 = vld [vmem:[%s1 + $0x18] sm:$0xf]
  %v51 = vld [vmem:[%s1 + $0x1c] sm:$0xf]
  %v52 = vld [vmem:[%s1 + $0x20] sm:$0xf]
  %v53 = vld [vmem:[%s1 + $0x24] sm:$0xf]
  %v54 = vld [vmem:[%s1 + $0x28] sm:$0xf]
  %v55 = vld [vmem:[%s1 + $0x2c] sm:$0xf]
  %v56 = vld [vmem:[%s1 + $0x30] sm:$0xf]
  %v57 = vld [vmem:[%s1 + $0x34] sm:$0xf]
  %v58 = vld [vmem:[%s1 + $0x38] sm:$0xf]
  %v59 = vld [vmem:[%s1 + $0x3c] sm:$0xf]
  %v60 = vld [vmem:[%s1 + $0x40] sm:$0xf]
  %v61 = vld [vmem:[%s1 + $0x44] sm:$0xf]
  %v62 = vld [vmem:[%s1 + $0x48] sm:$0xf]
  %v63 = vld [vmem:[%s1 + $0x4c] sm:$0xf]
  %v64 = vld [vmem:[%s1 + $0x50] sm:$0xf]
  %v65 = vld [vmem:[%s1 + $0x54] sm:$0xf]
  %v66 = vld [vmem:[%s1 + $0x58] sm:$0xf]
  %v67 = vld [vmem:[%s1 + $0x5c] sm:$0xf]
  %v68 = vld [vmem:[%s1 + $0x60] sm:$0xf]
  %v69 = vld [vmem:[%s1 + $0x64] sm:$0xf]
  %v70 = vld [vmem:[%s1 + $0x68] sm:$0xf]
  %v71 = vld [vmem:[%s1 + $0x6c] sm:$0xf]
  %v72 = vld [vmem:[%s1 + $0x70] sm:$0xf]
  %v73 = vld [vmem:[%s1 + $0x74] sm:$0xf]
  %v74 = vld [vmem:[%s1 + $0x78] sm:$0xf]
  %v75 = vld [vmem:[%s1 + $0x7c] sm:$0xf]
  %v76 = vld [vmem:[%s1 + $0x80] sm:$0xf]
  %v77 = vld [vmem:[%s1 + $0x84] sm:$0xf]
  %v78 = vld [vmem:[%s1 + $0x88] sm:$0xf]
  %v79 = vld [vmem:[%s1 + $0x8c] sm:$0xf]
  %v80 = vld [vmem:[%s1 + $0x90] sm:$0xf]
  %v81 = vld [vmem:[%s1 + $0x94] sm:$0xf]
  %v82 = vld [vmem:[%s1 + $0x98] sm:$0xf]
  %v83 = vld [vmem:[%s1 + $0x9c] sm:$0xf]
  %v84 = vld [vmem:[%s1 + $0xa0] sm:$0xf]
  %v85 = vld [vmem:[%s1 + $0xa4] sm:$0xf]
  %v86 = vld [vmem:[%s1 + $0xa8] sm:$0xf]
  %v87 = vld [vmem:[%s1 + $0xac] sm:$0xf]
  %v88 = vld [vmem:[%s1 + $0xb0] sm:$0xf]
  %v89 = vld [vmem:[%s1 + $0xb4] sm:$0xf]
  %v90 = vld [vmem:[%s1 + $0xb8] sm:$0xf]
  %v91 = vld [vmem:[%s1 + $0xbc] sm:$0xf]
  %v92 = vld [vmem:[%s1 + $0xc0] sm:$0xf]
  %v93 = vld [vmem:[%s1 + $0xc4] sm:$0xf]
  %v94 = vld [vmem:[%s1 + $0xc8] sm:$0xf]
  %v95 = vld [vmem:[%s1 + $0xcc] sm:$0xf]
  %v96 = vld [vmem:[%s1 + $0xd0] sm:$0xf]
  %v97 = vld [vmem:[%s1 + $0xd4] sm:$0xf]
  %v98 = vld [vmem:[%s1 + $0xd8] sm:$0xf]
  %v99 = vld [vmem:[%s1 + $0xdc] sm:$0xf]
  %v100 = vld [vmem:[%s1 + $0xe0] sm:$0xf]
  %v101 = vld [vmem:[%s1 + $0xe4] sm:$0xf]
  %v102 = vld [vmem:[%s1 + $0xe8] sm:$0xf]
  %v103 = vld [vmem:[%s1 + $0xec] sm:$0xf]
  %v104 = vld [vmem:[%s1 + $0xf0] sm:$0xf]
  %v105 = vld [vmem:[%s1 + $0xf4] sm:$0xf]
  %v106 = vld [vmem:[%s1 + $0xf8] sm:$0xf]
  %v107 = vld [vmem:[%s1 + $0xfc] sm:$0xf]
  %v108 = vld [vmem:[%s1 + $0x100] sm:$0xf]
  %v109 = vld [vmem:[%s1 + $0x104] sm:$0xf]
  %v110 = vld [vmem:[%s1 + $0x108] sm:$0xf]
  %v111 = vld [vmem:[%s1 + $0x10c] sm:$0xf]
  %v112 = vld [vmem:[%s1 + $0x110] sm:$0xf]
  %v113 = vld [vmem:[%s1 + $0x114] sm:$0xf]
  %v114 = vld [vmem:[%s1 + $0x118] sm:$0xf]
  %v115 = vld [vmem:[%s1 + $0x11c] sm:$0xf]
  %v116 = vld [vmem:[%s1 + $0x120] sm:$0xf]
  %v117 = vld [vmem:[%s1 + $0x124] sm:$0xf]
  %v118 = vld [vmem:[%s1 + $0x128] sm:$0xf]
  %v119 = vld [vmem:[%s1 + $0x12c] sm:$0xf]
  %v120 = vld [vmem:[%s1 + $0x130] sm:$0xf]
  %v121 = vld [vmem:[%s1 + $0x134] sm:$0xf]
  %v122 = vld [vmem:[%s1 + $0x138] sm:$0xf]
  %v123 = vld [vmem:[%s1 + $0x13c] sm:$0xf]
  %v124 = vld [vmem:[%s1 + $0x140] sm:$0xf]
  %v125 = vld [vmem:[%s1 + $0x144] sm:$0xf]
  %v126 = vld [vmem:[%s1 + $0x148] sm:$0xf]
  %v127 = vld [vmem:[%s1 + $0x14c] sm:$0xf]
  %v128 = vld [vmem:[%s1 + $0x150] sm:$0xf]
  %v129 = vld [vmem:[%s1 + $0x154] sm:$0xf]
  %v130 = vld [vmem:[%s1 + $0x158] sm:$0xf]
  %v131 = vld [vmem:[%s1 + $0x15c] sm:$0xf]
  %v132 = vld [vmem:[%s1 + $0x160] sm:$0xf]
  %v133 = vld [vmem:[%s1 + $0x164] sm:$0xf]
  %v134 = vld [vmem:[%s1 + $0x168] sm:$0xf]
  %v135 = vld [vmem:[%s1 + $0x16c] sm:$0xf]
  %v136 = vld [vmem:[%s1 + $0x170] sm:$0xf]
  %v137 = vld [vmem:[%s1 + $0x174] sm:$0xf]
  %v138 = vld [vmem:[%s1 + $0x178] sm:$0xf]
  %v139 = vld [vmem:[%s1 + $0x17c] sm:$0xf]
  %v140 = vld [vmem:[%s1 + $0x180] sm:$0xf]
  %v141 = vld [vmem:[%s1 + $0x184] sm:$0xf]
  %v142 = vld [vmem:[%s1 + $0x188] sm:$0xf]
  %v143 = vld [vmem:[%s1 + $0x18c] sm:$0xf]
  %v144 = vld [vmem:[%s1 + $0x190] sm:$0xf]
  %v145 = vld [vmem:[%s1 + $0x194] sm:$0xf]
  %v146 = vld [vmem:[%s1 + $0x198] sm:$0xf]
  %v147 = vld [vmem:[%s1 + $0x19c] sm:$0xf]
  %v148 = vld [vmem:[%s1 + $0x1a0] sm:$0xf]
  %v149 = vld [vmem:[%s1 + $0x1a4] sm:$0xf]
  %v150 = vld [vmem:[%s1 + $0x1a8] sm:$0xf]
  %v151 = vld [vmem:[%s1 + $0x1ac] sm:$0xf]
  %v152 = vld [vmem:[%s1 + $0x1b0] sm:$0xf]
  %v153 = vld [vmem:[%s1 + $0x1b4] sm:$0xf]
  %v154 = vld [vmem:[%s1 + $0x1b8] sm:$0xf]
  %v155 = vld [vmem:[%s1 + $0x1bc] sm:$0xf]
  %v156 = vld [vmem:[%s1 + $0x1c0] sm:$0xf]
  %v157 = vld [vmem:[%s1 + $0x1c4] sm:$0xf]
  %v158 = vld [vmem:[%s1 + $0x1c8] sm:$0xf]
  %v159 = vld [vmem:[%s1 + $0x1cc] sm:$0xf]
  %v160 = vld [vmem:[%s1 + $0x1d0] sm:$0xf]
  %v161 = vld [vmem:[%s1 + $0x1d4] sm:$0xf]
  %v162 = vld [vmem:[%s1 + $0x1d8] sm:$0xf]
  %v163 = vld [vmem:[%s1 + $0x1dc] sm:$0xf]
  %v164 = vld [vmem:[%s1 + $0x1e0] sm:$0xf]
  %v165 = vld [vmem:[%s1 + $0x1e4] sm:$0xf]
  %v166 = vld [vmem:[%s1 + $0x1e8] sm:$0xf]
  %v167 = vld [vmem:[%s1 + $0x1ec] sm:$0xf]
  %v168 = vld [vmem:[%s1 + $0x1f0] sm:$0xf]
  %v169 = vld [vmem:[%s1 + $0x1f4] sm:$0xf]
  %v170 = vld [vmem:[%s1 + $0x1f8] sm:$0xf]
  %v171 = vld [vmem:[%s1 + $0x1fc] sm:$0xf]
  %v172 = vld [vmem:[%s1 + $0x200] sm:$0xf]
  %v173 = vld [vmem:[%s1 + $0x204] sm:$0xf]
  %v174 = vld [vmem:[%s1 + $0x208] sm:$0xf]
  %v175 = vld [vmem:[%s1 + $0x20c] sm:$0xf]
  %v176 = vld [vmem:[%s1 + $0x210] sm:$0xf]
  %v177 = vld [vmem:[%s1 + $0x214] sm:$0xf]
  %v178 = vld [vmem:[%s1 + $0x218] sm:$0xf]
  %v179 = vld [vmem:[%s1 + $0x21c] sm:$0xf]
  %v180 = vld [vmem:[%s1 + $0x220] sm:$0xf]
  %v181 = vld [vmem:[%s1 + $0x224] sm:$0xf]
  %v182 = vld [vmem:[%s1 + $0x228] sm:$0xf]
  %v183 = vld [vmem:[%s1 + $0x22c] sm:$0xf]
  %v184 = vld [vmem:[%s1 + $0x230] sm:$0x7]
  %v185 = vld [vmem:[%s2] sm:$0xf]
  %v186 = vld [vmem:[%s2 + $0x4] sm:$0xf]
  %v187 = vld [vmem:[%s2 + $0x8] sm:$0xf]
  %v188 = vld [vmem:[%s2 + $0xc] sm:$0xf]
  %v189 = vunpack.c.l.bf16 %v185
  %v190 = vunpack.c.l.bf16 %v186
  %v191 = vunpack.c.l.bf16 %v187
  %v192 = vunpack.c.l.bf16 %v188
  %v213 = vunpack.c.l.b16 %v24
  %v214 = vunpack.c.h.b16 %v24
  %v215 = vunpack.c.l.b16 %v25
  %v216 = vunpack.c.h.b16 %v25
  %v217 = vunpack.c.l.b16 %v26
  %v218 = vunpack.c.h.b16 %v26
  %v219 = vunpack.c.l.b16 %v27
  %v220 = vunpack.c.h.b16 %v27
  %v221 = vunpack.c.l.b16 %v28
  %v222 = vunpack.c.l.b16 %v29
  %v223 = vunpack.c.h.b16 %v29
  %v224 = vunpack.c.l.b16 %v30
  %v225 = vunpack.c.h.b16 %v30
  %v226 = vunpack.c.l.b16 %v31
  %v227 = vunpack.c.h.b16 %v31
  %v228 = vunpack.c.l.b16 %v32
  %v229 = vunpack.c.h.b16 %v32
  %v230 = vunpack.c.l.b16 %v33
  %v231 = vunpack.c.l.b16 %v34
  %v232 = vunpack.c.h.b16 %v34
  %v233 = vunpack.c.l.b16 %v35
  %v234 = vunpack.c.h.b16 %v35
  %v235 = vunpack.c.l.b16 %v36
  %v236 = vunpack.c.h.b16 %v36
  %v237 = vunpack.c.l.b16 %v37
  %v238 = vunpack.c.h.b16 %v37
  %v239 = vunpack.c.l.b16 %v38
  %v240 = vunpack.c.l.b16 %v39
  %v241 = vunpack.c.h.b16 %v39
  %v242 = vunpack.c.l.b16 %v40
  %v243 = vunpack.c.h.b16 %v40
  %v244 = vunpack.c.l.b16 %v41
  %v245 = vunpack.c.h.b16 %v41
  %v246 = vunpack.c.l.b16 %v42
  %v247 = vunpack.c.h.b16 %v42
  %v248 = vunpack.c.l.b16 %v43
  %v249 = vpack.c.b16 %v222, %v213
  %v250 = vpack.c.b16 %v223, %v214
  %v251 = vpack.c.b16 %v224, %v215
  %v252 = vpack.c.b16 %v225, %v216
  %v253 = vpack.c.b16 %v226, %v217
  %v254 = vpack.c.b16 %v227, %v218
  %v255 = vpack.c.b16 %v228, %v219
  %v256 = vpack.c.b16 %v229, %v220
  %v257 = vpack.c.b16 %v230, %v221
  %v258 = vpack.c.b16 %v240, %v231
  %v259 = vpack.c.b16 %v241, %v232
  %v260 = vpack.c.b16 %v242, %v233
  %v261 = vpack.c.b16 %v243, %v234
  %v262 = vpack.c.b16 %v244, %v235
  %v263 = vpack.c.b16 %v245, %v236
  %v264 = vpack.c.b16 %v246, %v237
  %v265 = vpack.c.b16 %v247, %v238
  %v266 = vpack.c.b16 %v248, %v239
  %v424 = vunpack.c.l.b16 %v44
  %v425 = vunpack.c.l.b16 %v45
  %v426 = vunpack.c.l.b16 %v46
  %v427 = vunpack.c.l.b16 %v47
  %v428 = vunpack.c.l.b16 %v48
  %v429 = vunpack.c.l.b16 %v49
  %v430 = vunpack.c.l.b16 %v50
  %v431 = vunpack.c.l.b16 %v51
  %v432 = vunpack.c.l.b16 %v52
  %v433 = vunpack.c.l.b16 %v53
  %v434 = vunpack.c.l.b16 %v54
  %v435 = vunpack.c.l.b16 %v55
  %v436 = vunpack.c.l.b16 %v56
  %v437 = vunpack.c.l.b16 %v57
  %v438 = vunpack.c.l.b16 %v58
  %v439 = vunpack.c.l.b16 %v59
  %v440 = vunpack.c.l.b16 %v60
  %v441 = vunpack.c.l.b16 %v61
  %v442 = vunpack.c.l.b16 %v62
  %v443 = vunpack.c.l.b16 %v63
  %v444 = vunpack.c.l.b16 %v64
  %v445 = vunpack.c.l.b16 %v65
  %v446 = vunpack.c.l.b16 %v66
  %v447 = vunpack.c.l.b16 %v67
  %v448 = vunpack.c.l.b16 %v68
  %v449 = vunpack.c.l.b16 %v69
  %v450 = vunpack.c.l.b16 %v70
  %v451 = vunpack.c.l.b16 %v71
  %v452 = vunpack.c.l.b16 %v72
  %v453 = vunpack.c.l.b16 %v73
  %v454 = vunpack.c.l.b16 %v74
  %v455 = vunpack.c.l.b16 %v75
  %v456 = vunpack.c.l.b16 %v76
  %v457 = vunpack.c.l.b16 %v77
  %v458 = vunpack.c.l.b16 %v78
  %v459 = vunpack.c.l.b16 %v79
  %v460 = vunpack.c.l.b16 %v80
  %v461 = vunpack.c.l.b16 %v81
  %v462 = vunpack.c.l.b16 %v82
  %v463 = vunpack.c.l.b16 %v83
  %v464 = vunpack.c.l.b16 %v84
  %v465 = vunpack.c.l.b16 %v85
  %v466 = vunpack.c.l.b16 %v86
  %v467 = vunpack.c.l.b16 %v87
  %v468 = vunpack.c.l.b16 %v88
  %v469 = vunpack.c.l.b16 %v89
  %v470 = vunpack.c.l.b16 %v90
  %v471 = vunpack.c.l.b16 %v91
  %v472 = vunpack.c.l.b16 %v92
  %v473 = vunpack.c.l.b16 %v93
  %v474 = vunpack.c.l.b16 %v94
  %v475 = vunpack.c.l.b16 %v95
  %v476 = vunpack.c.l.b16 %v96
  %v477 = vunpack.c.l.b16 %v97
  %v478 = vunpack.c.l.b16 %v98
  %v479 = vunpack.c.l.b16 %v99
  %v480 = vunpack.c.l.b16 %v100
  %v481 = vunpack.c.l.b16 %v101
  %v482 = vunpack.c.l.b16 %v102
  %v483 = vunpack.c.l.b16 %v103
  %v484 = vunpack.c.l.b16 %v104
  %v485 = vunpack.c.l.b16 %v105
  %v486 = vunpack.c.l.b16 %v106
  %v487 = vunpack.c.l.b16 %v107
  %v488 = vunpack.c.l.b16 %v108
  %v489 = vunpack.c.l.b16 %v109
  %v490 = vunpack.c.l.b16 %v110
  %v491 = vunpack.c.l.b16 %v111
  %v492 = vunpack.c.l.b16 %v112
  %v493 = vunpack.c.l.b16 %v113
  %v494 = vunpack.c.l.b16 %v114
  %v495 = vunpack.c.l.b16 %v115
  %v496 = vunpack.c.l.b16 %v116
  %v497 = vunpack.c.l.b16 %v117
  %v498 = vunpack.c.l.b16 %v118
  %v499 = vunpack.c.l.b16 %v119
  %v500 = vunpack.c.l.b16 %v120
  %v501 = vunpack.c.l.b16 %v121
  %v502 = vunpack.c.l.b16 %v122
  %v503 = vunpack.c.l.b16 %v123
  %v504 = vunpack.c.l.b16 %v124
  %v505 = vunpack.c.l.b16 %v125
  %v506 = vunpack.c.l.b16 %v126
  %v507 = vunpack.c.l.b16 %v127
  %v508 = vunpack.c.l.b16 %v128
  %v509 = vunpack.c.l.b16 %v129
  %v510 = vunpack.c.l.b16 %v130
  %v511 = vunpack.c.l.b16 %v131
  %v512 = vunpack.c.l.b16 %v132
  %v513 = vunpack.c.l.b16 %v133
  %v514 = vunpack.c.l.b16 %v134
  %v515 = vunpack.c.l.b16 %v135
  %v516 = vunpack.c.l.b16 %v136
  %v517 = vunpack.c.l.b16 %v137
  %v518 = vunpack.c.l.b16 %v138
  %v519 = vunpack.c.l.b16 %v139
  %v520 = vunpack.c.l.b16 %v140
  %v521 = vunpack.c.l.b16 %v141
  %v522 = vunpack.c.l.b16 %v142
  %v523 = vunpack.c.l.b16 %v143
  %v524 = vunpack.c.l.b16 %v144
  %v525 = vunpack.c.l.b16 %v145
  %v526 = vunpack.c.l.b16 %v146
  %v527 = vunpack.c.l.b16 %v147
  %v528 = vunpack.c.l.b16 %v148
  %v529 = vunpack.c.l.b16 %v149
  %v530 = vunpack.c.l.b16 %v150
  %v531 = vunpack.c.l.b16 %v151
  %v532 = vunpack.c.l.b16 %v152
  %v533 = vunpack.c.l.b16 %v153
  %v534 = vunpack.c.l.b16 %v154
  %v535 = vunpack.c.l.b16 %v155
  %v536 = vunpack.c.l.b16 %v156
  %v537 = vunpack.c.l.b16 %v157
  %v538 = vunpack.c.l.b16 %v158
  %v539 = vunpack.c.l.b16 %v159
  %v540 = vunpack.c.l.b16 %v160
  %v541 = vunpack.c.l.b16 %v161
  %v542 = vunpack.c.l.b16 %v162
  %v543 = vunpack.c.l.b16 %v163
  %v544 = vunpack.c.l.b16 %v164
  %v545 = vunpack.c.l.b16 %v165
  %v546 = vunpack.c.l.b16 %v166
  %v547 = vunpack.c.l.b16 %v167
  %v548 = vunpack.c.l.b16 %v168
  %v549 = vunpack.c.l.b16 %v169
  %v550 = vunpack.c.l.b16 %v170
  %v551 = vunpack.c.l.b16 %v171
  %v552 = vunpack.c.l.b16 %v172
  %v553 = vunpack.c.l.b16 %v173
  %v554 = vunpack.c.l.b16 %v174
  %v555 = vunpack.c.l.b16 %v175
  %v556 = vunpack.c.l.b16 %v176
  %v557 = vunpack.c.l.b16 %v177
  %v558 = vunpack.c.l.b16 %v178
  %v559 = vunpack.c.l.b16 %v179
  %v560 = vunpack.c.l.b16 %v180
  %v561 = vunpack.c.l.b16 %v181
  %v562 = vunpack.c.l.b16 %v182
  %v563 = vunpack.c.l.b16 %v183
  %v564 = vunpack.c.l.b16 %v184
  %v565 = vpack.c.b16 %v425, %v424
  %v566 = vpack.c.b16 %v427, %v426
  %v567 = vpack.c.b16 %v429, %v428
  %v568 = vpack.c.b16 %v431, %v430
  %v569 = vpack.c.b16 %v433, %v432
  %v570 = vpack.c.b16 %v435, %v434
  %v571 = vpack.c.b16 %v437, %v436
  %v572 = vpack.c.b16 %v439, %v438
  %v573 = vpack.c.b16 %v441, %v440
  %v574 = vpack.c.b16 %v443, %v442
  %v575 = vpack.c.b16 %v445, %v444
  %v576 = vpack.c.b16 %v447, %v446
  %v577 = vpack.c.b16 %v449, %v448
  %v578 = vpack.c.b16 %v451, %v450
  %v579 = vpack.c.b16 %v453, %v452
  %v580 = vpack.c.b16 %v455, %v454
  %v581 = vpack.c.b16 %v457, %v456
  %v582 = vpack.c.b16 %v459, %v458
  %v583 = vpack.c.b16 %v461, %v460
  %v584 = vpack.c.b16 %v463, %v462
  %v585 = vpack.c.b16 %v465, %v464
  %v586 = vpack.c.b16 %v467, %v466
  %v587 = vpack.c.b16 %v469, %v468
  %v588 = vpack.c.b16 %v471, %v470
  %v589 = vpack.c.b16 %v473, %v472
  %v590 = vpack.c.b16 %v475, %v474
  %v591 = vpack.c.b16 %v477, %v476
  %v592 = vpack.c.b16 %v479, %v478
  %v593 = vpack.c.b16 %v481, %v480
  %v594 = vpack.c.b16 %v483, %v482
  %v595 = vpack.c.b16 %v485, %v484
  %v596 = vpack.c.b16 %v487, %v486
  %v597 = vpack.c.b16 %v489, %v488
  %v598 = vpack.c.b16 %v491, %v490
  %v599 = vpack.c.b16 %v493, %v492
  %v600 = vpack.c.b16 %v495, %v494
  %v601 = vpack.c.b16 %v497, %v496
  %v602 = vpack.c.b16 %v499, %v498
  %v603 = vpack.c.b16 %v501, %v500
  %v604 = vpack.c.b16 %v503, %v502
  %v605 = vpack.c.b16 %v505, %v504
  %v606 = vpack.c.b16 %v507, %v506
  %v607 = vpack.c.b16 %v509, %v508
  %v608 = vpack.c.b16 %v511, %v510
  %v609 = vpack.c.b16 %v513, %v512
  %v610 = vpack.c.b16 %v515, %v514
  %v611 = vpack.c.b16 %v517, %v516
  %v612 = vpack.c.b16 %v519, %v518
  %v613 = vpack.c.b16 %v521, %v520
  %v614 = vpack.c.b16 %v523, %v522
  %v615 = vpack.c.b16 %v525, %v524
  %v616 = vpack.c.b16 %v527, %v526
  %v617 = vpack.c.b16 %v529, %v528
  %v618 = vpack.c.b16 %v531, %v530
  %v619 = vpack.c.b16 %v533, %v532
  %v620 = vpack.c.b16 %v535, %v534
  %v621 = vpack.c.b16 %v537, %v536
  %v622 = vpack.c.b16 %v539, %v538
  %v623 = vpack.c.b16 %v541, %v540
  %v624 = vpack.c.b16 %v543, %v542
  %v625 = vpack.c.b16 %v545, %v544
  %v626 = vpack.c.b16 %v547, %v546
  %v627 = vpack.c.b16 %v549, %v548
  %v628 = vpack.c.b16 %v551, %v550
  %v629 = vpack.c.b16 %v553, %v552
  %v630 = vpack.c.b16 %v555, %v554
  %v631 = vpack.c.b16 %v557, %v556
  %v632 = vpack.c.b16 %v559, %v558
  %v633 = vpack.c.b16 %v561, %v560
  %v634 = vpack.c.b16 %v563, %v562
  %v635 = vpack.c.b16 %v564, %v564
  %vm706 = vcmask 826368
  %v708 = vsel %vm706, %v257, 0
  %v711 = vsel %vm706, %v266, 0
  %vm713 = vcmask 1041408
  %vm714 = vcmask 1042432
  %v715 = vsel %vm713, 4294967295, 65535
  %v716 = vsel %vm714, %v715, 0
  %v718 = vand.u32 %v635, %v716
  %720 = vmatpush.bf16.msra.mxu0 %v572
  %721 = vmatpush.bf16.msra.mxu0 %v571
  %722 = vmatpush.bf16.msra.mxu0 %v570
  %723 = vmatpush.bf16.msra.mxu0 %v569
  %724 = vmatpush.bf16.msra.mxu0 %v568
  %725 = vmatpush.bf16.msra.mxu0 %v567
  %726 = vmatpush.bf16.msra.mxu0 %v566
  %727 = vmatpush.bf16.msra.mxu0 %v565
  %728 = vmatmul.bf16.gmra.mxu0 %v249
  %v729 = vpop.f32.mrf.mxu0
  %v730 = vadd.f32 %v189, %v729
  %v731 = vpop.f32.mrf.mxu0
  %v732 = vadd.f32 %v190, %v731
  %733 = vmatmul.bf16.gmra.mxu0 %v258
  %v734 = vpop.f32.mrf.mxu0
  %v735 = vadd.f32 %v191, %v734
  %v736 = vpop.f32.mrf.mxu0
  %v737 = vadd.f32 %v192, %v736
  %738 = vdwg.mxu0
  %739 = vmatpush.bf16.msra.mxu0 %v580
  %740 = vmatpush.bf16.msra.mxu0 %v579
  %741 = vmatpush.bf16.msra.mxu0 %v578
  %742 = vmatpush.bf16.msra.mxu0 %v577
  %743 = vmatpush.bf16.msra.mxu0 %v576
  %744 = vmatpush.bf16.msra.mxu0 %v575
  %745 = vmatpush.bf16.msra.mxu0 %v574
  %746 = vmatpush.bf16.msra.mxu0 %v573
  %747 = vmatmul.bf16.gmra.mxu0 %v250
  %v748 = vpop.f32.mrf.mxu0
  %v749 = vadd.f32 %v730, %v748
  %v750 = vpop.f32.mrf.mxu0
  %v751 = vadd.f32 %v732, %v750
  %752 = vmatmul.bf16.gmra.mxu0 %v259
  %v753 = vpop.f32.mrf.mxu0
  %v754 = vadd.f32 %v735, %v753
  %v755 = vpop.f32.mrf.mxu0
  %v756 = vadd.f32 %v737, %v755
  %757 = vdwg.mxu0
  %758 = vmatpush.bf16.msra.mxu0 %v588
  %759 = vmatpush.bf16.msra.mxu0 %v587
  %760 = vmatpush.bf16.msra.mxu0 %v586
  %761 = vmatpush.bf16.msra.mxu0 %v585
  %762 = vmatpush.bf16.msra.mxu0 %v584
  %763 = vmatpush.bf16.msra.mxu0 %v583
  %764 = vmatpush.bf16.msra.mxu0 %v582
  %765 = vmatpush.bf16.msra.mxu0 %v581
  %766 = vmatmul.bf16.gmra.mxu0 %v251
  %v767 = vpop.f32.mrf.mxu0
  %v768 = vadd.f32 %v749, %v767
  %v769 = vpop.f32.mrf.mxu0
  %v770 = vadd.f32 %v751, %v769
  %771 = vmatmul.bf16.gmra.mxu0 %v260
  %v772 = vpop.f32.mrf.mxu0
  %v773 = vadd.f32 %v754, %v772
  %v774 = vpop.f32.mrf.mxu0
  %v775 = vadd.f32 %v756, %v774
  %776 = vdwg.mxu0
  %777 = vmatpush.bf16.msra.mxu0 %v596
  %778 = vmatpush.bf16.msra.mxu0 %v595
  %779 = vmatpush.bf16.msra.mxu0 %v594
  %780 = vmatpush.bf16.msra.mxu0 %v593
  %781 = vmatpush.bf16.msra.mxu0 %v592
  %782 = vmatpush.bf16.msra.mxu0 %v591
  %783 = vmatpush.bf16.msra.mxu0 %v590
  %784 = vmatpush.bf16.msra.mxu0 %v589
  %785 = vmatmul.bf16.gmra.mxu0 %v252
  %v786 = vpop.f32.mrf.mxu0
  %v787 = vadd.f32 %v768, %v786
  %v788 = vpop.f32.mrf.mxu0
  %v789 = vadd.f32 %v770, %v788
  %790 = vmatmul.bf16.gmra.mxu0 %v261
  %v791 = vpop.f32.mrf.mxu0
  %v792 = vadd.f32 %v773, %v791
  %v793 = vpop.f32.mrf.mxu0
  %v794 = vadd.f32 %v775, %v793
  %795 = vdwg.mxu0
  %796 = vmatpush.bf16.msra.mxu0 %v604
  %797 = vmatpush.bf16.msra.mxu0 %v603
  %798 = vmatpush.bf16.msra.mxu0 %v602
  %799 = vmatpush.bf16.msra.mxu0 %v601
  %800 = vmatpush.bf16.msra.mxu0 %v600
  %801 = vmatpush.bf16.msra.mxu0 %v599
  %802 = vmatpush.bf16.msra.mxu0 %v598
  %803 = vmatpush.bf16.msra.mxu0 %v597
  %804 = vmatmul.bf16.gmra.mxu0 %v253
  %v805 = vpop.f32.mrf.mxu0
  %v806 = vadd.f32 %v787, %v805
  %v807 = vpop.f32.mrf.mxu0
  %v808 = vadd.f32 %v789, %v807
  %809 = vmatmul.bf16.gmra.mxu0 %v262
  %v810 = vpop.f32.mrf.mxu0
  %v811 = vadd.f32 %v792, %v810
  %v812 = vpop.f32.mrf.mxu0
  %v813 = vadd.f32 %v794, %v812
  %814 = vdwg.mxu0
  %815 = vmatpush.bf16.msra.mxu0 %v612
  %816 = vmatpush.bf16.msra.mxu0 %v611
  %817 = vmatpush.bf16.msra.mxu0 %v610
  %818 = vmatpush.bf16.msra.mxu0 %v609
  %819 = vmatpush.bf16.msra.mxu0 %v608
  %820 = vmatpush.bf16.msra.mxu0 %v607
  %821 = vmatpush.bf16.msra.mxu0 %v606
  %822 = vmatpush.bf16.msra.mxu0 %v605
  %823 = vmatmul.bf16.gmra.mxu0 %v254
  %v824 = vpop.f32.mrf.mxu0
  %v825 = vadd.f32 %v806, %v824
  %v826 = vpop.f32.mrf.mxu0
  %v827 = vadd.f32 %v808, %v826
  %828 = vmatmul.bf16.gmra.mxu0 %v263
  %v829 = vpop.f32.mrf.mxu0
  %v830 = vadd.f32 %v811, %v829
  %v831 = vpop.f32.mrf.mxu0
  %v832 = vadd.f32 %v813, %v831
  %833 = vdwg.mxu0
  %834 = vmatpush.bf16.msra.mxu0 %v620
  %835 = vmatpush.bf16.msra.mxu0 %v619
  %836 = vmatpush.bf16.msra.mxu0 %v618
  %837 = vmatpush.bf16.msra.mxu0 %v617
  %838 = vmatpush.bf16.msra.mxu0 %v616
  %839 = vmatpush.bf16.msra.mxu0 %v615
  %840 = vmatpush.bf16.msra.mxu0 %v614
  %841 = vmatpush.bf16.msra.mxu0 %v613
  %842 = vmatmul.bf16.gmra.mxu0 %v255
  %v843 = vpop.f32.mrf.mxu0
  %v844 = vadd.f32 %v825, %v843
  %v845 = vpop.f32.mrf.mxu0
  %v846 = vadd.f32 %v827, %v845
  %847 = vmatmul.bf16.gmra.mxu0 %v264
  %v848 = vpop.f32.mrf.mxu0
  %v849 = vadd.f32 %v830, %v848
  %v850 = vpop.f32.mrf.mxu0
  %v851 = vadd.f32 %v832, %v850
  %852 = vdwg.mxu0
  %853 = vmatpush.bf16.msra.mxu0 %v628
  %854 = vmatpush.bf16.msra.mxu0 %v627
  %855 = vmatpush.bf16.msra.mxu0 %v626
  %856 = vmatpush.bf16.msra.mxu0 %v625
  %857 = vmatpush.bf16.msra.mxu0 %v624
  %858 = vmatpush.bf16.msra.mxu0 %v623
  %859 = vmatpush.bf16.msra.mxu0 %v622
  %860 = vmatpush.bf16.msra.mxu0 %v621
  %861 = vmatmul.bf16.gmra.mxu0 %v256
  %v862 = vpop.f32.mrf.mxu0
  %v863 = vadd.f32 %v844, %v862
  %v864 = vpop.f32.mrf.mxu0
  %v865 = vadd.f32 %v846, %v864
  %866 = vmatmul.bf16.gmra.mxu0 %v265
  %v867 = vpop.f32.mrf.mxu0
  %v868 = vadd.f32 %v849, %v867
  %v869 = vpop.f32.mrf.mxu0
  %v870 = vadd.f32 %v851, %v869
  %871 = vdwg.mxu0
  %872 = vmatpush.bf16.msra.mxu0 0
  %873 = vmatpush.bf16.msra.mxu0 %v718
  %874 = vmatpush.bf16.msra.mxu0 %v634
  %875 = vmatpush.bf16.msra.mxu0 %v633
  %876 = vmatpush.bf16.msra.mxu0 %v632
  %877 = vmatpush.bf16.msra.mxu0 %v631
  %878 = vmatpush.bf16.msra.mxu0 %v630
  %879 = vmatpush.bf16.msra.mxu0 %v629
  %880 = vmatmul.bf16.gmra.mxu0 %v708
  %v881 = vpop.f32.mrf.mxu0
  %v882 = vadd.f32 %v863, %v881
  %v883 = vpop.f32.mrf.mxu0
  %v884 = vadd.f32 %v865, %v883
  %885 = vmatmul.bf16.gmra.mxu0 %v711
  %v886 = vpop.f32.mrf.mxu0
  %v887 = vadd.f32 %v868, %v886
  %v888 = vpop.f32.mrf.mxu0
  %v889 = vadd.f32 %v870, %v888
  %890 = vdwg.mxu0
  %v891 = vld [vmem:[%s3] sm:$0x1]
  %v893 = vperm.slane %v891, 0
  %v895 = vmul.f32 %v882, %v893
  %v896 = vmul.f32 %v884, %v893
  %v897 = vmul.f32 %v887, %v893
  %v898 = vmul.f32 %v889, %v893
  %v899 = vld [vmem:[%s4] sm:$0x1]
  %v901 = vperm.slane %v899, 0
  %v903 = vadd.f32 %v895, %v901
  %v904 = vadd.f32 %v896, %v901
  %v905 = vadd.f32 %v897, %v901
  %v906 = vadd.f32 %v898, %v901
  %vm907 = vcmp.ge.f32.partialorder %v903, 0.0
  %vm908 = vcmp.ge.f32.partialorder %v904, 0.0
  %vm909 = vcmp.ge.f32.partialorder %v905, 0.0
  %vm910 = vcmp.ge.f32.partialorder %v906, 0.0
  %v911 = vld [vmem:[%s5] sm:$0x1]
  %v913 = vperm.slane %v911, 0
  %v915 = vmul.f32 %v913, %v903
  %v916 = vmul.f32 %v913, %v904
  %v917 = vmul.f32 %v913, %v905
  %v918 = vmul.f32 %v913, %v906
  %v919 = vsel %vm907, %v903, %v915
  %v920 = vsel %vm908, %v904, %v916
  %v921 = vsel %vm909, %v905, %v917
  %v922 = vsel %vm910, %v906, %v918
  %v923 = vpack.c.bf16 %v919, %v919
  %v924 = vpack.c.bf16 %v920, %v920
  %v925 = vpack.c.bf16 %v921, %v921
  %v926 = vpack.c.bf16 %v922, %v922
  %927 = vst [vmem:[%s6] sm:$0xf] %v923
  %928 = vst [vmem:[%s6 + $0x4] sm:$0xf] %v924
  %929 = vst [vmem:[%s6 + $0x8] sm:$0xf] %v925
  %930 = vst [vmem:[%s6 + $0xc] sm:$0xf] %v926
  // Predicated region
  $region26: #{espnet_forward.34} parent=0 // pred_check
    _
  $region27: #{espnet_forward.34} parent=0 // pred_check_branch
    %932 = sbr.rel (0) target = $region29
  $region28: #{espnet_forward.34} parent=0 // pred_region
    _
  $region29: #{espnet_forward.34} parent=0 // pred_fallthru
    _
  // Predicated region
  $region30: #{espnet_forward.34} parent=0 // pred_check
    _
  $region31: #{espnet_forward.34} parent=0 // pred_check_branch
    %934 = sbr.rel (0) target = $region33
  $region32: #{espnet_forward.34} parent=0 // pred_region
    _
  $region33: #{espnet_forward.34} parent=0 // pred_fallthru
    _

// kernel: espnet_forward.43
$region0: #{espnet_forward.43}
  #allocation0 [shape = 'u32[]', space=smem, size = 0x4, offset = 0x4, fixed_abs, tag = 'smem constant byte address 0x4 - core index']
  #allocation1 [shape = 'u32[72,128]{1,0:T(1,128)}', space=vmem, size = 0x9000, scoped, tag = 'internal scratch']
  %s0 = inlined_call_operand.vmem [shape: bf16[128,20], index: 0, kind: input, shape index: {}]
  %s1 = inlined_call_operand.vmem [shape: bf16[20,128], index: 1, kind: input, shape index: {}]
  %s2 = inlined_call_operand.vmem [shape: f32[1,128], index: 2, kind: input, shape index: {}]
  %s3 = inlined_call_operand.vmem [shape: f32[1,128], index: 3, kind: input, shape index: {}]
  %s4 = inlined_call_operand.vmem [shape: f32[1,128], index: 4, kind: input, shape index: {}]
  %s5 = inlined_call_operand.vmem [shape: bf16[128,128], index: 5, kind: output, shape index: {}]
  %s6 = sld [smem:[#allocation0]]
  $region30: #{espnet_forward.43} parent=0
    _
  %s8 = ssub.s32 1, %s6
  %s9 = scalar_select 0, %s8, %s6
  // Predicated region
  $region2: #{espnet_forward.43} parent=0 // pred_check
    _
  $region3: #{espnet_forward.43} parent=0 // pred_check_branch
    %11 = sbr.rel (0) target = $region5
  $region4: #{espnet_forward.43} parent=0 // pred_region
    _
  $region5: #{espnet_forward.43} parent=0 // pred_fallthru
    _
  // Predicated region
  $region6: #{espnet_forward.43} parent=0 // pred_check
    _
  $region7: #{espnet_forward.43} parent=0 // pred_check_branch
    %13 = sbr.rel (0) target = $region9
  $region8: #{espnet_forward.43} parent=0 // pred_region
    _
  $region9: #{espnet_forward.43} parent=0 // pred_fallthru
    _
  // Predicated region
  $region10: #{espnet_forward.43} parent=0 // pred_check
    _
  $region11: #{espnet_forward.43} parent=0 // pred_check_branch
    %15 = sbr.rel (0) target = $region13
  $region12: #{espnet_forward.43} parent=0 // pred_region
    _
  $region13: #{espnet_forward.43} parent=0 // pred_fallthru
    _
  // Predicated region
  $region14: #{espnet_forward.43} parent=0 // pred_check
    _
  $region15: #{espnet_forward.43} parent=0 // pred_check_branch
    %17 = sbr.rel (0) target = $region17
  $region16: #{espnet_forward.43} parent=0 // pred_region
    _
  $region17: #{espnet_forward.43} parent=0 // pred_fallthru
    _
  // Predicated region
  $region18: #{espnet_forward.43} parent=0 // pred_check
    _
  $region19: #{espnet_forward.43} parent=0 // pred_check_branch
    %19 = sbr.rel (0) target = $region21
  $region20: #{espnet_forward.43} parent=0 // pred_region
    _
  $region21: #{espnet_forward.43} parent=0 // pred_fallthru
    _
  %v21 = vld [vmem:[%s0] sm:$0xf]
  %v22 = vld [vmem:[%s0 + $0x4] sm:$0xf]
  %v23 = vld [vmem:[%s0 + $0x8] sm:$0xf]
  %v24 = vld [vmem:[%s0 + $0xc] sm:$0xf]
  %v25 = vld [vmem:[%s0 + $0x10] sm:$0xf]
  %v26 = vld [vmem:[%s0 + $0x14] sm:$0xf]
  %v27 = vld [vmem:[%s0 + $0x18] sm:$0xf]
  %v28 = vld [vmem:[%s0 + $0x1c] sm:$0xf]
  %v29 = vld [vmem:[%s0 + $0x20] sm:$0xf]
  %v30 = vld [vmem:[%s0 + $0x24] sm:$0xf]
  %v31 = vld [vmem:[%s0 + $0x28] sm:$0xf]
  %v32 = vld [vmem:[%s0 + $0x2c] sm:$0xf]
  %v33 = vld [vmem:[%s0 + $0x30] sm:$0xf]
  %v34 = vld [vmem:[%s0 + $0x34] sm:$0xf]
  %v35 = vld [vmem:[%s0 + $0x38] sm:$0xf]
  %v36 = vld [vmem:[%s0 + $0x3c] sm:$0xf]
  %v37 = vld [vmem:[%s1] sm:$0xf]
  %v38 = vld [vmem:[%s1 + $0x4] sm:$0xf]
  %v39 = vld [vmem:[%s1 + $0x8] sm:$0x3]
  %v56 = vunpack.c.l.b16 %v21
  %v57 = vunpack.c.l.b16 %v22
  %v58 = vunpack.c.l.b16 %v23
  %v59 = vunpack.c.l.b16 %v24
  %v60 = vunpack.c.l.b16 %v25
  %v61 = vunpack.c.l.b16 %v26
  %v62 = vunpack.c.l.b16 %v27
  %v63 = vunpack.c.l.b16 %v28
  %v64 = vunpack.c.l.b16 %v29
  %v65 = vunpack.c.l.b16 %v30
  %v66 = vunpack.c.l.b16 %v31
  %v67 = vunpack.c.l.b16 %v32
  %v68 = vunpack.c.l.b16 %v33
  %v69 = vunpack.c.l.b16 %v34
  %v70 = vunpack.c.l.b16 %v35
  %v71 = vunpack.c.l.b16 %v36
  %v72 = vpack.c.b16 %v57, %v56
  %v73 = vpack.c.b16 %v59, %v58
  %v74 = vpack.c.b16 %v61, %v60
  %v75 = vpack.c.b16 %v63, %v62
  %v76 = vpack.c.b16 %v65, %v64
  %v77 = vpack.c.b16 %v67, %v66
  %v78 = vpack.c.b16 %v69, %v68
  %v79 = vpack.c.b16 %v71, %v70
  %v83 = vunpack.c.l.b16 %v37
  %v84 = vunpack.c.l.b16 %v38
  %v85 = vunpack.c.l.b16 %v39
  %v86 = vpack.c.b16 %v84, %v83
  %v87 = vpack.c.b16 %v85, %v85
  %vm89 = vcmask 162816
  %v91 = vsel %vm89, %v72, 0
  %v94 = vsel %vm89, %v73, 0
  %v97 = vsel %vm89, %v74, 0
  %v100 = vsel %vm89, %v75, 0
  %v103 = vsel %vm89, %v76, 0
  %v106 = vsel %vm89, %v77, 0
  %v109 = vsel %vm89, %v78, 0
  %v112 = vsel %vm89, %v79, 0
  %vm114 = vcmask 1041408
  %v116 = vsel %vm114, %v87, 0
  %118 = vmatpush.bf16.msra.mxu0 0
  %119 = vmatpush.bf16.msra.mxu0 0
  %120 = vmatpush.bf16.msra.mxu0 0
  %121 = vmatpush.bf16.msra.mxu0 0
  %122 = vmatpush.bf16.msra.mxu0 0
  %123 = vmatpush.bf16.msra.mxu0 0
  %124 = vmatpush.bf16.msra.mxu0 %v116
  %125 = vmatpush.bf16.msra.mxu0 %v86
  %126 = vmatmul.bf16.gmra.mxu0 %v91
  %v127 = vpop.f32.mrf.mxu0
  %v128 = vadd.f32 0.0, %v127
  %v129 = vpop.f32.mrf.mxu0
  %v130 = vadd.f32 0.0, %v129
  %131 = vmatmul.bf16.gmra.mxu0 %v94
  %v132 = vpop.f32.mrf.mxu0
  %v133 = vadd.f32 0.0, %v132
  %v134 = vpop.f32.mrf.mxu0
  %v135 = vadd.f32 0.0, %v134
  %136 = vmatmul.bf16.gmra.mxu0 %v97
  %v137 = vpop.f32.mrf.mxu0
  %v138 = vadd.f32 0.0, %v137
  %v139 = vpop.f32.mrf.mxu0
  %v140 = vadd.f32 0.0, %v139
  %141 = vmatmul.bf16.gmra.mxu0 %v100
  %v142 = vpop.f32.mrf.mxu0
  %v143 = vadd.f32 0.0, %v142
  %v144 = vpop.f32.mrf.mxu0
  %v145 = vadd.f32 0.0, %v144
  %146 = vmatmul.bf16.gmra.mxu0 %v103
  %v147 = vpop.f32.mrf.mxu0
  %v148 = vadd.f32 0.0, %v147
  %v149 = vpop.f32.mrf.mxu0
  %v150 = vadd.f32 0.0, %v149
  %151 = vmatmul.bf16.gmra.mxu0 %v106
  %v152 = vpop.f32.mrf.mxu0
  %v153 = vadd.f32 0.0, %v152
  %v154 = vpop.f32.mrf.mxu0
  %v155 = vadd.f32 0.0, %v154
  %156 = vmatmul.bf16.gmra.mxu0 %v109
  %v157 = vpop.f32.mrf.mxu0
  %v158 = vadd.f32 0.0, %v157
  %v159 = vpop.f32.mrf.mxu0
  %v160 = vadd.f32 0.0, %v159
  %161 = vmatmul.bf16.gmra.mxu0 %v112
  %v162 = vpop.f32.mrf.mxu0
  %v163 = vadd.f32 0.0, %v162
  %v164 = vpop.f32.mrf.mxu0
  %v165 = vadd.f32 0.0, %v164
  %166 = vdwg.mxu0
  %v167 = vld [vmem:[%s2] sm:$0x1]
  %v169 = vperm.slane %v167, 0
  %v171 = vmul.f32 %v128, %v169
  %v172 = vmul.f32 %v130, %v169
  %v173 = vmul.f32 %v133, %v169
  %v174 = vmul.f32 %v135, %v169
  %v175 = vmul.f32 %v138, %v169
  %v176 = vmul.f32 %v140, %v169
  %v177 = vmul.f32 %v143, %v169
  %v178 = vmul.f32 %v145, %v169
  %v179 = vmul.f32 %v148, %v169
  %v180 = vmul.f32 %v150, %v169
  %v181 = vmul.f32 %v153, %v169
  %v182 = vmul.f32 %v155, %v169
  %v183 = vmul.f32 %v158, %v169
  %v184 = vmul.f32 %v160, %v169
  %v185 = vmul.f32 %v163, %v169
  %v186 = vmul.f32 %v165, %v169
  %v187 = vld [vmem:[%s3] sm:$0x1]
  %v189 = vperm.slane %v187, 0
  %v191 = vadd.f32 %v171, %v189
  %v192 = vadd.f32 %v172, %v189
  %v193 = vadd.f32 %v173, %v189
  %v194 = vadd.f32 %v174, %v189
  %v195 = vadd.f32 %v175, %v189
  %v196 = vadd.f32 %v176, %v189
  %v197 = vadd.f32 %v177, %v189
  %v198 = vadd.f32 %v178, %v189
  %v199 = vadd.f32 %v179, %v189
  %v200 = vadd.f32 %v180, %v189
  %v201 = vadd.f32 %v181, %v189
  %v202 = vadd.f32 %v182, %v189
  %v203 = vadd.f32 %v183, %v189
  %v204 = vadd.f32 %v184, %v189
  %v205 = vadd.f32 %v185, %v189
  %v206 = vadd.f32 %v186, %v189
  %vm207 = vcmp.ge.f32.partialorder %v191, 0.0
  %vm208 = vcmp.ge.f32.partialorder %v192, 0.0
  %vm209 = vcmp.ge.f32.partialorder %v193, 0.0
  %vm210 = vcmp.ge.f32.partialorder %v194, 0.0
  %vm211 = vcmp.ge.f32.partialorder %v195, 0.0
  %vm212 = vcmp.ge.f32.partialorder %v196, 0.0
  %vm213 = vcmp.ge.f32.partialorder %v197, 0.0
  %vm214 = vcmp.ge.f32.partialorder %v198, 0.0
  %vm215 = vcmp.ge.f32.partialorder %v199, 0.0
  %vm216 = vcmp.ge.f32.partialorder %v200, 0.0
  %vm217 = vcmp.ge.f32.partialorder %v201, 0.0
  %vm218 = vcmp.ge.f32.partialorder %v202, 0.0
  %vm219 = vcmp.ge.f32.partialorder %v203, 0.0
  %vm220 = vcmp.ge.f32.partialorder %v204, 0.0
  %vm221 = vcmp.ge.f32.partialorder %v205, 0.0
  %vm222 = vcmp.ge.f32.partialorder %v206, 0.0
  %v223 = vld [vmem:[%s4] sm:$0x1]
  %v225 = vperm.slane %v223, 0
  %v227 = vmul.f32 %v225, %v191
  %v228 = vmul.f32 %v225, %v192
  %v229 = vmul.f32 %v225, %v193
  %v230 = vmul.f32 %v225, %v194
  %v231 = vmul.f32 %v225, %v195
  %v232 = vmul.f32 %v225, %v196
  %v233 = vmul.f32 %v225, %v197
  %v234 = vmul.f32 %v225, %v198
  %v235 = vmul.f32 %v225, %v199
  %v236 = vmul.f32 %v225, %v200
  %v237 = vmul.f32 %v225, %v201
  %v238 = vmul.f32 %v225, %v202
  %v239 = vmul.f32 %v225, %v203
  %v240 = vmul.f32 %v225, %v204
  %v241 = vmul.f32 %v225, %v205
  %v242 = vmul.f32 %v225, %v206
  %v243 = vsel %vm207, %v191, %v227
  %v244 = vsel %vm208, %v192, %v228
  %v245 = vsel %vm209, %v193, %v229
  %v246 = vsel %vm210, %v194, %v230
  %v247 = vsel %vm211, %v195, %v231
  %v248 = vsel %vm212, %v196, %v232
  %v249 = vsel %vm213, %v197, %v233
  %v250 = vsel %vm214, %v198, %v234
  %v251 = vsel %vm215, %v199, %v235
  %v252 = vsel %vm216, %v200, %v236
  %v253 = vsel %vm217, %v201, %v237
  %v254 = vsel %vm218, %v202, %v238
  %v255 = vsel %vm219, %v203, %v239
  %v256 = vsel %vm220, %v204, %v240
  %v257 = vsel %vm221, %v205, %v241
  %v258 = vsel %vm222, %v206, %v242
  %v259 = vpack.c.bf16 %v243, %v243
  %v260 = vpack.c.bf16 %v244, %v244
  %v261 = vpack.c.bf16 %v245, %v245
  %v262 = vpack.c.bf16 %v246, %v246
  %v263 = vpack.c.bf16 %v247, %v247
  %v264 = vpack.c.bf16 %v248, %v248
  %v265 = vpack.c.bf16 %v249, %v249
  %v266 = vpack.c.bf16 %v250, %v250
  %v267 = vpack.c.bf16 %v251, %v251
  %v268 = vpack.c.bf16 %v252, %v252
  %v269 = vpack.c.bf16 %v253, %v253
  %v270 = vpack.c.bf16 %v254, %v254
  %v271 = vpack.c.bf16 %v255, %v255
  %v272 = vpack.c.bf16 %v256, %v256
  %v273 = vpack.c.bf16 %v257, %v257
  %v274 = vpack.c.bf16 %v258, %v258
  %275 = vst [vmem:[%s5] sm:$0xf] %v259
  %276 = vst [vmem:[%s5 + $0x4] sm:$0xf] %v260
  %277 = vst [vmem:[%s5 + $0x8] sm:$0xf] %v261
  %278 = vst [vmem:[%s5 + $0xc] sm:$0xf] %v262
  %279 = vst [vmem:[%s5 + $0x10] sm:$0xf] %v263
  %280 = vst [vmem:[%s5 + $0x14] sm:$0xf] %v264
  %281 = vst [vmem:[%s5 + $0x18] sm:$0xf] %v265
  %282 = vst [vmem:[%s5 + $0x1c] sm:$0xf] %v266
  %283 = vst [vmem:[%s5 + $0x20] sm:$0xf] %v267
  %284 = vst [vmem:[%s5 + $0x24] sm:$0xf] %v268
  %285 = vst [vmem:[%s5 + $0x28] sm:$0xf] %v269
  %286 = vst [vmem:[%s5 + $0x2c] sm:$0xf] %v270
  %287 = vst [vmem:[%s5 + $0x30] sm:$0xf] %v271
  %288 = vst [vmem:[%s5 + $0x34] sm:$0xf] %v272
  %289 = vst [vmem:[%s5 + $0x38] sm:$0xf] %v273
  %290 = vst [vmem:[%s5 + $0x3c] sm:$0xf] %v274
  // Predicated region
  $region22: #{espnet_forward.43} parent=0 // pred_check
    _
  $region23: #{espnet_forward.43} parent=0 // pred_check_branch
    %292 = sbr.rel (0) target = $region25
  $region24: #{espnet_forward.43} parent=0 // pred_region
    _
  $region25: #{espnet_forward.43} parent=0 // pred_fallthru
    _
  // Predicated region
  $region26: #{espnet_forward.43} parent=0 // pred_check
    _
  $region27: #{espnet_forward.43} parent=0 // pred_check_branch
    %294 = sbr.rel (0) target = $region29
  $region28: #{espnet_forward.43} parent=0 // pred_region
    _
  $region29: #{espnet_forward.43} parent=0 // pred_fallthru
    _

// kernel: espnet_forward.44
$region0: #{espnet_forward.44}
  #allocation0 [shape = 'u32[]', space=smem, size = 0x4, offset = 0x4, fixed_abs, tag = 'smem constant byte address 0x4 - core index']
  #allocation1 [shape = 'u32[72,128]{1,0:T(1,128)}', space=vmem, size = 0x9000, scoped, tag = 'internal scratch']
  %s0 = inlined_call_operand.vmem [shape: bf16[128,90], index: 0, kind: input, shape index: {}]
  %s1 = inlined_call_operand.vmem [shape: bf16[90,128], index: 1, kind: input, shape index: {}]
  %s2 = inlined_call_operand.vmem [shape: f32[1,128], index: 2, kind: input, shape index: {}]
  %s3 = inlined_call_operand.vmem [shape: f32[1,128], index: 3, kind: input, shape index: {}]
  %s4 = inlined_call_operand.vmem [shape: f32[1,128], index: 4, kind: input, shape index: {}]
  %s5 = inlined_call_operand.vmem [shape: bf16[128,128], index: 5, kind: output, shape index: {}]
  %s6 = sld [smem:[#allocation0]]
  $region30: #{espnet_forward.44} parent=0
    _
  %s8 = ssub.s32 1, %s6
  %s9 = scalar_select 0, %s8, %s6
  // Predicated region
  $region2: #{espnet_forward.44} parent=0 // pred_check
    _
  $region3: #{espnet_forward.44} parent=0 // pred_check_branch
    %11 = sbr.rel (0) target = $region5
  $region4: #{espnet_forward.44} parent=0 // pred_region
    _
  $region5: #{espnet_forward.44} parent=0 // pred_fallthru
    _
  // Predicated region
  $region6: #{espnet_forward.44} parent=0 // pred_check
    _
  $region7: #{espnet_forward.44} parent=0 // pred_check_branch
    %13 = sbr.rel (0) target = $region9
  $region8: #{espnet_forward.44} parent=0 // pred_region
    _
  $region9: #{espnet_forward.44} parent=0 // pred_fallthru
    _
  // Predicated region
  $region10: #{espnet_forward.44} parent=0 // pred_check
    _
  $region11: #{espnet_forward.44} parent=0 // pred_check_branch
    %15 = sbr.rel (0) target = $region13
  $region12: #{espnet_forward.44} parent=0 // pred_region
    _
  $region13: #{espnet_forward.44} parent=0 // pred_fallthru
    _
  // Predicated region
  $region14: #{espnet_forward.44} parent=0 // pred_check
    _
  $region15: #{espnet_forward.44} parent=0 // pred_check_branch
    %17 = sbr.rel (0) target = $region17
  $region16: #{espnet_forward.44} parent=0 // pred_region
    _
  $region17: #{espnet_forward.44} parent=0 // pred_fallthru
    _
  // Predicated region
  $region18: #{espnet_forward.44} parent=0 // pred_check
    _
  $region19: #{espnet_forward.44} parent=0 // pred_check_branch
    %19 = sbr.rel (0) target = $region21
  $region20: #{espnet_forward.44} parent=0 // pred_region
    _
  $region21: #{espnet_forward.44} parent=0 // pred_fallthru
    _
  %v21 = vld [vmem:[%s0] sm:$0xf]
  %v22 = vld [vmem:[%s0 + $0x4] sm:$0xf]
  %v23 = vld [vmem:[%s0 + $0x8] sm:$0xf]
  %v24 = vld [vmem:[%s0 + $0xc] sm:$0xf]
  %v25 = vld [vmem:[%s0 + $0x10] sm:$0xf]
  %v26 = vld [vmem:[%s0 + $0x14] sm:$0xf]
  %v27 = vld [vmem:[%s0 + $0x18] sm:$0xf]
  %v28 = vld [vmem:[%s0 + $0x1c] sm:$0xf]
  %v29 = vld [vmem:[%s0 + $0x20] sm:$0xf]
  %v30 = vld [vmem:[%s0 + $0x24] sm:$0xf]
  %v31 = vld [vmem:[%s0 + $0x28] sm:$0xf]
  %v32 = vld [vmem:[%s0 + $0x2c] sm:$0xf]
  %v33 = vld [vmem:[%s0 + $0x30] sm:$0xf]
  %v34 = vld [vmem:[%s0 + $0x34] sm:$0xf]
  %v35 = vld [vmem:[%s0 + $0x38] sm:$0xf]
  %v36 = vld [vmem:[%s0 + $0x3c] sm:$0xf]
  %v37 = vld [vmem:[%s1] sm:$0xf]
  %v38 = vld [vmem:[%s1 + $0x4] sm:$0xf]
  %v39 = vld [vmem:[%s1 + $0x8] sm:$0xf]
  %v40 = vld [vmem:[%s1 + $0xc] sm:$0xf]
  %v41 = vld [vmem:[%s1 + $0x10] sm:$0xf]
  %v42 = vld [vmem:[%s1 + $0x14] sm:$0xf]
  %v43 = vld [vmem:[%s1 + $0x18] sm:$0xf]
  %v44 = vld [vmem:[%s1 + $0x1c] sm:$0xf]
  %v45 = vld [vmem:[%s1 + $0x20] sm:$0xf]
  %v46 = vld [vmem:[%s1 + $0x24] sm:$0xf]
  %v47 = vld [vmem:[%s1 + $0x28] sm:$0xf]
  %v48 = vld [vmem:[%s1 + $0x2c] sm:$0x1]
  %v65 = vunpack.c.l.b16 %v21
  %v66 = vunpack.c.l.b16 %v22
  %v67 = vunpack.c.l.b16 %v23
  %v68 = vunpack.c.l.b16 %v24
  %v69 = vunpack.c.l.b16 %v25
  %v70 = vunpack.c.l.b16 %v26
  %v71 = vunpack.c.l.b16 %v27
  %v72 = vunpack.c.l.b16 %v28
  %v73 = vunpack.c.l.b16 %v29
  %v74 = vunpack.c.l.b16 %v30
  %v75 = vunpack.c.l.b16 %v31
  %v76 = vunpack.c.l.b16 %v32
  %v77 = vunpack.c.l.b16 %v33
  %v78 = vunpack.c.l.b16 %v34
  %v79 = vunpack.c.l.b16 %v35
  %v80 = vunpack.c.l.b16 %v36
  %v81 = vpack.c.b16 %v66, %v65
  %v82 = vpack.c.b16 %v68, %v67
  %v83 = vpack.c.b16 %v70, %v69
  %v84 = vpack.c.b16 %v72, %v71
  %v85 = vpack.c.b16 %v74, %v73
  %v86 = vpack.c.b16 %v76, %v75
  %v87 = vpack.c.b16 %v78, %v77
  %v88 = vpack.c.b16 %v80, %v79
  %v101 = vunpack.c.l.b16 %v37
  %v102 = vunpack.c.l.b16 %v38
  %v103 = vunpack.c.l.b16 %v39
  %v104 = vunpack.c.l.b16 %v40
  %v105 = vunpack.c.l.b16 %v41
  %v106 = vunpack.c.l.b16 %v42
  %v107 = vunpack.c.l.b16 %v43
  %v108 = vunpack.c.l.b16 %v44
  %v109 = vunpack.c.l.b16 %v45
  %v110 = vunpack.c.l.b16 %v46
  %v111 = vunpack.c.l.b16 %v47
  %v112 = vunpack.c.l.b16 %v48
  %v113 = vpack.c.b16 %v102, %v101
  %v114 = vpack.c.b16 %v104, %v103
  %v115 = vpack.c.b16 %v106, %v105
  %v116 = vpack.c.b16 %v108, %v107
  %v117 = vpack.c.b16 %v110, %v109
  %v118 = vpack.c.b16 %v112, %v111
  %vm124 = vcmask 736256
  %v126 = vsel %vm124, %v81, 0
  %v129 = vsel %vm124, %v82, 0
  %v132 = vsel %vm124, %v83, 0
  %v135 = vsel %vm124, %v84, 0
  %v138 = vsel %vm124, %v85, 0
  %v141 = vsel %vm124, %v86, 0
  %v144 = vsel %vm124, %v87, 0
  %v147 = vsel %vm124, %v88, 0
  %vm149 = vcmask 1044480
  %v151 = vsel %vm149, %v118, 0
  %153 = vmatpush.bf16.msra.mxu0 0
  %154 = vmatpush.bf16.msra.mxu0 0
  %155 = vmatpush.bf16.msra.mxu0 %v151
  %156 = vmatpush.bf16.msra.mxu0 %v117
  %157 = vmatpush.bf16.msra.mxu0 %v116
  %158 = vmatpush.bf16.msra.mxu0 %v115
  %159 = vmatpush.bf16.msra.mxu0 %v114
  %160 = vmatpush.bf16.msra.mxu0 %v113
  %161 = vmatmul.bf16.gmra.mxu0 %v126
  %v162 = vpop.f32.mrf.mxu0
  %v163 = vadd.f32 0.0, %v162
  %v164 = vpop.f32.mrf.mxu0
  %v165 = vadd.f32 0.0, %v164
  %166 = vmatmul.bf16.gmra.mxu0 %v129
  %v167 = vpop.f32.mrf.mxu0
  %v168 = vadd.f32 0.0, %v167
  %v169 = vpop.f32.mrf.mxu0
  %v170 = vadd.f32 0.0, %v169
  %171 = vmatmul.bf16.gmra.mxu0 %v132
  %v172 = vpop.f32.mrf.mxu0
  %v173 = vadd.f32 0.0, %v172
  %v174 = vpop.f32.mrf.mxu0
  %v175 = vadd.f32 0.0, %v174
  %176 = vmatmul.bf16.gmra.mxu0 %v135
  %v177 = vpop.f32.mrf.mxu0
  %v178 = vadd.f32 0.0, %v177
  %v179 = vpop.f32.mrf.mxu0
  %v180 = vadd.f32 0.0, %v179
  %181 = vmatmul.bf16.gmra.mxu0 %v138
  %v182 = vpop.f32.mrf.mxu0
  %v183 = vadd.f32 0.0, %v182
  %v184 = vpop.f32.mrf.mxu0
  %v185 = vadd.f32 0.0, %v184
  %186 = vmatmul.bf16.gmra.mxu0 %v141
  %v187 = vpop.f32.mrf.mxu0
  %v188 = vadd.f32 0.0, %v187
  %v189 = vpop.f32.mrf.mxu0
  %v190 = vadd.f32 0.0, %v189
  %191 = vmatmul.bf16.gmra.mxu0 %v144
  %v192 = vpop.f32.mrf.mxu0
  %v193 = vadd.f32 0.0, %v192
  %v194 = vpop.f32.mrf.mxu0
  %v195 = vadd.f32 0.0, %v194
  %196 = vmatmul.bf16.gmra.mxu0 %v147
  %v197 = vpop.f32.mrf.mxu0
  %v198 = vadd.f32 0.0, %v197
  %v199 = vpop.f32.mrf.mxu0
  %v200 = vadd.f32 0.0, %v199
  %201 = vdwg.mxu0
  %v202 = vld [vmem:[%s2] sm:$0x1]
  %v204 = vperm.slane %v202, 0
  %v206 = vmul.f32 %v163, %v204
  %v207 = vmul.f32 %v165, %v204
  %v208 = vmul.f32 %v168, %v204
  %v209 = vmul.f32 %v170, %v204
  %v210 = vmul.f32 %v173, %v204
  %v211 = vmul.f32 %v175, %v204
  %v212 = vmul.f32 %v178, %v204
  %v213 = vmul.f32 %v180, %v204
  %v214 = vmul.f32 %v183, %v204
  %v215 = vmul.f32 %v185, %v204
  %v216 = vmul.f32 %v188, %v204
  %v217 = vmul.f32 %v190, %v204
  %v218 = vmul.f32 %v193, %v204
  %v219 = vmul.f32 %v195, %v204
  %v220 = vmul.f32 %v198, %v204
  %v221 = vmul.f32 %v200, %v204
  %v222 = vld [vmem:[%s3] sm:$0x1]
  %v224 = vperm.slane %v222, 0
  %v226 = vadd.f32 %v206, %v224
  %v227 = vadd.f32 %v207, %v224
  %v228 = vadd.f32 %v208, %v224
  %v229 = vadd.f32 %v209, %v224
  %v230 = vadd.f32 %v210, %v224
  %v231 = vadd.f32 %v211, %v224
  %v232 = vadd.f32 %v212, %v224
  %v233 = vadd.f32 %v213, %v224
  %v234 = vadd.f32 %v214, %v224
  %v235 = vadd.f32 %v215, %v224
  %v236 = vadd.f32 %v216, %v224
  %v237 = vadd.f32 %v217, %v224
  %v238 = vadd.f32 %v218, %v224
  %v239 = vadd.f32 %v219, %v224
  %v240 = vadd.f32 %v220, %v224
  %v241 = vadd.f32 %v221, %v224
  %vm242 = vcmp.ge.f32.partialorder %v226, 0.0
  %vm243 = vcmp.ge.f32.partialorder %v227, 0.0
  %vm244 = vcmp.ge.f32.partialorder %v228, 0.0
  %vm245 = vcmp.ge.f32.partialorder %v229, 0.0
  %vm246 = vcmp.ge.f32.partialorder %v230, 0.0
  %vm247 = vcmp.ge.f32.partialorder %v231, 0.0
  %vm248 = vcmp.ge.f32.partialorder %v232, 0.0
  %vm249 = vcmp.ge.f32.partialorder %v233, 0.0
  %vm250 = vcmp.ge.f32.partialorder %v234, 0.0
  %vm251 = vcmp.ge.f32.partialorder %v235, 0.0
  %vm252 = vcmp.ge.f32.partialorder %v236, 0.0
  %vm253 = vcmp.ge.f32.partialorder %v237, 0.0
  %vm254 = vcmp.ge.f32.partialorder %v238, 0.0
  %vm255 = vcmp.ge.f32.partialorder %v239, 0.0
  %vm256 = vcmp.ge.f32.partialorder %v240, 0.0
  %vm257 = vcmp.ge.f32.partialorder %v241, 0.0
  %v258 = vld [vmem:[%s4] sm:$0x1]
  %v260 = vperm.slane %v258, 0
  %v262 = vmul.f32 %v260, %v226
  %v263 = vmul.f32 %v260, %v227
  %v264 = vmul.f32 %v260, %v228
  %v265 = vmul.f32 %v260, %v229
  %v266 = vmul.f32 %v260, %v230
  %v267 = vmul.f32 %v260, %v231
  %v268 = vmul.f32 %v260, %v232
  %v269 = vmul.f32 %v260, %v233
  %v270 = vmul.f32 %v260, %v234
  %v271 = vmul.f32 %v260, %v235
  %v272 = vmul.f32 %v260, %v236
  %v273 = vmul.f32 %v260, %v237
  %v274 = vmul.f32 %v260, %v238
  %v275 = vmul.f32 %v260, %v239
  %v276 = vmul.f32 %v260, %v240
  %v277 = vmul.f32 %v260, %v241
  %v278 = vsel %vm242, %v226, %v262
  %v279 = vsel %vm243, %v227, %v263
  %v280 = vsel %vm244, %v228, %v264
  %v281 = vsel %vm245, %v229, %v265
  %v282 = vsel %vm246, %v230, %v266
  %v283 = vsel %vm247, %v231, %v267
  %v284 = vsel %vm248, %v232, %v268
  %v285 = vsel %vm249, %v233, %v269
  %v286 = vsel %vm250, %v234, %v270
  %v287 = vsel %vm251, %v235, %v271
  %v288 = vsel %vm252, %v236, %v272
  %v289 = vsel %vm253, %v237, %v273
  %v290 = vsel %vm254, %v238, %v274
  %v291 = vsel %vm255, %v239, %v275
  %v292 = vsel %vm256, %v240, %v276
  %v293 = vsel %vm257, %v241, %v277
  %v294 = vpack.c.bf16 %v278, %v278
  %v295 = vpack.c.bf16 %v279, %v279
  %v296 = vpack.c.bf16 %v280, %v280
  %v297 = vpack.c.bf16 %v281, %v281
  %v298 = vpack.c.bf16 %v282, %v282
  %v299 = vpack.c.bf16 %v283, %v283
  %v300 = vpack.c.bf16 %v284, %v284
  %v301 = vpack.c.bf16 %v285, %v285
  %v302 = vpack.c.bf16 %v286, %v286
  %v303 = vpack.c.bf16 %v287, %v287
  %v304 = vpack.c.bf16 %v288, %v288
  %v305 = vpack.c.bf16 %v289, %v289
  %v306 = vpack.c.bf16 %v290, %v290
  %v307 = vpack.c.bf16 %v291, %v291
  %v308 = vpack.c.bf16 %v292, %v292
  %v309 = vpack.c.bf16 %v293, %v293
  %310 = vst [vmem:[%s5] sm:$0xf] %v294
  %311 = vst [vmem:[%s5 + $0x4] sm:$0xf] %v295
  %312 = vst [vmem:[%s5 + $0x8] sm:$0xf] %v296
  %313 = vst [vmem:[%s5 + $0xc] sm:$0xf] %v297
  %314 = vst [vmem:[%s5 + $0x10] sm:$0xf] %v298
  %315 = vst [vmem:[%s5 + $0x14] sm:$0xf] %v299
  %316 = vst [vmem:[%s5 + $0x18] sm:$0xf] %v300
  %317 = vst [vmem:[%s5 + $0x1c] sm:$0xf] %v301
  %318 = vst [vmem:[%s5 + $0x20] sm:$0xf] %v302
  %319 = vst [vmem:[%s5 + $0x24] sm:$0xf] %v303
  %320 = vst [vmem:[%s5 + $0x28] sm:$0xf] %v304
  %321 = vst [vmem:[%s5 + $0x2c] sm:$0xf] %v305
  %322 = vst [vmem:[%s5 + $0x30] sm:$0xf] %v306
  %323 = vst [vmem:[%s5 + $0x34] sm:$0xf] %v307
  %324 = vst [vmem:[%s5 + $0x38] sm:$0xf] %v308
  %325 = vst [vmem:[%s5 + $0x3c] sm:$0xf] %v309
  // Predicated region
  $region22: #{espnet_forward.44} parent=0 // pred_check
    _
  $region23: #{espnet_forward.44} parent=0 // pred_check_branch
    %327 = sbr.rel (0) target = $region25
  $region24: #{espnet_forward.44} parent=0 // pred_region
    _
  $region25: #{espnet_forward.44} parent=0 // pred_fallthru
    _
  // Predicated region
  $region26: #{espnet_forward.44} parent=0 // pred_check
    _
  $region27: #{espnet_forward.44} parent=0 // pred_check_branch
    %329 = sbr.rel (0) target = $region29
  $region28: #{espnet_forward.44} parent=0 // pred_region
    _
  $region29: #{espnet_forward.44} parent=0 // pred_fallthru
    _

// kernel: espnet_forward.45
$region0: #{espnet_forward.45}
  #allocation0 [shape = 'u32[]', space=smem, size = 0x4, offset = 0x4, fixed_abs, tag = 'smem constant byte address 0x4 - core index']
  #allocation1 [shape = 'u32[72,128]{1,0:T(1,128)}', space=vmem, size = 0x9000, scoped, tag = 'internal scratch']
  %s0 = inlined_call_operand.vmem [shape: bf16[128,10], index: 0, kind: input, shape index: {}]
  %s1 = inlined_call_operand.vmem [shape: bf16[10,128], index: 1, kind: input, shape index: {}]
  %s2 = inlined_call_operand.vmem [shape: f32[1,128], index: 2, kind: input, shape index: {}]
  %s3 = inlined_call_operand.vmem [shape: f32[1,128], index: 3, kind: input, shape index: {}]
  %s4 = inlined_call_operand.vmem [shape: f32[1,128], index: 4, kind: input, shape index: {}]
  %s5 = inlined_call_operand.vmem [shape: bf16[128,128], index: 5, kind: output, shape index: {}]
  %s6 = sld [smem:[#allocation0]]
  $region30: #{espnet_forward.45} parent=0
    _
  %s8 = ssub.s32 1, %s6
  %s9 = scalar_select 0, %s8, %s6
  // Predicated region
  $region2: #{espnet_forward.45} parent=0 // pred_check
    _
  $region3: #{espnet_forward.45} parent=0 // pred_check_branch
    %11 = sbr.rel (0) target = $region5
  $region4: #{espnet_forward.45} parent=0 // pred_region
    _
  $region5: #{espnet_forward.45} parent=0 // pred_fallthru
    _
  // Predicated region
  $region6: #{espnet_forward.45} parent=0 // pred_check
    _
  $region7: #{espnet_forward.45} parent=0 // pred_check_branch
    %13 = sbr.rel (0) target = $region9
  $region8: #{espnet_forward.45} parent=0 // pred_region
    _
  $region9: #{espnet_forward.45} parent=0 // pred_fallthru
    _
  // Predicated region
  $region10: #{espnet_forward.45} parent=0 // pred_check
    _
  $region11: #{espnet_forward.45} parent=0 // pred_check_branch
    %15 = sbr.rel (0) target = $region13
  $region12: #{espnet_forward.45} parent=0 // pred_region
    _
  $region13: #{espnet_forward.45} parent=0 // pred_fallthru
    _
  // Predicated region
  $region14: #{espnet_forward.45} parent=0 // pred_check
    _
  $region15: #{espnet_forward.45} parent=0 // pred_check_branch
    %17 = sbr.rel (0) target = $region17
  $region16: #{espnet_forward.45} parent=0 // pred_region
    _
  $region17: #{espnet_forward.45} parent=0 // pred_fallthru
    _
  // Predicated region
  $region18: #{espnet_forward.45} parent=0 // pred_check
    _
  $region19: #{espnet_forward.45} parent=0 // pred_check_branch
    %19 = sbr.rel (0) target = $region21
  $region20: #{espnet_forward.45} parent=0 // pred_region
    _
  $region21: #{espnet_forward.45} parent=0 // pred_fallthru
    _
  %v21 = vld [vmem:[%s0] sm:$0xf]
  %v22 = vld [vmem:[%s0 + $0x4] sm:$0xf]
  %v23 = vld [vmem:[%s0 + $0x8] sm:$0xf]
  %v24 = vld [vmem:[%s0 + $0xc] sm:$0xf]
  %v25 = vld [vmem:[%s0 + $0x10] sm:$0xf]
  %v26 = vld [vmem:[%s0 + $0x14] sm:$0xf]
  %v27 = vld [vmem:[%s0 + $0x18] sm:$0xf]
  %v28 = vld [vmem:[%s0 + $0x1c] sm:$0xf]
  %v29 = vld [vmem:[%s0 + $0x20] sm:$0xf]
  %v30 = vld [vmem:[%s0 + $0x24] sm:$0xf]
  %v31 = vld [vmem:[%s0 + $0x28] sm:$0xf]
  %v32 = vld [vmem:[%s0 + $0x2c] sm:$0xf]
  %v33 = vld [vmem:[%s0 + $0x30] sm:$0xf]
  %v34 = vld [vmem:[%s0 + $0x34] sm:$0xf]
  %v35 = vld [vmem:[%s0 + $0x38] sm:$0xf]
  %v36 = vld [vmem:[%s0 + $0x3c] sm:$0xf]
  %v37 = vld [vmem:[%s1] sm:$0xf]
  %v38 = vld [vmem:[%s1 + $0x4] sm:$0x1]
  %v55 = vunpack.c.l.b16 %v21
  %v56 = vunpack.c.l.b16 %v22
  %v57 = vunpack.c.l.b16 %v23
  %v58 = vunpack.c.l.b16 %v24
  %v59 = vunpack.c.l.b16 %v25
  %v60 = vunpack.c.l.b16 %v26
  %v61 = vunpack.c.l.b16 %v27
  %v62 = vunpack.c.l.b16 %v28
  %v63 = vunpack.c.l.b16 %v29
  %v64 = vunpack.c.l.b16 %v30
  %v65 = vunpack.c.l.b16 %v31
  %v66 = vunpack.c.l.b16 %v32
  %v67 = vunpack.c.l.b16 %v33
  %v68 = vunpack.c.l.b16 %v34
  %v69 = vunpack.c.l.b16 %v35
  %v70 = vunpack.c.l.b16 %v36
  %v71 = vpack.c.b16 %v56, %v55
  %v72 = vpack.c.b16 %v58, %v57
  %v73 = vpack.c.b16 %v60, %v59
  %v74 = vpack.c.b16 %v62, %v61
  %v75 = vpack.c.b16 %v64, %v63
  %v76 = vpack.c.b16 %v66, %v65
  %v77 = vpack.c.b16 %v68, %v67
  %v78 = vpack.c.b16 %v70, %v69
  %v81 = vunpack.c.l.b16 %v37
  %v82 = vunpack.c.l.b16 %v38
  %v83 = vpack.c.b16 %v82, %v81
  %vm84 = vcmask 80896
  %v86 = vsel %vm84, %v71, 0
  %v89 = vsel %vm84, %v72, 0
  %v92 = vsel %vm84, %v73, 0
  %v95 = vsel %vm84, %v74, 0
  %v98 = vsel %vm84, %v75, 0
  %v101 = vsel %vm84, %v76, 0
  %v104 = vsel %vm84, %v77, 0
  %v107 = vsel %vm84, %v78, 0
  %vm109 = vcmask 1044480
  %v111 = vsel %vm109, %v83, 0
  %113 = vmatpush.bf16.msra.mxu0 0
  %114 = vmatpush.bf16.msra.mxu0 0
  %115 = vmatpush.bf16.msra.mxu0 0
  %116 = vmatpush.bf16.msra.mxu0 0
  %117 = vmatpush.bf16.msra.mxu0 0
  %118 = vmatpush.bf16.msra.mxu0 0
  %119 = vmatpush.bf16.msra.mxu0 0
  %120 = vmatpush.bf16.msra.mxu0 %v111
  %121 = vmatmul.bf16.gmra.mxu0 %v86
  %v122 = vpop.f32.mrf.mxu0
  %v123 = vadd.f32 0.0, %v122
  %v124 = vpop.f32.mrf.mxu0
  %v125 = vadd.f32 0.0, %v124
  %126 = vmatmul.bf16.gmra.mxu0 %v89
  %v127 = vpop.f32.mrf.mxu0
  %v128 = vadd.f32 0.0, %v127
  %v129 = vpop.f32.mrf.mxu0
  %v130 = vadd.f32 0.0, %v129
  %131 = vmatmul.bf16.gmra.mxu0 %v92
  %v132 = vpop.f32.mrf.mxu0
  %v133 = vadd.f32 0.0, %v132
  %v134 = vpop.f32.mrf.mxu0
  %v135 = vadd.f32 0.0, %v134
  %136 = vmatmul.bf16.gmra.mxu0 %v95
  %v137 = vpop.f32.mrf.mxu0
  %v138 = vadd.f32 0.0, %v137
  %v139 = vpop.f32.mrf.mxu0
  %v140 = vadd.f32 0.0, %v139
  %141 = vmatmul.bf16.gmra.mxu0 %v98
  %v142 = vpop.f32.mrf.mxu0
  %v143 = vadd.f32 0.0, %v142
  %v144 = vpop.f32.mrf.mxu0
  %v145 = vadd.f32 0.0, %v144
  %146 = vmatmul.bf16.gmra.mxu0 %v101
  %v147 = vpop.f32.mrf.mxu0
  %v148 = vadd.f32 0.0, %v147
  %v149 = vpop.f32.mrf.mxu0
  %v150 = vadd.f32 0.0, %v149
  %151 = vmatmul.bf16.gmra.mxu0 %v104
  %v152 = vpop.f32.mrf.mxu0
  %v153 = vadd.f32 0.0, %v152
  %v154 = vpop.f32.mrf.mxu0
  %v155 = vadd.f32 0.0, %v154
  %156 = vmatmul.bf16.gmra.mxu0 %v107
  %v157 = vpop.f32.mrf.mxu0
  %v158 = vadd.f32 0.0, %v157
  %v159 = vpop.f32.mrf.mxu0
  %v160 = vadd.f32 0.0, %v159
  %161 = vdwg.mxu0
  %v162 = vld [vmem:[%s2] sm:$0x1]
  %v164 = vperm.slane %v162, 0
  %v166 = vmul.f32 %v123, %v164
  %v167 = vmul.f32 %v125, %v164
  %v168 = vmul.f32 %v128, %v164
  %v169 = vmul.f32 %v130, %v164
  %v170 = vmul.f32 %v133, %v164
  %v171 = vmul.f32 %v135, %v164
  %v172 = vmul.f32 %v138, %v164
  %v173 = vmul.f32 %v140, %v164
  %v174 = vmul.f32 %v143, %v164
  %v175 = vmul.f32 %v145, %v164
  %v176 = vmul.f32 %v148, %v164
  %v177 = vmul.f32 %v150, %v164
  %v178 = vmul.f32 %v153, %v164
  %v179 = vmul.f32 %v155, %v164
  %v180 = vmul.f32 %v158, %v164
  %v181 = vmul.f32 %v160, %v164
  %v182 = vld [vmem:[%s3] sm:$0x1]
  %v184 = vperm.slane %v182, 0
  %v186 = vadd.f32 %v166, %v184
  %v187 = vadd.f32 %v167, %v184
  %v188 = vadd.f32 %v168, %v184
  %v189 = vadd.f32 %v169, %v184
  %v190 = vadd.f32 %v170, %v184
  %v191 = vadd.f32 %v171, %v184
  %v192 = vadd.f32 %v172, %v184
  %v193 = vadd.f32 %v173, %v184
  %v194 = vadd.f32 %v174, %v184
  %v195 = vadd.f32 %v175, %v184
  %v196 = vadd.f32 %v176, %v184
  %v197 = vadd.f32 %v177, %v184
  %v198 = vadd.f32 %v178, %v184
  %v199 = vadd.f32 %v179, %v184
  %v200 = vadd.f32 %v180, %v184
  %v201 = vadd.f32 %v181, %v184
  %vm202 = vcmp.ge.f32.partialorder %v186, 0.0
  %vm203 = vcmp.ge.f32.partialorder %v187, 0.0
  %vm204 = vcmp.ge.f32.partialorder %v188, 0.0
  %vm205 = vcmp.ge.f32.partialorder %v189, 0.0
  %vm206 = vcmp.ge.f32.partialorder %v190, 0.0
  %vm207 = vcmp.ge.f32.partialorder %v191, 0.0
  %vm208 = vcmp.ge.f32.partialorder %v192, 0.0
  %vm209 = vcmp.ge.f32.partialorder %v193, 0.0
  %vm210 = vcmp.ge.f32.partialorder %v194, 0.0
  %vm211 = vcmp.ge.f32.partialorder %v195, 0.0
  %vm212 = vcmp.ge.f32.partialorder %v196, 0.0
  %vm213 = vcmp.ge.f32.partialorder %v197, 0.0
  %vm214 = vcmp.ge.f32.partialorder %v198, 0.0
  %vm215 = vcmp.ge.f32.partialorder %v199, 0.0
  %vm216 = vcmp.ge.f32.partialorder %v200, 0.0
  %vm217 = vcmp.ge.f32.partialorder %v201, 0.0
  %v218 = vld [vmem:[%s4] sm:$0x1]
  %v220 = vperm.slane %v218, 0
  %v222 = vmul.f32 %v220, %v186
  %v223 = vmul.f32 %v220, %v187
  %v224 = vmul.f32 %v220, %v188
  %v225 = vmul.f32 %v220, %v189
  %v226 = vmul.f32 %v220, %v190
  %v227 = vmul.f32 %v220, %v191
  %v228 = vmul.f32 %v220, %v192
  %v229 = vmul.f32 %v220, %v193
  %v230 = vmul.f32 %v220, %v194
  %v231 = vmul.f32 %v220, %v195
  %v232 = vmul.f32 %v220, %v196
  %v233 = vmul.f32 %v220, %v197
  %v234 = vmul.f32 %v220, %v198
  %v235 = vmul.f32 %v220, %v199
  %v236 = vmul.f32 %v220, %v200
  %v237 = vmul.f32 %v220, %v201
  %v238 = vsel %vm202, %v186, %v222
  %v239 = vsel %vm203, %v187, %v223
  %v240 = vsel %vm204, %v188, %v224
  %v241 = vsel %vm205, %v189, %v225
  %v242 = vsel %vm206, %v190, %v226
  %v243 = vsel %vm207, %v191, %v227
  %v244 = vsel %vm208, %v192, %v228
  %v245 = vsel %vm209, %v193, %v229
  %v246 = vsel %vm210, %v194, %v230
  %v247 = vsel %vm211, %v195, %v231
  %v248 = vsel %vm212, %v196, %v232
  %v249 = vsel %vm213, %v197, %v233
  %v250 = vsel %vm214, %v198, %v234
  %v251 = vsel %vm215, %v199, %v235
  %v252 = vsel %vm216, %v200, %v236
  %v253 = vsel %vm217, %v201, %v237
  %v254 = vpack.c.bf16 %v238, %v238
  %v255 = vpack.c.bf16 %v239, %v239
  %v256 = vpack.c.bf16 %v240, %v240
  %v257 = vpack.c.bf16 %v241, %v241
  %v258 = vpack.c.bf16 %v242, %v242
  %v259 = vpack.c.bf16 %v243, %v243
  %v260 = vpack.c.bf16 %v244, %v244
  %v261 = vpack.c.bf16 %v245, %v245
  %v262 = vpack.c.bf16 %v246, %v246
  %v263 = vpack.c.bf16 %v247, %v247
  %v264 = vpack.c.bf16 %v248, %v248
  %v265 = vpack.c.bf16 %v249, %v249
  %v266 = vpack.c.bf16 %v250, %v250
  %v267 = vpack.c.bf16 %v251, %v251
  %v268 = vpack.c.bf16 %v252, %v252
  %v269 = vpack.c.bf16 %v253, %v253
  %270 = vst [vmem:[%s5] sm:$0xf] %v254
  %271 = vst [vmem:[%s5 + $0x4] sm:$0xf] %v255
  %272 = vst [vmem:[%s5 + $0x8] sm:$0xf] %v256
  %273 = vst [vmem:[%s5 + $0xc] sm:$0xf] %v257
  %274 = vst [vmem:[%s5 + $0x10] sm:$0xf] %v258
  %275 = vst [vmem:[%s5 + $0x14] sm:$0xf] %v259
  %276 = vst [vmem:[%s5 + $0x18] sm:$0xf] %v260
  %277 = vst [vmem:[%s5 + $0x1c] sm:$0xf] %v261
  %278 = vst [vmem:[%s5 + $0x20] sm:$0xf] %v262
  %279 = vst [vmem:[%s5 + $0x24] sm:$0xf] %v263
  %280 = vst [vmem:[%s5 + $0x28] sm:$0xf] %v264
  %281 = vst [vmem:[%s5 + $0x2c] sm:$0xf] %v265
  %282 = vst [vmem:[%s5 + $0x30] sm:$0xf] %v266
  %283 = vst [vmem:[%s5 + $0x34] sm:$0xf] %v267
  %284 = vst [vmem:[%s5 + $0x38] sm:$0xf] %v268
  %285 = vst [vmem:[%s5 + $0x3c] sm:$0xf] %v269
  // Predicated region
  $region22: #{espnet_forward.45} parent=0 // pred_check
    _
  $region23: #{espnet_forward.45} parent=0 // pred_check_branch
    %287 = sbr.rel (0) target = $region25
  $region24: #{espnet_forward.45} parent=0 // pred_region
    _
  $region25: #{espnet_forward.45} parent=0 // pred_fallthru
    _
  // Predicated region
  $region26: #{espnet_forward.45} parent=0 // pred_check
    _
  $region27: #{espnet_forward.45} parent=0 // pred_check_branch
    %289 = sbr.rel (0) target = $region29
  $region28: #{espnet_forward.45} parent=0 // pred_region
    _
  $region29: #{espnet_forward.45} parent=0 // pred_fallthru
    _

// kernel: espnet_forward.47
$region0: #{espnet_forward.47}
  #allocation0 [shape = 'u32[]', space=smem, size = 0x4, offset = 0x4, fixed_abs, tag = 'smem constant byte address 0x4 - core index']
  #allocation1 [shape = 'u32[72,128]{1,0:T(1,128)}', space=vmem, size = 0x9000, scoped, tag = 'internal scratch']
  %s0 = inlined_call_operand.vmem [shape: bf16[512,10], index: 0, kind: input, shape index: {}]
  %s1 = inlined_call_operand.vmem [shape: bf16[10,128], index: 1, kind: input, shape index: {}]
  %s2 = inlined_call_operand.vmem [shape: f32[1,128], index: 2, kind: input, shape index: {}, may-alias: {2,4}]
  %s3 = inlined_call_operand.vmem [shape: f32[1,128], index: 3, kind: input, shape index: {}]
  %s4 = inlined_call_operand.vmem [shape: f32[1,128], index: 4, kind: input, shape index: {}, may-alias: {2,4}]
  %s5 = inlined_call_operand.vmem [shape: f32[512,128], index: 5, kind: output, shape index: {}]
  %s6 = sld [smem:[#allocation0]]
  $region53: #{espnet_forward.47} parent=0
    _
  %s8 = ssub.s32 1, %s6
  %s9 = scalar_select 0, %s8, %s6
  loop: start=0, step=1, limit=4
  $region2: #{espnet_forward.47} parent=0 // loop_pre_header
    _
  $region3: #{espnet_forward.47} parent=0 // loop_header
    %s11 = sphi 0, %s15
    %p12 = scmp.ge.s32.totalorder %s11, 4
    %s21 = sphi 0, %s23
    %s24 = sphi 0, %s21
    %s25 = sphi 0, %s24
    %s41 = sphi 0, %s25
    %s45 = sphi 0, %s45
    %s47 = sphi 0, %s45
    %s48 = sphi 0, %s47
    %s62 = sphi 0, %s48
    %s66 = sphi 0, %s66
    %s68 = sphi 0, %s66
    %s69 = sphi 0, %s68
    %s83 = sphi 0, %s69
    %s87 = sphi 0, %s87
    %s89 = sphi 0, %s87
    %s90 = sphi 0, %s89
    %s104 = sphi 0, %s90
    %s108 = sphi 0, %s108
    %s110 = sphi 0, %s108
    %s111 = sphi 0, %s110
    %s125 = sphi 0, %s111
    %s131 = sphi 0, %s133
    %s134 = sphi 0, %s131
    %s135 = sphi 0, %s134
    %s151 = sphi 0, %s135
  $region4: #{espnet_forward.47} parent=0 // loop_header_branch
    %14 = sbr.rel (%p12) target = $region8
  $region5: #{espnet_forward.47} parent=0 // loop_body
    %s16 = ssub.s32 %s11, 1
    %s17 = ssub.s32 %s11, 2
    %s18 = sadd.s32 %s11, 1
    %s19 = ssub.s32 %s11, %s18
    %p20 = scmp.eq.s32.totalorder %s19, 0
    %s22 = sadd.s32 %s21, 1
    %s23 = scalar_select %p20, %s21, %s22
    %p26 = pneg %p20
    %p27 = scmp.eq.s32.totalorder %s11, 1
    %p28 = por %p26, %p27
    %p29 = scmp.ne.s32.totalorder %s21, %s24
    %p30 = scmp.eq.s32.totalorder %s11, 0
    %p31 = por %p29, %p30
    %p32 = scmp.ne.s32.totalorder %s21, %s24
    %p33 = scmp.eq.s32.totalorder %s16, 1
    %p34 = por %p32, %p33
    %p35 = scmp.ne.s32.totalorder %s24, %s25
    %p36 = scmp.eq.s32.totalorder %s16, 0
    %p37 = por %p35, %p36
    %p38 = scmp.ne.s32.totalorder %s24, %s25
    %p39 = scmp.eq.s32.totalorder %s17, 1
    %p40 = por %p38, %p39
    %p42 = scmp.ne.s32.totalorder %s25, %s41
    %p43 = scmp.eq.s32.totalorder %s17, 0
    %p44 = por %p42, %p43
    %s46 = sadd.s32 %s45, 1
    %p49 = scmp.eq.s32.totalorder %s11, 1
    %p50 = scmp.ne.s32.totalorder %s45, %s47
    %p51 = scmp.eq.s32.totalorder %s11, 0
    %p52 = por %p50, %p51
    %p53 = scmp.ne.s32.totalorder %s45, %s47
    %p54 = scmp.eq.s32.totalorder %s16, 1
    %p55 = por %p53, %p54
    %p56 = scmp.ne.s32.totalorder %s47, %s48
    %p57 = scmp.eq.s32.totalorder %s16, 0
    %p58 = por %p56, %p57
    %p59 = scmp.ne.s32.totalorder %s47, %s48
    %p60 = scmp.eq.s32.totalorder %s17, 1
    %p61 = por %p59, %p60
    %p63 = scmp.ne.s32.totalorder %s48, %s62
    %p64 = scmp.eq.s32.totalorder %s17, 0
    %p65 = por %p63, %p64
    %s67 = sadd.s32 %s66, 1
    %p70 = scmp.eq.s32.totalorder %s11, 1
    %p71 = scmp.ne.s32.totalorder %s66, %s68
    %p72 = scmp.eq.s32.totalorder %s11, 0
    %p73 = por %p71, %p72
    %p74 = scmp.ne.s32.totalorder %s66, %s68
    %p75 = scmp.eq.s32.totalorder %s16, 1
    %p76 = por %p74, %p75
    %p77 = scmp.ne.s32.totalorder %s68, %s69
    %p78 = scmp.eq.s32.totalorder %s16, 0
    %p79 = por %p77, %p78
    %p80 = scmp.ne.s32.totalorder %s68, %s69
    %p81 = scmp.eq.s32.totalorder %s17, 1
    %p82 = por %p80, %p81
    %p84 = scmp.ne.s32.totalorder %s69, %s83
    %p85 = scmp.eq.s32.totalorder %s17, 0
    %p86 = por %p84, %p85
    %s88 = sadd.s32 %s87, 1
    %p91 = scmp.eq.s32.totalorder %s11, 1
    %p92 = scmp.ne.s32.totalorder %s87, %s89
    %p93 = scmp.eq.s32.totalorder %s11, 0
    %p94 = por %p92, %p93
    %p95 = scmp.ne.s32.totalorder %s87, %s89
    %p96 = scmp.eq.s32.totalorder %s16, 1
    %p97 = por %p95, %p96
    %p98 = scmp.ne.s32.totalorder %s89, %s90
    %p99 = scmp.eq.s32.totalorder %s16, 0
    %p100 = por %p98, %p99
    %p101 = scmp.ne.s32.totalorder %s89, %s90
    %p102 = scmp.eq.s32.totalorder %s17, 1
    %p103 = por %p101, %p102
    %p105 = scmp.ne.s32.totalorder %s90, %s104
    %p106 = scmp.eq.s32.totalorder %s17, 0
    %p107 = por %p105, %p106
    %s109 = sadd.s32 %s108, 1
    %p112 = scmp.eq.s32.totalorder %s11, 1
    %p113 = scmp.ne.s32.totalorder %s108, %s110
    %p114 = scmp.eq.s32.totalorder %s11, 0
    %p115 = por %p113, %p114
    %p116 = scmp.ne.s32.totalorder %s108, %s110
    %p117 = scmp.eq.s32.totalorder %s16, 1
    %p118 = por %p116, %p117
    %p119 = scmp.ne.s32.totalorder %s110, %s111
    %p120 = scmp.eq.s32.totalorder %s16, 0
    %p121 = por %p119, %p120
    %p122 = scmp.ne.s32.totalorder %s110, %s111
    %p123 = scmp.eq.s32.totalorder %s17, 1
    %p124 = por %p122, %p123
    %p126 = scmp.ne.s32.totalorder %s111, %s125
    %p127 = scmp.eq.s32.totalorder %s17, 0
    %p128 = por %p126, %p127
    %s129 = ssub.s32 %s11, %s18
    %p130 = scmp.eq.s32.totalorder %s129, 0
    %s132 = sadd.s32 %s131, 1
    %s133 = scalar_select %p130, %s131, %s132
    %p136 = pneg %p130
    %p137 = scmp.eq.s32.totalorder %s11, 1
    %p138 = por %p136, %p137
    %p139 = scmp.ne.s32.totalorder %s131, %s134
    %p140 = scmp.eq.s32.totalorder %s11, 0
    %p141 = por %p139, %p140
    %p142 = scmp.ne.s32.totalorder %s131, %s134
    %p143 = scmp.eq.s32.totalorder %s16, 1
    %p144 = por %p142, %p143
    %p145 = scmp.ne.s32.totalorder %s134, %s135
    %p146 = scmp.eq.s32.totalorder %s16, 0
    %p147 = por %p145, %p146
    %p148 = scmp.ne.s32.totalorder %s134, %s135
    %p149 = scmp.eq.s32.totalorder %s17, 1
    %p150 = por %p148, %p149
    %p152 = scmp.ne.s32.totalorder %s135, %s151
    %p153 = scmp.eq.s32.totalorder %s17, 0
    %p154 = por %p152, %p153
    %p155 = scmp.le.s32.totalorder 1, %s11
    %p156 = scmp.lt.s32.totalorder %s11, 3
    %p157 = pnand %p155, %p156
    %p158 = pneg %p157
    // Predicated region
    $region9: #{espnet_forward.47} parent=5 // pred_check
      _
    $region10: #{espnet_forward.47} parent=5 // pred_check_branch
      %160 = sbr.rel (%p157) target = $region12
    $region11: #{espnet_forward.47} parent=5 // pred_region
      %s161 = ssub.s32 %s11, 1
      // Predicated region
      $region13: #{espnet_forward.47} parent=11 // pred_check
        %p162 = pneg %p58
      $region14: #{espnet_forward.47} parent=11 // pred_check_branch
        %164 = sbr.rel (%p162) target = $region16
      $region15: #{espnet_forward.47} parent=11 // pred_region
        _
      $region16: #{espnet_forward.47} parent=11 // pred_fallthru
        _
      // Predicated region
      $region17: #{espnet_forward.47} parent=11 // pred_check
        %p165 = pneg %p79
      $region18: #{espnet_forward.47} parent=11 // pred_check_branch
        %167 = sbr.rel (%p165) target = $region20
      $region19: #{espnet_forward.47} parent=11 // pred_region
        _
      $region20: #{espnet_forward.47} parent=11 // pred_fallthru
        _
      // Predicated region
      $region21: #{espnet_forward.47} parent=11 // pred_check
        %p168 = pneg %p100
      $region22: #{espnet_forward.47} parent=11 // pred_check_branch
        %170 = sbr.rel (%p168) target = $region24
      $region23: #{espnet_forward.47} parent=11 // pred_region
        _
      $region24: #{espnet_forward.47} parent=11 // pred_fallthru
        _
      // Predicated region
      $region25: #{espnet_forward.47} parent=11 // pred_check
        %p171 = pneg %p121
      $region26: #{espnet_forward.47} parent=11 // pred_check_branch
        %173 = sbr.rel (%p171) target = $region28
      $region27: #{espnet_forward.47} parent=11 // pred_region
        _
      $region28: #{espnet_forward.47} parent=11 // pred_fallthru
        _
    $region12: #{espnet_forward.47} parent=5 // pred_fallthru
      _
    %p174 = scmp.lt.s32.totalorder %s11, 2
    // Predicated region
    $region29: #{espnet_forward.47} parent=5 // pred_check
      %p175 = pneg %p174
    $region30: #{espnet_forward.47} parent=5 // pred_check_branch
      %177 = sbr.rel (%p175) target = $region32
    $region31: #{espnet_forward.47} parent=5 // pred_region
      // Predicated region
      $region33: #{espnet_forward.47} parent=31 // pred_check
        %p178 = pneg %p31
      $region34: #{espnet_forward.47} parent=31 // pred_check_branch
        %180 = sbr.rel (%p178) target = $region36
      $region35: #{espnet_forward.47} parent=31 // pred_region
        %s181 = smul.u32 32, %s11
        %p182 = scmp.lt.s32.totalorder %s181, 63
        %s183 = scalar_select %p182, %s181, 63
        %s184 = smul.addr %s183, 4
        %s185 = scalar_lea.vmem %s0, %s184
        %s186 = smul.u32 32, %s11
      $region36: #{espnet_forward.47} parent=31 // pred_fallthru
        _
    $region32: #{espnet_forward.47} parent=5 // pred_fallthru
      _
    %p187 = scmp.le.s32.totalorder 1, %s11
    %p188 = scmp.lt.s32.totalorder %s11, 3
    %p189 = pnand %p187, %p188
    %p190 = pneg %p189
    // Predicated region
    $region37: #{espnet_forward.47} parent=5 // pred_check
      _
    $region38: #{espnet_forward.47} parent=5 // pred_check_branch
      %192 = sbr.rel (%p189) target = $region40
    $region39: #{espnet_forward.47} parent=5 // pred_region
      %s193 = ssub.s32 %s11, 1
      %s194 = smul.u32 32, %s16
      %p195 = scmp.lt.s32.totalorder %s194, 63
      %s196 = scalar_select %p195, %s194, 63
      %s197 = smul.addr %s196, 4
      %s198 = scalar_lea.vmem %s0, %s197
      %p199 = pneg %p37
      %p200 = pneg %p34
      %p201 = pneg %p58
      %p202 = pneg %p55
      %p203 = pneg %p79
      %p204 = pneg %p76
      %p205 = pneg %p100
      %p206 = pneg %p97
      %p207 = pneg %p121
      %p208 = pneg %p118
      %p209 = pneg %p147
      %p210 = pneg %p144
      %s211 = smul.u32 32, %s16
      %p212 = scmp.lt.s32.totalorder %s211, 63
      %s213 = scalar_select %p212, %s211, 63
      %s214 = smul.addr %s213, 8
      %s215 = scalar_lea.vmem %s5, %s214
      %s216 = smul.u32 32, %s16
      %p217 = scmp.lt.s32.totalorder %s216, 63
      %s218 = scalar_select %p217, %s216, 63
      %s219 = smul.addr %s218, 4
      %s220 = scalar_lea.vmem %s0, %s219
      %s221 = smul.u32 32, %s16
      %s222 = smul.u32 32, %s16
      %p223 = scmp.lt.s32.totalorder %s222, 63
      %s224 = scalar_select %p223, %s222, 63
      %s225 = smul.addr %s224, 8
      %s226 = scalar_lea.vmem %s5, %s225
      %s227 = smul.u32 32, %s16
      %v229 = vld [vmem:[%s220] sm:$0xf]
      %v230 = vld [vmem:[%s220 + $0x4] sm:$0xf]
      %v231 = vld [vmem:[%s220 + $0x8] sm:$0xf]
      %v232 = vld [vmem:[%s220 + $0xc] sm:$0xf]
      %v233 = vld [vmem:[%s220 + $0x10] sm:$0xf]
      %v234 = vld [vmem:[%s220 + $0x14] sm:$0xf]
      %v235 = vld [vmem:[%s220 + $0x18] sm:$0xf]
      %v236 = vld [vmem:[%s220 + $0x1c] sm:$0xf]
      %v237 = vld [vmem:[%s220 + $0x20] sm:$0xf]
      %v238 = vld [vmem:[%s220 + $0x24] sm:$0xf]
      %v239 = vld [vmem:[%s220 + $0x28] sm:$0xf]
      %v240 = vld [vmem:[%s220 + $0x2c] sm:$0xf]
      %v241 = vld [vmem:[%s220 + $0x30] sm:$0xf]
      %v242 = vld [vmem:[%s220 + $0x34] sm:$0xf]
      %v243 = vld [vmem:[%s220 + $0x38] sm:$0xf]
      %v244 = vld [vmem:[%s220 + $0x3c] sm:$0xf]
      %v245 = vld [vmem:[%s220 + $0x40] sm:$0xf]
      %v246 = vld [vmem:[%s220 + $0x44] sm:$0xf]
      %v247 = vld [vmem:[%s220 + $0x48] sm:$0xf]
      %v248 = vld [vmem:[%s220 + $0x4c] sm:$0xf]
      %v249 = vld [vmem:[%s220 + $0x50] sm:$0xf]
      %v250 = vld [vmem:[%s220 + $0x54] sm:$0xf]
      %v251 = vld [vmem:[%s220 + $0x58] sm:$0xf]
      %v252 = vld [vmem:[%s220 + $0x5c] sm:$0xf]
      %v253 = vld [vmem:[%s220 + $0x60] sm:$0xf]
      %v254 = vld [vmem:[%s220 + $0x64] sm:$0xf]
      %v255 = vld [vmem:[%s220 + $0x68] sm:$0xf]
      %v256 = vld [vmem:[%s220 + $0x6c] sm:$0xf]
      %v257 = vld [vmem:[%s220 + $0x70] sm:$0xf]
      %v258 = vld [vmem:[%s220 + $0x74] sm:$0xf]
      %v259 = vld [vmem:[%s220 + $0x78] sm:$0xf]
      %v260 = vld [vmem:[%s220 + $0x7c] sm:$0xf]
      %v261 = vld [vmem:[%s1] sm:$0xf]
      %v262 = vld [vmem:[%s1 + $0x4] sm:$0x1]
      %v295 = vunpack.c.l.b16 %v229
      %v296 = vunpack.c.l.b16 %v230
      %v297 = vunpack.c.l.b16 %v231
      %v298 = vunpack.c.l.b16 %v232
      %v299 = vunpack.c.l.b16 %v233
      %v300 = vunpack.c.l.b16 %v234
      %v301 = vunpack.c.l.b16 %v235
      %v302 = vunpack.c.l.b16 %v236
      %v303 = vunpack.c.l.b16 %v237
      %v304 = vunpack.c.l.b16 %v238
      %v305 = vunpack.c.l.b16 %v239
      %v306 = vunpack.c.l.b16 %v240
      %v307 = vunpack.c.l.b16 %v241
      %v308 = vunpack.c.l.b16 %v242
      %v309 = vunpack.c.l.b16 %v243
      %v310 = vunpack.c.l.b16 %v244
      %v311 = vunpack.c.l.b16 %v245
      %v312 = vunpack.c.l.b16 %v246
      %v313 = vunpack.c.l.b16 %v247
      %v314 = vunpack.c.l.b16 %v248
      %v315 = vunpack.c.l.b16 %v249
      %v316 = vunpack.c.l.b16 %v250
      %v317 = vunpack.c.l.b16 %v251
      %v318 = vunpack.c.l.b16 %v252
      %v319 = vunpack.c.l.b16 %v253
      %v320 = vunpack.c.l.b16 %v254
      %v321 = vunpack.c.l.b16 %v255
      %v322 = vunpack.c.l.b16 %v256
      %v323 = vunpack.c.l.b16 %v257
      %v324 = vunpack.c.l.b16 %v258
      %v325 = vunpack.c.l.b16 %v259
      %v326 = vunpack.c.l.b16 %v260
      %v327 = vpack.c.b16 %v296, %v295
      %v328 = vpack.c.b16 %v298, %v297
      %v329 = vpack.c.b16 %v300, %v299
      %v330 = vpack.c.b16 %v302, %v301
      %v331 = vpack.c.b16 %v304, %v303
      %v332 = vpack.c.b16 %v306, %v305
      %v333 = vpack.c.b16 %v308, %v307
      %v334 = vpack.c.b16 %v310, %v309
      %v335 = vpack.c.b16 %v312, %v311
      %v336 = vpack.c.b16 %v314, %v313
      %v337 = vpack.c.b16 %v316, %v315
      %v338 = vpack.c.b16 %v318, %v317
      %v339 = vpack.c.b16 %v320, %v319
      %v340 = vpack.c.b16 %v322, %v321
      %v341 = vpack.c.b16 %v324, %v323
      %v342 = vpack.c.b16 %v326, %v325
      %v345 = vunpack.c.l.b16 %v261
      %v346 = vunpack.c.l.b16 %v262
      %v347 = vpack.c.b16 %v346, %v345
      %vm348 = vcmask 80896
      %v350 = vsel %vm348, %v327, 0
      %v353 = vsel %vm348, %v328, 0
      %v356 = vsel %vm348, %v329, 0
      %v359 = vsel %vm348, %v330, 0
      %v362 = vsel %vm348, %v331, 0
      %v365 = vsel %vm348, %v332, 0
      %v368 = vsel %vm348, %v333, 0
      %v371 = vsel %vm348, %v334, 0
      %v374 = vsel %vm348, %v335, 0
      %v377 = vsel %vm348, %v336, 0
      %v380 = vsel %vm348, %v337, 0
      %v383 = vsel %vm348, %v338, 0
      %v386 = vsel %vm348, %v339, 0
      %v389 = vsel %vm348, %v340, 0
      %v392 = vsel %vm348, %v341, 0
      %v395 = vsel %vm348, %v342, 0
      %vm397 = vcmask 1044480
      %v399 = vsel %vm397, %v347, 0
      %401 = vmatpush.bf16.msra.mxu0 0
      %402 = vmatpush.bf16.msra.mxu0 0
      %403 = vmatpush.bf16.msra.mxu0 0
      %404 = vmatpush.bf16.msra.mxu0 0
      %405 = vmatpush.bf16.msra.mxu0 0
      %406 = vmatpush.bf16.msra.mxu0 0
      %407 = vmatpush.bf16.msra.mxu0 0
      %408 = vmatpush.bf16.msra.mxu0 %v399
      %409 = vmatmul.bf16.gmra.mxu0 %v350
      %v410 = vpop.f32.mrf.mxu0
      %v411 = vadd.f32 0.0, %v410
      %v412 = vpop.f32.mrf.mxu0
      %v413 = vadd.f32 0.0, %v412
      %414 = vmatmul.bf16.gmra.mxu0 %v353
      %v415 = vpop.f32.mrf.mxu0
      %v416 = vadd.f32 0.0, %v415
      %v417 = vpop.f32.mrf.mxu0
      %v418 = vadd.f32 0.0, %v417
      %419 = vmatmul.bf16.gmra.mxu0 %v356
      %v420 = vpop.f32.mrf.mxu0
      %v421 = vadd.f32 0.0, %v420
      %v422 = vpop.f32.mrf.mxu0
      %v423 = vadd.f32 0.0, %v422
      %424 = vmatmul.bf16.gmra.mxu0 %v359
      %v425 = vpop.f32.mrf.mxu0
      %v426 = vadd.f32 0.0, %v425
      %v427 = vpop.f32.mrf.mxu0
      %v428 = vadd.f32 0.0, %v427
      %429 = vmatmul.bf16.gmra.mxu0 %v362
      %v430 = vpop.f32.mrf.mxu0
      %v431 = vadd.f32 0.0, %v430
      %v432 = vpop.f32.mrf.mxu0
      %v433 = vadd.f32 0.0, %v432
      %434 = vmatmul.bf16.gmra.mxu0 %v365
      %v435 = vpop.f32.mrf.mxu0
      %v436 = vadd.f32 0.0, %v435
      %v437 = vpop.f32.mrf.mxu0
      %v438 = vadd.f32 0.0, %v437
      %439 = vmatmul.bf16.gmra.mxu0 %v368
      %v440 = vpop.f32.mrf.mxu0
      %v441 = vadd.f32 0.0, %v440
      %v442 = vpop.f32.mrf.mxu0
      %v443 = vadd.f32 0.0, %v442
      %444 = vmatmul.bf16.gmra.mxu0 %v371
      %v445 = vpop.f32.mrf.mxu0
      %v446 = vadd.f32 0.0, %v445
      %v447 = vpop.f32.mrf.mxu0
      %v448 = vadd.f32 0.0, %v447
      %449 = vmatmul.bf16.gmra.mxu0 %v374
      %v450 = vpop.f32.mrf.mxu0
      %v451 = vadd.f32 0.0, %v450
      %v452 = vpop.f32.mrf.mxu0
      %v453 = vadd.f32 0.0, %v452
      %454 = vmatmul.bf16.gmra.mxu0 %v377
      %v455 = vpop.f32.mrf.mxu0
      %v456 = vadd.f32 0.0, %v455
      %v457 = vpop.f32.mrf.mxu0
      %v458 = vadd.f32 0.0, %v457
      %459 = vmatmul.bf16.gmra.mxu0 %v380
      %v460 = vpop.f32.mrf.mxu0
      %v461 = vadd.f32 0.0, %v460
      %v462 = vpop.f32.mrf.mxu0
      %v463 = vadd.f32 0.0, %v462
      %464 = vmatmul.bf16.gmra.mxu0 %v383
      %v465 = vpop.f32.mrf.mxu0
      %v466 = vadd.f32 0.0, %v465
      %v467 = vpop.f32.mrf.mxu0
      %v468 = vadd.f32 0.0, %v467
      %469 = vmatmul.bf16.gmra.mxu0 %v386
      %v470 = vpop.f32.mrf.mxu0
      %v471 = vadd.f32 0.0, %v470
      %v472 = vpop.f32.mrf.mxu0
      %v473 = vadd.f32 0.0, %v472
      %474 = vmatmul.bf16.gmra.mxu0 %v389
      %v475 = vpop.f32.mrf.mxu0
      %v476 = vadd.f32 0.0, %v475
      %v477 = vpop.f32.mrf.mxu0
      %v478 = vadd.f32 0.0, %v477
      %479 = vmatmul.bf16.gmra.mxu0 %v392
      %v480 = vpop.f32.mrf.mxu0
      %v481 = vadd.f32 0.0, %v480
      %v482 = vpop.f32.mrf.mxu0
      %v483 = vadd.f32 0.0, %v482
      %484 = vmatmul.bf16.gmra.mxu0 %v395
      %v485 = vpop.f32.mrf.mxu0
      %v486 = vadd.f32 0.0, %v485
      %v487 = vpop.f32.mrf.mxu0
      %v488 = vadd.f32 0.0, %v487
      %489 = vdwg.mxu0
      %v490 = vld [vmem:[%s2] sm:$0x1]
      %v492 = vperm.slane %v490, 0
      %v494 = vmul.f32 %v411, %v492
      %v495 = vmul.f32 %v413, %v492
      %v496 = vmul.f32 %v416, %v492
      %v497 = vmul.f32 %v418, %v492
      %v498 = vmul.f32 %v421, %v492
      %v499 = vmul.f32 %v423, %v492
      %v500 = vmul.f32 %v426, %v492
      %v501 = vmul.f32 %v428, %v492
      %v502 = vmul.f32 %v431, %v492
      %v503 = vmul.f32 %v433, %v492
      %v504 = vmul.f32 %v436, %v492
      %v505 = vmul.f32 %v438, %v492
      %v506 = vmul.f32 %v441, %v492
      %v507 = vmul.f32 %v443, %v492
      %v508 = vmul.f32 %v446, %v492
      %v509 = vmul.f32 %v448, %v492
      %v510 = vmul.f32 %v451, %v492
      %v511 = vmul.f32 %v453, %v492
      %v512 = vmul.f32 %v456, %v492
      %v513 = vmul.f32 %v458, %v492
      %v514 = vmul.f32 %v461, %v492
      %v515 = vmul.f32 %v463, %v492
      %v516 = vmul.f32 %v466, %v492
      %v517 = vmul.f32 %v468, %v492
      %v518 = vmul.f32 %v471, %v492
      %v519 = vmul.f32 %v473, %v492
      %v520 = vmul.f32 %v476, %v492
      %v521 = vmul.f32 %v478, %v492
      %v522 = vmul.f32 %v481, %v492
      %v523 = vmul.f32 %v483, %v492
      %v524 = vmul.f32 %v486, %v492
      %v525 = vmul.f32 %v488, %v492
      %v526 = vld [vmem:[%s3] sm:$0x1]
      %v528 = vperm.slane %v526, 0
      %v530 = vadd.f32 %v494, %v528
      %v531 = vadd.f32 %v495, %v528
      %v532 = vadd.f32 %v496, %v528
      %v533 = vadd.f32 %v497, %v528
      %v534 = vadd.f32 %v498, %v528
      %v535 = vadd.f32 %v499, %v528
      %v536 = vadd.f32 %v500, %v528
      %v537 = vadd.f32 %v501, %v528
      %v538 = vadd.f32 %v502, %v528
      %v539 = vadd.f32 %v503, %v528
      %v540 = vadd.f32 %v504, %v528
      %v541 = vadd.f32 %v505, %v528
      %v542 = vadd.f32 %v506, %v528
      %v543 = vadd.f32 %v507, %v528
      %v544 = vadd.f32 %v508, %v528
      %v545 = vadd.f32 %v509, %v528
      %v546 = vadd.f32 %v510, %v528
      %v547 = vadd.f32 %v511, %v528
      %v548 = vadd.f32 %v512, %v528
      %v549 = vadd.f32 %v513, %v528
      %v550 = vadd.f32 %v514, %v528
      %v551 = vadd.f32 %v515, %v528
      %v552 = vadd.f32 %v516, %v528
      %v553 = vadd.f32 %v517, %v528
      %v554 = vadd.f32 %v518, %v528
      %v555 = vadd.f32 %v519, %v528
      %v556 = vadd.f32 %v520, %v528
      %v557 = vadd.f32 %v521, %v528
      %v558 = vadd.f32 %v522, %v528
      %v559 = vadd.f32 %v523, %v528
      %v560 = vadd.f32 %v524, %v528
      %v561 = vadd.f32 %v525, %v528
      %vm562 = vcmp.ge.f32.partialorder %v530, 0.0
      %vm563 = vcmp.ge.f32.partialorder %v531, 0.0
      %vm564 = vcmp.ge.f32.partialorder %v532, 0.0
      %vm565 = vcmp.ge.f32.partialorder %v533, 0.0
      %vm566 = vcmp.ge.f32.partialorder %v534, 0.0
      %vm567 = vcmp.ge.f32.partialorder %v535, 0.0
      %vm568 = vcmp.ge.f32.partialorder %v536, 0.0
      %vm569 = vcmp.ge.f32.partialorder %v537, 0.0
      %vm570 = vcmp.ge.f32.partialorder %v538, 0.0
      %vm571 = vcmp.ge.f32.partialorder %v539, 0.0
      %vm572 = vcmp.ge.f32.partialorder %v540, 0.0
      %vm573 = vcmp.ge.f32.partialorder %v541, 0.0
      %vm574 = vcmp.ge.f32.partialorder %v542, 0.0
      %vm575 = vcmp.ge.f32.partialorder %v543, 0.0
      %vm576 = vcmp.ge.f32.partialorder %v544, 0.0
      %vm577 = vcmp.ge.f32.partialorder %v545, 0.0
      %vm578 = vcmp.ge.f32.partialorder %v546, 0.0
      %vm579 = vcmp.ge.f32.partialorder %v547, 0.0
      %vm580 = vcmp.ge.f32.partialorder %v548, 0.0
      %vm581 = vcmp.ge.f32.partialorder %v549, 0.0
      %vm582 = vcmp.ge.f32.partialorder %v550, 0.0
      %vm583 = vcmp.ge.f32.partialorder %v551, 0.0
      %vm584 = vcmp.ge.f32.partialorder %v552, 0.0
      %vm585 = vcmp.ge.f32.partialorder %v553, 0.0
      %vm586 = vcmp.ge.f32.partialorder %v554, 0.0
      %vm587 = vcmp.ge.f32.partialorder %v555, 0.0
      %vm588 = vcmp.ge.f32.partialorder %v556, 0.0
      %vm589 = vcmp.ge.f32.partialorder %v557, 0.0
      %vm590 = vcmp.ge.f32.partialorder %v558, 0.0
      %vm591 = vcmp.ge.f32.partialorder %v559, 0.0
      %vm592 = vcmp.ge.f32.partialorder %v560, 0.0
      %vm593 = vcmp.ge.f32.partialorder %v561, 0.0
      %v594 = vld [vmem:[%s4] sm:$0x1]
      %v596 = vperm.slane %v594, 0
      %v598 = vmul.f32 %v596, %v530
      %v599 = vmul.f32 %v596, %v531
      %v600 = vmul.f32 %v596, %v532
      %v601 = vmul.f32 %v596, %v533
      %v602 = vmul.f32 %v596, %v534
      %v603 = vmul.f32 %v596, %v535
      %v604 = vmul.f32 %v596, %v536
      %v605 = vmul.f32 %v596, %v537
      %v606 = vmul.f32 %v596, %v538
      %v607 = vmul.f32 %v596, %v539
      %v608 = vmul.f32 %v596, %v540
      %v609 = vmul.f32 %v596, %v541
      %v610 = vmul.f32 %v596, %v542
      %v611 = vmul.f32 %v596, %v543
      %v612 = vmul.f32 %v596, %v544
      %v613 = vmul.f32 %v596, %v545
      %v614 = vmul.f32 %v596, %v546
      %v615 = vmul.f32 %v596, %v547
      %v616 = vmul.f32 %v596, %v548
      %v617 = vmul.f32 %v596, %v549
      %v618 = vmul.f32 %v596, %v550
      %v619 = vmul.f32 %v596, %v551
      %v620 = vmul.f32 %v596, %v552
      %v621 = vmul.f32 %v596, %v553
      %v622 = vmul.f32 %v596, %v554
      %v623 = vmul.f32 %v596, %v555
      %v624 = vmul.f32 %v596, %v556
      %v625 = vmul.f32 %v596, %v557
      %v626 = vmul.f32 %v596, %v558
      %v627 = vmul.f32 %v596, %v559
      %v628 = vmul.f32 %v596, %v560
      %v629 = vmul.f32 %v596, %v561
      %v630 = vsel %vm562, %v530, %v598
      %v631 = vsel %vm563, %v531, %v599
      %v632 = vsel %vm564, %v532, %v600
      %v633 = vsel %vm565, %v533, %v601
      %v634 = vsel %vm566, %v534, %v602
      %v635 = vsel %vm567, %v535, %v603
      %v636 = vsel %vm568, %v536, %v604
      %v637 = vsel %vm569, %v537, %v605
      %v638 = vsel %vm570, %v538, %v606
      %v639 = vsel %vm571, %v539, %v607
      %v640 = vsel %vm572, %v540, %v608
      %v641 = vsel %vm573, %v541, %v609
      %v642 = vsel %vm574, %v542, %v610
      %v643 = vsel %vm575, %v543, %v611
      %v644 = vsel %vm576, %v544, %v612
      %v645 = vsel %vm577, %v545, %v613
      %v646 = vsel %vm578, %v546, %v614
      %v647 = vsel %vm579, %v547, %v615
      %v648 = vsel %vm580, %v548, %v616
      %v649 = vsel %vm581, %v549, %v617
      %v650 = vsel %vm582, %v550, %v618
      %v651 = vsel %vm583, %v551, %v619
      %v652 = vsel %vm584, %v552, %v620
      %v653 = vsel %vm585, %v553, %v621
      %v654 = vsel %vm586, %v554, %v622
      %v655 = vsel %vm587, %v555, %v623
      %v656 = vsel %vm588, %v556, %v624
      %v657 = vsel %vm589, %v557, %v625
      %v658 = vsel %vm590, %v558, %v626
      %v659 = vsel %vm591, %v559, %v627
      %v660 = vsel %vm592, %v560, %v628
      %v661 = vsel %vm593, %v561, %v629
      %662 = vst [vmem:[%s226] sm:$0xff] %v630
      %663 = vst [vmem:[%s226 + $0x8] sm:$0xff] %v631
      %664 = vst [vmem:[%s226 + $0x10] sm:$0xff] %v632
      %665 = vst [vmem:[%s226 + $0x18] sm:$0xff] %v633
      %666 = vst [vmem:[%s226 + $0x20] sm:$0xff] %v634
      %667 = vst [vmem:[%s226 + $0x28] sm:$0xff] %v635
      %668 = vst [vmem:[%s226 + $0x30] sm:$0xff] %v636
      %669 = vst [vmem:[%s226 + $0x38] sm:$0xff] %v637
      %670 = vst [vmem:[%s226 + $0x40] sm:$0xff] %v638
      %671 = vst [vmem:[%s226 + $0x48] sm:$0xff] %v639
      %672 = vst [vmem:[%s226 + $0x50] sm:$0xff] %v640
      %673 = vst [vmem:[%s226 + $0x58] sm:$0xff] %v641
      %674 = vst [vmem:[%s226 + $0x60] sm:$0xff] %v642
      %675 = vst [vmem:[%s226 + $0x68] sm:$0xff] %v643
      %676 = vst [vmem:[%s226 + $0x70] sm:$0xff] %v644
      %677 = vst [vmem:[%s226 + $0x78] sm:$0xff] %v645
      %678 = vst [vmem:[%s226 + $0x80] sm:$0xff] %v646
      %679 = vst [vmem:[%s226 + $0x88] sm:$0xff] %v647
      %680 = vst [vmem:[%s226 + $0x90] sm:$0xff] %v648
      %681 = vst [vmem:[%s226 + $0x98] sm:$0xff] %v649
      %682 = vst [vmem:[%s226 + $0xa0] sm:$0xff] %v650
      %683 = vst [vmem:[%s226 + $0xa8] sm:$0xff] %v651
      %684 = vst [vmem:[%s226 + $0xb0] sm:$0xff] %v652
      %685 = vst [vmem:[%s226 + $0xb8] sm:$0xff] %v653
      %686 = vst [vmem:[%s226 + $0xc0] sm:$0xff] %v654
      %687 = vst [vmem:[%s226 + $0xc8] sm:$0xff] %v655
      %688 = vst [vmem:[%s226 + $0xd0] sm:$0xff] %v656
      %689 = vst [vmem:[%s226 + $0xd8] sm:$0xff] %v657
      %690 = vst [vmem:[%s226 + $0xe0] sm:$0xff] %v658
      %691 = vst [vmem:[%s226 + $0xe8] sm:$0xff] %v659
      %692 = vst [vmem:[%s226 + $0xf0] sm:$0xff] %v660
      %693 = vst [vmem:[%s226 + $0xf8] sm:$0xff] %v661
      %s694 = smul.u32 32, %s16
      %p695 = scmp.lt.s32.totalorder %s694, 63
      %s696 = scalar_select %p695, %s694, 63
      %s697 = smul.addr %s696, 8
      %s698 = scalar_lea.vmem %s5, %s697
      // Predicated region
      $region41: #{espnet_forward.47} parent=39 // pred_check
        %p699 = pneg %p144
      $region42: #{espnet_forward.47} parent=39 // pred_check_branch
        %701 = sbr.rel (%p699) target = $region44
      $region43: #{espnet_forward.47} parent=39 // pred_region
        %s702 = smul.u32 32, %s16
      $region44: #{espnet_forward.47} parent=39 // pred_fallthru
        _
    $region40: #{espnet_forward.47} parent=5 // pred_fallthru
      _
    %p703 = scmp.le.s32.totalorder 2, %s11
    // Predicated region
    $region45: #{espnet_forward.47} parent=5 // pred_check
      %p704 = pneg %p703
    $region46: #{espnet_forward.47} parent=5 // pred_check_branch
      %706 = sbr.rel (%p704) target = $region48
    $region47: #{espnet_forward.47} parent=5 // pred_region
      %s707 = ssub.s32 %s11, 2
      // Predicated region
      $region49: #{espnet_forward.47} parent=47 // pred_check
        %p708 = pneg %p150
      $region50: #{espnet_forward.47} parent=47 // pred_check_branch
        %710 = sbr.rel (%p708) target = $region52
      $region51: #{espnet_forward.47} parent=47 // pred_region
        %s711 = smul.u32 32, %s17
        %p712 = scmp.lt.s32.totalorder %s711, 63
        %s713 = scalar_select %p712, %s711, 63
        %s714 = smul.addr %s713, 8
        %s715 = scalar_lea.vmem %s5, %s714
      $region52: #{espnet_forward.47} parent=47 // pred_fallthru
        _
    $region48: #{espnet_forward.47} parent=5 // pred_fallthru
      _
  $region6: #{espnet_forward.47} parent=0 // loop_footer
    %s15 = sadd.s32 1, %s11
  $region7: #{espnet_forward.47} parent=0 // loop_footer_branch
    %10 = sbr.rel target = $region3
  $region8: #{espnet_forward.47} parent=0 // loop_exit
    _

// kernel: espnet_forward.46
$region0: #{espnet_forward.46}
  #allocation0 [shape = 'u32[]', space=smem, size = 0x4, offset = 0x4, fixed_abs, tag = 'smem constant byte address 0x4 - core index']
  #allocation1 [shape = 'u32[72,128]{1,0:T(1,128)}', space=vmem, size = 0x9000, scoped, tag = 'internal scratch']
  %s0 = inlined_call_operand.vmem [shape: bf16[512,20], index: 0, kind: input, shape index: {}]
  %s1 = inlined_call_operand.vmem [shape: bf16[20,128], index: 1, kind: input, shape index: {}]
  %s2 = inlined_call_operand.vmem [shape: f32[1,128], index: 2, kind: input, shape index: {}]
  %s3 = inlined_call_operand.vmem [shape: f32[1,128], index: 3, kind: input, shape index: {}]
  %s4 = inlined_call_operand.vmem [shape: f32[1,128], index: 4, kind: input, shape index: {}]
  %s5 = inlined_call_operand.vmem [shape: bf16[512,128], index: 5, kind: output, shape index: {}]
  %s6 = sld [smem:[#allocation0]]
  $region53: #{espnet_forward.46} parent=0
    _
  %s8 = ssub.s32 1, %s6
  %s9 = scalar_select 0, %s8, %s6
  loop: start=0, step=1, limit=4
  $region2: #{espnet_forward.46} parent=0 // loop_pre_header
    _
  $region3: #{espnet_forward.46} parent=0 // loop_header
    %s11 = sphi 0, %s15
    %p12 = scmp.ge.s32.totalorder %s11, 4
    %s21 = sphi 0, %s23
    %s24 = sphi 0, %s21
    %s25 = sphi 0, %s24
    %s41 = sphi 0, %s25
    %s45 = sphi 0, %s45
    %s47 = sphi 0, %s45
    %s48 = sphi 0, %s47
    %s62 = sphi 0, %s48
    %s66 = sphi 0, %s66
    %s68 = sphi 0, %s66
    %s69 = sphi 0, %s68
    %s83 = sphi 0, %s69
    %s87 = sphi 0, %s87
    %s89 = sphi 0, %s87
    %s90 = sphi 0, %s89
    %s104 = sphi 0, %s90
    %s108 = sphi 0, %s108
    %s110 = sphi 0, %s108
    %s111 = sphi 0, %s110
    %s125 = sphi 0, %s111
    %s131 = sphi 0, %s133
    %s134 = sphi 0, %s131
    %s135 = sphi 0, %s134
    %s151 = sphi 0, %s135
  $region4: #{espnet_forward.46} parent=0 // loop_header_branch
    %14 = sbr.rel (%p12) target = $region8
  $region5: #{espnet_forward.46} parent=0 // loop_body
    %s16 = ssub.s32 %s11, 1
    %s17 = ssub.s32 %s11, 2
    %s18 = sadd.s32 %s11, 1
    %s19 = ssub.s32 %s11, %s18
    %p20 = scmp.eq.s32.totalorder %s19, 0
    %s22 = sadd.s32 %s21, 1
    %s23 = scalar_select %p20, %s21, %s22
    %p26 = pneg %p20
    %p27 = scmp.eq.s32.totalorder %s11, 1
    %p28 = por %p26, %p27
    %p29 = scmp.ne.s32.totalorder %s21, %s24
    %p30 = scmp.eq.s32.totalorder %s11, 0
    %p31 = por %p29, %p30
    %p32 = scmp.ne.s32.totalorder %s21, %s24
    %p33 = scmp.eq.s32.totalorder %s16, 1
    %p34 = por %p32, %p33
    %p35 = scmp.ne.s32.totalorder %s24, %s25
    %p36 = scmp.eq.s32.totalorder %s16, 0
    %p37 = por %p35, %p36
    %p38 = scmp.ne.s32.totalorder %s24, %s25
    %p39 = scmp.eq.s32.totalorder %s17, 1
    %p40 = por %p38, %p39
    %p42 = scmp.ne.s32.totalorder %s25, %s41
    %p43 = scmp.eq.s32.totalorder %s17, 0
    %p44 = por %p42, %p43
    %s46 = sadd.s32 %s45, 1
    %p49 = scmp.eq.s32.totalorder %s11, 1
    %p50 = scmp.ne.s32.totalorder %s45, %s47
    %p51 = scmp.eq.s32.totalorder %s11, 0
    %p52 = por %p50, %p51
    %p53 = scmp.ne.s32.totalorder %s45, %s47
    %p54 = scmp.eq.s32.totalorder %s16, 1
    %p55 = por %p53, %p54
    %p56 = scmp.ne.s32.totalorder %s47, %s48
    %p57 = scmp.eq.s32.totalorder %s16, 0
    %p58 = por %p56, %p57
    %p59 = scmp.ne.s32.totalorder %s47, %s48
    %p60 = scmp.eq.s32.totalorder %s17, 1
    %p61 = por %p59, %p60
    %p63 = scmp.ne.s32.totalorder %s48, %s62
    %p64 = scmp.eq.s32.totalorder %s17, 0
    %p65 = por %p63, %p64
    %s67 = sadd.s32 %s66, 1
    %p70 = scmp.eq.s32.totalorder %s11, 1
    %p71 = scmp.ne.s32.totalorder %s66, %s68
    %p72 = scmp.eq.s32.totalorder %s11, 0
    %p73 = por %p71, %p72
    %p74 = scmp.ne.s32.totalorder %s66, %s68
    %p75 = scmp.eq.s32.totalorder %s16, 1
    %p76 = por %p74, %p75
    %p77 = scmp.ne.s32.totalorder %s68, %s69
    %p78 = scmp.eq.s32.totalorder %s16, 0
    %p79 = por %p77, %p78
    %p80 = scmp.ne.s32.totalorder %s68, %s69
    %p81 = scmp.eq.s32.totalorder %s17, 1
    %p82 = por %p80, %p81
    %p84 = scmp.ne.s32.totalorder %s69, %s83
    %p85 = scmp.eq.s32.totalorder %s17, 0
    %p86 = por %p84, %p85
    %s88 = sadd.s32 %s87, 1
    %p91 = scmp.eq.s32.totalorder %s11, 1
    %p92 = scmp.ne.s32.totalorder %s87, %s89
    %p93 = scmp.eq.s32.totalorder %s11, 0
    %p94 = por %p92, %p93
    %p95 = scmp.ne.s32.totalorder %s87, %s89
    %p96 = scmp.eq.s32.totalorder %s16, 1
    %p97 = por %p95, %p96
    %p98 = scmp.ne.s32.totalorder %s89, %s90
    %p99 = scmp.eq.s32.totalorder %s16, 0
    %p100 = por %p98, %p99
    %p101 = scmp.ne.s32.totalorder %s89, %s90
    %p102 = scmp.eq.s32.totalorder %s17, 1
    %p103 = por %p101, %p102
    %p105 = scmp.ne.s32.totalorder %s90, %s104
    %p106 = scmp.eq.s32.totalorder %s17, 0
    %p107 = por %p105, %p106
    %s109 = sadd.s32 %s108, 1
    %p112 = scmp.eq.s32.totalorder %s11, 1
    %p113 = scmp.ne.s32.totalorder %s108, %s110
    %p114 = scmp.eq.s32.totalorder %s11, 0
    %p115 = por %p113, %p114
    %p116 = scmp.ne.s32.totalorder %s108, %s110
    %p117 = scmp.eq.s32.totalorder %s16, 1
    %p118 = por %p116, %p117
    %p119 = scmp.ne.s32.totalorder %s110, %s111
    %p120 = scmp.eq.s32.totalorder %s16, 0
    %p121 = por %p119, %p120
    %p122 = scmp.ne.s32.totalorder %s110, %s111
    %p123 = scmp.eq.s32.totalorder %s17, 1
    %p124 = por %p122, %p123
    %p126 = scmp.ne.s32.totalorder %s111, %s125
    %p127 = scmp.eq.s32.totalorder %s17, 0
    %p128 = por %p126, %p127
    %s129 = ssub.s32 %s11, %s18
    %p130 = scmp.eq.s32.totalorder %s129, 0
    %s132 = sadd.s32 %s131, 1
    %s133 = scalar_select %p130, %s131, %s132
    %p136 = pneg %p130
    %p137 = scmp.eq.s32.totalorder %s11, 1
    %p138 = por %p136, %p137
    %p139 = scmp.ne.s32.totalorder %s131, %s134
    %p140 = scmp.eq.s32.totalorder %s11, 0
    %p141 = por %p139, %p140
    %p142 = scmp.ne.s32.totalorder %s131, %s134
    %p143 = scmp.eq.s32.totalorder %s16, 1
    %p144 = por %p142, %p143
    %p145 = scmp.ne.s32.totalorder %s134, %s135
    %p146 = scmp.eq.s32.totalorder %s16, 0
    %p147 = por %p145, %p146
    %p148 = scmp.ne.s32.totalorder %s134, %s135
    %p149 = scmp.eq.s32.totalorder %s17, 1
    %p150 = por %p148, %p149
    %p152 = scmp.ne.s32.totalorder %s135, %s151
    %p153 = scmp.eq.s32.totalorder %s17, 0
    %p154 = por %p152, %p153
    %p155 = scmp.le.s32.totalorder 1, %s11
    %p156 = scmp.lt.s32.totalorder %s11, 3
    %p157 = pnand %p155, %p156
    %p158 = pneg %p157
    // Predicated region
    $region9: #{espnet_forward.46} parent=5 // pred_check
      _
    $region10: #{espnet_forward.46} parent=5 // pred_check_branch
      %160 = sbr.rel (%p157) target = $region12
    $region11: #{espnet_forward.46} parent=5 // pred_region
      %s161 = ssub.s32 %s11, 1
      // Predicated region
      $region13: #{espnet_forward.46} parent=11 // pred_check
        %p162 = pneg %p58
      $region14: #{espnet_forward.46} parent=11 // pred_check_branch
        %164 = sbr.rel (%p162) target = $region16
      $region15: #{espnet_forward.46} parent=11 // pred_region
        _
      $region16: #{espnet_forward.46} parent=11 // pred_fallthru
        _
      // Predicated region
      $region17: #{espnet_forward.46} parent=11 // pred_check
        %p165 = pneg %p79
      $region18: #{espnet_forward.46} parent=11 // pred_check_branch
        %167 = sbr.rel (%p165) target = $region20
      $region19: #{espnet_forward.46} parent=11 // pred_region
        _
      $region20: #{espnet_forward.46} parent=11 // pred_fallthru
        _
      // Predicated region
      $region21: #{espnet_forward.46} parent=11 // pred_check
        %p168 = pneg %p100
      $region22: #{espnet_forward.46} parent=11 // pred_check_branch
        %170 = sbr.rel (%p168) target = $region24
      $region23: #{espnet_forward.46} parent=11 // pred_region
        _
      $region24: #{espnet_forward.46} parent=11 // pred_fallthru
        _
      // Predicated region
      $region25: #{espnet_forward.46} parent=11 // pred_check
        %p171 = pneg %p121
      $region26: #{espnet_forward.46} parent=11 // pred_check_branch
        %173 = sbr.rel (%p171) target = $region28
      $region27: #{espnet_forward.46} parent=11 // pred_region
        _
      $region28: #{espnet_forward.46} parent=11 // pred_fallthru
        _
    $region12: #{espnet_forward.46} parent=5 // pred_fallthru
      _
    %p174 = scmp.lt.s32.totalorder %s11, 2
    // Predicated region
    $region29: #{espnet_forward.46} parent=5 // pred_check
      %p175 = pneg %p174
    $region30: #{espnet_forward.46} parent=5 // pred_check_branch
      %177 = sbr.rel (%p175) target = $region32
    $region31: #{espnet_forward.46} parent=5 // pred_region
      // Predicated region
      $region33: #{espnet_forward.46} parent=31 // pred_check
        %p178 = pneg %p31
      $region34: #{espnet_forward.46} parent=31 // pred_check_branch
        %180 = sbr.rel (%p178) target = $region36
      $region35: #{espnet_forward.46} parent=31 // pred_region
        %s181 = smul.u32 32, %s11
        %p182 = scmp.lt.s32.totalorder %s181, 63
        %s183 = scalar_select %p182, %s181, 63
        %s184 = smul.addr %s183, 4
        %s185 = scalar_lea.vmem %s0, %s184
        %s186 = smul.u32 32, %s11
      $region36: #{espnet_forward.46} parent=31 // pred_fallthru
        _
    $region32: #{espnet_forward.46} parent=5 // pred_fallthru
      _
    %p187 = scmp.le.s32.totalorder 1, %s11
    %p188 = scmp.lt.s32.totalorder %s11, 3
    %p189 = pnand %p187, %p188
    %p190 = pneg %p189
    // Predicated region
    $region37: #{espnet_forward.46} parent=5 // pred_check
      _
    $region38: #{espnet_forward.46} parent=5 // pred_check_branch
      %192 = sbr.rel (%p189) target = $region40
    $region39: #{espnet_forward.46} parent=5 // pred_region
      %s193 = ssub.s32 %s11, 1
      %s194 = smul.u32 32, %s16
      %p195 = scmp.lt.s32.totalorder %s194, 63
      %s196 = scalar_select %p195, %s194, 63
      %s197 = smul.addr %s196, 4
      %s198 = scalar_lea.vmem %s0, %s197
      %p199 = pneg %p37
      %p200 = pneg %p34
      %p201 = pneg %p58
      %p202 = pneg %p55
      %p203 = pneg %p79
      %p204 = pneg %p76
      %p205 = pneg %p100
      %p206 = pneg %p97
      %p207 = pneg %p121
      %p208 = pneg %p118
      %p209 = pneg %p147
      %p210 = pneg %p144
      %s211 = smul.u32 32, %s16
      %p212 = scmp.lt.s32.totalorder %s211, 63
      %s213 = scalar_select %p212, %s211, 63
      %s214 = smul.addr %s213, 4
      %s215 = scalar_lea.vmem %s5, %s214
      %s216 = smul.u32 32, %s16
      %p217 = scmp.lt.s32.totalorder %s216, 63
      %s218 = scalar_select %p217, %s216, 63
      %s219 = smul.addr %s218, 4
      %s220 = scalar_lea.vmem %s0, %s219
      %s221 = smul.u32 32, %s16
      %s222 = smul.u32 32, %s16
      %p223 = scmp.lt.s32.totalorder %s222, 63
      %s224 = scalar_select %p223, %s222, 63
      %s225 = smul.addr %s224, 4
      %s226 = scalar_lea.vmem %s5, %s225
      %s227 = smul.u32 32, %s16
      %v229 = vld [vmem:[%s220] sm:$0xf]
      %v230 = vld [vmem:[%s220 + $0x4] sm:$0xf]
      %v231 = vld [vmem:[%s220 + $0x8] sm:$0xf]
      %v232 = vld [vmem:[%s220 + $0xc] sm:$0xf]
      %v233 = vld [vmem:[%s220 + $0x10] sm:$0xf]
      %v234 = vld [vmem:[%s220 + $0x14] sm:$0xf]
      %v235 = vld [vmem:[%s220 + $0x18] sm:$0xf]
      %v236 = vld [vmem:[%s220 + $0x1c] sm:$0xf]
      %v237 = vld [vmem:[%s220 + $0x20] sm:$0xf]
      %v238 = vld [vmem:[%s220 + $0x24] sm:$0xf]
      %v239 = vld [vmem:[%s220 + $0x28] sm:$0xf]
      %v240 = vld [vmem:[%s220 + $0x2c] sm:$0xf]
      %v241 = vld [vmem:[%s220 + $0x30] sm:$0xf]
      %v242 = vld [vmem:[%s220 + $0x34] sm:$0xf]
      %v243 = vld [vmem:[%s220 + $0x38] sm:$0xf]
      %v244 = vld [vmem:[%s220 + $0x3c] sm:$0xf]
      %v245 = vld [vmem:[%s220 + $0x40] sm:$0xf]
      %v246 = vld [vmem:[%s220 + $0x44] sm:$0xf]
      %v247 = vld [vmem:[%s220 + $0x48] sm:$0xf]
      %v248 = vld [vmem:[%s220 + $0x4c] sm:$0xf]
      %v249 = vld [vmem:[%s220 + $0x50] sm:$0xf]
      %v250 = vld [vmem:[%s220 + $0x54] sm:$0xf]
      %v251 = vld [vmem:[%s220 + $0x58] sm:$0xf]
      %v252 = vld [vmem:[%s220 + $0x5c] sm:$0xf]
      %v253 = vld [vmem:[%s220 + $0x60] sm:$0xf]
      %v254 = vld [vmem:[%s220 + $0x64] sm:$0xf]
      %v255 = vld [vmem:[%s220 + $0x68] sm:$0xf]
      %v256 = vld [vmem:[%s220 + $0x6c] sm:$0xf]
      %v257 = vld [vmem:[%s220 + $0x70] sm:$0xf]
      %v258 = vld [vmem:[%s220 + $0x74] sm:$0xf]
      %v259 = vld [vmem:[%s220 + $0x78] sm:$0xf]
      %v260 = vld [vmem:[%s220 + $0x7c] sm:$0xf]
      %v261 = vld [vmem:[%s1] sm:$0xf]
      %v262 = vld [vmem:[%s1 + $0x4] sm:$0xf]
      %v263 = vld [vmem:[%s1 + $0x8] sm:$0x3]
      %v296 = vunpack.c.l.b16 %v229
      %v297 = vunpack.c.l.b16 %v230
      %v298 = vunpack.c.l.b16 %v231
      %v299 = vunpack.c.l.b16 %v232
      %v300 = vunpack.c.l.b16 %v233
      %v301 = vunpack.c.l.b16 %v234
      %v302 = vunpack.c.l.b16 %v235
      %v303 = vunpack.c.l.b16 %v236
      %v304 = vunpack.c.l.b16 %v237
      %v305 = vunpack.c.l.b16 %v238
      %v306 = vunpack.c.l.b16 %v239
      %v307 = vunpack.c.l.b16 %v240
      %v308 = vunpack.c.l.b16 %v241
      %v309 = vunpack.c.l.b16 %v242
      %v310 = vunpack.c.l.b16 %v243
      %v311 = vunpack.c.l.b16 %v244
      %v312 = vunpack.c.l.b16 %v245
      %v313 = vunpack.c.l.b16 %v246
      %v314 = vunpack.c.l.b16 %v247
      %v315 = vunpack.c.l.b16 %v248
      %v316 = vunpack.c.l.b16 %v249
      %v317 = vunpack.c.l.b16 %v250
      %v318 = vunpack.c.l.b16 %v251
      %v319 = vunpack.c.l.b16 %v252
      %v320 = vunpack.c.l.b16 %v253
      %v321 = vunpack.c.l.b16 %v254
      %v322 = vunpack.c.l.b16 %v255
      %v323 = vunpack.c.l.b16 %v256
      %v324 = vunpack.c.l.b16 %v257
      %v325 = vunpack.c.l.b16 %v258
      %v326 = vunpack.c.l.b16 %v259
      %v327 = vunpack.c.l.b16 %v260
      %v328 = vpack.c.b16 %v297, %v296
      %v329 = vpack.c.b16 %v299, %v298
      %v330 = vpack.c.b16 %v301, %v300
      %v331 = vpack.c.b16 %v303, %v302
      %v332 = vpack.c.b16 %v305, %v304
      %v333 = vpack.c.b16 %v307, %v306
      %v334 = vpack.c.b16 %v309, %v308
      %v335 = vpack.c.b16 %v311, %v310
      %v336 = vpack.c.b16 %v313, %v312
      %v337 = vpack.c.b16 %v315, %v314
      %v338 = vpack.c.b16 %v317, %v316
      %v339 = vpack.c.b16 %v319, %v318
      %v340 = vpack.c.b16 %v321, %v320
      %v341 = vpack.c.b16 %v323, %v322
      %v342 = vpack.c.b16 %v325, %v324
      %v343 = vpack.c.b16 %v327, %v326
      %v347 = vunpack.c.l.b16 %v261
      %v348 = vunpack.c.l.b16 %v262
      %v349 = vunpack.c.l.b16 %v263
      %v350 = vpack.c.b16 %v348, %v347
      %v351 = vpack.c.b16 %v349, %v349
      %vm353 = vcmask 162816
      %v355 = vsel %vm353, %v328, 0
      %v358 = vsel %vm353, %v329, 0
      %v361 = vsel %vm353, %v330, 0
      %v364 = vsel %vm353, %v331, 0
      %v367 = vsel %vm353, %v332, 0
      %v370 = vsel %vm353, %v333, 0
      %v373 = vsel %vm353, %v334, 0
      %v376 = vsel %vm353, %v335, 0
      %v379 = vsel %vm353, %v336, 0
      %v382 = vsel %vm353, %v337, 0
      %v385 = vsel %vm353, %v338, 0
      %v388 = vsel %vm353, %v339, 0
      %v391 = vsel %vm353, %v340, 0
      %v394 = vsel %vm353, %v341, 0
      %v397 = vsel %vm353, %v342, 0
      %v400 = vsel %vm353, %v343, 0
      %vm402 = vcmask 1041408
      %v404 = vsel %vm402, %v351, 0
      %406 = vmatpush.bf16.msra.mxu0 0
      %407 = vmatpush.bf16.msra.mxu0 0
      %408 = vmatpush.bf16.msra.mxu0 0
      %409 = vmatpush.bf16.msra.mxu0 0
      %410 = vmatpush.bf16.msra.mxu0 0
      %411 = vmatpush.bf16.msra.mxu0 0
      %412 = vmatpush.bf16.msra.mxu0 %v404
      %413 = vmatpush.bf16.msra.mxu0 %v350
      %414 = vmatmul.bf16.gmra.mxu0 %v355
      %v415 = vpop.f32.mrf.mxu0
      %v416 = vadd.f32 0.0, %v415
      %v417 = vpop.f32.mrf.mxu0
      %v418 = vadd.f32 0.0, %v417
      %419 = vmatmul.bf16.gmra.mxu0 %v358
      %v420 = vpop.f32.mrf.mxu0
      %v421 = vadd.f32 0.0, %v420
      %v422 = vpop.f32.mrf.mxu0
      %v423 = vadd.f32 0.0, %v422
      %424 = vmatmul.bf16.gmra.mxu0 %v361
      %v425 = vpop.f32.mrf.mxu0
      %v426 = vadd.f32 0.0, %v425
      %v427 = vpop.f32.mrf.mxu0
      %v428 = vadd.f32 0.0, %v427
      %429 = vmatmul.bf16.gmra.mxu0 %v364
      %v430 = vpop.f32.mrf.mxu0
      %v431 = vadd.f32 0.0, %v430
      %v432 = vpop.f32.mrf.mxu0
      %v433 = vadd.f32 0.0, %v432
      %434 = vmatmul.bf16.gmra.mxu0 %v367
      %v435 = vpop.f32.mrf.mxu0
      %v436 = vadd.f32 0.0, %v435
      %v437 = vpop.f32.mrf.mxu0
      %v438 = vadd.f32 0.0, %v437
      %439 = vmatmul.bf16.gmra.mxu0 %v370
      %v440 = vpop.f32.mrf.mxu0
      %v441 = vadd.f32 0.0, %v440
      %v442 = vpop.f32.mrf.mxu0
      %v443 = vadd.f32 0.0, %v442
      %444 = vmatmul.bf16.gmra.mxu0 %v373
      %v445 = vpop.f32.mrf.mxu0
      %v446 = vadd.f32 0.0, %v445
      %v447 = vpop.f32.mrf.mxu0
      %v448 = vadd.f32 0.0, %v447
      %449 = vmatmul.bf16.gmra.mxu0 %v376
      %v450 = vpop.f32.mrf.mxu0
      %v451 = vadd.f32 0.0, %v450
      %v452 = vpop.f32.mrf.mxu0
      %v453 = vadd.f32 0.0, %v452
      %454 = vmatmul.bf16.gmra.mxu0 %v379
      %v455 = vpop.f32.mrf.mxu0
      %v456 = vadd.f32 0.0, %v455
      %v457 = vpop.f32.mrf.mxu0
      %v458 = vadd.f32 0.0, %v457
      %459 = vmatmul.bf16.gmra.mxu0 %v382
      %v460 = vpop.f32.mrf.mxu0
      %v461 = vadd.f32 0.0, %v460
      %v462 = vpop.f32.mrf.mxu0
      %v463 = vadd.f32 0.0, %v462
      %464 = vmatmul.bf16.gmra.mxu0 %v385
      %v465 = vpop.f32.mrf.mxu0
      %v466 = vadd.f32 0.0, %v465
      %v467 = vpop.f32.mrf.mxu0
      %v468 = vadd.f32 0.0, %v467
      %469 = vmatmul.bf16.gmra.mxu0 %v388
      %v470 = vpop.f32.mrf.mxu0
      %v471 = vadd.f32 0.0, %v470
      %v472 = vpop.f32.mrf.mxu0
      %v473 = vadd.f32 0.0, %v472
      %474 = vmatmul.bf16.gmra.mxu0 %v391
      %v475 = vpop.f32.mrf.mxu0
      %v476 = vadd.f32 0.0, %v475
      %v477 = vpop.f32.mrf.mxu0
      %v478 = vadd.f32 0.0, %v477
      %479 = vmatmul.bf16.gmra.mxu0 %v394
      %v480 = vpop.f32.mrf.mxu0
      %v481 = vadd.f32 0.0, %v480
      %v482 = vpop.f32.mrf.mxu0
      %v483 = vadd.f32 0.0, %v482
      %484 = vmatmul.bf16.gmra.mxu0 %v397
      %v485 = vpop.f32.mrf.mxu0
      %v486 = vadd.f32 0.0, %v485
      %v487 = vpop.f32.mrf.mxu0
      %v488 = vadd.f32 0.0, %v487
      %489 = vmatmul.bf16.gmra.mxu0 %v400
      %v490 = vpop.f32.mrf.mxu0
      %v491 = vadd.f32 0.0, %v490
      %v492 = vpop.f32.mrf.mxu0
      %v493 = vadd.f32 0.0, %v492
      %494 = vdwg.mxu0
      %v495 = vld [vmem:[%s2] sm:$0x1]
      %v497 = vperm.slane %v495, 0
      %v499 = vmul.f32 %v416, %v497
      %v500 = vmul.f32 %v418, %v497
      %v501 = vmul.f32 %v421, %v497
      %v502 = vmul.f32 %v423, %v497
      %v503 = vmul.f32 %v426, %v497
      %v504 = vmul.f32 %v428, %v497
      %v505 = vmul.f32 %v431, %v497
      %v506 = vmul.f32 %v433, %v497
      %v507 = vmul.f32 %v436, %v497
      %v508 = vmul.f32 %v438, %v497
      %v509 = vmul.f32 %v441, %v497
      %v510 = vmul.f32 %v443, %v497
      %v511 = vmul.f32 %v446, %v497
      %v512 = vmul.f32 %v448, %v497
      %v513 = vmul.f32 %v451, %v497
      %v514 = vmul.f32 %v453, %v497
      %v515 = vmul.f32 %v456, %v497
      %v516 = vmul.f32 %v458, %v497
      %v517 = vmul.f32 %v461, %v497
      %v518 = vmul.f32 %v463, %v497
      %v519 = vmul.f32 %v466, %v497
      %v520 = vmul.f32 %v468, %v497
      %v521 = vmul.f32 %v471, %v497
      %v522 = vmul.f32 %v473, %v497
      %v523 = vmul.f32 %v476, %v497
      %v524 = vmul.f32 %v478, %v497
      %v525 = vmul.f32 %v481, %v497
      %v526 = vmul.f32 %v483, %v497
      %v527 = vmul.f32 %v486, %v497
      %v528 = vmul.f32 %v488, %v497
      %v529 = vmul.f32 %v491, %v497
      %v530 = vmul.f32 %v493, %v497
      %v531 = vld [vmem:[%s3] sm:$0x1]
      %v533 = vperm.slane %v531, 0
      %v535 = vadd.f32 %v499, %v533
      %v536 = vadd.f32 %v500, %v533
      %v537 = vadd.f32 %v501, %v533
      %v538 = vadd.f32 %v502, %v533
      %v539 = vadd.f32 %v503, %v533
      %v540 = vadd.f32 %v504, %v533
      %v541 = vadd.f32 %v505, %v533
      %v542 = vadd.f32 %v506, %v533
      %v543 = vadd.f32 %v507, %v533
      %v544 = vadd.f32 %v508, %v533
      %v545 = vadd.f32 %v509, %v533
      %v546 = vadd.f32 %v510, %v533
      %v547 = vadd.f32 %v511, %v533
      %v548 = vadd.f32 %v512, %v533
      %v549 = vadd.f32 %v513, %v533
      %v550 = vadd.f32 %v514, %v533
      %v551 = vadd.f32 %v515, %v533
      %v552 = vadd.f32 %v516, %v533
      %v553 = vadd.f32 %v517, %v533
      %v554 = vadd.f32 %v518, %v533
      %v555 = vadd.f32 %v519, %v533
      %v556 = vadd.f32 %v520, %v533
      %v557 = vadd.f32 %v521, %v533
      %v558 = vadd.f32 %v522, %v533
      %v559 = vadd.f32 %v523, %v533
      %v560 = vadd.f32 %v524, %v533
      %v561 = vadd.f32 %v525, %v533
      %v562 = vadd.f32 %v526, %v533
      %v563 = vadd.f32 %v527, %v533
      %v564 = vadd.f32 %v528, %v533
      %v565 = vadd.f32 %v529, %v533
      %v566 = vadd.f32 %v530, %v533
      %vm567 = vcmp.ge.f32.partialorder %v535, 0.0
      %vm568 = vcmp.ge.f32.partialorder %v536, 0.0
      %vm569 = vcmp.ge.f32.partialorder %v537, 0.0
      %vm570 = vcmp.ge.f32.partialorder %v538, 0.0
      %vm571 = vcmp.ge.f32.partialorder %v539, 0.0
      %vm572 = vcmp.ge.f32.partialorder %v540, 0.0
      %vm573 = vcmp.ge.f32.partialorder %v541, 0.0
      %vm574 = vcmp.ge.f32.partialorder %v542, 0.0
      %vm575 = vcmp.ge.f32.partialorder %v543, 0.0
      %vm576 = vcmp.ge.f32.partialorder %v544, 0.0
      %vm577 = vcmp.ge.f32.partialorder %v545, 0.0
      %vm578 = vcmp.ge.f32.partialorder %v546, 0.0
      %vm579 = vcmp.ge.f32.partialorder %v547, 0.0
      %vm580 = vcmp.ge.f32.partialorder %v548, 0.0
      %vm581 = vcmp.ge.f32.partialorder %v549, 0.0
      %vm582 = vcmp.ge.f32.partialorder %v550, 0.0
      %vm583 = vcmp.ge.f32.partialorder %v551, 0.0
      %vm584 = vcmp.ge.f32.partialorder %v552, 0.0
      %vm585 = vcmp.ge.f32.partialorder %v553, 0.0
      %vm586 = vcmp.ge.f32.partialorder %v554, 0.0
      %vm587 = vcmp.ge.f32.partialorder %v555, 0.0
      %vm588 = vcmp.ge.f32.partialorder %v556, 0.0
      %vm589 = vcmp.ge.f32.partialorder %v557, 0.0
      %vm590 = vcmp.ge.f32.partialorder %v558, 0.0
      %vm591 = vcmp.ge.f32.partialorder %v559, 0.0
      %vm592 = vcmp.ge.f32.partialorder %v560, 0.0
      %vm593 = vcmp.ge.f32.partialorder %v561, 0.0
      %vm594 = vcmp.ge.f32.partialorder %v562, 0.0
      %vm595 = vcmp.ge.f32.partialorder %v563, 0.0
      %vm596 = vcmp.ge.f32.partialorder %v564, 0.0
      %vm597 = vcmp.ge.f32.partialorder %v565, 0.0
      %vm598 = vcmp.ge.f32.partialorder %v566, 0.0
      %v599 = vld [vmem:[%s4] sm:$0x1]
      %v601 = vperm.slane %v599, 0
      %v603 = vmul.f32 %v601, %v535
      %v604 = vmul.f32 %v601, %v536
      %v605 = vmul.f32 %v601, %v537
      %v606 = vmul.f32 %v601, %v538
      %v607 = vmul.f32 %v601, %v539
      %v608 = vmul.f32 %v601, %v540
      %v609 = vmul.f32 %v601, %v541
      %v610 = vmul.f32 %v601, %v542
      %v611 = vmul.f32 %v601, %v543
      %v612 = vmul.f32 %v601, %v544
      %v613 = vmul.f32 %v601, %v545
      %v614 = vmul.f32 %v601, %v546
      %v615 = vmul.f32 %v601, %v547
      %v616 = vmul.f32 %v601, %v548
      %v617 = vmul.f32 %v601, %v549
      %v618 = vmul.f32 %v601, %v550
      %v619 = vmul.f32 %v601, %v551
      %v620 = vmul.f32 %v601, %v552
      %v621 = vmul.f32 %v601, %v553
      %v622 = vmul.f32 %v601, %v554
      %v623 = vmul.f32 %v601, %v555
      %v624 = vmul.f32 %v601, %v556
      %v625 = vmul.f32 %v601, %v557
      %v626 = vmul.f32 %v601, %v558
      %v627 = vmul.f32 %v601, %v559
      %v628 = vmul.f32 %v601, %v560
      %v629 = vmul.f32 %v601, %v561
      %v630 = vmul.f32 %v601, %v562
      %v631 = vmul.f32 %v601, %v563
      %v632 = vmul.f32 %v601, %v564
      %v633 = vmul.f32 %v601, %v565
      %v634 = vmul.f32 %v601, %v566
      %v635 = vsel %vm567, %v535, %v603
      %v636 = vsel %vm568, %v536, %v604
      %v637 = vsel %vm569, %v537, %v605
      %v638 = vsel %vm570, %v538, %v606
      %v639 = vsel %vm571, %v539, %v607
      %v640 = vsel %vm572, %v540, %v608
      %v641 = vsel %vm573, %v541, %v609
      %v642 = vsel %vm574, %v542, %v610
      %v643 = vsel %vm575, %v543, %v611
      %v644 = vsel %vm576, %v544, %v612
      %v645 = vsel %vm577, %v545, %v613
      %v646 = vsel %vm578, %v546, %v614
      %v647 = vsel %vm579, %v547, %v615
      %v648 = vsel %vm580, %v548, %v616
      %v649 = vsel %vm581, %v549, %v617
      %v650 = vsel %vm582, %v550, %v618
      %v651 = vsel %vm583, %v551, %v619
      %v652 = vsel %vm584, %v552, %v620
      %v653 = vsel %vm585, %v553, %v621
      %v654 = vsel %vm586, %v554, %v622
      %v655 = vsel %vm587, %v555, %v623
      %v656 = vsel %vm588, %v556, %v624
      %v657 = vsel %vm589, %v557, %v625
      %v658 = vsel %vm590, %v558, %v626
      %v659 = vsel %vm591, %v559, %v627
      %v660 = vsel %vm592, %v560, %v628
      %v661 = vsel %vm593, %v561, %v629
      %v662 = vsel %vm594, %v562, %v630
      %v663 = vsel %vm595, %v563, %v631
      %v664 = vsel %vm596, %v564, %v632
      %v665 = vsel %vm597, %v565, %v633
      %v666 = vsel %vm598, %v566, %v634
      %v667 = vpack.c.bf16 %v635, %v635
      %v668 = vpack.c.bf16 %v636, %v636
      %v669 = vpack.c.bf16 %v637, %v637
      %v670 = vpack.c.bf16 %v638, %v638
      %v671 = vpack.c.bf16 %v639, %v639
      %v672 = vpack.c.bf16 %v640, %v640
      %v673 = vpack.c.bf16 %v641, %v641
      %v674 = vpack.c.bf16 %v642, %v642
      %v675 = vpack.c.bf16 %v643, %v643
      %v676 = vpack.c.bf16 %v644, %v644
      %v677 = vpack.c.bf16 %v645, %v645
      %v678 = vpack.c.bf16 %v646, %v646
      %v679 = vpack.c.bf16 %v647, %v647
      %v680 = vpack.c.bf16 %v648, %v648
      %v681 = vpack.c.bf16 %v649, %v649
      %v682 = vpack.c.bf16 %v650, %v650
      %v683 = vpack.c.bf16 %v651, %v651
      %v684 = vpack.c.bf16 %v652, %v652
      %v685 = vpack.c.bf16 %v653, %v653
      %v686 = vpack.c.bf16 %v654, %v654
      %v687 = vpack.c.bf16 %v655, %v655
      %v688 = vpack.c.bf16 %v656, %v656
      %v689 = vpack.c.bf16 %v657, %v657
      %v690 = vpack.c.bf16 %v658, %v658
      %v691 = vpack.c.bf16 %v659, %v659
      %v692 = vpack.c.bf16 %v660, %v660
      %v693 = vpack.c.bf16 %v661, %v661
      %v694 = vpack.c.bf16 %v662, %v662
      %v695 = vpack.c.bf16 %v663, %v663
      %v696 = vpack.c.bf16 %v664, %v664
      %v697 = vpack.c.bf16 %v665, %v665
      %v698 = vpack.c.bf16 %v666, %v666
      %699 = vst [vmem:[%s226] sm:$0xf] %v667
      %700 = vst [vmem:[%s226 + $0x4] sm:$0xf] %v668
      %701 = vst [vmem:[%s226 + $0x8] sm:$0xf] %v669
      %702 = vst [vmem:[%s226 + $0xc] sm:$0xf] %v670
      %703 = vst [vmem:[%s226 + $0x10] sm:$0xf] %v671
      %704 = vst [vmem:[%s226 + $0x14] sm:$0xf] %v672
      %705 = vst [vmem:[%s226 + $0x18] sm:$0xf] %v673
      %706 = vst [vmem:[%s226 + $0x1c] sm:$0xf] %v674
      %707 = vst [vmem:[%s226 + $0x20] sm:$0xf] %v675
      %708 = vst [vmem:[%s226 + $0x24] sm:$0xf] %v676
      %709 = vst [vmem:[%s226 + $0x28] sm:$0xf] %v677
      %710 = vst [vmem:[%s226 + $0x2c] sm:$0xf] %v678
      %711 = vst [vmem:[%s226 + $0x30] sm:$0xf] %v679
      %712 = vst [vmem:[%s226 + $0x34] sm:$0xf] %v680
      %713 = vst [vmem:[%s226 + $0x38] sm:$0xf] %v681
      %714 = vst [vmem:[%s226 + $0x3c] sm:$0xf] %v682
      %715 = vst [vmem:[%s226 + $0x40] sm:$0xf] %v683
      %716 = vst [vmem:[%s226 + $0x44] sm:$0xf] %v684
      %717 = vst [vmem:[%s226 + $0x48] sm:$0xf] %v685
      %718 = vst [vmem:[%s226 + $0x4c] sm:$0xf] %v686
      %719 = vst [vmem:[%s226 + $0x50] sm:$0xf] %v687
      %720 = vst [vmem:[%s226 + $0x54] sm:$0xf] %v688
      %721 = vst [vmem:[%s226 + $0x58] sm:$0xf] %v689
      %722 = vst [vmem:[%s226 + $0x5c] sm:$0xf] %v690
      %723 = vst [vmem:[%s226 + $0x60] sm:$0xf] %v691
      %724 = vst [vmem:[%s226 + $0x64] sm:$0xf] %v692
      %725 = vst [vmem:[%s226 + $0x68] sm:$0xf] %v693
      %726 = vst [vmem:[%s226 + $0x6c] sm:$0xf] %v694
      %727 = vst [vmem:[%s226 + $0x70] sm:$0xf] %v695
      %728 = vst [vmem:[%s226 + $0x74] sm:$0xf] %v696
      %729 = vst [vmem:[%s226 + $0x78] sm:$0xf] %v697
      %730 = vst [vmem:[%s226 + $0x7c] sm:$0xf] %v698
      %s731 = smul.u32 32, %s16
      %p732 = scmp.lt.s32.totalorder %s731, 63
      %s733 = scalar_select %p732, %s731, 63
      %s734 = smul.addr %s733, 4
      %s735 = scalar_lea.vmem %s5, %s734
      // Predicated region
      $region41: #{espnet_forward.46} parent=39 // pred_check
        %p736 = pneg %p144
      $region42: #{espnet_forward.46} parent=39 // pred_check_branch
        %738 = sbr.rel (%p736) target = $region44
      $region43: #{espnet_forward.46} parent=39 // pred_region
        %s739 = smul.u32 32, %s16
      $region44: #{espnet_forward.46} parent=39 // pred_fallthru
        _
    $region40: #{espnet_forward.46} parent=5 // pred_fallthru
      _
    %p740 = scmp.le.s32.totalorder 2, %s11
    // Predicated region
    $region45: #{espnet_forward.46} parent=5 // pred_check
      %p741 = pneg %p740
    $region46: #{espnet_forward.46} parent=5 // pred_check_branch
      %743 = sbr.rel (%p741) target = $region48
    $region47: #{espnet_forward.46} parent=5 // pred_region
      %s744 = ssub.s32 %s11, 2
      // Predicated region
      $region49: #{espnet_forward.46} parent=47 // pred_check
        %p745 = pneg %p150
      $region50: #{espnet_forward.46} parent=47 // pred_check_branch
        %747 = sbr.rel (%p745) target = $region52
      $region51: #{espnet_forward.46} parent=47 // pred_region
        %s748 = smul.u32 32, %s17
        %p749 = scmp.lt.s32.totalorder %s748, 63
        %s750 = scalar_select %p749, %s748, 63
        %s751 = smul.addr %s750, 4
        %s752 = scalar_lea.vmem %s5, %s751
      $region52: #{espnet_forward.46} parent=47 // pred_fallthru
        _
    $region48: #{espnet_forward.46} parent=5 // pred_fallthru
      _
  $region6: #{espnet_forward.46} parent=0 // loop_footer
    %s15 = sadd.s32 1, %s11
  $region7: #{espnet_forward.46} parent=0 // loop_footer_branch
    %10 = sbr.rel target = $region3
  $region8: #{espnet_forward.46} parent=0 // loop_exit
    _

</llo_original>
